<compile_context>
chip_gen: v7x
topology: tpu7x:2x2x1
jax: 0.10.0
libtpu: 0.0.40
codegen_flags: <defaults>
</compile_context>

<pallas_src>
import numpy as np
import jax
import jax.numpy as jnp
from jax.experimental import pallas as pl
from jax.experimental.pallas import tpu as pltpu

POOL_K = 5
POOL_S = 3
IN_HW = 14
HW = IN_HW * IN_HW            # 196
OUT_HW = 4                    # (14 - 5) // 3 + 1
OUT_P = OUT_HW * OUT_HW       # 16 pooled pixels
CONV_OUT = 128
FC1_IN = CONV_OUT * OUT_P     # 2048
FC1_OUT = 1024
FC2_OUT = 1000
FC2_PAD = 1024                # lane-dense padded fc2 width


def _pool_matrix():
    """Constant (16, 196) averaging matrix implementing AvgPool2d(5, stride=3)."""
    pm = np.zeros((OUT_P, HW), np.float32)
    for oh in range(OUT_HW):
        for ow in range(OUT_HW):
            p = oh * OUT_HW + ow
            for kh in range(POOL_K):
                for kw in range(POOL_K):
                    q = (POOL_S * oh + kh) * IN_HW + (POOL_S * ow + kw)
                    pm[p, q] = 1.0 / (POOL_K * POOL_K)
    return pm


def _inception_aux_kernel(x_ref, pm_ref, cw_ref, cb_ref, w1_ref, b1_ref,
                          w2_ref, b2_ref, o_ref):
    x = x_ref[...]                                   # (TM, 196, C) f32
    tm, _, c = x.shape

    # --- AvgPool2d(5, stride=3) as a batched MXU matmul ----------------------
    pm = jnp.broadcast_to(pm_ref[...][None, :, :], (tm, OUT_P, HW))
    pooled = jax.lax.dot_general(
        pm, x, (((2,), (1,)), ((0,), (0,))),
        preferred_element_type=jnp.float32)          # (TM, 16, C)

    # --- 1x1 conv (C -> 128) + bias + ReLU: ONE 2D matmul over all rows ------
    pooled2 = pooled.reshape(tm * OUT_P, c).astype(jnp.bfloat16)
    conv = jax.lax.dot_general(
        pooled2, cw_ref[...], (((1,), (0,)), ((), ())),
        preferred_element_type=jnp.float32)          # (TM*16, 128)
    conv = jnp.maximum(conv + cb_ref[...], 0.0)

    # --- Flatten to (TM, 2048) in (p, k) order (pure layout, no compute) -----
    conv3 = conv.reshape(tm, OUT_P, CONV_OUT)
    flat = jnp.concatenate([conv3[:, p, :] for p in range(OUT_P)], axis=1)
    flat = flat.astype(jnp.bfloat16)                 # (TM, 2048)

    # --- Linear(2048, 1024) + ReLU -------------------------------------------
    h = jax.lax.dot_general(flat, w1_ref[...], (((1,), (0,)), ((), ())),
                            preferred_element_type=jnp.float32)
    h = jnp.maximum(h + b1_ref[...], 0.0)            # (TM, 1024)

    # Dropout(p=0.7): identity in eval mode.
    # TODO(synk): training-mode dropout would need pltpu.prng_seed/prng_random_bits masking.

    # --- Linear(1024, 1000) padded to 1024 lanes ------------------------------
    out = jax.lax.dot_general(h.astype(jnp.bfloat16), w2_ref[...],
                              (((1,), (0,)), ((), ())),
                              preferred_element_type=jnp.float32)
    o_ref[...] = (out + b2_ref[...]).astype(o_ref.dtype)


def _round_up(v, m):
    return ((v + m - 1) // m) * m


def inception_aux(x, conv_w, conv_b, fc1_w, fc1_b, fc2_w, fc2_b):
    """x: (N, C, 14, 14) f32; params in PyTorch layout. Returns (N, 1000) f32."""
    n, c, hgt, wid = x.shape
    assert hgt == IN_HW and wid == IN_HW, "InceptionAux expects 14x14 spatial input"

    # --- glue: channels-last activations + kernel-layout params (plain JAX) --
    x_nqc = jnp.transpose(x, (0, 2, 3, 1)).reshape(n, HW, c).astype(jnp.float32)
    pm = jnp.asarray(_pool_matrix())                                   # (16, 196)

    cw = conv_w.reshape(CONV_OUT, c).T.astype(jnp.bfloat16)            # (C, 128)
    cb = conv_b.reshape(1, CONV_OUT).astype(jnp.float32)
    # kernel flatten index = p*128 + k ; PyTorch Flatten index = k*16 + p
    w1 = jnp.transpose(fc1_w.reshape(FC1_OUT, CONV_OUT, OUT_P), (2, 1, 0))
    w1 = w1.reshape(FC1_IN, FC1_OUT).astype(jnp.bfloat16)              # (2048, 1024)
    b1 = fc1_b.reshape(1, FC1_OUT).astype(jnp.float32)
    w2 = jnp.zeros((FC1_OUT, FC2_PAD), jnp.float32).at[:, :FC2_OUT].set(fc2_w.T)
    w2 = w2.astype(jnp.bfloat16)                                       # (1024, 1024)
    b2 = jnp.zeros((1, FC2_PAD), jnp.float32).at[:, :FC2_OUT].set(
        fc2_b.reshape(1, FC2_OUT))

    # --- batch tiling ---------------------------------------------------------
    row_bytes = HW * c * 4
    tm_cap = max(8, ((6 << 20) // row_bytes) // 8 * 8)    # keep x tile <= ~6 MiB
    tm = int(min(128, tm_cap, _round_up(n, 8)))
    n_pad = _round_up(n, tm)
    if n_pad != n:
        x_nqc = jnp.pad(x_nqc, ((0, n_pad - n), (0, 0), (0, 0)))
    grid = (n_pad // tm,)

    args = (x_nqc, pm, cw, cb, w1, b1, w2, b2)

    def resident(arr):            # weights: constant index_map -> VMEM-resident
        nd = arr.ndim
        return pl.BlockSpec(arr.shape, lambda *i, _nd=nd: (0,) * _nd)

    in_specs = [pl.BlockSpec((tm, HW, c), lambda i: (i, 0, 0))]
    in_specs += [resident(a) for a in args[1:]]
    out_specs = pl.BlockSpec((tm, FC2_PAD), lambda i: (i, 0))

    # VMEM budget from actual working set (bf16 weights + double-buffered tiles).
    def nbytes(a):
        return int(a.size) * a.dtype.itemsize
    weight_bytes = sum(nbytes(a) for a in args[1:])
    tile_bytes = tm * HW * c * 4 + tm * FC2_PAD * 4
    interm_bytes = tm * OUT_P * (HW + c + 2 * CONV_OUT) * 4 + tm * (FC1_IN + FC1_OUT) * 4
    vmem_limit = int(2 * (weight_bytes + tile_bytes) + interm_bytes + (8 << 20))
    vmem_limit = max(16 << 20, min(vmem_limit, 100 << 20))

    out = pl.pallas_call(
        _inception_aux_kernel,
        out_shape=jax.ShapeDtypeStruct((n_pad, FC2_PAD), jnp.float32),
        grid=grid,
        in_specs=in_specs,
        out_specs=out_specs,
        compiler_params=pltpu.CompilerParams(
            dimension_semantics=("parallel",),
            vmem_limit_bytes=vmem_limit),
    )(*args)
    return out[:n, :FC2_OUT]


def inception_aux_ref(x, conv_w, conv_b, fc1_w, fc1_b, fc2_w, fc2_b):
    """Pure-JAX f32 reference mirroring the PyTorch module (eval mode)."""
    n, c, _, _ = x.shape
    pooled = jax.lax.reduce_window(
        x, 0.0, jax.lax.add, (1, 1, POOL_K, POOL_K), (1, 1, POOL_S, POOL_S),
        "VALID") / float(POOL_K * POOL_K)                               # (N,C,4,4)
    conv = jnp.einsum("nchw,kc->nkhw", pooled, conv_w.reshape(CONV_OUT, c))
    conv = jnp.maximum(conv + conv_b[None, :, None, None], 0.0)        # (N,128,4,4)
    flat = conv.reshape(n, -1)                                         # (c,h,w) order
    h = jnp.maximum(flat @ fc1_w.T + fc1_b, 0.0)
    return h @ fc2_w.T + fc2_b


if __name__ == "__main__":
    N, C = 2, 4
    key = jax.random.PRNGKey(0)
    kx, k1, k2, k3, k4, k5, k6 = jax.random.split(key, 7)

    x = jax.random.normal(kx, (N, C, IN_HW, IN_HW), dtype=jnp.float32)
    conv_w = 0.1 * jax.random.normal(k1, (CONV_OUT, C, 1, 1), dtype=jnp.float32)
    conv_b = 0.1 * jax.random.normal(k2, (CONV_OUT,), dtype=jnp.float32)
    fc1_w = 0.05 * jax.random.normal(k3, (FC1_OUT, FC1_IN), dtype=jnp.float32)
    fc1_b = 0.05 * jax.random.normal(k4, (FC1_OUT,), dtype=jnp.float32)
    fc2_w = 0.05 * jax.random.normal(k5, (FC2_OUT, FC1_OUT), dtype=jnp.float32)
    fc2_b = 0.05 * jax.random.normal(k6, (FC2_OUT,), dtype=jnp.float32)

    out = inception_aux(x, conv_w, conv_b, fc1_w, fc1_b, fc2_w, fc2_b)
    out = jax.block_until_ready(out)

    ref = inception_aux_ref(x, conv_w, conv_b, fc1_w, fc1_b, fc2_w, fc2_b)
    assert out.shape == (N, FC2_OUT)
    assert bool(jnp.all(jnp.isfinite(out)))
    assert bool(jnp.allclose(out, ref, rtol=5e-2, atol=5e-2)), \
        f"max abs err {float(jnp.max(jnp.abs(out - ref)))}"
    print("KERNEL_OK")
</pallas_src>

<mosaic_0001>
module attributes {stable_mosaic.version = 11 : i64} {
  func.func @_inception_aux_kernel(%arg0: i32, %arg1: memref<8x196x4xf32, #tpu.memory_space<vmem>>, %arg2: memref<16x196xf32, #tpu.memory_space<vmem>>, %arg3: memref<4x128xbf16, #tpu.memory_space<vmem>>, %arg4: memref<1x128xf32, #tpu.memory_space<vmem>>, %arg5: memref<2048x1024xbf16, #tpu.memory_space<vmem>>, %arg6: memref<1x1024xf32, #tpu.memory_space<vmem>>, %arg7: memref<1024x1024xbf16, #tpu.memory_space<vmem>>, %arg8: memref<1x1024xf32, #tpu.memory_space<vmem>>, %arg9: memref<8x1024xf32, #tpu.memory_space<vmem>>) attributes {dimension_semantics = [#tpu.dimension_semantics<parallel>], iteration_bounds = array<i64: 1>, scalar_prefetch = 0 : i64, scratch_operands = 0 : i64, tpu.core_type = #tpu.core_type<tc>, window_params = [{transform_indices = @transform_0, window_bounds = array<i64: 8, 196, 4>}, {pipeline_mode = #tpu.pipeline_mode<synchronous>, transform_indices = @transform_1, window_bounds = array<i64: 16, 196>}, {pipeline_mode = #tpu.pipeline_mode<synchronous>, transform_indices = @transform_2, window_bounds = array<i64: 4, 128>}, {pipeline_mode = #tpu.pipeline_mode<synchronous>, transform_indices = @transform_3, window_bounds = array<i64: 1, 128>}, {pipeline_mode = #tpu.pipeline_mode<synchronous>, transform_indices = @transform_4, window_bounds = array<i64: 2048, 1024>}, {pipeline_mode = #tpu.pipeline_mode<synchronous>, transform_indices = @transform_5, window_bounds = array<i64: 1, 1024>}, {pipeline_mode = #tpu.pipeline_mode<synchronous>, transform_indices = @transform_6, window_bounds = array<i64: 1024, 1024>}, {pipeline_mode = #tpu.pipeline_mode<synchronous>, transform_indices = @transform_7, window_bounds = array<i64: 1, 1024>}, {transform_indices = @transform_8, window_bounds = array<i64: 8, 1024>}]} {
    %c0 = arith.constant 0 : index
    %c0_0 = arith.constant 0 : index
    %c0_1 = arith.constant 0 : index
    %0 = vector.load %arg1[%c0, %c0_0, %c0_1] : memref<8x196x4xf32, #tpu.memory_space<vmem>>, vector<8x196x4xf32>
    %c0_2 = arith.constant 0 : index
    %c0_3 = arith.constant 0 : index
    %1 = vector.load %arg2[%c0_2, %c0_3] : memref<16x196xf32, #tpu.memory_space<vmem>>, vector<16x196xf32>
    %2 = vector.shape_cast %1 : vector<16x196xf32> to vector<1x16x196xf32>
    %3 = vector.shape_cast %2 : vector<1x16x196xf32> to vector<1x16x196xf32>
    %4 = vector.broadcast %3 : vector<1x16x196xf32> to vector<8x16x196xf32>
    %cst = arith.constant dense<0.000000e+00> : vector<8x16x4xf32>
    %5 = tpu.matmul %4, %0, %cst {dimension_numbers = #tpu.dot_dimension_numbers<[2], [1], [1], [2], [0, 0, 0, 1, 1, 2], [0], [0]>} : vector<8x16x196xf32>, vector<8x196x4xf32>, vector<8x16x4xf32> -> vector<8x16x4xf32>
    %6 = vector.shape_cast %5 : vector<8x16x4xf32> to vector<128x4xf32>
    %7 = arith.truncf %6 : vector<128x4xf32> to vector<128x4xbf16>
    %c0_4 = arith.constant 0 : index
    %c0_5 = arith.constant 0 : index
    %8 = vector.load %arg3[%c0_4, %c0_5] : memref<4x128xbf16, #tpu.memory_space<vmem>>, vector<4x128xbf16>
    %cst_6 = arith.constant dense<0.000000e+00> : vector<128x128xf32>
    %9 = tpu.matmul %7, %8, %cst_6 {dimension_numbers = #tpu.dot_dimension_numbers<[1], [0], [0], [1], [0, 0, 1, 1], [], []>} : vector<128x4xbf16>, vector<4x128xbf16>, vector<128x128xf32> -> vector<128x128xf32>
    %c0_7 = arith.constant 0 : index
    %c0_8 = arith.constant 0 : index
    %10 = vector.load %arg4[%c0_7, %c0_8] : memref<1x128xf32, #tpu.memory_space<vmem>>, vector<1x128xf32>
    %11 = vector.broadcast %10 : vector<1x128xf32> to vector<128x128xf32>
    %12 = arith.addf %9, %11 : vector<128x128xf32>
    %cst_9 = arith.constant 0.000000e+00 : f32
    %13 = vector.broadcast %cst_9 : f32 to vector<128x128xf32>
    %14 = arith.maximumf %12, %13 : vector<128x128xf32>
    %15 = vector.shape_cast %14 : vector<128x128xf32> to vector<8x16x128xf32>
    %16 = vector.extract_strided_slice %15 {offsets = [0, 0, 0], sizes = [8, 1, 128], strides = [1, 1, 1]} : vector<8x16x128xf32> to vector<8x1x128xf32>
    %17 = vector.shape_cast %16 : vector<8x1x128xf32> to vector<8x128xf32>
    %18 = vector.extract_strided_slice %15 {offsets = [0, 1, 0], sizes = [8, 1, 128], strides = [1, 1, 1]} : vector<8x16x128xf32> to vector<8x1x128xf32>
    %19 = vector.shape_cast %18 : vector<8x1x128xf32> to vector<8x128xf32>
    %20 = vector.extract_strided_slice %15 {offsets = [0, 2, 0], sizes = [8, 1, 128], strides = [1, 1, 1]} : vector<8x16x128xf32> to vector<8x1x128xf32>
    %21 = vector.shape_cast %20 : vector<8x1x128xf32> to vector<8x128xf32>
    %22 = vector.extract_strided_slice %15 {offsets = [0, 3, 0], sizes = [8, 1, 128], strides = [1, 1, 1]} : vector<8x16x128xf32> to vector<8x1x128xf32>
    %23 = vector.shape_cast %22 : vector<8x1x128xf32> to vector<8x128xf32>
    %24 = vector.extract_strided_slice %15 {offsets = [0, 4, 0], sizes = [8, 1, 128], strides = [1, 1, 1]} : vector<8x16x128xf32> to vector<8x1x128xf32>
    %25 = vector.shape_cast %24 : vector<8x1x128xf32> to vector<8x128xf32>
    %26 = vector.extract_strided_slice %15 {offsets = [0, 5, 0], sizes = [8, 1, 128], strides = [1, 1, 1]} : vector<8x16x128xf32> to vector<8x1x128xf32>
    %27 = vector.shape_cast %26 : vector<8x1x128xf32> to vector<8x128xf32>
    %28 = vector.extract_strided_slice %15 {offsets = [0, 6, 0], sizes = [8, 1, 128], strides = [1, 1, 1]} : vector<8x16x128xf32> to vector<8x1x128xf32>
    %29 = vector.shape_cast %28 : vector<8x1x128xf32> to vector<8x128xf32>
    %30 = vector.extract_strided_slice %15 {offsets = [0, 7, 0], sizes = [8, 1, 128], strides = [1, 1, 1]} : vector<8x16x128xf32> to vector<8x1x128xf32>
    %31 = vector.shape_cast %30 : vector<8x1x128xf32> to vector<8x128xf32>
    %32 = vector.extract_strided_slice %15 {offsets = [0, 8, 0], sizes = [8, 1, 128], strides = [1, 1, 1]} : vector<8x16x128xf32> to vector<8x1x128xf32>
    %33 = vector.shape_cast %32 : vector<8x1x128xf32> to vector<8x128xf32>
    %34 = vector.extract_strided_slice %15 {offsets = [0, 9, 0], sizes = [8, 1, 128], strides = [1, 1, 1]} : vector<8x16x128xf32> to vector<8x1x128xf32>
    %35 = vector.shape_cast %34 : vector<8x1x128xf32> to vector<8x128xf32>
    %36 = vector.extract_strided_slice %15 {offsets = [0, 10, 0], sizes = [8, 1, 128], strides = [1, 1, 1]} : vector<8x16x128xf32> to vector<8x1x128xf32>
    %37 = vector.shape_cast %36 : vector<8x1x128xf32> to vector<8x128xf32>
    %38 = vector.extract_strided_slice %15 {offsets = [0, 11, 0], sizes = [8, 1, 128], strides = [1, 1, 1]} : vector<8x16x128xf32> to vector<8x1x128xf32>
    %39 = vector.shape_cast %38 : vector<8x1x128xf32> to vector<8x128xf32>
    %40 = vector.extract_strided_slice %15 {offsets = [0, 12, 0], sizes = [8, 1, 128], strides = [1, 1, 1]} : vector<8x16x128xf32> to vector<8x1x128xf32>
    %41 = vector.shape_cast %40 : vector<8x1x128xf32> to vector<8x128xf32>
    %42 = vector.extract_strided_slice %15 {offsets = [0, 13, 0], sizes = [8, 1, 128], strides = [1, 1, 1]} : vector<8x16x128xf32> to vector<8x1x128xf32>
    %43 = vector.shape_cast %42 : vector<8x1x128xf32> to vector<8x128xf32>
    %44 = vector.extract_strided_slice %15 {offsets = [0, 14, 0], sizes = [8, 1, 128], strides = [1, 1, 1]} : vector<8x16x128xf32> to vector<8x1x128xf32>
    %45 = vector.shape_cast %44 : vector<8x1x128xf32> to vector<8x128xf32>
    %46 = vector.extract_strided_slice %15 {offsets = [0, 15, 0], sizes = [8, 1, 128], strides = [1, 1, 1]} : vector<8x16x128xf32> to vector<8x1x128xf32>
    %47 = vector.shape_cast %46 : vector<8x1x128xf32> to vector<8x128xf32>
    %48 = tpu.concatenate %17, %19, %21, %23, %25, %27, %29, %31, %33, %35, %37, %39, %41, %43, %45, %47 in 1 : vector<8x128xf32>, vector<8x128xf32>, vector<8x128xf32>, vector<8x128xf32>, vector<8x128xf32>, vector<8x128xf32>, vector<8x128xf32>, vector<8x128xf32>, vector<8x128xf32>, vector<8x128xf32>, vector<8x128xf32>, vector<8x128xf32>, vector<8x128xf32>, vector<8x128xf32>, vector<8x128xf32>, vector<8x128xf32> -> vector<8x2048xf32>
    %49 = arith.truncf %48 : vector<8x2048xf32> to vector<8x2048xbf16>
    %c0_10 = arith.constant 0 : index
    %c0_11 = arith.constant 0 : index
    %50 = vector.load %arg5[%c0_10, %c0_11] : memref<2048x1024xbf16, #tpu.memory_space<vmem>>, vector<2048x1024xbf16>
    %cst_12 = arith.constant dense<0.000000e+00> : vector<8x1024xf32>
    %51 = tpu.matmul %49, %50, %cst_12 {dimension_numbers = #tpu.dot_dimension_numbers<[1], [0], [0], [1], [0, 0, 1, 1], [], []>} : vector<8x2048xbf16>, vector<2048x1024xbf16>, vector<8x1024xf32> -> vector<8x1024xf32>
    %c0_13 = arith.constant 0 : index
    %c0_14 = arith.constant 0 : index
    %52 = vector.load %arg6[%c0_13, %c0_14] : memref<1x1024xf32, #tpu.memory_space<vmem>>, vector<1x1024xf32>
    %53 = vector.broadcast %52 : vector<1x1024xf32> to vector<8x1024xf32>
    %54 = arith.addf %51, %53 : vector<8x1024xf32>
    %cst_15 = arith.constant 0.000000e+00 : f32
    %55 = vector.broadcast %cst_15 : f32 to vector<8x1024xf32>
    %56 = arith.maximumf %54, %55 : vector<8x1024xf32>
    %57 = arith.truncf %56 : vector<8x1024xf32> to vector<8x1024xbf16>
    %c0_16 = arith.constant 0 : index
    %c0_17 = arith.constant 0 : index
    %58 = vector.load %arg7[%c0_16, %c0_17] : memref<1024x1024xbf16, #tpu.memory_space<vmem>>, vector<1024x1024xbf16>
    %cst_18 = arith.constant dense<0.000000e+00> : vector<8x1024xf32>
    %59 = tpu.matmul %57, %58, %cst_18 {dimension_numbers = #tpu.dot_dimension_numbers<[1], [0], [0], [1], [0, 0, 1, 1], [], []>} : vector<8x1024xbf16>, vector<1024x1024xbf16>, vector<8x1024xf32> -> vector<8x1024xf32>
    %c0_19 = arith.constant 0 : index
    %c0_20 = arith.constant 0 : index
    %60 = vector.load %arg8[%c0_19, %c0_20] : memref<1x1024xf32, #tpu.memory_space<vmem>>, vector<1x1024xf32>
    %61 = vector.broadcast %60 : vector<1x1024xf32> to vector<8x1024xf32>
    %62 = arith.addf %59, %61 : vector<8x1024xf32>
    %c0_21 = arith.constant 0 : index
    %c0_22 = arith.constant 0 : index
    %63 = vector.load %arg9[%c0_21, %c0_22] : memref<8x1024xf32, #tpu.memory_space<vmem>>, vector<8x1024xf32>
    tpu.vector_store %arg9[%c0_21, %c0_22], %62 {strides = array<i32>} : memref<8x1024xf32, #tpu.memory_space<vmem>>, vector<8x1024xf32>,
    return
  }
  func.func @transform_0(%arg0: i32) -> (i32, i32, i32) {
    %c0_i32 = arith.constant 0 : i32
    %c0_i32_0 = arith.constant 0 : i32
    %c0_i32_1 = arith.constant 0 : i32
    return %arg0, %c0_i32, %c0_i32_0 : i32, i32, i32
  }
  func.func @transform_1(%arg0: i32) -> (i32, i32) {
    %c0_i32 = arith.constant 0 : i32
    %c0_i32_0 = arith.constant 0 : i32
    %c0_i32_1 = arith.constant 0 : i32
    return %c0_i32, %c0_i32_0 : i32, i32
  }
  func.func @transform_2(%arg0: i32) -> (i32, i32) {
    %c0_i32 = arith.constant 0 : i32
    %c0_i32_0 = arith.constant 0 : i32
    %c0_i32_1 = arith.constant 0 : i32
    return %c0_i32, %c0_i32_0 : i32, i32
  }
  func.func @transform_3(%arg0: i32) -> (i32, i32) {
    %c0_i32 = arith.constant 0 : i32
    %c0_i32_0 = arith.constant 0 : i32
    %c0_i32_1 = arith.constant 0 : i32
    return %c0_i32, %c0_i32_0 : i32, i32
  }
  func.func @transform_4(%arg0: i32) -> (i32, i32) {
    %c0_i32 = arith.constant 0 : i32
    %c0_i32_0 = arith.constant 0 : i32
    %c0_i32_1 = arith.constant 0 : i32
    return %c0_i32, %c0_i32_0 : i32, i32
  }
  func.func @transform_5(%arg0: i32) -> (i32, i32) {
    %c0_i32 = arith.constant 0 : i32
    %c0_i32_0 = arith.constant 0 : i32
    %c0_i32_1 = arith.constant 0 : i32
    return %c0_i32, %c0_i32_0 : i32, i32
  }
  func.func @transform_6(%arg0: i32) -> (i32, i32) {
    %c0_i32 = arith.constant 0 : i32
    %c0_i32_0 = arith.constant 0 : i32
    %c0_i32_1 = arith.constant 0 : i32
    return %c0_i32, %c0_i32_0 : i32, i32
  }
  func.func @transform_7(%arg0: i32) -> (i32, i32) {
    %c0_i32 = arith.constant 0 : i32
    %c0_i32_0 = arith.constant 0 : i32
    %c0_i32_1 = arith.constant 0 : i32
    return %c0_i32, %c0_i32_0 : i32, i32
  }
  func.func @transform_8(%arg0: i32) -> (i32, i32) {
    %c0_i32 = arith.constant 0 : i32
    %c0_i32_0 = arith.constant 0 : i32
    return %arg0, %c0_i32 : i32, i32
  }
}

</mosaic_0001>

<llo_original>
// kernel: tpu_custom_call.1
$region0: #{tpu_custom_call.1}
  #allocation0 [shape = 'u32[]', space=smem, size = 0x4, offset = 0x4, fixed_abs, tag = 'smem constant byte address 0x4 - core index']
  #allocation1 [shape = 'u32[144,128]{1,0:T(1,128)}', space=vmem, size = 0x12000, scoped, tag = 'internal scratch']
  %s0 = inlined_call_operand.vmem [shape: f32[8,196,4], index: 0, kind: input, shape index: {}]
  %s1 = inlined_call_operand.hbm [shape: f32[16,196], index: 1, kind: input, shape index: {}]
  %s2 = inlined_call_operand.hbm [shape: bf16[4,128], index: 2, kind: input, shape index: {}]
  %s3 = inlined_call_operand.hbm [shape: f32[1,128], index: 3, kind: input, shape index: {}]
  %s4 = inlined_call_operand.hbm [shape: bf16[2048,1024], index: 4, kind: input, shape index: {}]
  %s5 = inlined_call_operand.hbm [shape: f32[1,1024], index: 5, kind: input, shape index: {}]
  %s6 = inlined_call_operand.hbm [shape: bf16[1024,1024], index: 6, kind: input, shape index: {}]
  %s7 = inlined_call_operand.hbm [shape: f32[1,1024], index: 7, kind: input, shape index: {}]
  %s8 = inlined_call_operand.hbm [shape: f32[8,1024], index: 8, kind: output, shape index: {}]
  %s9 = sld [smem:[#allocation0]]
  $region70: #{tpu_custom_call.1} parent=0
    _
  %s11 = ssub.s32 1, %s9
  %s12 = scalar_select 0, %s11, %s9
  $region1: #{tpu_custom_call.1} parent=0
    #allocation2 [shape = 'u8[16384]{0}', space=vmem, size = 0x4000, scoped, tag = 'input window, operand 1, single buffered']
    #allocation3 [shape = 's32[1]{0}', space=sflag, size = 0x4, scoped, tag = 'scoped memory for tpu_custom_call.1']
    #allocation4 [shape = 's32[1]{0}', space=sflag, size = 0x4, scoped, tag = 'scoped memory for tpu_custom_call.1']
    #allocation5 [shape = 'u8[1024]{0}', space=vmem, size = 0x400, scoped, tag = 'input window, operand 2, single buffered']
    #allocation6 [shape = 's32[1]{0}', space=sflag, size = 0x4, scoped, tag = 'scoped memory for tpu_custom_call.1']
    #allocation7 [shape = 'u8[512]{0}', space=vmem, size = 0x400, scoped, tag = 'input window, operand 3, single buffered']
    #allocation8 [shape = 'u8[4194304]{0}', space=vmem, size = 0x400000, scoped, tag = 'input window, operand 4, single buffered']
    #allocation9 [shape = 's32[1]{0}', space=sflag, size = 0x4, scoped, tag = 'scoped memory for tpu_custom_call.1']
    #allocation10 [shape = 'u8[4096]{0}', space=vmem, size = 0x1000, scoped, tag = 'input window, operand 5, single buffered']
    #allocation11 [shape = 'u8[2097152]{0}', space=vmem, size = 0x200000, scoped, tag = 'input window, operand 6, single buffered']
    #allocation12 [shape = 's32[1]{0}', space=sflag, size = 0x4, scoped, tag = 'scoped memory for tpu_custom_call.1']
    #allocation13 [shape = 'u8[4096]{0}', space=vmem, size = 0x1000, scoped, tag = 'input window, operand 7, single buffered']
    #allocation14 [shape = 'u8[32768]{0}', space=vmem, size = 0x8000, scoped, tag = 'output window, operand 0, single buffered']
    %13 = vsyncpa [#allocation3], 0
    %14 = vsyncpa [#allocation6], 0
    %15 = vsyncpa [#allocation9], 0
    %16 = vsyncpa [#allocation12], 0
    %17 = vsyncpa [#allocation4], 0
    // Predicated region
    $region2: #{tpu_custom_call.1} parent=1 // pred_check
      _
    $region3: #{tpu_custom_call.1} parent=1 // pred_check_branch
      %19 = sbr.rel (0) target = $region5
    $region4: #{tpu_custom_call.1} parent=1 // pred_region
      _
    $region5: #{tpu_custom_call.1} parent=1 // pred_fallthru
      _
    // Predicated region
    $region6: #{tpu_custom_call.1} parent=1 // pred_check
      _
    $region7: #{tpu_custom_call.1} parent=1 // pred_check_branch
      %21 = sbr.rel (0) target = $region9
    $region8: #{tpu_custom_call.1} parent=1 // pred_region
      %s23 = ssub.s32 512, 512
      %24 = vsyncadd [#allocation3], %s23
      %s25 = sshll.u32 [#allocation2], 4
      %s26 = int_to_ptr.vmem [resolvable:$true] %s25
      %31 = dma.hbm_to_vmem [thread:$0]  %s1, 512, %s26, [#allocation3], 256, 256, 16
    $region9: #{tpu_custom_call.1} parent=1 // pred_fallthru
      _
    // Predicated region
    $region10: #{tpu_custom_call.1} parent=1 // pred_check
      _
    $region11: #{tpu_custom_call.1} parent=1 // pred_check_branch
      %33 = sbr.rel (0) target = $region13
    $region12: #{tpu_custom_call.1} parent=1 // pred_region
      %s35 = ssub.s32 32, 32
      %36 = vsyncadd [#allocation6], %s35
      %s38 = sshll.u32 [#allocation5], 4
      %s39 = int_to_ptr.vmem [resolvable:$true] %s38
      %41 = dma.hbm_to_vmem [thread:$0]  %s2, 32, %s39, [#allocation6]
    $region13: #{tpu_custom_call.1} parent=1 // pred_fallthru
      _
    // Predicated region
    $region14: #{tpu_custom_call.1} parent=1 // pred_check
      _
    $region15: #{tpu_custom_call.1} parent=1 // pred_check_branch
      %43 = sbr.rel (0) target = $region17
    $region16: #{tpu_custom_call.1} parent=1 // pred_region
      %s45 = ssub.s32 16, 16
      %46 = vsyncadd [#allocation6], %s45
      %s48 = sshll.u32 [#allocation7], 4
      %s49 = int_to_ptr.vmem [resolvable:$true] %s48
      %51 = dma.hbm_to_vmem [thread:$0]  %s3, 16, %s49, [#allocation6]
    $region17: #{tpu_custom_call.1} parent=1 // pred_fallthru
      _
    // Predicated region
    $region18: #{tpu_custom_call.1} parent=1 // pred_check
      _
    $region19: #{tpu_custom_call.1} parent=1 // pred_check_branch
      %53 = sbr.rel (0) target = $region21
    $region20: #{tpu_custom_call.1} parent=1 // pred_region
      %s55 = ssub.s32 131072, 131072
      %56 = vsyncadd [#allocation9], %s55
      %s57 = sshll.u32 [#allocation8], 4
      %s58 = int_to_ptr.vmem [resolvable:$true] %s57
      %63 = dma.hbm_to_vmem [thread:$0]  %s4, 131072, %s58, [#allocation9], 512, 512, 32
    $region21: #{tpu_custom_call.1} parent=1 // pred_fallthru
      _
    // Predicated region
    $region22: #{tpu_custom_call.1} parent=1 // pred_check
      _
    $region23: #{tpu_custom_call.1} parent=1 // pred_check_branch
      %65 = sbr.rel (0) target = $region25
    $region24: #{tpu_custom_call.1} parent=1 // pred_region
      %s67 = ssub.s32 128, 128
      %68 = vsyncadd [#allocation9], %s67
      %s70 = sshll.u32 [#allocation10], 4
      %s71 = int_to_ptr.vmem [resolvable:$true] %s70
      %73 = dma.hbm_to_vmem [thread:$0]  %s5, 128, %s71, [#allocation9]
    $region25: #{tpu_custom_call.1} parent=1 // pred_fallthru
      _
    // Predicated region
    $region26: #{tpu_custom_call.1} parent=1 // pred_check
      _
    $region27: #{tpu_custom_call.1} parent=1 // pred_check_branch
      %75 = sbr.rel (0) target = $region29
    $region28: #{tpu_custom_call.1} parent=1 // pred_region
      %s77 = ssub.s32 65536, 65536
      %78 = vsyncadd [#allocation12], %s77
      %s79 = sshll.u32 [#allocation11], 4
      %s80 = int_to_ptr.vmem [resolvable:$true] %s79
      %85 = dma.hbm_to_vmem [thread:$0]  %s6, 65536, %s80, [#allocation12], 512, 512, 32
    $region29: #{tpu_custom_call.1} parent=1 // pred_fallthru
      _
    // Predicated region
    $region30: #{tpu_custom_call.1} parent=1 // pred_check
      _
    $region31: #{tpu_custom_call.1} parent=1 // pred_check_branch
      %87 = sbr.rel (0) target = $region33
    $region32: #{tpu_custom_call.1} parent=1 // pred_region
      %s89 = ssub.s32 128, 128
      %90 = vsyncadd [#allocation12], %s89
      %s92 = sshll.u32 [#allocation13], 4
      %s93 = int_to_ptr.vmem [resolvable:$true] %s92
      %95 = dma.hbm_to_vmem [thread:$0]  %s7, 128, %s93, [#allocation12]
    $region33: #{tpu_custom_call.1} parent=1 // pred_fallthru
      _
    // Predicated region
    $region34: #{tpu_custom_call.1} parent=1 // pred_check
      _
    $region35: #{tpu_custom_call.1} parent=1 // pred_check_branch
      %97 = sbr.rel (0) target = $region37
    $region36: #{tpu_custom_call.1} parent=1 // pred_region
      %98 = dma.done [#allocation3], 512
    $region37: #{tpu_custom_call.1} parent=1 // pred_fallthru
      _
    // Predicated region
    $region38: #{tpu_custom_call.1} parent=1 // pred_check
      _
    $region39: #{tpu_custom_call.1} parent=1 // pred_check_branch
      %100 = sbr.rel (0) target = $region41
    $region40: #{tpu_custom_call.1} parent=1 // pred_region
      %101 = dma.done [#allocation6], 32
    $region41: #{tpu_custom_call.1} parent=1 // pred_fallthru
      _
    // Predicated region
    $region42: #{tpu_custom_call.1} parent=1 // pred_check
      _
    $region43: #{tpu_custom_call.1} parent=1 // pred_check_branch
      %103 = sbr.rel (0) target = $region45
    $region44: #{tpu_custom_call.1} parent=1 // pred_region
      %104 = dma.done [#allocation6], 16
    $region45: #{tpu_custom_call.1} parent=1 // pred_fallthru
      _
    // Predicated region
    $region46: #{tpu_custom_call.1} parent=1 // pred_check
      _
    $region47: #{tpu_custom_call.1} parent=1 // pred_check_branch
      %106 = sbr.rel (0) target = $region49
    $region48: #{tpu_custom_call.1} parent=1 // pred_region
      %107 = dma.done [#allocation9], 131072
    $region49: #{tpu_custom_call.1} parent=1 // pred_fallthru
      _
    // Predicated region
    $region50: #{tpu_custom_call.1} parent=1 // pred_check
      _
    $region51: #{tpu_custom_call.1} parent=1 // pred_check_branch
      %109 = sbr.rel (0) target = $region53
    $region52: #{tpu_custom_call.1} parent=1 // pred_region
      %110 = dma.done [#allocation9], 128
    $region53: #{tpu_custom_call.1} parent=1 // pred_fallthru
      _
    // Predicated region
    $region54: #{tpu_custom_call.1} parent=1 // pred_check
      _
    $region55: #{tpu_custom_call.1} parent=1 // pred_check_branch
      %112 = sbr.rel (0) target = $region57
    $region56: #{tpu_custom_call.1} parent=1 // pred_region
      %113 = dma.done [#allocation12], 65536
    $region57: #{tpu_custom_call.1} parent=1 // pred_fallthru
      _
    // Predicated region
    $region58: #{tpu_custom_call.1} parent=1 // pred_check
      _
    $region59: #{tpu_custom_call.1} parent=1 // pred_check_branch
      %115 = sbr.rel (0) target = $region61
    $region60: #{tpu_custom_call.1} parent=1 // pred_region
      %116 = dma.done [#allocation12], 128
    $region61: #{tpu_custom_call.1} parent=1 // pred_fallthru
      _
    %v118 = vld [vmem:[%s0] sm:$0xff]
    %v119 = vld [vmem:[%s0 + $0x8] sm:$0xff]
    %v120 = vld [vmem:[%s0 + $0x10] sm:$0xff]
    %v121 = vld [vmem:[%s0 + $0x18] sm:$0xff]
    %v122 = vld [vmem:[%s0 + $0x20] sm:$0xff]
    %v123 = vld [vmem:[%s0 + $0x28] sm:$0xff]
    %v124 = vld [vmem:[%s0 + $0x30] sm:$0xff]
    %v125 = vld [vmem:[%s0 + $0x38] sm:$0xff]
    %v126 = vld [vmem:[%s0 + $0x40] sm:$0xff]
    %v127 = vld [vmem:[%s0 + $0x48] sm:$0xff]
    %v128 = vld [vmem:[%s0 + $0x50] sm:$0xff]
    %v129 = vld [vmem:[%s0 + $0x58] sm:$0xff]
    %v130 = vld [vmem:[%s0 + $0x60] sm:$0xff]
    %v131 = vld [vmem:[%s0 + $0x68] sm:$0xff]
    %v132 = vld [vmem:[%s0 + $0x70] sm:$0xff]
    %v133 = vld [vmem:[%s0 + $0x78] sm:$0xff]
    %v134 = vld [vmem:[%s0 + $0x80] sm:$0xff]
    %v135 = vld [vmem:[%s0 + $0x88] sm:$0xff]
    %v136 = vld [vmem:[%s0 + $0x90] sm:$0xff]
    %v137 = vld [vmem:[%s0 + $0x98] sm:$0xff]
    %v138 = vld [vmem:[%s0 + $0xa0] sm:$0xff]
    %v139 = vld [vmem:[%s0 + $0xa8] sm:$0xff]
    %v140 = vld [vmem:[%s0 + $0xb0] sm:$0xff]
    %v141 = vld [vmem:[%s0 + $0xb8] sm:$0xff]
    %v142 = vld [vmem:[%s0 + $0xc0] sm:$0xf]
    %v143 = vld [vmem:[%s0 + $0xc8] sm:$0xff]
    %v144 = vld [vmem:[%s0 + $0xd0] sm:$0xff]
    %v145 = vld [vmem:[%s0 + $0xd8] sm:$0xff]
    %v146 = vld [vmem:[%s0 + $0xe0] sm:$0xff]
    %v147 = vld [vmem:[%s0 + $0xe8] sm:$0xff]
    %v148 = vld [vmem:[%s0 + $0xf0] sm:$0xff]
    %v149 = vld [vmem:[%s0 + $0xf8] sm:$0xff]
    %v150 = vld [vmem:[%s0 + $0x100] sm:$0xff]
    %v151 = vld [vmem:[%s0 + $0x108] sm:$0xff]
    %v152 = vld [vmem:[%s0 + $0x110] sm:$0xff]
    %v153 = vld [vmem:[%s0 + $0x118] sm:$0xff]
    %v154 = vld [vmem:[%s0 + $0x120] sm:$0xff]
    %v155 = vld [vmem:[%s0 + $0x128] sm:$0xff]
    %v156 = vld [vmem:[%s0 + $0x130] sm:$0xff]
    %v157 = vld [vmem:[%s0 + $0x138] sm:$0xff]
    %v158 = vld [vmem:[%s0 + $0x140] sm:$0xff]
    %v159 = vld [vmem:[%s0 + $0x148] sm:$0xff]
    %v160 = vld [vmem:[%s0 + $0x150] sm:$0xff]
    %v161 = vld [vmem:[%s0 + $0x158] sm:$0xff]
    %v162 = vld [vmem:[%s0 + $0x160] sm:$0xff]
    %v163 = vld [vmem:[%s0 + $0x168] sm:$0xff]
    %v164 = vld [vmem:[%s0 + $0x170] sm:$0xff]
    %v165 = vld [vmem:[%s0 + $0x178] sm:$0xff]
    %v166 = vld [vmem:[%s0 + $0x180] sm:$0xff]
    %v167 = vld [vmem:[%s0 + $0x188] sm:$0xf]
    %v168 = vld [vmem:[%s0 + $0x190] sm:$0xff]
    %v169 = vld [vmem:[%s0 + $0x198] sm:$0xff]
    %v170 = vld [vmem:[%s0 + $0x1a0] sm:$0xff]
    %v171 = vld [vmem:[%s0 + $0x1a8] sm:$0xff]
    %v172 = vld [vmem:[%s0 + $0x1b0] sm:$0xff]
    %v173 = vld [vmem:[%s0 + $0x1b8] sm:$0xff]
    %v174 = vld [vmem:[%s0 + $0x1c0] sm:$0xff]
    %v175 = vld [vmem:[%s0 + $0x1c8] sm:$0xff]
    %v176 = vld [vmem:[%s0 + $0x1d0] sm:$0xff]
    %v177 = vld [vmem:[%s0 + $0x1d8] sm:$0xff]
    %v178 = vld [vmem:[%s0 + $0x1e0] sm:$0xff]
    %v179 = vld [vmem:[%s0 + $0x1e8] sm:$0xff]
    %v180 = vld [vmem:[%s0 + $0x1f0] sm:$0xff]
    %v181 = vld [vmem:[%s0 + $0x1f8] sm:$0xff]
    %v182 = vld [vmem:[%s0 + $0x200] sm:$0xff]
    %v183 = vld [vmem:[%s0 + $0x208] sm:$0xff]
    %v184 = vld [vmem:[%s0 + $0x210] sm:$0xff]
    %v185 = vld [vmem:[%s0 + $0x218] sm:$0xff]
    %v186 = vld [vmem:[%s0 + $0x220] sm:$0xff]
    %v187 = vld [vmem:[%s0 + $0x228] sm:$0xff]
    %v188 = vld [vmem:[%s0 + $0x230] sm:$0xff]
    %v189 = vld [vmem:[%s0 + $0x238] sm:$0xff]
    %v190 = vld [vmem:[%s0 + $0x240] sm:$0xff]
    %v191 = vld [vmem:[%s0 + $0x248] sm:$0xff]
    %v192 = vld [vmem:[%s0 + $0x250] sm:$0xf]
    %v193 = vld [vmem:[%s0 + $0x258] sm:$0xff]
    %v194 = vld [vmem:[%s0 + $0x260] sm:$0xff]
    %v195 = vld [vmem:[%s0 + $0x268] sm:$0xff]
    %v196 = vld [vmem:[%s0 + $0x270] sm:$0xff]
    %v197 = vld [vmem:[%s0 + $0x278] sm:$0xff]
    %v198 = vld [vmem:[%s0 + $0x280] sm:$0xff]
    %v199 = vld [vmem:[%s0 + $0x288] sm:$0xff]
    %v200 = vld [vmem:[%s0 + $0x290] sm:$0xff]
    %v201 = vld [vmem:[%s0 + $0x298] sm:$0xff]
    %v202 = vld [vmem:[%s0 + $0x2a0] sm:$0xff]
    %v203 = vld [vmem:[%s0 + $0x2a8] sm:$0xff]
    %v204 = vld [vmem:[%s0 + $0x2b0] sm:$0xff]
    %v205 = vld [vmem:[%s0 + $0x2b8] sm:$0xff]
    %v206 = vld [vmem:[%s0 + $0x2c0] sm:$0xff]
    %v207 = vld [vmem:[%s0 + $0x2c8] sm:$0xff]
    %v208 = vld [vmem:[%s0 + $0x2d0] sm:$0xff]
    %v209 = vld [vmem:[%s0 + $0x2d8] sm:$0xff]
    %v210 = vld [vmem:[%s0 + $0x2e0] sm:$0xff]
    %v211 = vld [vmem:[%s0 + $0x2e8] sm:$0xff]
    %v212 = vld [vmem:[%s0 + $0x2f0] sm:$0xff]
    %v213 = vld [vmem:[%s0 + $0x2f8] sm:$0xff]
    %v214 = vld [vmem:[%s0 + $0x300] sm:$0xff]
    %v215 = vld [vmem:[%s0 + $0x308] sm:$0xff]
    %v216 = vld [vmem:[%s0 + $0x310] sm:$0xff]
    %v217 = vld [vmem:[%s0 + $0x318] sm:$0xf]
    %v218 = vld [vmem:[%s0 + $0x320] sm:$0xff]
    %v219 = vld [vmem:[%s0 + $0x328] sm:$0xff]
    %v220 = vld [vmem:[%s0 + $0x330] sm:$0xff]
    %v221 = vld [vmem:[%s0 + $0x338] sm:$0xff]
    %v222 = vld [vmem:[%s0 + $0x340] sm:$0xff]
    %v223 = vld [vmem:[%s0 + $0x348] sm:$0xff]
    %v224 = vld [vmem:[%s0 + $0x350] sm:$0xff]
    %v225 = vld [vmem:[%s0 + $0x358] sm:$0xff]
    %v226 = vld [vmem:[%s0 + $0x360] sm:$0xff]
    %v227 = vld [vmem:[%s0 + $0x368] sm:$0xff]
    %v228 = vld [vmem:[%s0 + $0x370] sm:$0xff]
    %v229 = vld [vmem:[%s0 + $0x378] sm:$0xff]
    %v230 = vld [vmem:[%s0 + $0x380] sm:$0xff]
    %v231 = vld [vmem:[%s0 + $0x388] sm:$0xff]
    %v232 = vld [vmem:[%s0 + $0x390] sm:$0xff]
    %v233 = vld [vmem:[%s0 + $0x398] sm:$0xff]
    %v234 = vld [vmem:[%s0 + $0x3a0] sm:$0xff]
    %v235 = vld [vmem:[%s0 + $0x3a8] sm:$0xff]
    %v236 = vld [vmem:[%s0 + $0x3b0] sm:$0xff]
    %v237 = vld [vmem:[%s0 + $0x3b8] sm:$0xff]
    %v238 = vld [vmem:[%s0 + $0x3c0] sm:$0xff]
    %v239 = vld [vmem:[%s0 + $0x3c8] sm:$0xff]
    %v240 = vld [vmem:[%s0 + $0x3d0] sm:$0xff]
    %v241 = vld [vmem:[%s0 + $0x3d8] sm:$0xff]
    %v242 = vld [vmem:[%s0 + $0x3e0] sm:$0xf]
    %v243 = vld [vmem:[%s0 + $0x3e8] sm:$0xff]
    %v244 = vld [vmem:[%s0 + $0x3f0] sm:$0xff]
    %v245 = vld [vmem:[%s0 + $0x3f8] sm:$0xff]
    %v246 = vld [vmem:[%s0 + $0x400] sm:$0xff]
    %v247 = vld [vmem:[%s0 + $0x408] sm:$0xff]
    %v248 = vld [vmem:[%s0 + $0x410] sm:$0xff]
    %v249 = vld [vmem:[%s0 + $0x418] sm:$0xff]
    %v250 = vld [vmem:[%s0 + $0x420] sm:$0xff]
    %v251 = vld [vmem:[%s0 + $0x428] sm:$0xff]
    %v252 = vld [vmem:[%s0 + $0x430] sm:$0xff]
    %v253 = vld [vmem:[%s0 + $0x438] sm:$0xff]
    %v254 = vld [vmem:[%s0 + $0x440] sm:$0xff]
    %v255 = vld [vmem:[%s0 + $0x448] sm:$0xff]
    %v256 = vld [vmem:[%s0 + $0x450] sm:$0xff]
    %v257 = vld [vmem:[%s0 + $0x458] sm:$0xff]
    %v258 = vld [vmem:[%s0 + $0x460] sm:$0xff]
    %v259 = vld [vmem:[%s0 + $0x468] sm:$0xff]
    %v260 = vld [vmem:[%s0 + $0x470] sm:$0xff]
    %v261 = vld [vmem:[%s0 + $0x478] sm:$0xff]
    %v262 = vld [vmem:[%s0 + $0x480] sm:$0xff]
    %v263 = vld [vmem:[%s0 + $0x488] sm:$0xff]
    %v264 = vld [vmem:[%s0 + $0x490] sm:$0xff]
    %v265 = vld [vmem:[%s0 + $0x498] sm:$0xff]
    %v266 = vld [vmem:[%s0 + $0x4a0] sm:$0xff]
    %v267 = vld [vmem:[%s0 + $0x4a8] sm:$0xf]
    %v268 = vld [vmem:[%s0 + $0x4b0] sm:$0xff]
    %v269 = vld [vmem:[%s0 + $0x4b8] sm:$0xff]
    %v270 = vld [vmem:[%s0 + $0x4c0] sm:$0xff]
    %v271 = vld [vmem:[%s0 + $0x4c8] sm:$0xff]
    %v272 = vld [vmem:[%s0 + $0x4d0] sm:$0xff]
    %v273 = vld [vmem:[%s0 + $0x4d8] sm:$0xff]
    %v274 = vld [vmem:[%s0 + $0x4e0] sm:$0xff]
    %v275 = vld [vmem:[%s0 + $0x4e8] sm:$0xff]
    %v276 = vld [vmem:[%s0 + $0x4f0] sm:$0xff]
    %v277 = vld [vmem:[%s0 + $0x4f8] sm:$0xff]
    %v278 = vld [vmem:[%s0 + $0x500] sm:$0xff]
    %v279 = vld [vmem:[%s0 + $0x508] sm:$0xff]
    %v280 = vld [vmem:[%s0 + $0x510] sm:$0xff]
    %v281 = vld [vmem:[%s0 + $0x518] sm:$0xff]
    %v282 = vld [vmem:[%s0 + $0x520] sm:$0xff]
    %v283 = vld [vmem:[%s0 + $0x528] sm:$0xff]
    %v284 = vld [vmem:[%s0 + $0x530] sm:$0xff]
    %v285 = vld [vmem:[%s0 + $0x538] sm:$0xff]
    %v286 = vld [vmem:[%s0 + $0x540] sm:$0xff]
    %v287 = vld [vmem:[%s0 + $0x548] sm:$0xff]
    %v288 = vld [vmem:[%s0 + $0x550] sm:$0xff]
    %v289 = vld [vmem:[%s0 + $0x558] sm:$0xff]
    %v290 = vld [vmem:[%s0 + $0x560] sm:$0xff]
    %v291 = vld [vmem:[%s0 + $0x568] sm:$0xff]
    %v292 = vld [vmem:[%s0 + $0x570] sm:$0xf]
    %v293 = vld [vmem:[%s0 + $0x578] sm:$0xff]
    %v294 = vld [vmem:[%s0 + $0x580] sm:$0xff]
    %v295 = vld [vmem:[%s0 + $0x588] sm:$0xff]
    %v296 = vld [vmem:[%s0 + $0x590] sm:$0xff]
    %v297 = vld [vmem:[%s0 + $0x598] sm:$0xff]
    %v298 = vld [vmem:[%s0 + $0x5a0] sm:$0xff]
    %v299 = vld [vmem:[%s0 + $0x5a8] sm:$0xff]
    %v300 = vld [vmem:[%s0 + $0x5b0] sm:$0xff]
    %v301 = vld [vmem:[%s0 + $0x5b8] sm:$0xff]
    %v302 = vld [vmem:[%s0 + $0x5c0] sm:$0xff]
    %v303 = vld [vmem:[%s0 + $0x5c8] sm:$0xff]
    %v304 = vld [vmem:[%s0 + $0x5d0] sm:$0xff]
    %v305 = vld [vmem:[%s0 + $0x5d8] sm:$0xff]
    %v306 = vld [vmem:[%s0 + $0x5e0] sm:$0xff]
    %v307 = vld [vmem:[%s0 + $0x5e8] sm:$0xff]
    %v308 = vld [vmem:[%s0 + $0x5f0] sm:$0xff]
    %v309 = vld [vmem:[%s0 + $0x5f8] sm:$0xff]
    %v310 = vld [vmem:[%s0 + $0x600] sm:$0xff]
    %v311 = vld [vmem:[%s0 + $0x608] sm:$0xff]
    %v312 = vld [vmem:[%s0 + $0x610] sm:$0xff]
    %v313 = vld [vmem:[%s0 + $0x618] sm:$0xff]
    %v314 = vld [vmem:[%s0 + $0x620] sm:$0xff]
    %v315 = vld [vmem:[%s0 + $0x628] sm:$0xff]
    %v316 = vld [vmem:[%s0 + $0x630] sm:$0xff]
    %v317 = vld [vmem:[%s0 + $0x638] sm:$0xf]
    %v318 = vld [vmem:[#allocation2] sm:$0xff]
    %v319 = vld [vmem:[#allocation2 + $0x8] sm:$0xff]
    %v320 = vld [vmem:[#allocation2 + $0x10] sm:$0xff]
    %v321 = vld [vmem:[#allocation2 + $0x18] sm:$0xff]
    %vm322 = vcmask 556032
    %v324 = vsel %vm322, %v319, 0
    %v327 = vsel %vm322, %v321, 0
    %vm329 = vcmask 1043456
    %v331 = vsel %vm329, %v142, 0
    %333 = vmatprep.subr.mxu0 0.0
    %334 = vmatpush1.msra.mxu0 %v118
    %335 = vmatprep.subr.mxu0 0.0
    %336 = vmatpush1.msra.mxu0 %v119
    %337 = vmatprep.subr.mxu0 0.0
    %338 = vmatpush1.msra.mxu0 %v120
    %339 = vmatprep.subr.mxu0 0.0
    %340 = vmatpush1.msra.mxu0 %v121
    %341 = vmatprep.subr.mxu0 0.0
    %342 = vmatpush1.msra.mxu0 %v122
    %343 = vmatprep.subr.mxu0 0.0
    %344 = vmatpush1.msra.mxu0 %v123
    %345 = vmatprep.subr.mxu0 0.0
    %346 = vmatpush1.msra.mxu0 %v124
    %347 = vmatprep.subr.mxu0 0.0
    %348 = vmatpush1.msra.mxu0 %v125
    %349 = vmatprep.subr.mxu0 0.0
    %350 = vmatpush1.msra.mxu0 %v126
    %351 = vmatprep.subr.mxu0 0.0
    %352 = vmatpush1.msra.mxu0 %v127
    %353 = vmatprep.subr.mxu0 0.0
    %354 = vmatpush1.msra.mxu0 %v128
    %355 = vmatprep.subr.mxu0 0.0
    %356 = vmatpush1.msra.mxu0 %v129
    %357 = vmatprep.subr.mxu0 0.0
    %358 = vmatpush1.msra.mxu0 %v130
    %359 = vmatprep.subr.mxu0 0.0
    %360 = vmatpush1.msra.mxu0 %v131
    %361 = vmatprep.subr.mxu0 0.0
    %362 = vmatpush1.msra.mxu0 %v132
    %363 = vmatprep.subr.mxu0 0.0
    %364 = vmatpush1.msra.mxu0 %v133
    %365 = vmatprep.subr.mxu0 0.0
    %366 = vmatpush1.msra.mxu0 %v134
    %367 = vmatprep.subr.mxu0 0.0
    %368 = vmatpush1.msra.mxu0 %v135
    %369 = vmatprep.subr.mxu0 0.0
    %370 = vmatpush1.msra.mxu0 %v136
    %371 = vmatprep.subr.mxu0 0.0
    %372 = vmatpush1.msra.mxu0 %v137
    %373 = vmatprep.subr.mxu0 0.0
    %374 = vmatpush1.msra.mxu0 %v138
    %375 = vmatprep.subr.mxu0 0.0
    %376 = vmatpush1.msra.mxu0 %v139
    %377 = vmatprep.subr.mxu0 0.0
    %378 = vmatpush1.msra.mxu0 %v140
    %379 = vmatprep.subr.mxu0 0.0
    %380 = vmatpush1.msra.mxu0 %v141
    %381 = vmatprep.subr.mxu0 0.0
    %382 = vmatpush1.msra.mxu0 %v331
    %383 = vmatprep.subr.mxu0 0.0
    %384 = vmatpush1.msra.mxu0 0.0
    %385 = vmatprep.subr.mxu0 0.0
    %386 = vmatpush1.msra.mxu0 0.0
    %387 = vmatprep.subr.mxu0 0.0
    %388 = vmatpush1.msra.mxu0 0.0
    %389 = vmatprep.subr.mxu0 0.0
    %390 = vmatpush1.msra.mxu0 0.0
    %391 = vmatprep.subr.mxu0 0.0
    %392 = vmatpush1.msra.mxu0 0.0
    %393 = vmatprep.subr.mxu0 0.0
    %394 = vmatpush1.msra.mxu0 0.0
    %395 = vmatprep.subr.mxu0 0.0
    %396 = vmatpush1.msra.mxu0 0.0
    %397 = vmatprep.mubr.f32.mxu0 %v324
    %398 = vmatmul.mubr.f32.gmra.mrb[0].mxu0 %v318
    %v399 = vpop.f32.mrb[0].mxu0
    %v400 = vadd.f32 0.0, %v399
    %v401 = vpop.f32.mrb[0].mxu0
    %402 = vmatprep.mubr.f32.mxu0 %v327
    %403 = vmatmul.mubr.f32.gmra.mrb[0].mxu0 %v320
    %v404 = vpop.f32.mrb[0].mxu0
    %v405 = vadd.f32 0.0, %v404
    %v406 = vpop.f32.mrb[0].mxu0
    %407 = vdwg.mxu0
    %v409 = vsel %vm329, %v167, 0
    %411 = vmatprep.subr.mxu0 0.0
    %412 = vmatpush1.msra.mxu0 %v143
    %413 = vmatprep.subr.mxu0 0.0
    %414 = vmatpush1.msra.mxu0 %v144
    %415 = vmatprep.subr.mxu0 0.0
    %416 = vmatpush1.msra.mxu0 %v145
    %417 = vmatprep.subr.mxu0 0.0
    %418 = vmatpush1.msra.mxu0 %v146
    %419 = vmatprep.subr.mxu0 0.0
    %420 = vmatpush1.msra.mxu0 %v147
    %421 = vmatprep.subr.mxu0 0.0
    %422 = vmatpush1.msra.mxu0 %v148
    %423 = vmatprep.subr.mxu0 0.0
    %424 = vmatpush1.msra.mxu0 %v149
    %425 = vmatprep.subr.mxu0 0.0
    %426 = vmatpush1.msra.mxu0 %v150
    %427 = vmatprep.subr.mxu0 0.0
    %428 = vmatpush1.msra.mxu0 %v151
    %429 = vmatprep.subr.mxu0 0.0
    %430 = vmatpush1.msra.mxu0 %v152
    %431 = vmatprep.subr.mxu0 0.0
    %432 = vmatpush1.msra.mxu0 %v153
    %433 = vmatprep.subr.mxu0 0.0
    %434 = vmatpush1.msra.mxu0 %v154
    %435 = vmatprep.subr.mxu0 0.0
    %436 = vmatpush1.msra.mxu0 %v155
    %437 = vmatprep.subr.mxu0 0.0
    %438 = vmatpush1.msra.mxu0 %v156
    %439 = vmatprep.subr.mxu0 0.0
    %440 = vmatpush1.msra.mxu0 %v157
    %441 = vmatprep.subr.mxu0 0.0
    %442 = vmatpush1.msra.mxu0 %v158
    %443 = vmatprep.subr.mxu0 0.0
    %444 = vmatpush1.msra.mxu0 %v159
    %445 = vmatprep.subr.mxu0 0.0
    %446 = vmatpush1.msra.mxu0 %v160
    %447 = vmatprep.subr.mxu0 0.0
    %448 = vmatpush1.msra.mxu0 %v161
    %449 = vmatprep.subr.mxu0 0.0
    %450 = vmatpush1.msra.mxu0 %v162
    %451 = vmatprep.subr.mxu0 0.0
    %452 = vmatpush1.msra.mxu0 %v163
    %453 = vmatprep.subr.mxu0 0.0
    %454 = vmatpush1.msra.mxu0 %v164
    %455 = vmatprep.subr.mxu0 0.0
    %456 = vmatpush1.msra.mxu0 %v165
    %457 = vmatprep.subr.mxu0 0.0
    %458 = vmatpush1.msra.mxu0 %v166
    %459 = vmatprep.subr.mxu0 0.0
    %460 = vmatpush1.msra.mxu0 %v409
    %461 = vmatprep.subr.mxu0 0.0
    %462 = vmatpush1.msra.mxu0 0.0
    %463 = vmatprep.subr.mxu0 0.0
    %464 = vmatpush1.msra.mxu0 0.0
    %465 = vmatprep.subr.mxu0 0.0
    %466 = vmatpush1.msra.mxu0 0.0
    %467 = vmatprep.subr.mxu0 0.0
    %468 = vmatpush1.msra.mxu0 0.0
    %469 = vmatprep.subr.mxu0 0.0
    %470 = vmatpush1.msra.mxu0 0.0
    %471 = vmatprep.subr.mxu0 0.0
    %472 = vmatpush1.msra.mxu0 0.0
    %473 = vmatprep.subr.mxu0 0.0
    %474 = vmatpush1.msra.mxu0 0.0
    %475 = vmatprep.mubr.f32.mxu0 %v324
    %476 = vmatmul.mubr.f32.gmra.mrb[0].mxu0 %v318
    %v477 = vpop.f32.mrb[0].mxu0
    %v478 = vadd.f32 0.0, %v477
    %v479 = vpop.f32.mrb[0].mxu0
    %480 = vmatprep.mubr.f32.mxu0 %v327
    %481 = vmatmul.mubr.f32.gmra.mrb[0].mxu0 %v320
    %v482 = vpop.f32.mrb[0].mxu0
    %v483 = vadd.f32 0.0, %v482
    %v484 = vpop.f32.mrb[0].mxu0
    %485 = vdwg.mxu0
    %v487 = vsel %vm329, %v192, 0
    %489 = vmatprep.subr.mxu0 0.0
    %490 = vmatpush1.msra.mxu0 %v168
    %491 = vmatprep.subr.mxu0 0.0
    %492 = vmatpush1.msra.mxu0 %v169
    %493 = vmatprep.subr.mxu0 0.0
    %494 = vmatpush1.msra.mxu0 %v170
    %495 = vmatprep.subr.mxu0 0.0
    %496 = vmatpush1.msra.mxu0 %v171
    %497 = vmatprep.subr.mxu0 0.0
    %498 = vmatpush1.msra.mxu0 %v172
    %499 = vmatprep.subr.mxu0 0.0
    %500 = vmatpush1.msra.mxu0 %v173
    %501 = vmatprep.subr.mxu0 0.0
    %502 = vmatpush1.msra.mxu0 %v174
    %503 = vmatprep.subr.mxu0 0.0
    %504 = vmatpush1.msra.mxu0 %v175
    %505 = vmatprep.subr.mxu0 0.0
    %506 = vmatpush1.msra.mxu0 %v176
    %507 = vmatprep.subr.mxu0 0.0
    %508 = vmatpush1.msra.mxu0 %v177
    %509 = vmatprep.subr.mxu0 0.0
    %510 = vmatpush1.msra.mxu0 %v178
    %511 = vmatprep.subr.mxu0 0.0
    %512 = vmatpush1.msra.mxu0 %v179
    %513 = vmatprep.subr.mxu0 0.0
    %514 = vmatpush1.msra.mxu0 %v180
    %515 = vmatprep.subr.mxu0 0.0
    %516 = vmatpush1.msra.mxu0 %v181
    %517 = vmatprep.subr.mxu0 0.0
    %518 = vmatpush1.msra.mxu0 %v182
    %519 = vmatprep.subr.mxu0 0.0
    %520 = vmatpush1.msra.mxu0 %v183
    %521 = vmatprep.subr.mxu0 0.0
    %522 = vmatpush1.msra.mxu0 %v184
    %523 = vmatprep.subr.mxu0 0.0
    %524 = vmatpush1.msra.mxu0 %v185
    %525 = vmatprep.subr.mxu0 0.0
    %526 = vmatpush1.msra.mxu0 %v186
    %527 = vmatprep.subr.mxu0 0.0
    %528 = vmatpush1.msra.mxu0 %v187
    %529 = vmatprep.subr.mxu0 0.0
    %530 = vmatpush1.msra.mxu0 %v188
    %531 = vmatprep.subr.mxu0 0.0
    %532 = vmatpush1.msra.mxu0 %v189
    %533 = vmatprep.subr.mxu0 0.0
    %534 = vmatpush1.msra.mxu0 %v190
    %535 = vmatprep.subr.mxu0 0.0
    %536 = vmatpush1.msra.mxu0 %v191
    %537 = vmatprep.subr.mxu0 0.0
    %538 = vmatpush1.msra.mxu0 %v487
    %539 = vmatprep.subr.mxu0 0.0
    %540 = vmatpush1.msra.mxu0 0.0
    %541 = vmatprep.subr.mxu0 0.0
    %542 = vmatpush1.msra.mxu0 0.0
    %543 = vmatprep.subr.mxu0 0.0
    %544 = vmatpush1.msra.mxu0 0.0
    %545 = vmatprep.subr.mxu0 0.0
    %546 = vmatpush1.msra.mxu0 0.0
    %547 = vmatprep.subr.mxu0 0.0
    %548 = vmatpush1.msra.mxu0 0.0
    %549 = vmatprep.subr.mxu0 0.0
    %550 = vmatpush1.msra.mxu0 0.0
    %551 = vmatprep.subr.mxu0 0.0
    %552 = vmatpush1.msra.mxu0 0.0
    %553 = vmatprep.mubr.f32.mxu0 %v324
    %554 = vmatmul.mubr.f32.gmra.mrb[0].mxu0 %v318
    %v555 = vpop.f32.mrb[0].mxu0
    %v556 = vadd.f32 0.0, %v555
    %v557 = vpop.f32.mrb[0].mxu0
    %558 = vmatprep.mubr.f32.mxu0 %v327
    %559 = vmatmul.mubr.f32.gmra.mrb[0].mxu0 %v320
    %v560 = vpop.f32.mrb[0].mxu0
    %v561 = vadd.f32 0.0, %v560
    %v562 = vpop.f32.mrb[0].mxu0
    %563 = vdwg.mxu0
    %v565 = vsel %vm329, %v217, 0
    %567 = vmatprep.subr.mxu0 0.0
    %568 = vmatpush1.msra.mxu0 %v193
    %569 = vmatprep.subr.mxu0 0.0
    %570 = vmatpush1.msra.mxu0 %v194
    %571 = vmatprep.subr.mxu0 0.0
    %572 = vmatpush1.msra.mxu0 %v195
    %573 = vmatprep.subr.mxu0 0.0
    %574 = vmatpush1.msra.mxu0 %v196
    %575 = vmatprep.subr.mxu0 0.0
    %576 = vmatpush1.msra.mxu0 %v197
    %577 = vmatprep.subr.mxu0 0.0
    %578 = vmatpush1.msra.mxu0 %v198
    %579 = vmatprep.subr.mxu0 0.0
    %580 = vmatpush1.msra.mxu0 %v199
    %581 = vmatprep.subr.mxu0 0.0
    %582 = vmatpush1.msra.mxu0 %v200
    %583 = vmatprep.subr.mxu0 0.0
    %584 = vmatpush1.msra.mxu0 %v201
    %585 = vmatprep.subr.mxu0 0.0
    %586 = vmatpush1.msra.mxu0 %v202
    %587 = vmatprep.subr.mxu0 0.0
    %588 = vmatpush1.msra.mxu0 %v203
    %589 = vmatprep.subr.mxu0 0.0
    %590 = vmatpush1.msra.mxu0 %v204
    %591 = vmatprep.subr.mxu0 0.0
    %592 = vmatpush1.msra.mxu0 %v205
    %593 = vmatprep.subr.mxu0 0.0
    %594 = vmatpush1.msra.mxu0 %v206
    %595 = vmatprep.subr.mxu0 0.0
    %596 = vmatpush1.msra.mxu0 %v207
    %597 = vmatprep.subr.mxu0 0.0
    %598 = vmatpush1.msra.mxu0 %v208
    %599 = vmatprep.subr.mxu0 0.0
    %600 = vmatpush1.msra.mxu0 %v209
    %601 = vmatprep.subr.mxu0 0.0
    %602 = vmatpush1.msra.mxu0 %v210
    %603 = vmatprep.subr.mxu0 0.0
    %604 = vmatpush1.msra.mxu0 %v211
    %605 = vmatprep.subr.mxu0 0.0
    %606 = vmatpush1.msra.mxu0 %v212
    %607 = vmatprep.subr.mxu0 0.0
    %608 = vmatpush1.msra.mxu0 %v213
    %609 = vmatprep.subr.mxu0 0.0
    %610 = vmatpush1.msra.mxu0 %v214
    %611 = vmatprep.subr.mxu0 0.0
    %612 = vmatpush1.msra.mxu0 %v215
    %613 = vmatprep.subr.mxu0 0.0
    %614 = vmatpush1.msra.mxu0 %v216
    %615 = vmatprep.subr.mxu0 0.0
    %616 = vmatpush1.msra.mxu0 %v565
    %617 = vmatprep.subr.mxu0 0.0
    %618 = vmatpush1.msra.mxu0 0.0
    %619 = vmatprep.subr.mxu0 0.0
    %620 = vmatpush1.msra.mxu0 0.0
    %621 = vmatprep.subr.mxu0 0.0
    %622 = vmatpush1.msra.mxu0 0.0
    %623 = vmatprep.subr.mxu0 0.0
    %624 = vmatpush1.msra.mxu0 0.0
    %625 = vmatprep.subr.mxu0 0.0
    %626 = vmatpush1.msra.mxu0 0.0
    %627 = vmatprep.subr.mxu0 0.0
    %628 = vmatpush1.msra.mxu0 0.0
    %629 = vmatprep.subr.mxu0 0.0
    %630 = vmatpush1.msra.mxu0 0.0
    %631 = vmatprep.mubr.f32.mxu0 %v324
    %632 = vmatmul.mubr.f32.gmra.mrb[0].mxu0 %v318
    %v633 = vpop.f32.mrb[0].mxu0
    %v634 = vadd.f32 0.0, %v633
    %v635 = vpop.f32.mrb[0].mxu0
    %636 = vmatprep.mubr.f32.mxu0 %v327
    %637 = vmatmul.mubr.f32.gmra.mrb[0].mxu0 %v320
    %v638 = vpop.f32.mrb[0].mxu0
    %v639 = vadd.f32 0.0, %v638
    %v640 = vpop.f32.mrb[0].mxu0
    %641 = vdwg.mxu0
    %v643 = vsel %vm329, %v242, 0
    %645 = vmatprep.subr.mxu0 0.0
    %646 = vmatpush1.msra.mxu0 %v218
    %647 = vmatprep.subr.mxu0 0.0
    %648 = vmatpush1.msra.mxu0 %v219
    %649 = vmatprep.subr.mxu0 0.0
    %650 = vmatpush1.msra.mxu0 %v220
    %651 = vmatprep.subr.mxu0 0.0
    %652 = vmatpush1.msra.mxu0 %v221
    %653 = vmatprep.subr.mxu0 0.0
    %654 = vmatpush1.msra.mxu0 %v222
    %655 = vmatprep.subr.mxu0 0.0
    %656 = vmatpush1.msra.mxu0 %v223
    %657 = vmatprep.subr.mxu0 0.0
    %658 = vmatpush1.msra.mxu0 %v224
    %659 = vmatprep.subr.mxu0 0.0
    %660 = vmatpush1.msra.mxu0 %v225
    %661 = vmatprep.subr.mxu0 0.0
    %662 = vmatpush1.msra.mxu0 %v226
    %663 = vmatprep.subr.mxu0 0.0
    %664 = vmatpush1.msra.mxu0 %v227
    %665 = vmatprep.subr.mxu0 0.0
    %666 = vmatpush1.msra.mxu0 %v228
    %667 = vmatprep.subr.mxu0 0.0
    %668 = vmatpush1.msra.mxu0 %v229
    %669 = vmatprep.subr.mxu0 0.0
    %670 = vmatpush1.msra.mxu0 %v230
    %671 = vmatprep.subr.mxu0 0.0
    %672 = vmatpush1.msra.mxu0 %v231
    %673 = vmatprep.subr.mxu0 0.0
    %674 = vmatpush1.msra.mxu0 %v232
    %675 = vmatprep.subr.mxu0 0.0
    %676 = vmatpush1.msra.mxu0 %v233
    %677 = vmatprep.subr.mxu0 0.0
    %678 = vmatpush1.msra.mxu0 %v234
    %679 = vmatprep.subr.mxu0 0.0
    %680 = vmatpush1.msra.mxu0 %v235
    %681 = vmatprep.subr.mxu0 0.0
    %682 = vmatpush1.msra.mxu0 %v236
    %683 = vmatprep.subr.mxu0 0.0
    %684 = vmatpush1.msra.mxu0 %v237
    %685 = vmatprep.subr.mxu0 0.0
    %686 = vmatpush1.msra.mxu0 %v238
    %687 = vmatprep.subr.mxu0 0.0
    %688 = vmatpush1.msra.mxu0 %v239
    %689 = vmatprep.subr.mxu0 0.0
    %690 = vmatpush1.msra.mxu0 %v240
    %691 = vmatprep.subr.mxu0 0.0
    %692 = vmatpush1.msra.mxu0 %v241
    %693 = vmatprep.subr.mxu0 0.0
    %694 = vmatpush1.msra.mxu0 %v643
    %695 = vmatprep.subr.mxu0 0.0
    %696 = vmatpush1.msra.mxu0 0.0
    %697 = vmatprep.subr.mxu0 0.0
    %698 = vmatpush1.msra.mxu0 0.0
    %699 = vmatprep.subr.mxu0 0.0
    %700 = vmatpush1.msra.mxu0 0.0
    %701 = vmatprep.subr.mxu0 0.0
    %702 = vmatpush1.msra.mxu0 0.0
    %703 = vmatprep.subr.mxu0 0.0
    %704 = vmatpush1.msra.mxu0 0.0
    %705 = vmatprep.subr.mxu0 0.0
    %706 = vmatpush1.msra.mxu0 0.0
    %707 = vmatprep.subr.mxu0 0.0
    %708 = vmatpush1.msra.mxu0 0.0
    %709 = vmatprep.mubr.f32.mxu0 %v324
    %710 = vmatmul.mubr.f32.gmra.mrb[0].mxu0 %v318
    %v711 = vpop.f32.mrb[0].mxu0
    %v712 = vadd.f32 0.0, %v711
    %v713 = vpop.f32.mrb[0].mxu0
    %714 = vmatprep.mubr.f32.mxu0 %v327
    %715 = vmatmul.mubr.f32.gmra.mrb[0].mxu0 %v320
    %v716 = vpop.f32.mrb[0].mxu0
    %v717 = vadd.f32 0.0, %v716
    %v718 = vpop.f32.mrb[0].mxu0
    %719 = vdwg.mxu0
    %v721 = vsel %vm329, %v267, 0
    %723 = vmatprep.subr.mxu0 0.0
    %724 = vmatpush1.msra.mxu0 %v243
    %725 = vmatprep.subr.mxu0 0.0
    %726 = vmatpush1.msra.mxu0 %v244
    %727 = vmatprep.subr.mxu0 0.0
    %728 = vmatpush1.msra.mxu0 %v245
    %729 = vmatprep.subr.mxu0 0.0
    %730 = vmatpush1.msra.mxu0 %v246
    %731 = vmatprep.subr.mxu0 0.0
    %732 = vmatpush1.msra.mxu0 %v247
    %733 = vmatprep.subr.mxu0 0.0
    %734 = vmatpush1.msra.mxu0 %v248
    %735 = vmatprep.subr.mxu0 0.0
    %736 = vmatpush1.msra.mxu0 %v249
    %737 = vmatprep.subr.mxu0 0.0
    %738 = vmatpush1.msra.mxu0 %v250
    %739 = vmatprep.subr.mxu0 0.0
    %740 = vmatpush1.msra.mxu0 %v251
    %741 = vmatprep.subr.mxu0 0.0
    %742 = vmatpush1.msra.mxu0 %v252
    %743 = vmatprep.subr.mxu0 0.0
    %744 = vmatpush1.msra.mxu0 %v253
    %745 = vmatprep.subr.mxu0 0.0
    %746 = vmatpush1.msra.mxu0 %v254
    %747 = vmatprep.subr.mxu0 0.0
    %748 = vmatpush1.msra.mxu0 %v255
    %749 = vmatprep.subr.mxu0 0.0
    %750 = vmatpush1.msra.mxu0 %v256
    %751 = vmatprep.subr.mxu0 0.0
    %752 = vmatpush1.msra.mxu0 %v257
    %753 = vmatprep.subr.mxu0 0.0
    %754 = vmatpush1.msra.mxu0 %v258
    %755 = vmatprep.subr.mxu0 0.0
    %756 = vmatpush1.msra.mxu0 %v259
    %757 = vmatprep.subr.mxu0 0.0
    %758 = vmatpush1.msra.mxu0 %v260
    %759 = vmatprep.subr.mxu0 0.0
    %760 = vmatpush1.msra.mxu0 %v261
    %761 = vmatprep.subr.mxu0 0.0
    %762 = vmatpush1.msra.mxu0 %v262
    %763 = vmatprep.subr.mxu0 0.0
    %764 = vmatpush1.msra.mxu0 %v263
    %765 = vmatprep.subr.mxu0 0.0
    %766 = vmatpush1.msra.mxu0 %v264
    %767 = vmatprep.subr.mxu0 0.0
    %768 = vmatpush1.msra.mxu0 %v265
    %769 = vmatprep.subr.mxu0 0.0
    %770 = vmatpush1.msra.mxu0 %v266
    %771 = vmatprep.subr.mxu0 0.0
    %772 = vmatpush1.msra.mxu0 %v721
    %773 = vmatprep.subr.mxu0 0.0
    %774 = vmatpush1.msra.mxu0 0.0
    %775 = vmatprep.subr.mxu0 0.0
    %776 = vmatpush1.msra.mxu0 0.0
    %777 = vmatprep.subr.mxu0 0.0
    %778 = vmatpush1.msra.mxu0 0.0
    %779 = vmatprep.subr.mxu0 0.0
    %780 = vmatpush1.msra.mxu0 0.0
    %781 = vmatprep.subr.mxu0 0.0
    %782 = vmatpush1.msra.mxu0 0.0
    %783 = vmatprep.subr.mxu0 0.0
    %784 = vmatpush1.msra.mxu0 0.0
    %785 = vmatprep.subr.mxu0 0.0
    %786 = vmatpush1.msra.mxu0 0.0
    %787 = vmatprep.mubr.f32.mxu0 %v324
    %788 = vmatmul.mubr.f32.gmra.mrb[0].mxu0 %v318
    %v789 = vpop.f32.mrb[0].mxu0
    %v790 = vadd.f32 0.0, %v789
    %v791 = vpop.f32.mrb[0].mxu0
    %792 = vmatprep.mubr.f32.mxu0 %v327
    %793 = vmatmul.mubr.f32.gmra.mrb[0].mxu0 %v320
    %v794 = vpop.f32.mrb[0].mxu0
    %v795 = vadd.f32 0.0, %v794
    %v796 = vpop.f32.mrb[0].mxu0
    %797 = vdwg.mxu0
    %v799 = vsel %vm329, %v292, 0
    %801 = vmatprep.subr.mxu0 0.0
    %802 = vmatpush1.msra.mxu0 %v268
    %803 = vmatprep.subr.mxu0 0.0
    %804 = vmatpush1.msra.mxu0 %v269
    %805 = vmatprep.subr.mxu0 0.0
    %806 = vmatpush1.msra.mxu0 %v270
    %807 = vmatprep.subr.mxu0 0.0
    %808 = vmatpush1.msra.mxu0 %v271
    %809 = vmatprep.subr.mxu0 0.0
    %810 = vmatpush1.msra.mxu0 %v272
    %811 = vmatprep.subr.mxu0 0.0
    %812 = vmatpush1.msra.mxu0 %v273
    %813 = vmatprep.subr.mxu0 0.0
    %814 = vmatpush1.msra.mxu0 %v274
    %815 = vmatprep.subr.mxu0 0.0
    %816 = vmatpush1.msra.mxu0 %v275
    %817 = vmatprep.subr.mxu0 0.0
    %818 = vmatpush1.msra.mxu0 %v276
    %819 = vmatprep.subr.mxu0 0.0
    %820 = vmatpush1.msra.mxu0 %v277
    %821 = vmatprep.subr.mxu0 0.0
    %822 = vmatpush1.msra.mxu0 %v278
    %823 = vmatprep.subr.mxu0 0.0
    %824 = vmatpush1.msra.mxu0 %v279
    %825 = vmatprep.subr.mxu0 0.0
    %826 = vmatpush1.msra.mxu0 %v280
    %827 = vmatprep.subr.mxu0 0.0
    %828 = vmatpush1.msra.mxu0 %v281
    %829 = vmatprep.subr.mxu0 0.0
    %830 = vmatpush1.msra.mxu0 %v282
    %831 = vmatprep.subr.mxu0 0.0
    %832 = vmatpush1.msra.mxu0 %v283
    %833 = vmatprep.subr.mxu0 0.0
    %834 = vmatpush1.msra.mxu0 %v284
    %835 = vmatprep.subr.mxu0 0.0
    %836 = vmatpush1.msra.mxu0 %v285
    %837 = vmatprep.subr.mxu0 0.0
    %838 = vmatpush1.msra.mxu0 %v286
    %839 = vmatprep.subr.mxu0 0.0
    %840 = vmatpush1.msra.mxu0 %v287
    %841 = vmatprep.subr.mxu0 0.0
    %842 = vmatpush1.msra.mxu0 %v288
    %843 = vmatprep.subr.mxu0 0.0
    %844 = vmatpush1.msra.mxu0 %v289
    %845 = vmatprep.subr.mxu0 0.0
    %846 = vmatpush1.msra.mxu0 %v290
    %847 = vmatprep.subr.mxu0 0.0
    %848 = vmatpush1.msra.mxu0 %v291
    %849 = vmatprep.subr.mxu0 0.0
    %850 = vmatpush1.msra.mxu0 %v799
    %851 = vmatprep.subr.mxu0 0.0
    %852 = vmatpush1.msra.mxu0 0.0
    %853 = vmatprep.subr.mxu0 0.0
    %854 = vmatpush1.msra.mxu0 0.0
    %855 = vmatprep.subr.mxu0 0.0
    %856 = vmatpush1.msra.mxu0 0.0
    %857 = vmatprep.subr.mxu0 0.0
    %858 = vmatpush1.msra.mxu0 0.0
    %859 = vmatprep.subr.mxu0 0.0
    %860 = vmatpush1.msra.mxu0 0.0
    %861 = vmatprep.subr.mxu0 0.0
    %862 = vmatpush1.msra.mxu0 0.0
    %863 = vmatprep.subr.mxu0 0.0
    %864 = vmatpush1.msra.mxu0 0.0
    %865 = vmatprep.mubr.f32.mxu0 %v324
    %866 = vmatmul.mubr.f32.gmra.mrb[0].mxu0 %v318
    %v867 = vpop.f32.mrb[0].mxu0
    %v868 = vadd.f32 0.0, %v867
    %v869 = vpop.f32.mrb[0].mxu0
    %870 = vmatprep.mubr.f32.mxu0 %v327
    %871 = vmatmul.mubr.f32.gmra.mrb[0].mxu0 %v320
    %v872 = vpop.f32.mrb[0].mxu0
    %v873 = vadd.f32 0.0, %v872
    %v874 = vpop.f32.mrb[0].mxu0
    %875 = vdwg.mxu0
    %v877 = vsel %vm329, %v317, 0
    %879 = vmatprep.subr.mxu0 0.0
    %880 = vmatpush1.msra.mxu0 %v293
    %881 = vmatprep.subr.mxu0 0.0
    %882 = vmatpush1.msra.mxu0 %v294
    %883 = vmatprep.subr.mxu0 0.0
    %884 = vmatpush1.msra.mxu0 %v295
    %885 = vmatprep.subr.mxu0 0.0
    %886 = vmatpush1.msra.mxu0 %v296
    %887 = vmatprep.subr.mxu0 0.0
    %888 = vmatpush1.msra.mxu0 %v297
    %889 = vmatprep.subr.mxu0 0.0
    %890 = vmatpush1.msra.mxu0 %v298
    %891 = vmatprep.subr.mxu0 0.0
    %892 = vmatpush1.msra.mxu0 %v299
    %893 = vmatprep.subr.mxu0 0.0
    %894 = vmatpush1.msra.mxu0 %v300
    %895 = vmatprep.subr.mxu0 0.0
    %896 = vmatpush1.msra.mxu0 %v301
    %897 = vmatprep.subr.mxu0 0.0
    %898 = vmatpush1.msra.mxu0 %v302
    %899 = vmatprep.subr.mxu0 0.0
    %900 = vmatpush1.msra.mxu0 %v303
    %901 = vmatprep.subr.mxu0 0.0
    %902 = vmatpush1.msra.mxu0 %v304
    %903 = vmatprep.subr.mxu0 0.0
    %904 = vmatpush1.msra.mxu0 %v305
    %905 = vmatprep.subr.mxu0 0.0
    %906 = vmatpush1.msra.mxu0 %v306
    %907 = vmatprep.subr.mxu0 0.0
    %908 = vmatpush1.msra.mxu0 %v307
    %909 = vmatprep.subr.mxu0 0.0
    %910 = vmatpush1.msra.mxu0 %v308
    %911 = vmatprep.subr.mxu0 0.0
    %912 = vmatpush1.msra.mxu0 %v309
    %913 = vmatprep.subr.mxu0 0.0
    %914 = vmatpush1.msra.mxu0 %v310
    %915 = vmatprep.subr.mxu0 0.0
    %916 = vmatpush1.msra.mxu0 %v311
    %917 = vmatprep.subr.mxu0 0.0
    %918 = vmatpush1.msra.mxu0 %v312
    %919 = vmatprep.subr.mxu0 0.0
    %920 = vmatpush1.msra.mxu0 %v313
    %921 = vmatprep.subr.mxu0 0.0
    %922 = vmatpush1.msra.mxu0 %v314
    %923 = vmatprep.subr.mxu0 0.0
    %924 = vmatpush1.msra.mxu0 %v315
    %925 = vmatprep.subr.mxu0 0.0
    %926 = vmatpush1.msra.mxu0 %v316
    %927 = vmatprep.subr.mxu0 0.0
    %928 = vmatpush1.msra.mxu0 %v877
    %929 = vmatprep.subr.mxu0 0.0
    %930 = vmatpush1.msra.mxu0 0.0
    %931 = vmatprep.subr.mxu0 0.0
    %932 = vmatpush1.msra.mxu0 0.0
    %933 = vmatprep.subr.mxu0 0.0
    %934 = vmatpush1.msra.mxu0 0.0
    %935 = vmatprep.subr.mxu0 0.0
    %936 = vmatpush1.msra.mxu0 0.0
    %937 = vmatprep.subr.mxu0 0.0
    %938 = vmatpush1.msra.mxu0 0.0
    %939 = vmatprep.subr.mxu0 0.0
    %940 = vmatpush1.msra.mxu0 0.0
    %941 = vmatprep.subr.mxu0 0.0
    %942 = vmatpush1.msra.mxu0 0.0
    %943 = vmatprep.mubr.f32.mxu0 %v324
    %944 = vmatmul.mubr.f32.gmra.mrb[0].mxu0 %v318
    %v945 = vpop.f32.mrb[0].mxu0
    %v946 = vadd.f32 0.0, %v945
    %v947 = vpop.f32.mrb[0].mxu0
    %948 = vmatprep.mubr.f32.mxu0 %v327
    %949 = vmatmul.mubr.f32.gmra.mrb[0].mxu0 %v320
    %v950 = vpop.f32.mrb[0].mxu0
    %v951 = vadd.f32 0.0, %v950
    %v952 = vpop.f32.mrb[0].mxu0
    %953 = vdwg.mxu0
    %v954 = vpack.c.bf16 %v405, %v400
    %v955 = vpack.c.bf16 %v483, %v478
    %v956 = vpack.c.bf16 %v561, %v556
    %v957 = vpack.c.bf16 %v639, %v634
    %v958 = vpack.c.bf16 %v717, %v712
    %v959 = vpack.c.bf16 %v795, %v790
    %v960 = vpack.c.bf16 %v873, %v868
    %v961 = vpack.c.bf16 %v951, %v946
    %v962 = vld [vmem:[#allocation5] sm:$0x3]
    %v963 = vld [vmem:[#allocation7] sm:$0x1]
    %v965 = vlaneseq
    %v966 = vshrl.u32 %v965, 7
    %v967 = vsub.s32 0, %v966
    %v968 = vrot.slane %v963, %v967
    %vm970 = vcmask 31744
    %v972 = vsel %vm970, %v954, 0
    %v975 = vsel %vm970, %v955, 0
    %v978 = vsel %vm970, %v956, 0
    %v981 = vsel %vm970, %v957, 0
    %v984 = vsel %vm970, %v958, 0
    %v987 = vsel %vm970, %v959, 0
    %v990 = vsel %vm970, %v960, 0
    %v993 = vsel %vm970, %v961, 0
    %vm995 = vcmask 1041408
    %v997 = vsel %vm995, %v962, 0
    %999 = vmatprep.subr.bf16.mxu0 0
    %1000 = vmatpush1.bf16.msra.mxu0 %v997
    %1001 = vmatprep.subr.bf16.mxu0 0
    %1002 = vmatpush1.bf16.msra.mxu0 0
    %1003 = vmatprep.subr.bf16.mxu0 0
    %1004 = vmatpush1.bf16.msra.mxu0 0
    %1005 = vmatprep.subr.bf16.mxu0 0
    %1006 = vmatpush1.bf16.msra.mxu0 0
    %1007 = vmatprep.subr.bf16.mxu0 0
    %1008 = vmatpush1.bf16.msra.mxu0 0
    %1009 = vmatprep.subr.bf16.mxu0 0
    %1010 = vmatpush1.bf16.msra.mxu0 0
    %1011 = vmatprep.subr.bf16.mxu0 0
    %1012 = vmatpush1.bf16.msra.mxu0 0
    %1013 = vmatprep.subr.bf16.mxu0 0
    %1014 = vmatpush1.bf16.msra.mxu0 0
    %1015 = vmatprep.subr.bf16.mxu0 0
    %1016 = vmatpush1.bf16.msra.mxu0 0
    %1017 = vmatprep.subr.bf16.mxu0 0
    %1018 = vmatpush1.bf16.msra.mxu0 0
    %1019 = vmatprep.subr.bf16.mxu0 0
    %1020 = vmatpush1.bf16.msra.mxu0 0
    %1021 = vmatprep.subr.bf16.mxu0 0
    %1022 = vmatpush1.bf16.msra.mxu0 0
    %1023 = vmatprep.subr.bf16.mxu0 0
    %1024 = vmatpush1.bf16.msra.mxu0 0
    %1025 = vmatprep.subr.bf16.mxu0 0
    %1026 = vmatpush1.bf16.msra.mxu0 0
    %1027 = vmatprep.subr.bf16.mxu0 0
    %1028 = vmatpush1.bf16.msra.mxu0 0
    %1029 = vmatprep.subr.bf16.mxu0 0
    %1030 = vmatpush1.bf16.msra.mxu0 0
    %1031 = vmatprep.mubr.bf16.mxu0 0
    %1032 = vmatmul.mubr.bf16.gmra.mrb[0].mxu0 %v972
    %v1033 = vpop.f32.mrb[0].mxu0
    %v1034 = vadd.f32 %v968, %v1033
    %v1035 = vpop.f32.mrb[0].mxu0
    %v1036 = vpop.f32.mrb[0].mxu0
    %v1037 = vadd.f32 %v968, %v1036
    %v1038 = vpop.f32.mrb[0].mxu0
    %1039 = vmatprep.mubr.bf16.mxu0 0
    %1040 = vmatmul.mubr.bf16.gmra.mrb[0].mxu0 %v975
    %v1041 = vpop.f32.mrb[0].mxu0
    %v1042 = vadd.f32 %v968, %v1041
    %v1043 = vpop.f32.mrb[0].mxu0
    %v1044 = vpop.f32.mrb[0].mxu0
    %v1045 = vadd.f32 %v968, %v1044
    %v1046 = vpop.f32.mrb[0].mxu0
    %1047 = vmatprep.mubr.bf16.mxu0 0
    %1048 = vmatmul.mubr.bf16.gmra.mrb[0].mxu0 %v978
    %v1049 = vpop.f32.mrb[0].mxu0
    %v1050 = vadd.f32 %v968, %v1049
    %v1051 = vpop.f32.mrb[0].mxu0
    %v1052 = vpop.f32.mrb[0].mxu0
    %v1053 = vadd.f32 %v968, %v1052
    %v1054 = vpop.f32.mrb[0].mxu0
    %1055 = vmatprep.mubr.bf16.mxu0 0
    %1056 = vmatmul.mubr.bf16.gmra.mrb[0].mxu0 %v981
    %v1057 = vpop.f32.mrb[0].mxu0
    %v1058 = vadd.f32 %v968, %v1057
    %v1059 = vpop.f32.mrb[0].mxu0
    %v1060 = vpop.f32.mrb[0].mxu0
    %v1061 = vadd.f32 %v968, %v1060
    %v1062 = vpop.f32.mrb[0].mxu0
    %1063 = vmatprep.mubr.bf16.mxu0 0
    %1064 = vmatmul.mubr.bf16.gmra.mrb[0].mxu0 %v984
    %v1065 = vpop.f32.mrb[0].mxu0
    %v1066 = vadd.f32 %v968, %v1065
    %v1067 = vpop.f32.mrb[0].mxu0
    %v1068 = vpop.f32.mrb[0].mxu0
    %v1069 = vadd.f32 %v968, %v1068
    %v1070 = vpop.f32.mrb[0].mxu0
    %1071 = vmatprep.mubr.bf16.mxu0 0
    %1072 = vmatmul.mubr.bf16.gmra.mrb[0].mxu0 %v987
    %v1073 = vpop.f32.mrb[0].mxu0
    %v1074 = vadd.f32 %v968, %v1073
    %v1075 = vpop.f32.mrb[0].mxu0
    %v1076 = vpop.f32.mrb[0].mxu0
    %v1077 = vadd.f32 %v968, %v1076
    %v1078 = vpop.f32.mrb[0].mxu0
    %1079 = vmatprep.mubr.bf16.mxu0 0
    %1080 = vmatmul.mubr.bf16.gmra.mrb[0].mxu0 %v990
    %v1081 = vpop.f32.mrb[0].mxu0
    %v1082 = vadd.f32 %v968, %v1081
    %v1083 = vpop.f32.mrb[0].mxu0
    %v1084 = vpop.f32.mrb[0].mxu0
    %v1085 = vadd.f32 %v968, %v1084
    %v1086 = vpop.f32.mrb[0].mxu0
    %1087 = vmatprep.mubr.bf16.mxu0 0
    %1088 = vmatmul.mubr.bf16.gmra.mrb[0].mxu0 %v993
    %v1089 = vpop.f32.mrb[0].mxu0
    %v1090 = vadd.f32 %v968, %v1089
    %v1091 = vpop.f32.mrb[0].mxu0
    %v1092 = vpop.f32.mrb[0].mxu0
    %v1093 = vadd.f32 %v968, %v1092
    %v1094 = vpop.f32.mrb[0].mxu0
    %1095 = vdwg.mxu0
    %v1096 = vmax.f32 %v1034, 0.0
    %v1097 = vmax.f32 %v1037, 0.0
    %v1098 = vmax.f32 %v1042, 0.0
    %v1099 = vmax.f32 %v1045, 0.0
    %v1100 = vmax.f32 %v1050, 0.0
    %v1101 = vmax.f32 %v1053, 0.0
    %v1102 = vmax.f32 %v1058, 0.0
    %v1103 = vmax.f32 %v1061, 0.0
    %v1104 = vmax.f32 %v1066, 0.0
    %v1105 = vmax.f32 %v1069, 0.0
    %v1106 = vmax.f32 %v1074, 0.0
    %v1107 = vmax.f32 %v1077, 0.0
    %v1108 = vmax.f32 %v1082, 0.0
    %v1109 = vmax.f32 %v1085, 0.0
    %v1110 = vmax.f32 %v1090, 0.0
    %v1111 = vmax.f32 %v1093, 0.0
    %v1120 = vrot.slane %v1098, 7
    %vm1121 = vcmask 1041409
    %v1122 = vsel %vm1121, %v1120, %v1096
    %v1123 = vrot.slane %v1100, 6
    %vm1124 = vcmask 1042434
    %v1125 = vsel %vm1124, %v1123, %v1122
    %v1126 = vrot.slane %v1102, 5
    %vm1127 = vcmask 1043459
    %v1128 = vsel %vm1127, %v1126, %v1125
    %v1129 = vrot.slane %v1104, 4
    %vm1130 = vcmask 1044484
    %v1131 = vsel %vm1130, %v1129, %v1128
    %v1132 = vrot.slane %v1106, 3
    %vm1133 = vcmask 1045509
    %v1134 = vsel %vm1133, %v1132, %v1131
    %v1135 = vrot.slane %v1108, 2
    %vm1136 = vcmask 1046534
    %v1137 = vsel %vm1136, %v1135, %v1134
    %v1138 = vrot.slane %v1110, 1
    %vm1139 = vcmask 1047559
    %v1140 = vsel %vm1139, %v1138, %v1137
    %v1142 = vrot.slane %v1096, 1
    %v1143 = vsel %vm1121, %v1098, %v1142
    %v1144 = vrot.slane %v1100, 7
    %v1145 = vsel %vm1124, %v1144, %v1143
    %v1146 = vrot.slane %v1102, 6
    %v1147 = vsel %vm1127, %v1146, %v1145
    %v1148 = vrot.slane %v1104, 5
    %v1149 = vsel %vm1130, %v1148, %v1147
    %v1150 = vrot.slane %v1106, 4
    %v1151 = vsel %vm1133, %v1150, %v1149
    %v1152 = vrot.slane %v1108, 3
    %v1153 = vsel %vm1136, %v1152, %v1151
    %v1154 = vrot.slane %v1110, 2
    %v1155 = vsel %vm1139, %v1154, %v1153
    %v1157 = vrot.slane %v1096, 2
    %v1158 = vrot.slane %v1098, 1
    %v1159 = vsel %vm1121, %v1158, %v1157
    %v1160 = vsel %vm1124, %v1100, %v1159
    %v1161 = vrot.slane %v1102, 7
    %v1162 = vsel %vm1127, %v1161, %v1160
    %v1163 = vrot.slane %v1104, 6
    %v1164 = vsel %vm1130, %v1163, %v1162
    %v1165 = vrot.slane %v1106, 5
    %v1166 = vsel %vm1133, %v1165, %v1164
    %v1167 = vrot.slane %v1108, 4
    %v1168 = vsel %vm1136, %v1167, %v1166
    %v1169 = vrot.slane %v1110, 3
    %v1170 = vsel %vm1139, %v1169, %v1168
    %v1172 = vrot.slane %v1096, 3
    %v1173 = vrot.slane %v1098, 2
    %v1174 = vsel %vm1121, %v1173, %v1172
    %v1175 = vrot.slane %v1100, 1
    %v1176 = vsel %vm1124, %v1175, %v1174
    %v1177 = vsel %vm1127, %v1102, %v1176
    %v1178 = vrot.slane %v1104, 7
    %v1179 = vsel %vm1130, %v1178, %v1177
    %v1180 = vrot.slane %v1106, 6
    %v1181 = vsel %vm1133, %v1180, %v1179
    %v1182 = vrot.slane %v1108, 5
    %v1183 = vsel %vm1136, %v1182, %v1181
    %v1184 = vrot.slane %v1110, 4
    %v1185 = vsel %vm1139, %v1184, %v1183
    %v1187 = vrot.slane %v1096, 4
    %v1188 = vrot.slane %v1098, 3
    %v1189 = vsel %vm1121, %v1188, %v1187
    %v1190 = vrot.slane %v1100, 2
    %v1191 = vsel %vm1124, %v1190, %v1189
    %v1192 = vrot.slane %v1102, 1
    %v1193 = vsel %vm1127, %v1192, %v1191
    %v1194 = vsel %vm1130, %v1104, %v1193
    %v1195 = vrot.slane %v1106, 7
    %v1196 = vsel %vm1133, %v1195, %v1194
    %v1197 = vrot.slane %v1108, 6
    %v1198 = vsel %vm1136, %v1197, %v1196
    %v1199 = vrot.slane %v1110, 5
    %v1200 = vsel %vm1139, %v1199, %v1198
    %v1202 = vrot.slane %v1096, 5
    %v1203 = vrot.slane %v1098, 4
    %v1204 = vsel %vm1121, %v1203, %v1202
    %v1205 = vrot.slane %v1100, 3
    %v1206 = vsel %vm1124, %v1205, %v1204
    %v1207 = vrot.slane %v1102, 2
    %v1208 = vsel %vm1127, %v1207, %v1206
    %v1209 = vrot.slane %v1104, 1
    %v1210 = vsel %vm1130, %v1209, %v1208
    %v1211 = vsel %vm1133, %v1106, %v1210
    %v1212 = vrot.slane %v1108, 7
    %v1213 = vsel %vm1136, %v1212, %v1211
    %v1214 = vrot.slane %v1110, 6
    %v1215 = vsel %vm1139, %v1214, %v1213
    %v1217 = vrot.slane %v1096, 6
    %v1218 = vrot.slane %v1098, 5
    %v1219 = vsel %vm1121, %v1218, %v1217
    %v1220 = vrot.slane %v1100, 4
    %v1221 = vsel %vm1124, %v1220, %v1219
    %v1222 = vrot.slane %v1102, 3
    %v1223 = vsel %vm1127, %v1222, %v1221
    %v1224 = vrot.slane %v1104, 2
    %v1225 = vsel %vm1130, %v1224, %v1223
    %v1226 = vrot.slane %v1106, 1
    %v1227 = vsel %vm1133, %v1226, %v1225
    %v1228 = vsel %vm1136, %v1108, %v1227
    %v1229 = vrot.slane %v1110, 7
    %v1230 = vsel %vm1139, %v1229, %v1228
    %v1232 = vrot.slane %v1096, 7
    %v1233 = vrot.slane %v1098, 6
    %v1234 = vsel %vm1121, %v1233, %v1232
    %v1235 = vrot.slane %v1100, 5
    %v1236 = vsel %vm1124, %v1235, %v1234
    %v1237 = vrot.slane %v1102, 4
    %v1238 = vsel %vm1127, %v1237, %v1236
    %v1239 = vrot.slane %v1104, 3
    %v1240 = vsel %vm1130, %v1239, %v1238
    %v1241 = vrot.slane %v1106, 2
    %v1242 = vsel %vm1133, %v1241, %v1240
    %v1243 = vrot.slane %v1108, 1
    %v1244 = vsel %vm1136, %v1243, %v1242
    %v1245 = vsel %vm1139, %v1110, %v1244
    %v1255 = vrot.slane %v1099, 7
    %v1256 = vsel %vm1121, %v1255, %v1097
    %v1257 = vrot.slane %v1101, 6
    %v1258 = vsel %vm1124, %v1257, %v1256
    %v1259 = vrot.slane %v1103, 5
    %v1260 = vsel %vm1127, %v1259, %v1258
    %v1261 = vrot.slane %v1105, 4
    %v1262 = vsel %vm1130, %v1261, %v1260
    %v1263 = vrot.slane %v1107, 3
    %v1264 = vsel %vm1133, %v1263, %v1262
    %v1265 = vrot.slane %v1109, 2
    %v1266 = vsel %vm1136, %v1265, %v1264
    %v1267 = vrot.slane %v1111, 1
    %v1268 = vsel %vm1139, %v1267, %v1266
    %v1270 = vrot.slane %v1097, 1
    %v1271 = vsel %vm1121, %v1099, %v1270
    %v1272 = vrot.slane %v1101, 7
    %v1273 = vsel %vm1124, %v1272, %v1271
    %v1274 = vrot.slane %v1103, 6
    %v1275 = vsel %vm1127, %v1274, %v1273
    %v1276 = vrot.slane %v1105, 5
    %v1277 = vsel %vm1130, %v1276, %v1275
    %v1278 = vrot.slane %v1107, 4
    %v1279 = vsel %vm1133, %v1278, %v1277
    %v1280 = vrot.slane %v1109, 3
    %v1281 = vsel %vm1136, %v1280, %v1279
    %v1282 = vrot.slane %v1111, 2
    %v1283 = vsel %vm1139, %v1282, %v1281
    %v1285 = vrot.slane %v1097, 2
    %v1286 = vrot.slane %v1099, 1
    %v1287 = vsel %vm1121, %v1286, %v1285
    %v1288 = vsel %vm1124, %v1101, %v1287
    %v1289 = vrot.slane %v1103, 7
    %v1290 = vsel %vm1127, %v1289, %v1288
    %v1291 = vrot.slane %v1105, 6
    %v1292 = vsel %vm1130, %v1291, %v1290
    %v1293 = vrot.slane %v1107, 5
    %v1294 = vsel %vm1133, %v1293, %v1292
    %v1295 = vrot.slane %v1109, 4
    %v1296 = vsel %vm1136, %v1295, %v1294
    %v1297 = vrot.slane %v1111, 3
    %v1298 = vsel %vm1139, %v1297, %v1296
    %v1300 = vrot.slane %v1097, 3
    %v1301 = vrot.slane %v1099, 2
    %v1302 = vsel %vm1121, %v1301, %v1300
    %v1303 = vrot.slane %v1101, 1
    %v1304 = vsel %vm1124, %v1303, %v1302
    %v1305 = vsel %vm1127, %v1103, %v1304
    %v1306 = vrot.slane %v1105, 7
    %v1307 = vsel %vm1130, %v1306, %v1305
    %v1308 = vrot.slane %v1107, 6
    %v1309 = vsel %vm1133, %v1308, %v1307
    %v1310 = vrot.slane %v1109, 5
    %v1311 = vsel %vm1136, %v1310, %v1309
    %v1312 = vrot.slane %v1111, 4
    %v1313 = vsel %vm1139, %v1312, %v1311
    %v1315 = vrot.slane %v1097, 4
    %v1316 = vrot.slane %v1099, 3
    %v1317 = vsel %vm1121, %v1316, %v1315
    %v1318 = vrot.slane %v1101, 2
    %v1319 = vsel %vm1124, %v1318, %v1317
    %v1320 = vrot.slane %v1103, 1
    %v1321 = vsel %vm1127, %v1320, %v1319
    %v1322 = vsel %vm1130, %v1105, %v1321
    %v1323 = vrot.slane %v1107, 7
    %v1324 = vsel %vm1133, %v1323, %v1322
    %v1325 = vrot.slane %v1109, 6
    %v1326 = vsel %vm1136, %v1325, %v1324
    %v1327 = vrot.slane %v1111, 5
    %v1328 = vsel %vm1139, %v1327, %v1326
    %v1330 = vrot.slane %v1097, 5
    %v1331 = vrot.slane %v1099, 4
    %v1332 = vsel %vm1121, %v1331, %v1330
    %v1333 = vrot.slane %v1101, 3
    %v1334 = vsel %vm1124, %v1333, %v1332
    %v1335 = vrot.slane %v1103, 2
    %v1336 = vsel %vm1127, %v1335, %v1334
    %v1337 = vrot.slane %v1105, 1
    %v1338 = vsel %vm1130, %v1337, %v1336
    %v1339 = vsel %vm1133, %v1107, %v1338
    %v1340 = vrot.slane %v1109, 7
    %v1341 = vsel %vm1136, %v1340, %v1339
    %v1342 = vrot.slane %v1111, 6
    %v1343 = vsel %vm1139, %v1342, %v1341
    %v1345 = vrot.slane %v1097, 6
    %v1346 = vrot.slane %v1099, 5
    %v1347 = vsel %vm1121, %v1346, %v1345
    %v1348 = vrot.slane %v1101, 4
    %v1349 = vsel %vm1124, %v1348, %v1347
    %v1350 = vrot.slane %v1103, 3
    %v1351 = vsel %vm1127, %v1350, %v1349
    %v1352 = vrot.slane %v1105, 2
    %v1353 = vsel %vm1130, %v1352, %v1351
    %v1354 = vrot.slane %v1107, 1
    %v1355 = vsel %vm1133, %v1354, %v1353
    %v1356 = vsel %vm1136, %v1109, %v1355
    %v1357 = vrot.slane %v1111, 7
    %v1358 = vsel %vm1139, %v1357, %v1356
    %v1360 = vrot.slane %v1097, 7
    %v1361 = vrot.slane %v1099, 6
    %v1362 = vsel %vm1121, %v1361, %v1360
    %v1363 = vrot.slane %v1101, 5
    %v1364 = vsel %vm1124, %v1363, %v1362
    %v1365 = vrot.slane %v1103, 4
    %v1366 = vsel %vm1127, %v1365, %v1364
    %v1367 = vrot.slane %v1105, 3
    %v1368 = vsel %vm1130, %v1367, %v1366
    %v1369 = vrot.slane %v1107, 2
    %v1370 = vsel %vm1133, %v1369, %v1368
    %v1371 = vrot.slane %v1109, 1
    %v1372 = vsel %vm1136, %v1371, %v1370
    %v1373 = vsel %vm1139, %v1111, %v1372
    %v1375 = vpack.c.bf16 %v1140, %v1140
    %v1376 = vpack.c.bf16 %v1155, %v1155
    %v1377 = vpack.c.bf16 %v1170, %v1170
    %v1378 = vpack.c.bf16 %v1185, %v1185
    %v1379 = vpack.c.bf16 %v1200, %v1200
    %v1380 = vpack.c.bf16 %v1215, %v1215
    %v1381 = vpack.c.bf16 %v1230, %v1230
    %v1382 = vpack.c.bf16 %v1245, %v1245
    %v1383 = vpack.c.bf16 %v1268, %v1268
    %v1384 = vpack.c.bf16 %v1283, %v1283
    %v1385 = vpack.c.bf16 %v1298, %v1298
    %v1386 = vpack.c.bf16 %v1313, %v1313
    %v1387 = vpack.c.bf16 %v1328, %v1328
    %v1388 = vpack.c.bf16 %v1343, %v1343
    %v1389 = vpack.c.bf16 %v1358, %v1358
    %v1390 = vpack.c.bf16 %v1373, %v1373
    %v1391 = vld [vmem:[#allocation8] sm:$0xff]
    %v1392 = vld [vmem:[#allocation8 + $0x8] sm:$0xff]
    %v1393 = vld [vmem:[#allocation8 + $0x10] sm:$0xff]
    %v1394 = vld [vmem:[#allocation8 + $0x18] sm:$0xff]
    %v1395 = vld [vmem:[#allocation8 + $0x20] sm:$0xff]
    %v1396 = vld [vmem:[#allocation8 + $0x28] sm:$0xff]
    %v1397 = vld [vmem:[#allocation8 + $0x30] sm:$0xff]
    %v1398 = vld [vmem:[#allocation8 + $0x38] sm:$0xff]
    %v1399 = vld [vmem:[#allocation8 + $0x40] sm:$0xff]
    %v1400 = vld [vmem:[#allocation8 + $0x48] sm:$0xff]
    %v1401 = vld [vmem:[#allocation8 + $0x50] sm:$0xff]
    %v1402 = vld [vmem:[#allocation8 + $0x58] sm:$0xff]
    %v1403 = vld [vmem:[#allocation8 + $0x60] sm:$0xff]
    %v1404 = vld [vmem:[#allocation8 + $0x68] sm:$0xff]
    %v1405 = vld [vmem:[#allocation8 + $0x70] sm:$0xff]
    %v1406 = vld [vmem:[#allocation8 + $0x78] sm:$0xff]
    %v1407 = vld [vmem:[#allocation8 + $0x80] sm:$0xff]
    %v1408 = vld [vmem:[#allocation8 + $0x88] sm:$0xff]
    %v1409 = vld [vmem:[#allocation8 + $0x90] sm:$0xff]
    %v1410 = vld [vmem:[#allocation8 + $0x98] sm:$0xff]
    %v1411 = vld [vmem:[#allocation8 + $0xa0] sm:$0xff]
    %v1412 = vld [vmem:[#allocation8 + $0xa8] sm:$0xff]
    %v1413 = vld [vmem:[#allocation8 + $0xb0] sm:$0xff]
    %v1414 = vld [vmem:[#allocation8 + $0xb8] sm:$0xff]
    %v1415 = vld [vmem:[#allocation8 + $0xc0] sm:$0xff]
    %v1416 = vld [vmem:[#allocation8 + $0xc8] sm:$0xff]
    %v1417 = vld [vmem:[#allocation8 + $0xd0] sm:$0xff]
    %v1418 = vld [vmem:[#allocation8 + $0xd8] sm:$0xff]
    %v1419 = vld [vmem:[#allocation8 + $0xe0] sm:$0xff]
    %v1420 = vld [vmem:[#allocation8 + $0xe8] sm:$0xff]
    %v1421 = vld [vmem:[#allocation8 + $0xf0] sm:$0xff]
    %v1422 = vld [vmem:[#allocation8 + $0xf8] sm:$0xff]
    %v1423 = vld [vmem:[#allocation8 + $0x100] sm:$0xff]
    %v1424 = vld [vmem:[#allocation8 + $0x108] sm:$0xff]
    %v1425 = vld [vmem:[#allocation8 + $0x110] sm:$0xff]
    %v1426 = vld [vmem:[#allocation8 + $0x118] sm:$0xff]
    %v1427 = vld [vmem:[#allocation8 + $0x120] sm:$0xff]
    %v1428 = vld [vmem:[#allocation8 + $0x128] sm:$0xff]
    %v1429 = vld [vmem:[#allocation8 + $0x130] sm:$0xff]
    %v1430 = vld [vmem:[#allocation8 + $0x138] sm:$0xff]
    %v1431 = vld [vmem:[#allocation8 + $0x140] sm:$0xff]
    %v1432 = vld [vmem:[#allocation8 + $0x148] sm:$0xff]
    %v1433 = vld [vmem:[#allocation8 + $0x150] sm:$0xff]
    %v1434 = vld [vmem:[#allocation8 + $0x158] sm:$0xff]
    %v1435 = vld [vmem:[#allocation8 + $0x160] sm:$0xff]
    %v1436 = vld [vmem:[#allocation8 + $0x168] sm:$0xff]
    %v1437 = vld [vmem:[#allocation8 + $0x170] sm:$0xff]
    %v1438 = vld [vmem:[#allocation8 + $0x178] sm:$0xff]
    %v1439 = vld [vmem:[#allocation8 + $0x180] sm:$0xff]
    %v1440 = vld [vmem:[#allocation8 + $0x188] sm:$0xff]
    %v1441 = vld [vmem:[#allocation8 + $0x190] sm:$0xff]
    %v1442 = vld [vmem:[#allocation8 + $0x198] sm:$0xff]
    %v1443 = vld [vmem:[#allocation8 + $0x1a0] sm:$0xff]
    %v1444 = vld [vmem:[#allocation8 + $0x1a8] sm:$0xff]
    %v1445 = vld [vmem:[#allocation8 + $0x1b0] sm:$0xff]
    %v1446 = vld [vmem:[#allocation8 + $0x1b8] sm:$0xff]
    %v1447 = vld [vmem:[#allocation8 + $0x1c0] sm:$0xff]
    %v1448 = vld [vmem:[#allocation8 + $0x1c8] sm:$0xff]
    %v1449 = vld [vmem:[#allocation8 + $0x1d0] sm:$0xff]
    %v1450 = vld [vmem:[#allocation8 + $0x1d8] sm:$0xff]
    %v1451 = vld [vmem:[#allocation8 + $0x1e0] sm:$0xff]
    %v1452 = vld [vmem:[#allocation8 + $0x1e8] sm:$0xff]
    %v1453 = vld [vmem:[#allocation8 + $0x1f0] sm:$0xff]
    %v1454 = vld [vmem:[#allocation8 + $0x1f8] sm:$0xff]
    %v1455 = vld [vmem:[#allocation8 + $0x200] sm:$0xff]
    %v1456 = vld [vmem:[#allocation8 + $0x208] sm:$0xff]
    %v1457 = vld [vmem:[#allocation8 + $0x210] sm:$0xff]
    %v1458 = vld [vmem:[#allocation8 + $0x218] sm:$0xff]
    %v1459 = vld [vmem:[#allocation8 + $0x220] sm:$0xff]
    %v1460 = vld [vmem:[#allocation8 + $0x228] sm:$0xff]
    %v1461 = vld [vmem:[#allocation8 + $0x230] sm:$0xff]
    %v1462 = vld [vmem:[#allocation8 + $0x238] sm:$0xff]
    %v1463 = vld [vmem:[#allocation8 + $0x240] sm:$0xff]
    %v1464 = vld [vmem:[#allocation8 + $0x248] sm:$0xff]
    %v1465 = vld [vmem:[#allocation8 + $0x250] sm:$0xff]
    %v1466 = vld [vmem:[#allocation8 + $0x258] sm:$0xff]
    %v1467 = vld [vmem:[#allocation8 + $0x260] sm:$0xff]
    %v1468 = vld [vmem:[#allocation8 + $0x268] sm:$0xff]
    %v1469 = vld [vmem:[#allocation8 + $0x270] sm:$0xff]
    %v1470 = vld [vmem:[#allocation8 + $0x278] sm:$0xff]
    %v1471 = vld [vmem:[#allocation8 + $0x280] sm:$0xff]
    %v1472 = vld [vmem:[#allocation8 + $0x288] sm:$0xff]
    %v1473 = vld [vmem:[#allocation8 + $0x290] sm:$0xff]
    %v1474 = vld [vmem:[#allocation8 + $0x298] sm:$0xff]
    %v1475 = vld [vmem:[#allocation8 + $0x2a0] sm:$0xff]
    %v1476 = vld [vmem:[#allocation8 + $0x2a8] sm:$0xff]
    %v1477 = vld [vmem:[#allocation8 + $0x2b0] sm:$0xff]
    %v1478 = vld [vmem:[#allocation8 + $0x2b8] sm:$0xff]
    %v1479 = vld [vmem:[#allocation8 + $0x2c0] sm:$0xff]
    %v1480 = vld [vmem:[#allocation8 + $0x2c8] sm:$0xff]
    %v1481 = vld [vmem:[#allocation8 + $0x2d0] sm:$0xff]
    %v1482 = vld [vmem:[#allocation8 + $0x2d8] sm:$0xff]
    %v1483 = vld [vmem:[#allocation8 + $0x2e0] sm:$0xff]
    %v1484 = vld [vmem:[#allocation8 + $0x2e8] sm:$0xff]
    %v1485 = vld [vmem:[#allocation8 + $0x2f0] sm:$0xff]
    %v1486 = vld [vmem:[#allocation8 + $0x2f8] sm:$0xff]
    %v1487 = vld [vmem:[#allocation8 + $0x300] sm:$0xff]
    %v1488 = vld [vmem:[#allocation8 + $0x308] sm:$0xff]
    %v1489 = vld [vmem:[#allocation8 + $0x310] sm:$0xff]
    %v1490 = vld [vmem:[#allocation8 + $0x318] sm:$0xff]
    %v1491 = vld [vmem:[#allocation8 + $0x320] sm:$0xff]
    %v1492 = vld [vmem:[#allocation8 + $0x328] sm:$0xff]
    %v1493 = vld [vmem:[#allocation8 + $0x330] sm:$0xff]
    %v1494 = vld [vmem:[#allocation8 + $0x338] sm:$0xff]
    %v1495 = vld [vmem:[#allocation8 + $0x340] sm:$0xff]
    %v1496 = vld [vmem:[#allocation8 + $0x348] sm:$0xff]
    %v1497 = vld [vmem:[#allocation8 + $0x350] sm:$0xff]
    %v1498 = vld [vmem:[#allocation8 + $0x358] sm:$0xff]
    %v1499 = vld [vmem:[#allocation8 + $0x360] sm:$0xff]
    %v1500 = vld [vmem:[#allocation8 + $0x368] sm:$0xff]
    %v1501 = vld [vmem:[#allocation8 + $0x370] sm:$0xff]
    %v1502 = vld [vmem:[#allocation8 + $0x378] sm:$0xff]
    %v1503 = vld [vmem:[#allocation8 + $0x380] sm:$0xff]
    %v1504 = vld [vmem:[#allocation8 + $0x388] sm:$0xff]
    %v1505 = vld [vmem:[#allocation8 + $0x390] sm:$0xff]
    %v1506 = vld [vmem:[#allocation8 + $0x398] sm:$0xff]
    %v1507 = vld [vmem:[#allocation8 + $0x3a0] sm:$0xff]
    %v1508 = vld [vmem:[#allocation8 + $0x3a8] sm:$0xff]
    %v1509 = vld [vmem:[#allocation8 + $0x3b0] sm:$0xff]
    %v1510 = vld [vmem:[#allocation8 + $0x3b8] sm:$0xff]
    %v1511 = vld [vmem:[#allocation8 + $0x3c0] sm:$0xff]
    %v1512 = vld [vmem:[#allocation8 + $0x3c8] sm:$0xff]
    %v1513 = vld [vmem:[#allocation8 + $0x3d0] sm:$0xff]
    %v1514 = vld [vmem:[#allocation8 + $0x3d8] sm:$0xff]
    %v1515 = vld [vmem:[#allocation8 + $0x3e0] sm:$0xff]
    %v1516 = vld [vmem:[#allocation8 + $0x3e8] sm:$0xff]
    %v1517 = vld [vmem:[#allocation8 + $0x3f0] sm:$0xff]
    %v1518 = vld [vmem:[#allocation8 + $0x3f8] sm:$0xff]
    %v1519 = vld [vmem:[#allocation8 + $0x400] sm:$0xff]
    %v1520 = vld [vmem:[#allocation8 + $0x408] sm:$0xff]
    %v1521 = vld [vmem:[#allocation8 + $0x410] sm:$0xff]
    %v1522 = vld [vmem:[#allocation8 + $0x418] sm:$0xff]
    %v1523 = vld [vmem:[#allocation8 + $0x420] sm:$0xff]
    %v1524 = vld [vmem:[#allocation8 + $0x428] sm:$0xff]
    %v1525 = vld [vmem:[#allocation8 + $0x430] sm:$0xff]
    %v1526 = vld [vmem:[#allocation8 + $0x438] sm:$0xff]
    %v1527 = vld [vmem:[#allocation8 + $0x440] sm:$0xff]
    %v1528 = vld [vmem:[#allocation8 + $0x448] sm:$0xff]
    %v1529 = vld [vmem:[#allocation8 + $0x450] sm:$0xff]
    %v1530 = vld [vmem:[#allocation8 + $0x458] sm:$0xff]
    %v1531 = vld [vmem:[#allocation8 + $0x460] sm:$0xff]
    %v1532 = vld [vmem:[#allocation8 + $0x468] sm:$0xff]
    %v1533 = vld [vmem:[#allocation8 + $0x470] sm:$0xff]
    %v1534 = vld [vmem:[#allocation8 + $0x478] sm:$0xff]
    %v1535 = vld [vmem:[#allocation8 + $0x480] sm:$0xff]
    %v1536 = vld [vmem:[#allocation8 + $0x488] sm:$0xff]
    %v1537 = vld [vmem:[#allocation8 + $0x490] sm:$0xff]
    %v1538 = vld [vmem:[#allocation8 + $0x498] sm:$0xff]
    %v1539 = vld [vmem:[#allocation8 + $0x4a0] sm:$0xff]
    %v1540 = vld [vmem:[#allocation8 + $0x4a8] sm:$0xff]
    %v1541 = vld [vmem:[#allocation8 + $0x4b0] sm:$0xff]
    %v1542 = vld [vmem:[#allocation8 + $0x4b8] sm:$0xff]
    %v1543 = vld [vmem:[#allocation8 + $0x4c0] sm:$0xff]
    %v1544 = vld [vmem:[#allocation8 + $0x4c8] sm:$0xff]
    %v1545 = vld [vmem:[#allocation8 + $0x4d0] sm:$0xff]
    %v1546 = vld [vmem:[#allocation8 + $0x4d8] sm:$0xff]
    %v1547 = vld [vmem:[#allocation8 + $0x4e0] sm:$0xff]
    %v1548 = vld [vmem:[#allocation8 + $0x4e8] sm:$0xff]
    %v1549 = vld [vmem:[#allocation8 + $0x4f0] sm:$0xff]
    %v1550 = vld [vmem:[#allocation8 + $0x4f8] sm:$0xff]
    %v1551 = vld [vmem:[#allocation8 + $0x500] sm:$0xff]
    %v1552 = vld [vmem:[#allocation8 + $0x508] sm:$0xff]
    %v1553 = vld [vmem:[#allocation8 + $0x510] sm:$0xff]
    %v1554 = vld [vmem:[#allocation8 + $0x518] sm:$0xff]
    %v1555 = vld [vmem:[#allocation8 + $0x520] sm:$0xff]
    %v1556 = vld [vmem:[#allocation8 + $0x528] sm:$0xff]
    %v1557 = vld [vmem:[#allocation8 + $0x530] sm:$0xff]
    %v1558 = vld [vmem:[#allocation8 + $0x538] sm:$0xff]
    %v1559 = vld [vmem:[#allocation8 + $0x540] sm:$0xff]
    %v1560 = vld [vmem:[#allocation8 + $0x548] sm:$0xff]
    %v1561 = vld [vmem:[#allocation8 + $0x550] sm:$0xff]
    %v1562 = vld [vmem:[#allocation8 + $0x558] sm:$0xff]
    %v1563 = vld [vmem:[#allocation8 + $0x560] sm:$0xff]
    %v1564 = vld [vmem:[#allocation8 + $0x568] sm:$0xff]
    %v1565 = vld [vmem:[#allocation8 + $0x570] sm:$0xff]
    %v1566 = vld [vmem:[#allocation8 + $0x578] sm:$0xff]
    %v1567 = vld [vmem:[#allocation8 + $0x580] sm:$0xff]
    %v1568 = vld [vmem:[#allocation8 + $0x588] sm:$0xff]
    %v1569 = vld [vmem:[#allocation8 + $0x590] sm:$0xff]
    %v1570 = vld [vmem:[#allocation8 + $0x598] sm:$0xff]
    %v1571 = vld [vmem:[#allocation8 + $0x5a0] sm:$0xff]
    %v1572 = vld [vmem:[#allocation8 + $0x5a8] sm:$0xff]
    %v1573 = vld [vmem:[#allocation8 + $0x5b0] sm:$0xff]
    %v1574 = vld [vmem:[#allocation8 + $0x5b8] sm:$0xff]
    %v1575 = vld [vmem:[#allocation8 + $0x5c0] sm:$0xff]
    %v1576 = vld [vmem:[#allocation8 + $0x5c8] sm:$0xff]
    %v1577 = vld [vmem:[#allocation8 + $0x5d0] sm:$0xff]
    %v1578 = vld [vmem:[#allocation8 + $0x5d8] sm:$0xff]
    %v1579 = vld [vmem:[#allocation8 + $0x5e0] sm:$0xff]
    %v1580 = vld [vmem:[#allocation8 + $0x5e8] sm:$0xff]
    %v1581 = vld [vmem:[#allocation8 + $0x5f0] sm:$0xff]
    %v1582 = vld [vmem:[#allocation8 + $0x5f8] sm:$0xff]
    %v1583 = vld [vmem:[#allocation8 + $0x600] sm:$0xff]
    %v1584 = vld [vmem:[#allocation8 + $0x608] sm:$0xff]
    %v1585 = vld [vmem:[#allocation8 + $0x610] sm:$0xff]
    %v1586 = vld [vmem:[#allocation8 + $0x618] sm:$0xff]
    %v1587 = vld [vmem:[#allocation8 + $0x620] sm:$0xff]
    %v1588 = vld [vmem:[#allocation8 + $0x628] sm:$0xff]
    %v1589 = vld [vmem:[#allocation8 + $0x630] sm:$0xff]
    %v1590 = vld [vmem:[#allocation8 + $0x638] sm:$0xff]
    %v1591 = vld [vmem:[#allocation8 + $0x640] sm:$0xff]
    %v1592 = vld [vmem:[#allocation8 + $0x648] sm:$0xff]
    %v1593 = vld [vmem:[#allocation8 + $0x650] sm:$0xff]
    %v1594 = vld [vmem:[#allocation8 + $0x658] sm:$0xff]
    %v1595 = vld [vmem:[#allocation8 + $0x660] sm:$0xff]
    %v1596 = vld [vmem:[#allocation8 + $0x668] sm:$0xff]
    %v1597 = vld [vmem:[#allocation8 + $0x670] sm:$0xff]
    %v1598 = vld [vmem:[#allocation8 + $0x678] sm:$0xff]
    %v1599 = vld [vmem:[#allocation8 + $0x680] sm:$0xff]
    %v1600 = vld [vmem:[#allocation8 + $0x688] sm:$0xff]
    %v1601 = vld [vmem:[#allocation8 + $0x690] sm:$0xff]
    %v1602 = vld [vmem:[#allocation8 + $0x698] sm:$0xff]
    %v1603 = vld [vmem:[#allocation8 + $0x6a0] sm:$0xff]
    %v1604 = vld [vmem:[#allocation8 + $0x6a8] sm:$0xff]
    %v1605 = vld [vmem:[#allocation8 + $0x6b0] sm:$0xff]
    %v1606 = vld [vmem:[#allocation8 + $0x6b8] sm:$0xff]
    %v1607 = vld [vmem:[#allocation8 + $0x6c0] sm:$0xff]
    %v1608 = vld [vmem:[#allocation8 + $0x6c8] sm:$0xff]
    %v1609 = vld [vmem:[#allocation8 + $0x6d0] sm:$0xff]
    %v1610 = vld [vmem:[#allocation8 + $0x6d8] sm:$0xff]
    %v1611 = vld [vmem:[#allocation8 + $0x6e0] sm:$0xff]
    %v1612 = vld [vmem:[#allocation8 + $0x6e8] sm:$0xff]
    %v1613 = vld [vmem:[#allocation8 + $0x6f0] sm:$0xff]
    %v1614 = vld [vmem:[#allocation8 + $0x6f8] sm:$0xff]
    %v1615 = vld [vmem:[#allocation8 + $0x700] sm:$0xff]
    %v1616 = vld [vmem:[#allocation8 + $0x708] sm:$0xff]
    %v1617 = vld [vmem:[#allocation8 + $0x710] sm:$0xff]
    %v1618 = vld [vmem:[#allocation8 + $0x718] sm:$0xff]
    %v1619 = vld [vmem:[#allocation8 + $0x720] sm:$0xff]
    %v1620 = vld [vmem:[#allocation8 + $0x728] sm:$0xff]
    %v1621 = vld [vmem:[#allocation8 + $0x730] sm:$0xff]
    %v1622 = vld [vmem:[#allocation8 + $0x738] sm:$0xff]
    %v1623 = vld [vmem:[#allocation8 + $0x740] sm:$0xff]
    %v1624 = vld [vmem:[#allocation8 + $0x748] sm:$0xff]
    %v1625 = vld [vmem:[#allocation8 + $0x750] sm:$0xff]
    %v1626 = vld [vmem:[#allocation8 + $0x758] sm:$0xff]
    %v1627 = vld [vmem:[#allocation8 + $0x760] sm:$0xff]
    %v1628 = vld [vmem:[#allocation8 + $0x768] sm:$0xff]
    %v1629 = vld [vmem:[#allocation8 + $0x770] sm:$0xff]
    %v1630 = vld [vmem:[#allocation8 + $0x778] sm:$0xff]
    %v1631 = vld [vmem:[#allocation8 + $0x780] sm:$0xff]
    %v1632 = vld [vmem:[#allocation8 + $0x788] sm:$0xff]
    %v1633 = vld [vmem:[#allocation8 + $0x790] sm:$0xff]
    %v1634 = vld [vmem:[#allocation8 + $0x798] sm:$0xff]
    %v1635 = vld [vmem:[#allocation8 + $0x7a0] sm:$0xff]
    %v1636 = vld [vmem:[#allocation8 + $0x7a8] sm:$0xff]
    %v1637 = vld [vmem:[#allocation8 + $0x7b0] sm:$0xff]
    %v1638 = vld [vmem:[#allocation8 + $0x7b8] sm:$0xff]
    %v1639 = vld [vmem:[#allocation8 + $0x7c0] sm:$0xff]
    %v1640 = vld [vmem:[#allocation8 + $0x7c8] sm:$0xff]
    %v1641 = vld [vmem:[#allocation8 + $0x7d0] sm:$0xff]
    %v1642 = vld [vmem:[#allocation8 + $0x7d8] sm:$0xff]
    %v1643 = vld [vmem:[#allocation8 + $0x7e0] sm:$0xff]
    %v1644 = vld [vmem:[#allocation8 + $0x7e8] sm:$0xff]
    %v1645 = vld [vmem:[#allocation8 + $0x7f0] sm:$0xff]
    %v1646 = vld [vmem:[#allocation8 + $0x7f8] sm:$0xff]
    %v1647 = vld [vmem:[#allocation8 + $0x800] sm:$0xff]
    %v1648 = vld [vmem:[#allocation8 + $0x808] sm:$0xff]
    %v1649 = vld [vmem:[#allocation8 + $0x810] sm:$0xff]
    %v1650 = vld [vmem:[#allocation8 + $0x818] sm:$0xff]
    %v1651 = vld [vmem:[#allocation8 + $0x820] sm:$0xff]
    %v1652 = vld [vmem:[#allocation8 + $0x828] sm:$0xff]
    %v1653 = vld [vmem:[#allocation8 + $0x830] sm:$0xff]
    %v1654 = vld [vmem:[#allocation8 + $0x838] sm:$0xff]
    %v1655 = vld [vmem:[#allocation8 + $0x840] sm:$0xff]
    %v1656 = vld [vmem:[#allocation8 + $0x848] sm:$0xff]
    %v1657 = vld [vmem:[#allocation8 + $0x850] sm:$0xff]
    %v1658 = vld [vmem:[#allocation8 + $0x858] sm:$0xff]
    %v1659 = vld [vmem:[#allocation8 + $0x860] sm:$0xff]
    %v1660 = vld [vmem:[#allocation8 + $0x868] sm:$0xff]
    %v1661 = vld [vmem:[#allocation8 + $0x870] sm:$0xff]
    %v1662 = vld [vmem:[#allocation8 + $0x878] sm:$0xff]
    %v1663 = vld [vmem:[#allocation8 + $0x880] sm:$0xff]
    %v1664 = vld [vmem:[#allocation8 + $0x888] sm:$0xff]
    %v1665 = vld [vmem:[#allocation8 + $0x890] sm:$0xff]
    %v1666 = vld [vmem:[#allocation8 + $0x898] sm:$0xff]
    %v1667 = vld [vmem:[#allocation8 + $0x8a0] sm:$0xff]
    %v1668 = vld [vmem:[#allocation8 + $0x8a8] sm:$0xff]
    %v1669 = vld [vmem:[#allocation8 + $0x8b0] sm:$0xff]
    %v1670 = vld [vmem:[#allocation8 + $0x8b8] sm:$0xff]
    %v1671 = vld [vmem:[#allocation8 + $0x8c0] sm:$0xff]
    %v1672 = vld [vmem:[#allocation8 + $0x8c8] sm:$0xff]
    %v1673 = vld [vmem:[#allocation8 + $0x8d0] sm:$0xff]
    %v1674 = vld [vmem:[#allocation8 + $0x8d8] sm:$0xff]
    %v1675 = vld [vmem:[#allocation8 + $0x8e0] sm:$0xff]
    %v1676 = vld [vmem:[#allocation8 + $0x8e8] sm:$0xff]
    %v1677 = vld [vmem:[#allocation8 + $0x8f0] sm:$0xff]
    %v1678 = vld [vmem:[#allocation8 + $0x8f8] sm:$0xff]
    %v1679 = vld [vmem:[#allocation8 + $0x900] sm:$0xff]
    %v1680 = vld [vmem:[#allocation8 + $0x908] sm:$0xff]
    %v1681 = vld [vmem:[#allocation8 + $0x910] sm:$0xff]
    %v1682 = vld [vmem:[#allocation8 + $0x918] sm:$0xff]
    %v1683 = vld [vmem:[#allocation8 + $0x920] sm:$0xff]
    %v1684 = vld [vmem:[#allocation8 + $0x928] sm:$0xff]
    %v1685 = vld [vmem:[#allocation8 + $0x930] sm:$0xff]
    %v1686 = vld [vmem:[#allocation8 + $0x938] sm:$0xff]
    %v1687 = vld [vmem:[#allocation8 + $0x940] sm:$0xff]
    %v1688 = vld [vmem:[#allocation8 + $0x948] sm:$0xff]
    %v1689 = vld [vmem:[#allocation8 + $0x950] sm:$0xff]
    %v1690 = vld [vmem:[#allocation8 + $0x958] sm:$0xff]
    %v1691 = vld [vmem:[#allocation8 + $0x960] sm:$0xff]
    %v1692 = vld [vmem:[#allocation8 + $0x968] sm:$0xff]
    %v1693 = vld [vmem:[#allocation8 + $0x970] sm:$0xff]
    %v1694 = vld [vmem:[#allocation8 + $0x978] sm:$0xff]
    %v1695 = vld [vmem:[#allocation8 + $0x980] sm:$0xff]
    %v1696 = vld [vmem:[#allocation8 + $0x988] sm:$0xff]
    %v1697 = vld [vmem:[#allocation8 + $0x990] sm:$0xff]
    %v1698 = vld [vmem:[#allocation8 + $0x998] sm:$0xff]
    %v1699 = vld [vmem:[#allocation8 + $0x9a0] sm:$0xff]
    %v1700 = vld [vmem:[#allocation8 + $0x9a8] sm:$0xff]
    %v1701 = vld [vmem:[#allocation8 + $0x9b0] sm:$0xff]
    %v1702 = vld [vmem:[#allocation8 + $0x9b8] sm:$0xff]
    %v1703 = vld [vmem:[#allocation8 + $0x9c0] sm:$0xff]
    %v1704 = vld [vmem:[#allocation8 + $0x9c8] sm:$0xff]
    %v1705 = vld [vmem:[#allocation8 + $0x9d0] sm:$0xff]
    %v1706 = vld [vmem:[#allocation8 + $0x9d8] sm:$0xff]
    %v1707 = vld [vmem:[#allocation8 + $0x9e0] sm:$0xff]
    %v1708 = vld [vmem:[#allocation8 + $0x9e8] sm:$0xff]
    %v1709 = vld [vmem:[#allocation8 + $0x9f0] sm:$0xff]
    %v1710 = vld [vmem:[#allocation8 + $0x9f8] sm:$0xff]
    %v1711 = vld [vmem:[#allocation8 + $0xa00] sm:$0xff]
    %v1712 = vld [vmem:[#allocation8 + $0xa08] sm:$0xff]
    %v1713 = vld [vmem:[#allocation8 + $0xa10] sm:$0xff]
    %v1714 = vld [vmem:[#allocation8 + $0xa18] sm:$0xff]
    %v1715 = vld [vmem:[#allocation8 + $0xa20] sm:$0xff]
    %v1716 = vld [vmem:[#allocation8 + $0xa28] sm:$0xff]
    %v1717 = vld [vmem:[#allocation8 + $0xa30] sm:$0xff]
    %v1718 = vld [vmem:[#allocation8 + $0xa38] sm:$0xff]
    %v1719 = vld [vmem:[#allocation8 + $0xa40] sm:$0xff]
    %v1720 = vld [vmem:[#allocation8 + $0xa48] sm:$0xff]
    %v1721 = vld [vmem:[#allocation8 + $0xa50] sm:$0xff]
    %v1722 = vld [vmem:[#allocation8 + $0xa58] sm:$0xff]
    %v1723 = vld [vmem:[#allocation8 + $0xa60] sm:$0xff]
    %v1724 = vld [vmem:[#allocation8 + $0xa68] sm:$0xff]
    %v1725 = vld [vmem:[#allocation8 + $0xa70] sm:$0xff]
    %v1726 = vld [vmem:[#allocation8 + $0xa78] sm:$0xff]
    %v1727 = vld [vmem:[#allocation8 + $0xa80] sm:$0xff]
    %v1728 = vld [vmem:[#allocation8 + $0xa88] sm:$0xff]
    %v1729 = vld [vmem:[#allocation8 + $0xa90] sm:$0xff]
    %v1730 = vld [vmem:[#allocation8 + $0xa98] sm:$0xff]
    %v1731 = vld [vmem:[#allocation8 + $0xaa0] sm:$0xff]
    %v1732 = vld [vmem:[#allocation8 + $0xaa8] sm:$0xff]
    %v1733 = vld [vmem:[#allocation8 + $0xab0] sm:$0xff]
    %v1734 = vld [vmem:[#allocation8 + $0xab8] sm:$0xff]
    %v1735 = vld [vmem:[#allocation8 + $0xac0] sm:$0xff]
    %v1736 = vld [vmem:[#allocation8 + $0xac8] sm:$0xff]
    %v1737 = vld [vmem:[#allocation8 + $0xad0] sm:$0xff]
    %v1738 = vld [vmem:[#allocation8 + $0xad8] sm:$0xff]
    %v1739 = vld [vmem:[#allocation8 + $0xae0] sm:$0xff]
    %v1740 = vld [vmem:[#allocation8 + $0xae8] sm:$0xff]
    %v1741 = vld [vmem:[#allocation8 + $0xaf0] sm:$0xff]
    %v1742 = vld [vmem:[#allocation8 + $0xaf8] sm:$0xff]
    %v1743 = vld [vmem:[#allocation8 + $0xb00] sm:$0xff]
    %v1744 = vld [vmem:[#allocation8 + $0xb08] sm:$0xff]
    %v1745 = vld [vmem:[#allocation8 + $0xb10] sm:$0xff]
    %v1746 = vld [vmem:[#allocation8 + $0xb18] sm:$0xff]
    %v1747 = vld [vmem:[#allocation8 + $0xb20] sm:$0xff]
    %v1748 = vld [vmem:[#allocation8 + $0xb28] sm:$0xff]
    %v1749 = vld [vmem:[#allocation8 + $0xb30] sm:$0xff]
    %v1750 = vld [vmem:[#allocation8 + $0xb38] sm:$0xff]
    %v1751 = vld [vmem:[#allocation8 + $0xb40] sm:$0xff]
    %v1752 = vld [vmem:[#allocation8 + $0xb48] sm:$0xff]
    %v1753 = vld [vmem:[#allocation8 + $0xb50] sm:$0xff]
    %v1754 = vld [vmem:[#allocation8 + $0xb58] sm:$0xff]
    %v1755 = vld [vmem:[#allocation8 + $0xb60] sm:$0xff]
    %v1756 = vld [vmem:[#allocation8 + $0xb68] sm:$0xff]
    %v1757 = vld [vmem:[#allocation8 + $0xb70] sm:$0xff]
    %v1758 = vld [vmem:[#allocation8 + $0xb78] sm:$0xff]
    %v1759 = vld [vmem:[#allocation8 + $0xb80] sm:$0xff]
    %v1760 = vld [vmem:[#allocation8 + $0xb88] sm:$0xff]
    %v1761 = vld [vmem:[#allocation8 + $0xb90] sm:$0xff]
    %v1762 = vld [vmem:[#allocation8 + $0xb98] sm:$0xff]
    %v1763 = vld [vmem:[#allocation8 + $0xba0] sm:$0xff]
    %v1764 = vld [vmem:[#allocation8 + $0xba8] sm:$0xff]
    %v1765 = vld [vmem:[#allocation8 + $0xbb0] sm:$0xff]
    %v1766 = vld [vmem:[#allocation8 + $0xbb8] sm:$0xff]
    %v1767 = vld [vmem:[#allocation8 + $0xbc0] sm:$0xff]
    %v1768 = vld [vmem:[#allocation8 + $0xbc8] sm:$0xff]
    %v1769 = vld [vmem:[#allocation8 + $0xbd0] sm:$0xff]
    %v1770 = vld [vmem:[#allocation8 + $0xbd8] sm:$0xff]
    %v1771 = vld [vmem:[#allocation8 + $0xbe0] sm:$0xff]
    %v1772 = vld [vmem:[#allocation8 + $0xbe8] sm:$0xff]
    %v1773 = vld [vmem:[#allocation8 + $0xbf0] sm:$0xff]
    %v1774 = vld [vmem:[#allocation8 + $0xbf8] sm:$0xff]
    %v1775 = vld [vmem:[#allocation8 + $0xc00] sm:$0xff]
    %v1776 = vld [vmem:[#allocation8 + $0xc08] sm:$0xff]
    %v1777 = vld [vmem:[#allocation8 + $0xc10] sm:$0xff]
    %v1778 = vld [vmem:[#allocation8 + $0xc18] sm:$0xff]
    %v1779 = vld [vmem:[#allocation8 + $0xc20] sm:$0xff]
    %v1780 = vld [vmem:[#allocation8 + $0xc28] sm:$0xff]
    %v1781 = vld [vmem:[#allocation8 + $0xc30] sm:$0xff]
    %v1782 = vld [vmem:[#allocation8 + $0xc38] sm:$0xff]
    %v1783 = vld [vmem:[#allocation8 + $0xc40] sm:$0xff]
    %v1784 = vld [vmem:[#allocation8 + $0xc48] sm:$0xff]
    %v1785 = vld [vmem:[#allocation8 + $0xc50] sm:$0xff]
    %v1786 = vld [vmem:[#allocation8 + $0xc58] sm:$0xff]
    %v1787 = vld [vmem:[#allocation8 + $0xc60] sm:$0xff]
    %v1788 = vld [vmem:[#allocation8 + $0xc68] sm:$0xff]
    %v1789 = vld [vmem:[#allocation8 + $0xc70] sm:$0xff]
    %v1790 = vld [vmem:[#allocation8 + $0xc78] sm:$0xff]
    %v1791 = vld [vmem:[#allocation8 + $0xc80] sm:$0xff]
    %v1792 = vld [vmem:[#allocation8 + $0xc88] sm:$0xff]
    %v1793 = vld [vmem:[#allocation8 + $0xc90] sm:$0xff]
    %v1794 = vld [vmem:[#allocation8 + $0xc98] sm:$0xff]
    %v1795 = vld [vmem:[#allocation8 + $0xca0] sm:$0xff]
    %v1796 = vld [vmem:[#allocation8 + $0xca8] sm:$0xff]
    %v1797 = vld [vmem:[#allocation8 + $0xcb0] sm:$0xff]
    %v1798 = vld [vmem:[#allocation8 + $0xcb8] sm:$0xff]
    %v1799 = vld [vmem:[#allocation8 + $0xcc0] sm:$0xff]
    %v1800 = vld [vmem:[#allocation8 + $0xcc8] sm:$0xff]
    %v1801 = vld [vmem:[#allocation8 + $0xcd0] sm:$0xff]
    %v1802 = vld [vmem:[#allocation8 + $0xcd8] sm:$0xff]
    %v1803 = vld [vmem:[#allocation8 + $0xce0] sm:$0xff]
    %v1804 = vld [vmem:[#allocation8 + $0xce8] sm:$0xff]
    %v1805 = vld [vmem:[#allocation8 + $0xcf0] sm:$0xff]
    %v1806 = vld [vmem:[#allocation8 + $0xcf8] sm:$0xff]
    %v1807 = vld [vmem:[#allocation8 + $0xd00] sm:$0xff]
    %v1808 = vld [vmem:[#allocation8 + $0xd08] sm:$0xff]
    %v1809 = vld [vmem:[#allocation8 + $0xd10] sm:$0xff]
    %v1810 = vld [vmem:[#allocation8 + $0xd18] sm:$0xff]
    %v1811 = vld [vmem:[#allocation8 + $0xd20] sm:$0xff]
    %v1812 = vld [vmem:[#allocation8 + $0xd28] sm:$0xff]
    %v1813 = vld [vmem:[#allocation8 + $0xd30] sm:$0xff]
    %v1814 = vld [vmem:[#allocation8 + $0xd38] sm:$0xff]
    %v1815 = vld [vmem:[#allocation8 + $0xd40] sm:$0xff]
    %v1816 = vld [vmem:[#allocation8 + $0xd48] sm:$0xff]
    %v1817 = vld [vmem:[#allocation8 + $0xd50] sm:$0xff]
    %v1818 = vld [vmem:[#allocation8 + $0xd58] sm:$0xff]
    %v1819 = vld [vmem:[#allocation8 + $0xd60] sm:$0xff]
    %v1820 = vld [vmem:[#allocation8 + $0xd68] sm:$0xff]
    %v1821 = vld [vmem:[#allocation8 + $0xd70] sm:$0xff]
    %v1822 = vld [vmem:[#allocation8 + $0xd78] sm:$0xff]
    %v1823 = vld [vmem:[#allocation8 + $0xd80] sm:$0xff]
    %v1824 = vld [vmem:[#allocation8 + $0xd88] sm:$0xff]
    %v1825 = vld [vmem:[#allocation8 + $0xd90] sm:$0xff]
    %v1826 = vld [vmem:[#allocation8 + $0xd98] sm:$0xff]
    %v1827 = vld [vmem:[#allocation8 + $0xda0] sm:$0xff]
    %v1828 = vld [vmem:[#allocation8 + $0xda8] sm:$0xff]
    %v1829 = vld [vmem:[#allocation8 + $0xdb0] sm:$0xff]
    %v1830 = vld [vmem:[#allocation8 + $0xdb8] sm:$0xff]
    %v1831 = vld [vmem:[#allocation8 + $0xdc0] sm:$0xff]
    %v1832 = vld [vmem:[#allocation8 + $0xdc8] sm:$0xff]
    %v1833 = vld [vmem:[#allocation8 + $0xdd0] sm:$0xff]
    %v1834 = vld [vmem:[#allocation8 + $0xdd8] sm:$0xff]
    %v1835 = vld [vmem:[#allocation8 + $0xde0] sm:$0xff]
    %v1836 = vld [vmem:[#allocation8 + $0xde8] sm:$0xff]
    %v1837 = vld [vmem:[#allocation8 + $0xdf0] sm:$0xff]
    %v1838 = vld [vmem:[#allocation8 + $0xdf8] sm:$0xff]
    %v1839 = vld [vmem:[#allocation8 + $0xe00] sm:$0xff]
    %v1840 = vld [vmem:[#allocation8 + $0xe08] sm:$0xff]
    %v1841 = vld [vmem:[#allocation8 + $0xe10] sm:$0xff]
    %v1842 = vld [vmem:[#allocation8 + $0xe18] sm:$0xff]
    %v1843 = vld [vmem:[#allocation8 + $0xe20] sm:$0xff]
    %v1844 = vld [vmem:[#allocation8 + $0xe28] sm:$0xff]
    %v1845 = vld [vmem:[#allocation8 + $0xe30] sm:$0xff]
    %v1846 = vld [vmem:[#allocation8 + $0xe38] sm:$0xff]
    %v1847 = vld [vmem:[#allocation8 + $0xe40] sm:$0xff]
    %v1848 = vld [vmem:[#allocation8 + $0xe48] sm:$0xff]
    %v1849 = vld [vmem:[#allocation8 + $0xe50] sm:$0xff]
    %v1850 = vld [vmem:[#allocation8 + $0xe58] sm:$0xff]
    %v1851 = vld [vmem:[#allocation8 + $0xe60] sm:$0xff]
    %v1852 = vld [vmem:[#allocation8 + $0xe68] sm:$0xff]
    %v1853 = vld [vmem:[#allocation8 + $0xe70] sm:$0xff]
    %v1854 = vld [vmem:[#allocation8 + $0xe78] sm:$0xff]
    %v1855 = vld [vmem:[#allocation8 + $0xe80] sm:$0xff]
    %v1856 = vld [vmem:[#allocation8 + $0xe88] sm:$0xff]
    %v1857 = vld [vmem:[#allocation8 + $0xe90] sm:$0xff]
    %v1858 = vld [vmem:[#allocation8 + $0xe98] sm:$0xff]
    %v1859 = vld [vmem:[#allocation8 + $0xea0] sm:$0xff]
    %v1860 = vld [vmem:[#allocation8 + $0xea8] sm:$0xff]
    %v1861 = vld [vmem:[#allocation8 + $0xeb0] sm:$0xff]
    %v1862 = vld [vmem:[#allocation8 + $0xeb8] sm:$0xff]
    %v1863 = vld [vmem:[#allocation8 + $0xec0] sm:$0xff]
    %v1864 = vld [vmem:[#allocation8 + $0xec8] sm:$0xff]
    %v1865 = vld [vmem:[#allocation8 + $0xed0] sm:$0xff]
    %v1866 = vld [vmem:[#allocation8 + $0xed8] sm:$0xff]
    %v1867 = vld [vmem:[#allocation8 + $0xee0] sm:$0xff]
    %v1868 = vld [vmem:[#allocation8 + $0xee8] sm:$0xff]
    %v1869 = vld [vmem:[#allocation8 + $0xef0] sm:$0xff]
    %v1870 = vld [vmem:[#allocation8 + $0xef8] sm:$0xff]
    %v1871 = vld [vmem:[#allocation8 + $0xf00] sm:$0xff]
    %v1872 = vld [vmem:[#allocation8 + $0xf08] sm:$0xff]
    %v1873 = vld [vmem:[#allocation8 + $0xf10] sm:$0xff]
    %v1874 = vld [vmem:[#allocation8 + $0xf18] sm:$0xff]
    %v1875 = vld [vmem:[#allocation8 + $0xf20] sm:$0xff]
    %v1876 = vld [vmem:[#allocation8 + $0xf28] sm:$0xff]
    %v1877 = vld [vmem:[#allocation8 + $0xf30] sm:$0xff]
    %v1878 = vld [vmem:[#allocation8 + $0xf38] sm:$0xff]
    %v1879 = vld [vmem:[#allocation8 + $0xf40] sm:$0xff]
    %v1880 = vld [vmem:[#allocation8 + $0xf48] sm:$0xff]
    %v1881 = vld [vmem:[#allocation8 + $0xf50] sm:$0xff]
    %v1882 = vld [vmem:[#allocation8 + $0xf58] sm:$0xff]
    %v1883 = vld [vmem:[#allocation8 + $0xf60] sm:$0xff]
    %v1884 = vld [vmem:[#allocation8 + $0xf68] sm:$0xff]
    %v1885 = vld [vmem:[#allocation8 + $0xf70] sm:$0xff]
    %v1886 = vld [vmem:[#allocation8 + $0xf78] sm:$0xff]
    %v1887 = vld [vmem:[#allocation8 + $0xf80] sm:$0xff]
    %v1888 = vld [vmem:[#allocation8 + $0xf88] sm:$0xff]
    %v1889 = vld [vmem:[#allocation8 + $0xf90] sm:$0xff]
    %v1890 = vld [vmem:[#allocation8 + $0xf98] sm:$0xff]
    %v1891 = vld [vmem:[#allocation8 + $0xfa0] sm:$0xff]
    %v1892 = vld [vmem:[#allocation8 + $0xfa8] sm:$0xff]
    %v1893 = vld [vmem:[#allocation8 + $0xfb0] sm:$0xff]
    %v1894 = vld [vmem:[#allocation8 + $0xfb8] sm:$0xff]
    %v1895 = vld [vmem:[#allocation8 + $0xfc0] sm:$0xff]
    %v1896 = vld [vmem:[#allocation8 + $0xfc8] sm:$0xff]
    %v1897 = vld [vmem:[#allocation8 + $0xfd0] sm:$0xff]
    %v1898 = vld [vmem:[#allocation8 + $0xfd8] sm:$0xff]
    %v1899 = vld [vmem:[#allocation8 + $0xfe0] sm:$0xff]
    %v1900 = vld [vmem:[#allocation8 + $0xfe8] sm:$0xff]
    %v1901 = vld [vmem:[#allocation8 + $0xff0] sm:$0xff]
    %v1902 = vld [vmem:[#allocation8 + $0xff8] sm:$0xff]
    %v1903 = vld [vmem:[#allocation8 + $0x1000] sm:$0xff]
    %v1904 = vld [vmem:[#allocation8 + $0x1008] sm:$0xff]
    %v1905 = vld [vmem:[#allocation8 + $0x1010] sm:$0xff]
    %v1906 = vld [vmem:[#allocation8 + $0x1018] sm:$0xff]
    %v1907 = vld [vmem:[#allocation8 + $0x1020] sm:$0xff]
    %v1908 = vld [vmem:[#allocation8 + $0x1028] sm:$0xff]
    %v1909 = vld [vmem:[#allocation8 + $0x1030] sm:$0xff]
    %v1910 = vld [vmem:[#allocation8 + $0x1038] sm:$0xff]
    %v1911 = vld [vmem:[#allocation8 + $0x1040] sm:$0xff]
    %v1912 = vld [vmem:[#allocation8 + $0x1048] sm:$0xff]
    %v1913 = vld [vmem:[#allocation8 + $0x1050] sm:$0xff]
    %v1914 = vld [vmem:[#allocation8 + $0x1058] sm:$0xff]
    %v1915 = vld [vmem:[#allocation8 + $0x1060] sm:$0xff]
    %v1916 = vld [vmem:[#allocation8 + $0x1068] sm:$0xff]
    %v1917 = vld [vmem:[#allocation8 + $0x1070] sm:$0xff]
    %v1918 = vld [vmem:[#allocation8 + $0x1078] sm:$0xff]
    %v1919 = vld [vmem:[#allocation8 + $0x1080] sm:$0xff]
    %v1920 = vld [vmem:[#allocation8 + $0x1088] sm:$0xff]
    %v1921 = vld [vmem:[#allocation8 + $0x1090] sm:$0xff]
    %v1922 = vld [vmem:[#allocation8 + $0x1098] sm:$0xff]
    %v1923 = vld [vmem:[#allocation8 + $0x10a0] sm:$0xff]
    %v1924 = vld [vmem:[#allocation8 + $0x10a8] sm:$0xff]
    %v1925 = vld [vmem:[#allocation8 + $0x10b0] sm:$0xff]
    %v1926 = vld [vmem:[#allocation8 + $0x10b8] sm:$0xff]
    %v1927 = vld [vmem:[#allocation8 + $0x10c0] sm:$0xff]
    %v1928 = vld [vmem:[#allocation8 + $0x10c8] sm:$0xff]
    %v1929 = vld [vmem:[#allocation8 + $0x10d0] sm:$0xff]
    %v1930 = vld [vmem:[#allocation8 + $0x10d8] sm:$0xff]
    %v1931 = vld [vmem:[#allocation8 + $0x10e0] sm:$0xff]
    %v1932 = vld [vmem:[#allocation8 + $0x10e8] sm:$0xff]
    %v1933 = vld [vmem:[#allocation8 + $0x10f0] sm:$0xff]
    %v1934 = vld [vmem:[#allocation8 + $0x10f8] sm:$0xff]
    %v1935 = vld [vmem:[#allocation8 + $0x1100] sm:$0xff]
    %v1936 = vld [vmem:[#allocation8 + $0x1108] sm:$0xff]
    %v1937 = vld [vmem:[#allocation8 + $0x1110] sm:$0xff]
    %v1938 = vld [vmem:[#allocation8 + $0x1118] sm:$0xff]
    %v1939 = vld [vmem:[#allocation8 + $0x1120] sm:$0xff]
    %v1940 = vld [vmem:[#allocation8 + $0x1128] sm:$0xff]
    %v1941 = vld [vmem:[#allocation8 + $0x1130] sm:$0xff]
    %v1942 = vld [vmem:[#allocation8 + $0x1138] sm:$0xff]
    %v1943 = vld [vmem:[#allocation8 + $0x1140] sm:$0xff]
    %v1944 = vld [vmem:[#allocation8 + $0x1148] sm:$0xff]
    %v1945 = vld [vmem:[#allocation8 + $0x1150] sm:$0xff]
    %v1946 = vld [vmem:[#allocation8 + $0x1158] sm:$0xff]
    %v1947 = vld [vmem:[#allocation8 + $0x1160] sm:$0xff]
    %v1948 = vld [vmem:[#allocation8 + $0x1168] sm:$0xff]
    %v1949 = vld [vmem:[#allocation8 + $0x1170] sm:$0xff]
    %v1950 = vld [vmem:[#allocation8 + $0x1178] sm:$0xff]
    %v1951 = vld [vmem:[#allocation8 + $0x1180] sm:$0xff]
    %v1952 = vld [vmem:[#allocation8 + $0x1188] sm:$0xff]
    %v1953 = vld [vmem:[#allocation8 + $0x1190] sm:$0xff]
    %v1954 = vld [vmem:[#allocation8 + $0x1198] sm:$0xff]
    %v1955 = vld [vmem:[#allocation8 + $0x11a0] sm:$0xff]
    %v1956 = vld [vmem:[#allocation8 + $0x11a8] sm:$0xff]
    %v1957 = vld [vmem:[#allocation8 + $0x11b0] sm:$0xff]
    %v1958 = vld [vmem:[#allocation8 + $0x11b8] sm:$0xff]
    %v1959 = vld [vmem:[#allocation8 + $0x11c0] sm:$0xff]
    %v1960 = vld [vmem:[#allocation8 + $0x11c8] sm:$0xff]
    %v1961 = vld [vmem:[#allocation8 + $0x11d0] sm:$0xff]
    %v1962 = vld [vmem:[#allocation8 + $0x11d8] sm:$0xff]
    %v1963 = vld [vmem:[#allocation8 + $0x11e0] sm:$0xff]
    %v1964 = vld [vmem:[#allocation8 + $0x11e8] sm:$0xff]
    %v1965 = vld [vmem:[#allocation8 + $0x11f0] sm:$0xff]
    %v1966 = vld [vmem:[#allocation8 + $0x11f8] sm:$0xff]
    %v1967 = vld [vmem:[#allocation8 + $0x1200] sm:$0xff]
    %v1968 = vld [vmem:[#allocation8 + $0x1208] sm:$0xff]
    %v1969 = vld [vmem:[#allocation8 + $0x1210] sm:$0xff]
    %v1970 = vld [vmem:[#allocation8 + $0x1218] sm:$0xff]
    %v1971 = vld [vmem:[#allocation8 + $0x1220] sm:$0xff]
    %v1972 = vld [vmem:[#allocation8 + $0x1228] sm:$0xff]
    %v1973 = vld [vmem:[#allocation8 + $0x1230] sm:$0xff]
    %v1974 = vld [vmem:[#allocation8 + $0x1238] sm:$0xff]
    %v1975 = vld [vmem:[#allocation8 + $0x1240] sm:$0xff]
    %v1976 = vld [vmem:[#allocation8 + $0x1248] sm:$0xff]
    %v1977 = vld [vmem:[#allocation8 + $0x1250] sm:$0xff]
    %v1978 = vld [vmem:[#allocation8 + $0x1258] sm:$0xff]
    %v1979 = vld [vmem:[#allocation8 + $0x1260] sm:$0xff]
    %v1980 = vld [vmem:[#allocation8 + $0x1268] sm:$0xff]
    %v1981 = vld [vmem:[#allocation8 + $0x1270] sm:$0xff]
    %v1982 = vld [vmem:[#allocation8 + $0x1278] sm:$0xff]
    %v1983 = vld [vmem:[#allocation8 + $0x1280] sm:$0xff]
    %v1984 = vld [vmem:[#allocation8 + $0x1288] sm:$0xff]
    %v1985 = vld [vmem:[#allocation8 + $0x1290] sm:$0xff]
    %v1986 = vld [vmem:[#allocation8 + $0x1298] sm:$0xff]
    %v1987 = vld [vmem:[#allocation8 + $0x12a0] sm:$0xff]
    %v1988 = vld [vmem:[#allocation8 + $0x12a8] sm:$0xff]
    %v1989 = vld [vmem:[#allocation8 + $0x12b0] sm:$0xff]
    %v1990 = vld [vmem:[#allocation8 + $0x12b8] sm:$0xff]
    %v1991 = vld [vmem:[#allocation8 + $0x12c0] sm:$0xff]
    %v1992 = vld [vmem:[#allocation8 + $0x12c8] sm:$0xff]
    %v1993 = vld [vmem:[#allocation8 + $0x12d0] sm:$0xff]
    %v1994 = vld [vmem:[#allocation8 + $0x12d8] sm:$0xff]
    %v1995 = vld [vmem:[#allocation8 + $0x12e0] sm:$0xff]
    %v1996 = vld [vmem:[#allocation8 + $0x12e8] sm:$0xff]
    %v1997 = vld [vmem:[#allocation8 + $0x12f0] sm:$0xff]
    %v1998 = vld [vmem:[#allocation8 + $0x12f8] sm:$0xff]
    %v1999 = vld [vmem:[#allocation8 + $0x1300] sm:$0xff]
    %v2000 = vld [vmem:[#allocation8 + $0x1308] sm:$0xff]
    %v2001 = vld [vmem:[#allocation8 + $0x1310] sm:$0xff]
    %v2002 = vld [vmem:[#allocation8 + $0x1318] sm:$0xff]
    %v2003 = vld [vmem:[#allocation8 + $0x1320] sm:$0xff]
    %v2004 = vld [vmem:[#allocation8 + $0x1328] sm:$0xff]
    %v2005 = vld [vmem:[#allocation8 + $0x1330] sm:$0xff]
    %v2006 = vld [vmem:[#allocation8 + $0x1338] sm:$0xff]
    %v2007 = vld [vmem:[#allocation8 + $0x1340] sm:$0xff]
    %v2008 = vld [vmem:[#allocation8 + $0x1348] sm:$0xff]
    %v2009 = vld [vmem:[#allocation8 + $0x1350] sm:$0xff]
    %v2010 = vld [vmem:[#allocation8 + $0x1358] sm:$0xff]
    %v2011 = vld [vmem:[#allocation8 + $0x1360] sm:$0xff]
    %v2012 = vld [vmem:[#allocation8 + $0x1368] sm:$0xff]
    %v2013 = vld [vmem:[#allocation8 + $0x1370] sm:$0xff]
    %v2014 = vld [vmem:[#allocation8 + $0x1378] sm:$0xff]
    %v2015 = vld [vmem:[#allocation8 + $0x1380] sm:$0xff]
    %v2016 = vld [vmem:[#allocation8 + $0x1388] sm:$0xff]
    %v2017 = vld [vmem:[#allocation8 + $0x1390] sm:$0xff]
    %v2018 = vld [vmem:[#allocation8 + $0x1398] sm:$0xff]
    %v2019 = vld [vmem:[#allocation8 + $0x13a0] sm:$0xff]
    %v2020 = vld [vmem:[#allocation8 + $0x13a8] sm:$0xff]
    %v2021 = vld [vmem:[#allocation8 + $0x13b0] sm:$0xff]
    %v2022 = vld [vmem:[#allocation8 + $0x13b8] sm:$0xff]
    %v2023 = vld [vmem:[#allocation8 + $0x13c0] sm:$0xff]
    %v2024 = vld [vmem:[#allocation8 + $0x13c8] sm:$0xff]
    %v2025 = vld [vmem:[#allocation8 + $0x13d0] sm:$0xff]
    %v2026 = vld [vmem:[#allocation8 + $0x13d8] sm:$0xff]
    %v2027 = vld [vmem:[#allocation8 + $0x13e0] sm:$0xff]
    %v2028 = vld [vmem:[#allocation8 + $0x13e8] sm:$0xff]
    %v2029 = vld [vmem:[#allocation8 + $0x13f0] sm:$0xff]
    %v2030 = vld [vmem:[#allocation8 + $0x13f8] sm:$0xff]
    %v2031 = vld [vmem:[#allocation8 + $0x1400] sm:$0xff]
    %v2032 = vld [vmem:[#allocation8 + $0x1408] sm:$0xff]
    %v2033 = vld [vmem:[#allocation8 + $0x1410] sm:$0xff]
    %v2034 = vld [vmem:[#allocation8 + $0x1418] sm:$0xff]
    %v2035 = vld [vmem:[#allocation8 + $0x1420] sm:$0xff]
    %v2036 = vld [vmem:[#allocation8 + $0x1428] sm:$0xff]
    %v2037 = vld [vmem:[#allocation8 + $0x1430] sm:$0xff]
    %v2038 = vld [vmem:[#allocation8 + $0x1438] sm:$0xff]
    %v2039 = vld [vmem:[#allocation8 + $0x1440] sm:$0xff]
    %v2040 = vld [vmem:[#allocation8 + $0x1448] sm:$0xff]
    %v2041 = vld [vmem:[#allocation8 + $0x1450] sm:$0xff]
    %v2042 = vld [vmem:[#allocation8 + $0x1458] sm:$0xff]
    %v2043 = vld [vmem:[#allocation8 + $0x1460] sm:$0xff]
    %v2044 = vld [vmem:[#allocation8 + $0x1468] sm:$0xff]
    %v2045 = vld [vmem:[#allocation8 + $0x1470] sm:$0xff]
    %v2046 = vld [vmem:[#allocation8 + $0x1478] sm:$0xff]
    %v2047 = vld [vmem:[#allocation8 + $0x1480] sm:$0xff]
    %v2048 = vld [vmem:[#allocation8 + $0x1488] sm:$0xff]
    %v2049 = vld [vmem:[#allocation8 + $0x1490] sm:$0xff]
    %v2050 = vld [vmem:[#allocation8 + $0x1498] sm:$0xff]
    %v2051 = vld [vmem:[#allocation8 + $0x14a0] sm:$0xff]
    %v2052 = vld [vmem:[#allocation8 + $0x14a8] sm:$0xff]
    %v2053 = vld [vmem:[#allocation8 + $0x14b0] sm:$0xff]
    %v2054 = vld [vmem:[#allocation8 + $0x14b8] sm:$0xff]
    %v2055 = vld [vmem:[#allocation8 + $0x14c0] sm:$0xff]
    %v2056 = vld [vmem:[#allocation8 + $0x14c8] sm:$0xff]
    %v2057 = vld [vmem:[#allocation8 + $0x14d0] sm:$0xff]
    %v2058 = vld [vmem:[#allocation8 + $0x14d8] sm:$0xff]
    %v2059 = vld [vmem:[#allocation8 + $0x14e0] sm:$0xff]
    %v2060 = vld [vmem:[#allocation8 + $0x14e8] sm:$0xff]
    %v2061 = vld [vmem:[#allocation8 + $0x14f0] sm:$0xff]
    %v2062 = vld [vmem:[#allocation8 + $0x14f8] sm:$0xff]
    %v2063 = vld [vmem:[#allocation8 + $0x1500] sm:$0xff]
    %v2064 = vld [vmem:[#allocation8 + $0x1508] sm:$0xff]
    %v2065 = vld [vmem:[#allocation8 + $0x1510] sm:$0xff]
    %v2066 = vld [vmem:[#allocation8 + $0x1518] sm:$0xff]
    %v2067 = vld [vmem:[#allocation8 + $0x1520] sm:$0xff]
    %v2068 = vld [vmem:[#allocation8 + $0x1528] sm:$0xff]
    %v2069 = vld [vmem:[#allocation8 + $0x1530] sm:$0xff]
    %v2070 = vld [vmem:[#allocation8 + $0x1538] sm:$0xff]
    %v2071 = vld [vmem:[#allocation8 + $0x1540] sm:$0xff]
    %v2072 = vld [vmem:[#allocation8 + $0x1548] sm:$0xff]
    %v2073 = vld [vmem:[#allocation8 + $0x1550] sm:$0xff]
    %v2074 = vld [vmem:[#allocation8 + $0x1558] sm:$0xff]
    %v2075 = vld [vmem:[#allocation8 + $0x1560] sm:$0xff]
    %v2076 = vld [vmem:[#allocation8 + $0x1568] sm:$0xff]
    %v2077 = vld [vmem:[#allocation8 + $0x1570] sm:$0xff]
    %v2078 = vld [vmem:[#allocation8 + $0x1578] sm:$0xff]
    %v2079 = vld [vmem:[#allocation8 + $0x1580] sm:$0xff]
    %v2080 = vld [vmem:[#allocation8 + $0x1588] sm:$0xff]
    %v2081 = vld [vmem:[#allocation8 + $0x1590] sm:$0xff]
    %v2082 = vld [vmem:[#allocation8 + $0x1598] sm:$0xff]
    %v2083 = vld [vmem:[#allocation8 + $0x15a0] sm:$0xff]
    %v2084 = vld [vmem:[#allocation8 + $0x15a8] sm:$0xff]
    %v2085 = vld [vmem:[#allocation8 + $0x15b0] sm:$0xff]
    %v2086 = vld [vmem:[#allocation8 + $0x15b8] sm:$0xff]
    %v2087 = vld [vmem:[#allocation8 + $0x15c0] sm:$0xff]
    %v2088 = vld [vmem:[#allocation8 + $0x15c8] sm:$0xff]
    %v2089 = vld [vmem:[#allocation8 + $0x15d0] sm:$0xff]
    %v2090 = vld [vmem:[#allocation8 + $0x15d8] sm:$0xff]
    %v2091 = vld [vmem:[#allocation8 + $0x15e0] sm:$0xff]
    %v2092 = vld [vmem:[#allocation8 + $0x15e8] sm:$0xff]
    %v2093 = vld [vmem:[#allocation8 + $0x15f0] sm:$0xff]
    %v2094 = vld [vmem:[#allocation8 + $0x15f8] sm:$0xff]
    %v2095 = vld [vmem:[#allocation8 + $0x1600] sm:$0xff]
    %v2096 = vld [vmem:[#allocation8 + $0x1608] sm:$0xff]
    %v2097 = vld [vmem:[#allocation8 + $0x1610] sm:$0xff]
    %v2098 = vld [vmem:[#allocation8 + $0x1618] sm:$0xff]
    %v2099 = vld [vmem:[#allocation8 + $0x1620] sm:$0xff]
    %v2100 = vld [vmem:[#allocation8 + $0x1628] sm:$0xff]
    %v2101 = vld [vmem:[#allocation8 + $0x1630] sm:$0xff]
    %v2102 = vld [vmem:[#allocation8 + $0x1638] sm:$0xff]
    %v2103 = vld [vmem:[#allocation8 + $0x1640] sm:$0xff]
    %v2104 = vld [vmem:[#allocation8 + $0x1648] sm:$0xff]
    %v2105 = vld [vmem:[#allocation8 + $0x1650] sm:$0xff]
    %v2106 = vld [vmem:[#allocation8 + $0x1658] sm:$0xff]
    %v2107 = vld [vmem:[#allocation8 + $0x1660] sm:$0xff]
    %v2108 = vld [vmem:[#allocation8 + $0x1668] sm:$0xff]
    %v2109 = vld [vmem:[#allocation8 + $0x1670] sm:$0xff]
    %v2110 = vld [vmem:[#allocation8 + $0x1678] sm:$0xff]
    %v2111 = vld [vmem:[#allocation8 + $0x1680] sm:$0xff]
    %v2112 = vld [vmem:[#allocation8 + $0x1688] sm:$0xff]
    %v2113 = vld [vmem:[#allocation8 + $0x1690] sm:$0xff]
    %v2114 = vld [vmem:[#allocation8 + $0x1698] sm:$0xff]
    %v2115 = vld [vmem:[#allocation8 + $0x16a0] sm:$0xff]
    %v2116 = vld [vmem:[#allocation8 + $0x16a8] sm:$0xff]
    %v2117 = vld [vmem:[#allocation8 + $0x16b0] sm:$0xff]
    %v2118 = vld [vmem:[#allocation8 + $0x16b8] sm:$0xff]
    %v2119 = vld [vmem:[#allocation8 + $0x16c0] sm:$0xff]
    %v2120 = vld [vmem:[#allocation8 + $0x16c8] sm:$0xff]
    %v2121 = vld [vmem:[#allocation8 + $0x16d0] sm:$0xff]
    %v2122 = vld [vmem:[#allocation8 + $0x16d8] sm:$0xff]
    %v2123 = vld [vmem:[#allocation8 + $0x16e0] sm:$0xff]
    %v2124 = vld [vmem:[#allocation8 + $0x16e8] sm:$0xff]
    %v2125 = vld [vmem:[#allocation8 + $0x16f0] sm:$0xff]
    %v2126 = vld [vmem:[#allocation8 + $0x16f8] sm:$0xff]
    %v2127 = vld [vmem:[#allocation8 + $0x1700] sm:$0xff]
    %v2128 = vld [vmem:[#allocation8 + $0x1708] sm:$0xff]
    %v2129 = vld [vmem:[#allocation8 + $0x1710] sm:$0xff]
    %v2130 = vld [vmem:[#allocation8 + $0x1718] sm:$0xff]
    %v2131 = vld [vmem:[#allocation8 + $0x1720] sm:$0xff]
    %v2132 = vld [vmem:[#allocation8 + $0x1728] sm:$0xff]
    %v2133 = vld [vmem:[#allocation8 + $0x1730] sm:$0xff]
    %v2134 = vld [vmem:[#allocation8 + $0x1738] sm:$0xff]
    %v2135 = vld [vmem:[#allocation8 + $0x1740] sm:$0xff]
    %v2136 = vld [vmem:[#allocation8 + $0x1748] sm:$0xff]
    %v2137 = vld [vmem:[#allocation8 + $0x1750] sm:$0xff]
    %v2138 = vld [vmem:[#allocation8 + $0x1758] sm:$0xff]
    %v2139 = vld [vmem:[#allocation8 + $0x1760] sm:$0xff]
    %v2140 = vld [vmem:[#allocation8 + $0x1768] sm:$0xff]
    %v2141 = vld [vmem:[#allocation8 + $0x1770] sm:$0xff]
    %v2142 = vld [vmem:[#allocation8 + $0x1778] sm:$0xff]
    %v2143 = vld [vmem:[#allocation8 + $0x1780] sm:$0xff]
    %v2144 = vld [vmem:[#allocation8 + $0x1788] sm:$0xff]
    %v2145 = vld [vmem:[#allocation8 + $0x1790] sm:$0xff]
    %v2146 = vld [vmem:[#allocation8 + $0x1798] sm:$0xff]
    %v2147 = vld [vmem:[#allocation8 + $0x17a0] sm:$0xff]
    %v2148 = vld [vmem:[#allocation8 + $0x17a8] sm:$0xff]
    %v2149 = vld [vmem:[#allocation8 + $0x17b0] sm:$0xff]
    %v2150 = vld [vmem:[#allocation8 + $0x17b8] sm:$0xff]
    %v2151 = vld [vmem:[#allocation8 + $0x17c0] sm:$0xff]
    %v2152 = vld [vmem:[#allocation8 + $0x17c8] sm:$0xff]
    %v2153 = vld [vmem:[#allocation8 + $0x17d0] sm:$0xff]
    %v2154 = vld [vmem:[#allocation8 + $0x17d8] sm:$0xff]
    %v2155 = vld [vmem:[#allocation8 + $0x17e0] sm:$0xff]
    %v2156 = vld [vmem:[#allocation8 + $0x17e8] sm:$0xff]
    %v2157 = vld [vmem:[#allocation8 + $0x17f0] sm:$0xff]
    %v2158 = vld [vmem:[#allocation8 + $0x17f8] sm:$0xff]
    %v2159 = vld [vmem:[#allocation8 + $0x1800] sm:$0xff]
    %v2160 = vld [vmem:[#allocation8 + $0x1808] sm:$0xff]
    %v2161 = vld [vmem:[#allocation8 + $0x1810] sm:$0xff]
    %v2162 = vld [vmem:[#allocation8 + $0x1818] sm:$0xff]
    %v2163 = vld [vmem:[#allocation8 + $0x1820] sm:$0xff]
    %v2164 = vld [vmem:[#allocation8 + $0x1828] sm:$0xff]
    %v2165 = vld [vmem:[#allocation8 + $0x1830] sm:$0xff]
    %v2166 = vld [vmem:[#allocation8 + $0x1838] sm:$0xff]
    %v2167 = vld [vmem:[#allocation8 + $0x1840] sm:$0xff]
    %v2168 = vld [vmem:[#allocation8 + $0x1848] sm:$0xff]
    %v2169 = vld [vmem:[#allocation8 + $0x1850] sm:$0xff]
    %v2170 = vld [vmem:[#allocation8 + $0x1858] sm:$0xff]
    %v2171 = vld [vmem:[#allocation8 + $0x1860] sm:$0xff]
    %v2172 = vld [vmem:[#allocation8 + $0x1868] sm:$0xff]
    %v2173 = vld [vmem:[#allocation8 + $0x1870] sm:$0xff]
    %v2174 = vld [vmem:[#allocation8 + $0x1878] sm:$0xff]
    %v2175 = vld [vmem:[#allocation8 + $0x1880] sm:$0xff]
    %v2176 = vld [vmem:[#allocation8 + $0x1888] sm:$0xff]
    %v2177 = vld [vmem:[#allocation8 + $0x1890] sm:$0xff]
    %v2178 = vld [vmem:[#allocation8 + $0x1898] sm:$0xff]
    %v2179 = vld [vmem:[#allocation8 + $0x18a0] sm:$0xff]
    %v2180 = vld [vmem:[#allocation8 + $0x18a8] sm:$0xff]
    %v2181 = vld [vmem:[#allocation8 + $0x18b0] sm:$0xff]
    %v2182 = vld [vmem:[#allocation8 + $0x18b8] sm:$0xff]
    %v2183 = vld [vmem:[#allocation8 + $0x18c0] sm:$0xff]
    %v2184 = vld [vmem:[#allocation8 + $0x18c8] sm:$0xff]
    %v2185 = vld [vmem:[#allocation8 + $0x18d0] sm:$0xff]
    %v2186 = vld [vmem:[#allocation8 + $0x18d8] sm:$0xff]
    %v2187 = vld [vmem:[#allocation8 + $0x18e0] sm:$0xff]
    %v2188 = vld [vmem:[#allocation8 + $0x18e8] sm:$0xff]
    %v2189 = vld [vmem:[#allocation8 + $0x18f0] sm:$0xff]
    %v2190 = vld [vmem:[#allocation8 + $0x18f8] sm:$0xff]
    %v2191 = vld [vmem:[#allocation8 + $0x1900] sm:$0xff]
    %v2192 = vld [vmem:[#allocation8 + $0x1908] sm:$0xff]
    %v2193 = vld [vmem:[#allocation8 + $0x1910] sm:$0xff]
    %v2194 = vld [vmem:[#allocation8 + $0x1918] sm:$0xff]
    %v2195 = vld [vmem:[#allocation8 + $0x1920] sm:$0xff]
    %v2196 = vld [vmem:[#allocation8 + $0x1928] sm:$0xff]
    %v2197 = vld [vmem:[#allocation8 + $0x1930] sm:$0xff]
    %v2198 = vld [vmem:[#allocation8 + $0x1938] sm:$0xff]
    %v2199 = vld [vmem:[#allocation8 + $0x1940] sm:$0xff]
    %v2200 = vld [vmem:[#allocation8 + $0x1948] sm:$0xff]
    %v2201 = vld [vmem:[#allocation8 + $0x1950] sm:$0xff]
    %v2202 = vld [vmem:[#allocation8 + $0x1958] sm:$0xff]
    %v2203 = vld [vmem:[#allocation8 + $0x1960] sm:$0xff]
    %v2204 = vld [vmem:[#allocation8 + $0x1968] sm:$0xff]
    %v2205 = vld [vmem:[#allocation8 + $0x1970] sm:$0xff]
    %v2206 = vld [vmem:[#allocation8 + $0x1978] sm:$0xff]
    %v2207 = vld [vmem:[#allocation8 + $0x1980] sm:$0xff]
    %v2208 = vld [vmem:[#allocation8 + $0x1988] sm:$0xff]
    %v2209 = vld [vmem:[#allocation8 + $0x1990] sm:$0xff]
    %v2210 = vld [vmem:[#allocation8 + $0x1998] sm:$0xff]
    %v2211 = vld [vmem:[#allocation8 + $0x19a0] sm:$0xff]
    %v2212 = vld [vmem:[#allocation8 + $0x19a8] sm:$0xff]
    %v2213 = vld [vmem:[#allocation8 + $0x19b0] sm:$0xff]
    %v2214 = vld [vmem:[#allocation8 + $0x19b8] sm:$0xff]
    %v2215 = vld [vmem:[#allocation8 + $0x19c0] sm:$0xff]
    %v2216 = vld [vmem:[#allocation8 + $0x19c8] sm:$0xff]
    %v2217 = vld [vmem:[#allocation8 + $0x19d0] sm:$0xff]
    %v2218 = vld [vmem:[#allocation8 + $0x19d8] sm:$0xff]
    %v2219 = vld [vmem:[#allocation8 + $0x19e0] sm:$0xff]
    %v2220 = vld [vmem:[#allocation8 + $0x19e8] sm:$0xff]
    %v2221 = vld [vmem:[#allocation8 + $0x19f0] sm:$0xff]
    %v2222 = vld [vmem:[#allocation8 + $0x19f8] sm:$0xff]
    %v2223 = vld [vmem:[#allocation8 + $0x1a00] sm:$0xff]
    %v2224 = vld [vmem:[#allocation8 + $0x1a08] sm:$0xff]
    %v2225 = vld [vmem:[#allocation8 + $0x1a10] sm:$0xff]
    %v2226 = vld [vmem:[#allocation8 + $0x1a18] sm:$0xff]
    %v2227 = vld [vmem:[#allocation8 + $0x1a20] sm:$0xff]
    %v2228 = vld [vmem:[#allocation8 + $0x1a28] sm:$0xff]
    %v2229 = vld [vmem:[#allocation8 + $0x1a30] sm:$0xff]
    %v2230 = vld [vmem:[#allocation8 + $0x1a38] sm:$0xff]
    %v2231 = vld [vmem:[#allocation8 + $0x1a40] sm:$0xff]
    %v2232 = vld [vmem:[#allocation8 + $0x1a48] sm:$0xff]
    %v2233 = vld [vmem:[#allocation8 + $0x1a50] sm:$0xff]
    %v2234 = vld [vmem:[#allocation8 + $0x1a58] sm:$0xff]
    %v2235 = vld [vmem:[#allocation8 + $0x1a60] sm:$0xff]
    %v2236 = vld [vmem:[#allocation8 + $0x1a68] sm:$0xff]
    %v2237 = vld [vmem:[#allocation8 + $0x1a70] sm:$0xff]
    %v2238 = vld [vmem:[#allocation8 + $0x1a78] sm:$0xff]
    %v2239 = vld [vmem:[#allocation8 + $0x1a80] sm:$0xff]
    %v2240 = vld [vmem:[#allocation8 + $0x1a88] sm:$0xff]
    %v2241 = vld [vmem:[#allocation8 + $0x1a90] sm:$0xff]
    %v2242 = vld [vmem:[#allocation8 + $0x1a98] sm:$0xff]
    %v2243 = vld [vmem:[#allocation8 + $0x1aa0] sm:$0xff]
    %v2244 = vld [vmem:[#allocation8 + $0x1aa8] sm:$0xff]
    %v2245 = vld [vmem:[#allocation8 + $0x1ab0] sm:$0xff]
    %v2246 = vld [vmem:[#allocation8 + $0x1ab8] sm:$0xff]
    %v2247 = vld [vmem:[#allocation8 + $0x1ac0] sm:$0xff]
    %v2248 = vld [vmem:[#allocation8 + $0x1ac8] sm:$0xff]
    %v2249 = vld [vmem:[#allocation8 + $0x1ad0] sm:$0xff]
    %v2250 = vld [vmem:[#allocation8 + $0x1ad8] sm:$0xff]
    %v2251 = vld [vmem:[#allocation8 + $0x1ae0] sm:$0xff]
    %v2252 = vld [vmem:[#allocation8 + $0x1ae8] sm:$0xff]
    %v2253 = vld [vmem:[#allocation8 + $0x1af0] sm:$0xff]
    %v2254 = vld [vmem:[#allocation8 + $0x1af8] sm:$0xff]
    %v2255 = vld [vmem:[#allocation8 + $0x1b00] sm:$0xff]
    %v2256 = vld [vmem:[#allocation8 + $0x1b08] sm:$0xff]
    %v2257 = vld [vmem:[#allocation8 + $0x1b10] sm:$0xff]
    %v2258 = vld [vmem:[#allocation8 + $0x1b18] sm:$0xff]
    %v2259 = vld [vmem:[#allocation8 + $0x1b20] sm:$0xff]
    %v2260 = vld [vmem:[#allocation8 + $0x1b28] sm:$0xff]
    %v2261 = vld [vmem:[#allocation8 + $0x1b30] sm:$0xff]
    %v2262 = vld [vmem:[#allocation8 + $0x1b38] sm:$0xff]
    %v2263 = vld [vmem:[#allocation8 + $0x1b40] sm:$0xff]
    %v2264 = vld [vmem:[#allocation8 + $0x1b48] sm:$0xff]
    %v2265 = vld [vmem:[#allocation8 + $0x1b50] sm:$0xff]
    %v2266 = vld [vmem:[#allocation8 + $0x1b58] sm:$0xff]
    %v2267 = vld [vmem:[#allocation8 + $0x1b60] sm:$0xff]
    %v2268 = vld [vmem:[#allocation8 + $0x1b68] sm:$0xff]
    %v2269 = vld [vmem:[#allocation8 + $0x1b70] sm:$0xff]
    %v2270 = vld [vmem:[#allocation8 + $0x1b78] sm:$0xff]
    %v2271 = vld [vmem:[#allocation8 + $0x1b80] sm:$0xff]
    %v2272 = vld [vmem:[#allocation8 + $0x1b88] sm:$0xff]
    %v2273 = vld [vmem:[#allocation8 + $0x1b90] sm:$0xff]
    %v2274 = vld [vmem:[#allocation8 + $0x1b98] sm:$0xff]
    %v2275 = vld [vmem:[#allocation8 + $0x1ba0] sm:$0xff]
    %v2276 = vld [vmem:[#allocation8 + $0x1ba8] sm:$0xff]
    %v2277 = vld [vmem:[#allocation8 + $0x1bb0] sm:$0xff]
    %v2278 = vld [vmem:[#allocation8 + $0x1bb8] sm:$0xff]
    %v2279 = vld [vmem:[#allocation8 + $0x1bc0] sm:$0xff]
    %v2280 = vld [vmem:[#allocation8 + $0x1bc8] sm:$0xff]
    %v2281 = vld [vmem:[#allocation8 + $0x1bd0] sm:$0xff]
    %v2282 = vld [vmem:[#allocation8 + $0x1bd8] sm:$0xff]
    %v2283 = vld [vmem:[#allocation8 + $0x1be0] sm:$0xff]
    %v2284 = vld [vmem:[#allocation8 + $0x1be8] sm:$0xff]
    %v2285 = vld [vmem:[#allocation8 + $0x1bf0] sm:$0xff]
    %v2286 = vld [vmem:[#allocation8 + $0x1bf8] sm:$0xff]
    %v2287 = vld [vmem:[#allocation8 + $0x1c00] sm:$0xff]
    %v2288 = vld [vmem:[#allocation8 + $0x1c08] sm:$0xff]
    %v2289 = vld [vmem:[#allocation8 + $0x1c10] sm:$0xff]
    %v2290 = vld [vmem:[#allocation8 + $0x1c18] sm:$0xff]
    %v2291 = vld [vmem:[#allocation8 + $0x1c20] sm:$0xff]
    %v2292 = vld [vmem:[#allocation8 + $0x1c28] sm:$0xff]
    %v2293 = vld [vmem:[#allocation8 + $0x1c30] sm:$0xff]
    %v2294 = vld [vmem:[#allocation8 + $0x1c38] sm:$0xff]
    %v2295 = vld [vmem:[#allocation8 + $0x1c40] sm:$0xff]
    %v2296 = vld [vmem:[#allocation8 + $0x1c48] sm:$0xff]
    %v2297 = vld [vmem:[#allocation8 + $0x1c50] sm:$0xff]
    %v2298 = vld [vmem:[#allocation8 + $0x1c58] sm:$0xff]
    %v2299 = vld [vmem:[#allocation8 + $0x1c60] sm:$0xff]
    %v2300 = vld [vmem:[#allocation8 + $0x1c68] sm:$0xff]
    %v2301 = vld [vmem:[#allocation8 + $0x1c70] sm:$0xff]
    %v2302 = vld [vmem:[#allocation8 + $0x1c78] sm:$0xff]
    %v2303 = vld [vmem:[#allocation8 + $0x1c80] sm:$0xff]
    %v2304 = vld [vmem:[#allocation8 + $0x1c88] sm:$0xff]
    %v2305 = vld [vmem:[#allocation8 + $0x1c90] sm:$0xff]
    %v2306 = vld [vmem:[#allocation8 + $0x1c98] sm:$0xff]
    %v2307 = vld [vmem:[#allocation8 + $0x1ca0] sm:$0xff]
    %v2308 = vld [vmem:[#allocation8 + $0x1ca8] sm:$0xff]
    %v2309 = vld [vmem:[#allocation8 + $0x1cb0] sm:$0xff]
    %v2310 = vld [vmem:[#allocation8 + $0x1cb8] sm:$0xff]
    %v2311 = vld [vmem:[#allocation8 + $0x1cc0] sm:$0xff]
    %v2312 = vld [vmem:[#allocation8 + $0x1cc8] sm:$0xff]
    %v2313 = vld [vmem:[#allocation8 + $0x1cd0] sm:$0xff]
    %v2314 = vld [vmem:[#allocation8 + $0x1cd8] sm:$0xff]
    %v2315 = vld [vmem:[#allocation8 + $0x1ce0] sm:$0xff]
    %v2316 = vld [vmem:[#allocation8 + $0x1ce8] sm:$0xff]
    %v2317 = vld [vmem:[#allocation8 + $0x1cf0] sm:$0xff]
    %v2318 = vld [vmem:[#allocation8 + $0x1cf8] sm:$0xff]
    %v2319 = vld [vmem:[#allocation8 + $0x1d00] sm:$0xff]
    %v2320 = vld [vmem:[#allocation8 + $0x1d08] sm:$0xff]
    %v2321 = vld [vmem:[#allocation8 + $0x1d10] sm:$0xff]
    %v2322 = vld [vmem:[#allocation8 + $0x1d18] sm:$0xff]
    %v2323 = vld [vmem:[#allocation8 + $0x1d20] sm:$0xff]
    %v2324 = vld [vmem:[#allocation8 + $0x1d28] sm:$0xff]
    %v2325 = vld [vmem:[#allocation8 + $0x1d30] sm:$0xff]
    %v2326 = vld [vmem:[#allocation8 + $0x1d38] sm:$0xff]
    %v2327 = vld [vmem:[#allocation8 + $0x1d40] sm:$0xff]
    %v2328 = vld [vmem:[#allocation8 + $0x1d48] sm:$0xff]
    %v2329 = vld [vmem:[#allocation8 + $0x1d50] sm:$0xff]
    %v2330 = vld [vmem:[#allocation8 + $0x1d58] sm:$0xff]
    %v2331 = vld [vmem:[#allocation8 + $0x1d60] sm:$0xff]
    %v2332 = vld [vmem:[#allocation8 + $0x1d68] sm:$0xff]
    %v2333 = vld [vmem:[#allocation8 + $0x1d70] sm:$0xff]
    %v2334 = vld [vmem:[#allocation8 + $0x1d78] sm:$0xff]
    %v2335 = vld [vmem:[#allocation8 + $0x1d80] sm:$0xff]
    %v2336 = vld [vmem:[#allocation8 + $0x1d88] sm:$0xff]
    %v2337 = vld [vmem:[#allocation8 + $0x1d90] sm:$0xff]
    %v2338 = vld [vmem:[#allocation8 + $0x1d98] sm:$0xff]
    %v2339 = vld [vmem:[#allocation8 + $0x1da0] sm:$0xff]
    %v2340 = vld [vmem:[#allocation8 + $0x1da8] sm:$0xff]
    %v2341 = vld [vmem:[#allocation8 + $0x1db0] sm:$0xff]
    %v2342 = vld [vmem:[#allocation8 + $0x1db8] sm:$0xff]
    %v2343 = vld [vmem:[#allocation8 + $0x1dc0] sm:$0xff]
    %v2344 = vld [vmem:[#allocation8 + $0x1dc8] sm:$0xff]
    %v2345 = vld [vmem:[#allocation8 + $0x1dd0] sm:$0xff]
    %v2346 = vld [vmem:[#allocation8 + $0x1dd8] sm:$0xff]
    %v2347 = vld [vmem:[#allocation8 + $0x1de0] sm:$0xff]
    %v2348 = vld [vmem:[#allocation8 + $0x1de8] sm:$0xff]
    %v2349 = vld [vmem:[#allocation8 + $0x1df0] sm:$0xff]
    %v2350 = vld [vmem:[#allocation8 + $0x1df8] sm:$0xff]
    %v2351 = vld [vmem:[#allocation8 + $0x1e00] sm:$0xff]
    %v2352 = vld [vmem:[#allocation8 + $0x1e08] sm:$0xff]
    %v2353 = vld [vmem:[#allocation8 + $0x1e10] sm:$0xff]
    %v2354 = vld [vmem:[#allocation8 + $0x1e18] sm:$0xff]
    %v2355 = vld [vmem:[#allocation8 + $0x1e20] sm:$0xff]
    %v2356 = vld [vmem:[#allocation8 + $0x1e28] sm:$0xff]
    %v2357 = vld [vmem:[#allocation8 + $0x1e30] sm:$0xff]
    %v2358 = vld [vmem:[#allocation8 + $0x1e38] sm:$0xff]
    %v2359 = vld [vmem:[#allocation8 + $0x1e40] sm:$0xff]
    %v2360 = vld [vmem:[#allocation8 + $0x1e48] sm:$0xff]
    %v2361 = vld [vmem:[#allocation8 + $0x1e50] sm:$0xff]
    %v2362 = vld [vmem:[#allocation8 + $0x1e58] sm:$0xff]
    %v2363 = vld [vmem:[#allocation8 + $0x1e60] sm:$0xff]
    %v2364 = vld [vmem:[#allocation8 + $0x1e68] sm:$0xff]
    %v2365 = vld [vmem:[#allocation8 + $0x1e70] sm:$0xff]
    %v2366 = vld [vmem:[#allocation8 + $0x1e78] sm:$0xff]
    %v2367 = vld [vmem:[#allocation8 + $0x1e80] sm:$0xff]
    %v2368 = vld [vmem:[#allocation8 + $0x1e88] sm:$0xff]
    %v2369 = vld [vmem:[#allocation8 + $0x1e90] sm:$0xff]
    %v2370 = vld [vmem:[#allocation8 + $0x1e98] sm:$0xff]
    %v2371 = vld [vmem:[#allocation8 + $0x1ea0] sm:$0xff]
    %v2372 = vld [vmem:[#allocation8 + $0x1ea8] sm:$0xff]
    %v2373 = vld [vmem:[#allocation8 + $0x1eb0] sm:$0xff]
    %v2374 = vld [vmem:[#allocation8 + $0x1eb8] sm:$0xff]
    %v2375 = vld [vmem:[#allocation8 + $0x1ec0] sm:$0xff]
    %v2376 = vld [vmem:[#allocation8 + $0x1ec8] sm:$0xff]
    %v2377 = vld [vmem:[#allocation8 + $0x1ed0] sm:$0xff]
    %v2378 = vld [vmem:[#allocation8 + $0x1ed8] sm:$0xff]
    %v2379 = vld [vmem:[#allocation8 + $0x1ee0] sm:$0xff]
    %v2380 = vld [vmem:[#allocation8 + $0x1ee8] sm:$0xff]
    %v2381 = vld [vmem:[#allocation8 + $0x1ef0] sm:$0xff]
    %v2382 = vld [vmem:[#allocation8 + $0x1ef8] sm:$0xff]
    %v2383 = vld [vmem:[#allocation8 + $0x1f00] sm:$0xff]
    %v2384 = vld [vmem:[#allocation8 + $0x1f08] sm:$0xff]
    %v2385 = vld [vmem:[#allocation8 + $0x1f10] sm:$0xff]
    %v2386 = vld [vmem:[#allocation8 + $0x1f18] sm:$0xff]
    %v2387 = vld [vmem:[#allocation8 + $0x1f20] sm:$0xff]
    %v2388 = vld [vmem:[#allocation8 + $0x1f28] sm:$0xff]
    %v2389 = vld [vmem:[#allocation8 + $0x1f30] sm:$0xff]
    %v2390 = vld [vmem:[#allocation8 + $0x1f38] sm:$0xff]
    %v2391 = vld [vmem:[#allocation8 + $0x1f40] sm:$0xff]
    %v2392 = vld [vmem:[#allocation8 + $0x1f48] sm:$0xff]
    %v2393 = vld [vmem:[#allocation8 + $0x1f50] sm:$0xff]
    %v2394 = vld [vmem:[#allocation8 + $0x1f58] sm:$0xff]
    %v2395 = vld [vmem:[#allocation8 + $0x1f60] sm:$0xff]
    %v2396 = vld [vmem:[#allocation8 + $0x1f68] sm:$0xff]
    %v2397 = vld [vmem:[#allocation8 + $0x1f70] sm:$0xff]
    %v2398 = vld [vmem:[#allocation8 + $0x1f78] sm:$0xff]
    %v2399 = vld [vmem:[#allocation8 + $0x1f80] sm:$0xff]
    %v2400 = vld [vmem:[#allocation8 + $0x1f88] sm:$0xff]
    %v2401 = vld [vmem:[#allocation8 + $0x1f90] sm:$0xff]
    %v2402 = vld [vmem:[#allocation8 + $0x1f98] sm:$0xff]
    %v2403 = vld [vmem:[#allocation8 + $0x1fa0] sm:$0xff]
    %v2404 = vld [vmem:[#allocation8 + $0x1fa8] sm:$0xff]
    %v2405 = vld [vmem:[#allocation8 + $0x1fb0] sm:$0xff]
    %v2406 = vld [vmem:[#allocation8 + $0x1fb8] sm:$0xff]
    %v2407 = vld [vmem:[#allocation8 + $0x1fc0] sm:$0xff]
    %v2408 = vld [vmem:[#allocation8 + $0x1fc8] sm:$0xff]
    %v2409 = vld [vmem:[#allocation8 + $0x1fd0] sm:$0xff]
    %v2410 = vld [vmem:[#allocation8 + $0x1fd8] sm:$0xff]
    %v2411 = vld [vmem:[#allocation8 + $0x1fe0] sm:$0xff]
    %v2412 = vld [vmem:[#allocation8 + $0x1fe8] sm:$0xff]
    %v2413 = vld [vmem:[#allocation8 + $0x1ff0] sm:$0xff]
    %v2414 = vld [vmem:[#allocation8 + $0x1ff8] sm:$0xff]
    %v2415 = vld [vmem:[#allocation10] sm:$0xff]
    %v2417 = vlaneseq
    %v2418 = vshrl.u32 %v2417, 7
    %v2419 = vsub.s32 0, %v2418
    %v2420 = vrot.slane %v2415, %v2419
    %v2421 = vlaneseq
    %v2422 = vshrl.u32 %v2421, 7
    %v2423 = vsub.s32 1, %v2422
    %v2424 = vrot.slane %v2415, %v2423
    %v2425 = vlaneseq
    %v2426 = vshrl.u32 %v2425, 7
    %v2427 = vsub.s32 2, %v2426
    %v2428 = vrot.slane %v2415, %v2427
    %v2429 = vlaneseq
    %v2430 = vshrl.u32 %v2429, 7
    %v2431 = vsub.s32 3, %v2430
    %v2432 = vrot.slane %v2415, %v2431
    %v2433 = vlaneseq
    %v2434 = vshrl.u32 %v2433, 7
    %v2435 = vsub.s32 4, %v2434
    %v2436 = vrot.slane %v2415, %v2435
    %v2437 = vlaneseq
    %v2438 = vshrl.u32 %v2437, 7
    %v2439 = vsub.s32 5, %v2438
    %v2440 = vrot.slane %v2415, %v2439
    %v2441 = vlaneseq
    %v2442 = vshrl.u32 %v2441, 7
    %v2443 = vsub.s32 6, %v2442
    %v2444 = vrot.slane %v2415, %v2443
    %v2445 = vlaneseq
    %v2446 = vshrl.u32 %v2445, 7
    %v2447 = vsub.s32 7, %v2446
    %v2448 = vrot.slane %v2415, %v2447
    %v3481 = vunpack.c.l.b16 %v1391
    %v3482 = vunpack.c.h.b16 %v1391
    %v3483 = vunpack.c.l.b16 %v1392
    %v3484 = vunpack.c.h.b16 %v1392
    %v3485 = vunpack.c.l.b16 %v1393
    %v3486 = vunpack.c.h.b16 %v1393
    %v3487 = vunpack.c.l.b16 %v1394
    %v3488 = vunpack.c.h.b16 %v1394
    %v3489 = vunpack.c.l.b16 %v1395
    %v3490 = vunpack.c.h.b16 %v1395
    %v3491 = vunpack.c.l.b16 %v1396
    %v3492 = vunpack.c.h.b16 %v1396
    %v3493 = vunpack.c.l.b16 %v1397
    %v3494 = vunpack.c.h.b16 %v1397
    %v3495 = vunpack.c.l.b16 %v1398
    %v3496 = vunpack.c.h.b16 %v1398
    %v3497 = vunpack.c.l.b16 %v1399
    %v3498 = vunpack.c.h.b16 %v1399
    %v3499 = vunpack.c.l.b16 %v1400
    %v3500 = vunpack.c.h.b16 %v1400
    %v3501 = vunpack.c.l.b16 %v1401
    %v3502 = vunpack.c.h.b16 %v1401
    %v3503 = vunpack.c.l.b16 %v1402
    %v3504 = vunpack.c.h.b16 %v1402
    %v3505 = vunpack.c.l.b16 %v1403
    %v3506 = vunpack.c.h.b16 %v1403
    %v3507 = vunpack.c.l.b16 %v1404
    %v3508 = vunpack.c.h.b16 %v1404
    %v3509 = vunpack.c.l.b16 %v1405
    %v3510 = vunpack.c.h.b16 %v1405
    %v3511 = vunpack.c.l.b16 %v1406
    %v3512 = vunpack.c.h.b16 %v1406
    %v3513 = vunpack.c.l.b16 %v1407
    %v3514 = vunpack.c.h.b16 %v1407
    %v3515 = vunpack.c.l.b16 %v1408
    %v3516 = vunpack.c.h.b16 %v1408
    %v3517 = vunpack.c.l.b16 %v1409
    %v3518 = vunpack.c.h.b16 %v1409
    %v3519 = vunpack.c.l.b16 %v1410
    %v3520 = vunpack.c.h.b16 %v1410
    %v3521 = vunpack.c.l.b16 %v1411
    %v3522 = vunpack.c.h.b16 %v1411
    %v3523 = vunpack.c.l.b16 %v1412
    %v3524 = vunpack.c.h.b16 %v1412
    %v3525 = vunpack.c.l.b16 %v1413
    %v3526 = vunpack.c.h.b16 %v1413
    %v3527 = vunpack.c.l.b16 %v1414
    %v3528 = vunpack.c.h.b16 %v1414
    %v3529 = vunpack.c.l.b16 %v1415
    %v3530 = vunpack.c.h.b16 %v1415
    %v3531 = vunpack.c.l.b16 %v1416
    %v3532 = vunpack.c.h.b16 %v1416
    %v3533 = vunpack.c.l.b16 %v1417
    %v3534 = vunpack.c.h.b16 %v1417
    %v3535 = vunpack.c.l.b16 %v1418
    %v3536 = vunpack.c.h.b16 %v1418
    %v3537 = vunpack.c.l.b16 %v1419
    %v3538 = vunpack.c.h.b16 %v1419
    %v3539 = vunpack.c.l.b16 %v1420
    %v3540 = vunpack.c.h.b16 %v1420
    %v3541 = vunpack.c.l.b16 %v1421
    %v3542 = vunpack.c.h.b16 %v1421
    %v3543 = vunpack.c.l.b16 %v1422
    %v3544 = vunpack.c.h.b16 %v1422
    %v3545 = vunpack.c.l.b16 %v1423
    %v3546 = vunpack.c.h.b16 %v1423
    %v3547 = vunpack.c.l.b16 %v1424
    %v3548 = vunpack.c.h.b16 %v1424
    %v3549 = vunpack.c.l.b16 %v1425
    %v3550 = vunpack.c.h.b16 %v1425
    %v3551 = vunpack.c.l.b16 %v1426
    %v3552 = vunpack.c.h.b16 %v1426
    %v3553 = vunpack.c.l.b16 %v1427
    %v3554 = vunpack.c.h.b16 %v1427
    %v3555 = vunpack.c.l.b16 %v1428
    %v3556 = vunpack.c.h.b16 %v1428
    %v3557 = vunpack.c.l.b16 %v1429
    %v3558 = vunpack.c.h.b16 %v1429
    %v3559 = vunpack.c.l.b16 %v1430
    %v3560 = vunpack.c.h.b16 %v1430
    %v3561 = vunpack.c.l.b16 %v1431
    %v3562 = vunpack.c.h.b16 %v1431
    %v3563 = vunpack.c.l.b16 %v1432
    %v3564 = vunpack.c.h.b16 %v1432
    %v3565 = vunpack.c.l.b16 %v1433
    %v3566 = vunpack.c.h.b16 %v1433
    %v3567 = vunpack.c.l.b16 %v1434
    %v3568 = vunpack.c.h.b16 %v1434
    %v3569 = vunpack.c.l.b16 %v1435
    %v3570 = vunpack.c.h.b16 %v1435
    %v3571 = vunpack.c.l.b16 %v1436
    %v3572 = vunpack.c.h.b16 %v1436
    %v3573 = vunpack.c.l.b16 %v1437
    %v3574 = vunpack.c.h.b16 %v1437
    %v3575 = vunpack.c.l.b16 %v1438
    %v3576 = vunpack.c.h.b16 %v1438
    %v3577 = vunpack.c.l.b16 %v1439
    %v3578 = vunpack.c.h.b16 %v1439
    %v3579 = vunpack.c.l.b16 %v1440
    %v3580 = vunpack.c.h.b16 %v1440
    %v3581 = vunpack.c.l.b16 %v1441
    %v3582 = vunpack.c.h.b16 %v1441
    %v3583 = vunpack.c.l.b16 %v1442
    %v3584 = vunpack.c.h.b16 %v1442
    %v3585 = vunpack.c.l.b16 %v1443
    %v3586 = vunpack.c.h.b16 %v1443
    %v3587 = vunpack.c.l.b16 %v1444
    %v3588 = vunpack.c.h.b16 %v1444
    %v3589 = vunpack.c.l.b16 %v1445
    %v3590 = vunpack.c.h.b16 %v1445
    %v3591 = vunpack.c.l.b16 %v1446
    %v3592 = vunpack.c.h.b16 %v1446
    %v3593 = vunpack.c.l.b16 %v1447
    %v3594 = vunpack.c.h.b16 %v1447
    %v3595 = vunpack.c.l.b16 %v1448
    %v3596 = vunpack.c.h.b16 %v1448
    %v3597 = vunpack.c.l.b16 %v1449
    %v3598 = vunpack.c.h.b16 %v1449
    %v3599 = vunpack.c.l.b16 %v1450
    %v3600 = vunpack.c.h.b16 %v1450
    %v3601 = vunpack.c.l.b16 %v1451
    %v3602 = vunpack.c.h.b16 %v1451
    %v3603 = vunpack.c.l.b16 %v1452
    %v3604 = vunpack.c.h.b16 %v1452
    %v3605 = vunpack.c.l.b16 %v1453
    %v3606 = vunpack.c.h.b16 %v1453
    %v3607 = vunpack.c.l.b16 %v1454
    %v3608 = vunpack.c.h.b16 %v1454
    %v3609 = vunpack.c.l.b16 %v1455
    %v3610 = vunpack.c.h.b16 %v1455
    %v3611 = vunpack.c.l.b16 %v1456
    %v3612 = vunpack.c.h.b16 %v1456
    %v3613 = vunpack.c.l.b16 %v1457
    %v3614 = vunpack.c.h.b16 %v1457
    %v3615 = vunpack.c.l.b16 %v1458
    %v3616 = vunpack.c.h.b16 %v1458
    %v3617 = vunpack.c.l.b16 %v1459
    %v3618 = vunpack.c.h.b16 %v1459
    %v3619 = vunpack.c.l.b16 %v1460
    %v3620 = vunpack.c.h.b16 %v1460
    %v3621 = vunpack.c.l.b16 %v1461
    %v3622 = vunpack.c.h.b16 %v1461
    %v3623 = vunpack.c.l.b16 %v1462
    %v3624 = vunpack.c.h.b16 %v1462
    %v3625 = vunpack.c.l.b16 %v1463
    %v3626 = vunpack.c.h.b16 %v1463
    %v3627 = vunpack.c.l.b16 %v1464
    %v3628 = vunpack.c.h.b16 %v1464
    %v3629 = vunpack.c.l.b16 %v1465
    %v3630 = vunpack.c.h.b16 %v1465
    %v3631 = vunpack.c.l.b16 %v1466
    %v3632 = vunpack.c.h.b16 %v1466
    %v3633 = vunpack.c.l.b16 %v1467
    %v3634 = vunpack.c.h.b16 %v1467
    %v3635 = vunpack.c.l.b16 %v1468
    %v3636 = vunpack.c.h.b16 %v1468
    %v3637 = vunpack.c.l.b16 %v1469
    %v3638 = vunpack.c.h.b16 %v1469
    %v3639 = vunpack.c.l.b16 %v1470
    %v3640 = vunpack.c.h.b16 %v1470
    %v3641 = vunpack.c.l.b16 %v1471
    %v3642 = vunpack.c.h.b16 %v1471
    %v3643 = vunpack.c.l.b16 %v1472
    %v3644 = vunpack.c.h.b16 %v1472
    %v3645 = vunpack.c.l.b16 %v1473
    %v3646 = vunpack.c.h.b16 %v1473
    %v3647 = vunpack.c.l.b16 %v1474
    %v3648 = vunpack.c.h.b16 %v1474
    %v3649 = vunpack.c.l.b16 %v1475
    %v3650 = vunpack.c.h.b16 %v1475
    %v3651 = vunpack.c.l.b16 %v1476
    %v3652 = vunpack.c.h.b16 %v1476
    %v3653 = vunpack.c.l.b16 %v1477
    %v3654 = vunpack.c.h.b16 %v1477
    %v3655 = vunpack.c.l.b16 %v1478
    %v3656 = vunpack.c.h.b16 %v1478
    %v3657 = vunpack.c.l.b16 %v1479
    %v3658 = vunpack.c.h.b16 %v1479
    %v3659 = vunpack.c.l.b16 %v1480
    %v3660 = vunpack.c.h.b16 %v1480
    %v3661 = vunpack.c.l.b16 %v1481
    %v3662 = vunpack.c.h.b16 %v1481
    %v3663 = vunpack.c.l.b16 %v1482
    %v3664 = vunpack.c.h.b16 %v1482
    %v3665 = vunpack.c.l.b16 %v1483
    %v3666 = vunpack.c.h.b16 %v1483
    %v3667 = vunpack.c.l.b16 %v1484
    %v3668 = vunpack.c.h.b16 %v1484
    %v3669 = vunpack.c.l.b16 %v1485
    %v3670 = vunpack.c.h.b16 %v1485
    %v3671 = vunpack.c.l.b16 %v1486
    %v3672 = vunpack.c.h.b16 %v1486
    %v3673 = vunpack.c.l.b16 %v1487
    %v3674 = vunpack.c.h.b16 %v1487
    %v3675 = vunpack.c.l.b16 %v1488
    %v3676 = vunpack.c.h.b16 %v1488
    %v3677 = vunpack.c.l.b16 %v1489
    %v3678 = vunpack.c.h.b16 %v1489
    %v3679 = vunpack.c.l.b16 %v1490
    %v3680 = vunpack.c.h.b16 %v1490
    %v3681 = vunpack.c.l.b16 %v1491
    %v3682 = vunpack.c.h.b16 %v1491
    %v3683 = vunpack.c.l.b16 %v1492
    %v3684 = vunpack.c.h.b16 %v1492
    %v3685 = vunpack.c.l.b16 %v1493
    %v3686 = vunpack.c.h.b16 %v1493
    %v3687 = vunpack.c.l.b16 %v1494
    %v3688 = vunpack.c.h.b16 %v1494
    %v3689 = vunpack.c.l.b16 %v1495
    %v3690 = vunpack.c.h.b16 %v1495
    %v3691 = vunpack.c.l.b16 %v1496
    %v3692 = vunpack.c.h.b16 %v1496
    %v3693 = vunpack.c.l.b16 %v1497
    %v3694 = vunpack.c.h.b16 %v1497
    %v3695 = vunpack.c.l.b16 %v1498
    %v3696 = vunpack.c.h.b16 %v1498
    %v3697 = vunpack.c.l.b16 %v1499
    %v3698 = vunpack.c.h.b16 %v1499
    %v3699 = vunpack.c.l.b16 %v1500
    %v3700 = vunpack.c.h.b16 %v1500
    %v3701 = vunpack.c.l.b16 %v1501
    %v3702 = vunpack.c.h.b16 %v1501
    %v3703 = vunpack.c.l.b16 %v1502
    %v3704 = vunpack.c.h.b16 %v1502
    %v3705 = vunpack.c.l.b16 %v1503
    %v3706 = vunpack.c.h.b16 %v1503
    %v3707 = vunpack.c.l.b16 %v1504
    %v3708 = vunpack.c.h.b16 %v1504
    %v3709 = vunpack.c.l.b16 %v1505
    %v3710 = vunpack.c.h.b16 %v1505
    %v3711 = vunpack.c.l.b16 %v1506
    %v3712 = vunpack.c.h.b16 %v1506
    %v3713 = vunpack.c.l.b16 %v1507
    %v3714 = vunpack.c.h.b16 %v1507
    %v3715 = vunpack.c.l.b16 %v1508
    %v3716 = vunpack.c.h.b16 %v1508
    %v3717 = vunpack.c.l.b16 %v1509
    %v3718 = vunpack.c.h.b16 %v1509
    %v3719 = vunpack.c.l.b16 %v1510
    %v3720 = vunpack.c.h.b16 %v1510
    %v3721 = vunpack.c.l.b16 %v1511
    %v3722 = vunpack.c.h.b16 %v1511
    %v3723 = vunpack.c.l.b16 %v1512
    %v3724 = vunpack.c.h.b16 %v1512
    %v3725 = vunpack.c.l.b16 %v1513
    %v3726 = vunpack.c.h.b16 %v1513
    %v3727 = vunpack.c.l.b16 %v1514
    %v3728 = vunpack.c.h.b16 %v1514
    %v3729 = vunpack.c.l.b16 %v1515
    %v3730 = vunpack.c.h.b16 %v1515
    %v3731 = vunpack.c.l.b16 %v1516
    %v3732 = vunpack.c.h.b16 %v1516
    %v3733 = vunpack.c.l.b16 %v1517
    %v3734 = vunpack.c.h.b16 %v1517
    %v3735 = vunpack.c.l.b16 %v1518
    %v3736 = vunpack.c.h.b16 %v1518
    %v3737 = vunpack.c.l.b16 %v1519
    %v3738 = vunpack.c.h.b16 %v1519
    %v3739 = vunpack.c.l.b16 %v1520
    %v3740 = vunpack.c.h.b16 %v1520
    %v3741 = vunpack.c.l.b16 %v1521
    %v3742 = vunpack.c.h.b16 %v1521
    %v3743 = vunpack.c.l.b16 %v1522
    %v3744 = vunpack.c.h.b16 %v1522
    %v3745 = vunpack.c.l.b16 %v1523
    %v3746 = vunpack.c.h.b16 %v1523
    %v3747 = vunpack.c.l.b16 %v1524
    %v3748 = vunpack.c.h.b16 %v1524
    %v3749 = vunpack.c.l.b16 %v1525
    %v3750 = vunpack.c.h.b16 %v1525
    %v3751 = vunpack.c.l.b16 %v1526
    %v3752 = vunpack.c.h.b16 %v1526
    %v3753 = vunpack.c.l.b16 %v1527
    %v3754 = vunpack.c.h.b16 %v1527
    %v3755 = vunpack.c.l.b16 %v1528
    %v3756 = vunpack.c.h.b16 %v1528
    %v3757 = vunpack.c.l.b16 %v1529
    %v3758 = vunpack.c.h.b16 %v1529
    %v3759 = vunpack.c.l.b16 %v1530
    %v3760 = vunpack.c.h.b16 %v1530
    %v3761 = vunpack.c.l.b16 %v1531
    %v3762 = vunpack.c.h.b16 %v1531
    %v3763 = vunpack.c.l.b16 %v1532
    %v3764 = vunpack.c.h.b16 %v1532
    %v3765 = vunpack.c.l.b16 %v1533
    %v3766 = vunpack.c.h.b16 %v1533
    %v3767 = vunpack.c.l.b16 %v1534
    %v3768 = vunpack.c.h.b16 %v1534
    %v3769 = vunpack.c.l.b16 %v1535
    %v3770 = vunpack.c.h.b16 %v1535
    %v3771 = vunpack.c.l.b16 %v1536
    %v3772 = vunpack.c.h.b16 %v1536
    %v3773 = vunpack.c.l.b16 %v1537
    %v3774 = vunpack.c.h.b16 %v1537
    %v3775 = vunpack.c.l.b16 %v1538
    %v3776 = vunpack.c.h.b16 %v1538
    %v3777 = vunpack.c.l.b16 %v1539
    %v3778 = vunpack.c.h.b16 %v1539
    %v3779 = vunpack.c.l.b16 %v1540
    %v3780 = vunpack.c.h.b16 %v1540
    %v3781 = vunpack.c.l.b16 %v1541
    %v3782 = vunpack.c.h.b16 %v1541
    %v3783 = vunpack.c.l.b16 %v1542
    %v3784 = vunpack.c.h.b16 %v1542
    %v3785 = vunpack.c.l.b16 %v1543
    %v3786 = vunpack.c.h.b16 %v1543
    %v3787 = vunpack.c.l.b16 %v1544
    %v3788 = vunpack.c.h.b16 %v1544
    %v3789 = vunpack.c.l.b16 %v1545
    %v3790 = vunpack.c.h.b16 %v1545
    %v3791 = vunpack.c.l.b16 %v1546
    %v3792 = vunpack.c.h.b16 %v1546
    %v3793 = vunpack.c.l.b16 %v1547
    %v3794 = vunpack.c.h.b16 %v1547
    %v3795 = vunpack.c.l.b16 %v1548
    %v3796 = vunpack.c.h.b16 %v1548
    %v3797 = vunpack.c.l.b16 %v1549
    %v3798 = vunpack.c.h.b16 %v1549
    %v3799 = vunpack.c.l.b16 %v1550
    %v3800 = vunpack.c.h.b16 %v1550
    %v3801 = vunpack.c.l.b16 %v1551
    %v3802 = vunpack.c.h.b16 %v1551
    %v3803 = vunpack.c.l.b16 %v1552
    %v3804 = vunpack.c.h.b16 %v1552
    %v3805 = vunpack.c.l.b16 %v1553
    %v3806 = vunpack.c.h.b16 %v1553
    %v3807 = vunpack.c.l.b16 %v1554
    %v3808 = vunpack.c.h.b16 %v1554
    %v3809 = vunpack.c.l.b16 %v1555
    %v3810 = vunpack.c.h.b16 %v1555
    %v3811 = vunpack.c.l.b16 %v1556
    %v3812 = vunpack.c.h.b16 %v1556
    %v3813 = vunpack.c.l.b16 %v1557
    %v3814 = vunpack.c.h.b16 %v1557
    %v3815 = vunpack.c.l.b16 %v1558
    %v3816 = vunpack.c.h.b16 %v1558
    %v3817 = vunpack.c.l.b16 %v1559
    %v3818 = vunpack.c.h.b16 %v1559
    %v3819 = vunpack.c.l.b16 %v1560
    %v3820 = vunpack.c.h.b16 %v1560
    %v3821 = vunpack.c.l.b16 %v1561
    %v3822 = vunpack.c.h.b16 %v1561
    %v3823 = vunpack.c.l.b16 %v1562
    %v3824 = vunpack.c.h.b16 %v1562
    %v3825 = vunpack.c.l.b16 %v1563
    %v3826 = vunpack.c.h.b16 %v1563
    %v3827 = vunpack.c.l.b16 %v1564
    %v3828 = vunpack.c.h.b16 %v1564
    %v3829 = vunpack.c.l.b16 %v1565
    %v3830 = vunpack.c.h.b16 %v1565
    %v3831 = vunpack.c.l.b16 %v1566
    %v3832 = vunpack.c.h.b16 %v1566
    %v3833 = vunpack.c.l.b16 %v1567
    %v3834 = vunpack.c.h.b16 %v1567
    %v3835 = vunpack.c.l.b16 %v1568
    %v3836 = vunpack.c.h.b16 %v1568
    %v3837 = vunpack.c.l.b16 %v1569
    %v3838 = vunpack.c.h.b16 %v1569
    %v3839 = vunpack.c.l.b16 %v1570
    %v3840 = vunpack.c.h.b16 %v1570
    %v3841 = vunpack.c.l.b16 %v1571
    %v3842 = vunpack.c.h.b16 %v1571
    %v3843 = vunpack.c.l.b16 %v1572
    %v3844 = vunpack.c.h.b16 %v1572
    %v3845 = vunpack.c.l.b16 %v1573
    %v3846 = vunpack.c.h.b16 %v1573
    %v3847 = vunpack.c.l.b16 %v1574
    %v3848 = vunpack.c.h.b16 %v1574
    %v3849 = vunpack.c.l.b16 %v1575
    %v3850 = vunpack.c.h.b16 %v1575
    %v3851 = vunpack.c.l.b16 %v1576
    %v3852 = vunpack.c.h.b16 %v1576
    %v3853 = vunpack.c.l.b16 %v1577
    %v3854 = vunpack.c.h.b16 %v1577
    %v3855 = vunpack.c.l.b16 %v1578
    %v3856 = vunpack.c.h.b16 %v1578
    %v3857 = vunpack.c.l.b16 %v1579
    %v3858 = vunpack.c.h.b16 %v1579
    %v3859 = vunpack.c.l.b16 %v1580
    %v3860 = vunpack.c.h.b16 %v1580
    %v3861 = vunpack.c.l.b16 %v1581
    %v3862 = vunpack.c.h.b16 %v1581
    %v3863 = vunpack.c.l.b16 %v1582
    %v3864 = vunpack.c.h.b16 %v1582
    %v3865 = vunpack.c.l.b16 %v1583
    %v3866 = vunpack.c.h.b16 %v1583
    %v3867 = vunpack.c.l.b16 %v1584
    %v3868 = vunpack.c.h.b16 %v1584
    %v3869 = vunpack.c.l.b16 %v1585
    %v3870 = vunpack.c.h.b16 %v1585
    %v3871 = vunpack.c.l.b16 %v1586
    %v3872 = vunpack.c.h.b16 %v1586
    %v3873 = vunpack.c.l.b16 %v1587
    %v3874 = vunpack.c.h.b16 %v1587
    %v3875 = vunpack.c.l.b16 %v1588
    %v3876 = vunpack.c.h.b16 %v1588
    %v3877 = vunpack.c.l.b16 %v1589
    %v3878 = vunpack.c.h.b16 %v1589
    %v3879 = vunpack.c.l.b16 %v1590
    %v3880 = vunpack.c.h.b16 %v1590
    %v3881 = vunpack.c.l.b16 %v1591
    %v3882 = vunpack.c.h.b16 %v1591
    %v3883 = vunpack.c.l.b16 %v1592
    %v3884 = vunpack.c.h.b16 %v1592
    %v3885 = vunpack.c.l.b16 %v1593
    %v3886 = vunpack.c.h.b16 %v1593
    %v3887 = vunpack.c.l.b16 %v1594
    %v3888 = vunpack.c.h.b16 %v1594
    %v3889 = vunpack.c.l.b16 %v1595
    %v3890 = vunpack.c.h.b16 %v1595
    %v3891 = vunpack.c.l.b16 %v1596
    %v3892 = vunpack.c.h.b16 %v1596
    %v3893 = vunpack.c.l.b16 %v1597
    %v3894 = vunpack.c.h.b16 %v1597
    %v3895 = vunpack.c.l.b16 %v1598
    %v3896 = vunpack.c.h.b16 %v1598
    %v3897 = vunpack.c.l.b16 %v1599
    %v3898 = vunpack.c.h.b16 %v1599
    %v3899 = vunpack.c.l.b16 %v1600
    %v3900 = vunpack.c.h.b16 %v1600
    %v3901 = vunpack.c.l.b16 %v1601
    %v3902 = vunpack.c.h.b16 %v1601
    %v3903 = vunpack.c.l.b16 %v1602
    %v3904 = vunpack.c.h.b16 %v1602
    %v3905 = vunpack.c.l.b16 %v1603
    %v3906 = vunpack.c.h.b16 %v1603
    %v3907 = vunpack.c.l.b16 %v1604
    %v3908 = vunpack.c.h.b16 %v1604
    %v3909 = vunpack.c.l.b16 %v1605
    %v3910 = vunpack.c.h.b16 %v1605
    %v3911 = vunpack.c.l.b16 %v1606
    %v3912 = vunpack.c.h.b16 %v1606
    %v3913 = vunpack.c.l.b16 %v1607
    %v3914 = vunpack.c.h.b16 %v1607
    %v3915 = vunpack.c.l.b16 %v1608
    %v3916 = vunpack.c.h.b16 %v1608
    %v3917 = vunpack.c.l.b16 %v1609
    %v3918 = vunpack.c.h.b16 %v1609
    %v3919 = vunpack.c.l.b16 %v1610
    %v3920 = vunpack.c.h.b16 %v1610
    %v3921 = vunpack.c.l.b16 %v1611
    %v3922 = vunpack.c.h.b16 %v1611
    %v3923 = vunpack.c.l.b16 %v1612
    %v3924 = vunpack.c.h.b16 %v1612
    %v3925 = vunpack.c.l.b16 %v1613
    %v3926 = vunpack.c.h.b16 %v1613
    %v3927 = vunpack.c.l.b16 %v1614
    %v3928 = vunpack.c.h.b16 %v1614
    %v3929 = vunpack.c.l.b16 %v1615
    %v3930 = vunpack.c.h.b16 %v1615
    %v3931 = vunpack.c.l.b16 %v1616
    %v3932 = vunpack.c.h.b16 %v1616
    %v3933 = vunpack.c.l.b16 %v1617
    %v3934 = vunpack.c.h.b16 %v1617
    %v3935 = vunpack.c.l.b16 %v1618
    %v3936 = vunpack.c.h.b16 %v1618
    %v3937 = vunpack.c.l.b16 %v1619
    %v3938 = vunpack.c.h.b16 %v1619
    %v3939 = vunpack.c.l.b16 %v1620
    %v3940 = vunpack.c.h.b16 %v1620
    %v3941 = vunpack.c.l.b16 %v1621
    %v3942 = vunpack.c.h.b16 %v1621
    %v3943 = vunpack.c.l.b16 %v1622
    %v3944 = vunpack.c.h.b16 %v1622
    %v3945 = vunpack.c.l.b16 %v1623
    %v3946 = vunpack.c.h.b16 %v1623
    %v3947 = vunpack.c.l.b16 %v1624
    %v3948 = vunpack.c.h.b16 %v1624
    %v3949 = vunpack.c.l.b16 %v1625
    %v3950 = vunpack.c.h.b16 %v1625
    %v3951 = vunpack.c.l.b16 %v1626
    %v3952 = vunpack.c.h.b16 %v1626
    %v3953 = vunpack.c.l.b16 %v1627
    %v3954 = vunpack.c.h.b16 %v1627
    %v3955 = vunpack.c.l.b16 %v1628
    %v3956 = vunpack.c.h.b16 %v1628
    %v3957 = vunpack.c.l.b16 %v1629
    %v3958 = vunpack.c.h.b16 %v1629
    %v3959 = vunpack.c.l.b16 %v1630
    %v3960 = vunpack.c.h.b16 %v1630
    %v3961 = vunpack.c.l.b16 %v1631
    %v3962 = vunpack.c.h.b16 %v1631
    %v3963 = vunpack.c.l.b16 %v1632
    %v3964 = vunpack.c.h.b16 %v1632
    %v3965 = vunpack.c.l.b16 %v1633
    %v3966 = vunpack.c.h.b16 %v1633
    %v3967 = vunpack.c.l.b16 %v1634
    %v3968 = vunpack.c.h.b16 %v1634
    %v3969 = vunpack.c.l.b16 %v1635
    %v3970 = vunpack.c.h.b16 %v1635
    %v3971 = vunpack.c.l.b16 %v1636
    %v3972 = vunpack.c.h.b16 %v1636
    %v3973 = vunpack.c.l.b16 %v1637
    %v3974 = vunpack.c.h.b16 %v1637
    %v3975 = vunpack.c.l.b16 %v1638
    %v3976 = vunpack.c.h.b16 %v1638
    %v3977 = vunpack.c.l.b16 %v1639
    %v3978 = vunpack.c.h.b16 %v1639
    %v3979 = vunpack.c.l.b16 %v1640
    %v3980 = vunpack.c.h.b16 %v1640
    %v3981 = vunpack.c.l.b16 %v1641
    %v3982 = vunpack.c.h.b16 %v1641
    %v3983 = vunpack.c.l.b16 %v1642
    %v3984 = vunpack.c.h.b16 %v1642
    %v3985 = vunpack.c.l.b16 %v1643
    %v3986 = vunpack.c.h.b16 %v1643
    %v3987 = vunpack.c.l.b16 %v1644
    %v3988 = vunpack.c.h.b16 %v1644
    %v3989 = vunpack.c.l.b16 %v1645
    %v3990 = vunpack.c.h.b16 %v1645
    %v3991 = vunpack.c.l.b16 %v1646
    %v3992 = vunpack.c.h.b16 %v1646
    %v3993 = vunpack.c.l.b16 %v1647
    %v3994 = vunpack.c.h.b16 %v1647
    %v3995 = vunpack.c.l.b16 %v1648
    %v3996 = vunpack.c.h.b16 %v1648
    %v3997 = vunpack.c.l.b16 %v1649
    %v3998 = vunpack.c.h.b16 %v1649
    %v3999 = vunpack.c.l.b16 %v1650
    %v4000 = vunpack.c.h.b16 %v1650
    %v4001 = vunpack.c.l.b16 %v1651
    %v4002 = vunpack.c.h.b16 %v1651
    %v4003 = vunpack.c.l.b16 %v1652
    %v4004 = vunpack.c.h.b16 %v1652
    %v4005 = vunpack.c.l.b16 %v1653
    %v4006 = vunpack.c.h.b16 %v1653
    %v4007 = vunpack.c.l.b16 %v1654
    %v4008 = vunpack.c.h.b16 %v1654
    %v4009 = vunpack.c.l.b16 %v1655
    %v4010 = vunpack.c.h.b16 %v1655
    %v4011 = vunpack.c.l.b16 %v1656
    %v4012 = vunpack.c.h.b16 %v1656
    %v4013 = vunpack.c.l.b16 %v1657
    %v4014 = vunpack.c.h.b16 %v1657
    %v4015 = vunpack.c.l.b16 %v1658
    %v4016 = vunpack.c.h.b16 %v1658
    %v4017 = vunpack.c.l.b16 %v1659
    %v4018 = vunpack.c.h.b16 %v1659
    %v4019 = vunpack.c.l.b16 %v1660
    %v4020 = vunpack.c.h.b16 %v1660
    %v4021 = vunpack.c.l.b16 %v1661
    %v4022 = vunpack.c.h.b16 %v1661
    %v4023 = vunpack.c.l.b16 %v1662
    %v4024 = vunpack.c.h.b16 %v1662
    %v4025 = vunpack.c.l.b16 %v1663
    %v4026 = vunpack.c.h.b16 %v1663
    %v4027 = vunpack.c.l.b16 %v1664
    %v4028 = vunpack.c.h.b16 %v1664
    %v4029 = vunpack.c.l.b16 %v1665
    %v4030 = vunpack.c.h.b16 %v1665
    %v4031 = vunpack.c.l.b16 %v1666
    %v4032 = vunpack.c.h.b16 %v1666
    %v4033 = vunpack.c.l.b16 %v1667
    %v4034 = vunpack.c.h.b16 %v1667
    %v4035 = vunpack.c.l.b16 %v1668
    %v4036 = vunpack.c.h.b16 %v1668
    %v4037 = vunpack.c.l.b16 %v1669
    %v4038 = vunpack.c.h.b16 %v1669
    %v4039 = vunpack.c.l.b16 %v1670
    %v4040 = vunpack.c.h.b16 %v1670
    %v4041 = vunpack.c.l.b16 %v1671
    %v4042 = vunpack.c.h.b16 %v1671
    %v4043 = vunpack.c.l.b16 %v1672
    %v4044 = vunpack.c.h.b16 %v1672
    %v4045 = vunpack.c.l.b16 %v1673
    %v4046 = vunpack.c.h.b16 %v1673
    %v4047 = vunpack.c.l.b16 %v1674
    %v4048 = vunpack.c.h.b16 %v1674
    %v4049 = vunpack.c.l.b16 %v1675
    %v4050 = vunpack.c.h.b16 %v1675
    %v4051 = vunpack.c.l.b16 %v1676
    %v4052 = vunpack.c.h.b16 %v1676
    %v4053 = vunpack.c.l.b16 %v1677
    %v4054 = vunpack.c.h.b16 %v1677
    %v4055 = vunpack.c.l.b16 %v1678
    %v4056 = vunpack.c.h.b16 %v1678
    %v4057 = vunpack.c.l.b16 %v1679
    %v4058 = vunpack.c.h.b16 %v1679
    %v4059 = vunpack.c.l.b16 %v1680
    %v4060 = vunpack.c.h.b16 %v1680
    %v4061 = vunpack.c.l.b16 %v1681
    %v4062 = vunpack.c.h.b16 %v1681
    %v4063 = vunpack.c.l.b16 %v1682
    %v4064 = vunpack.c.h.b16 %v1682
    %v4065 = vunpack.c.l.b16 %v1683
    %v4066 = vunpack.c.h.b16 %v1683
    %v4067 = vunpack.c.l.b16 %v1684
    %v4068 = vunpack.c.h.b16 %v1684
    %v4069 = vunpack.c.l.b16 %v1685
    %v4070 = vunpack.c.h.b16 %v1685
    %v4071 = vunpack.c.l.b16 %v1686
    %v4072 = vunpack.c.h.b16 %v1686
    %v4073 = vunpack.c.l.b16 %v1687
    %v4074 = vunpack.c.h.b16 %v1687
    %v4075 = vunpack.c.l.b16 %v1688
    %v4076 = vunpack.c.h.b16 %v1688
    %v4077 = vunpack.c.l.b16 %v1689
    %v4078 = vunpack.c.h.b16 %v1689
    %v4079 = vunpack.c.l.b16 %v1690
    %v4080 = vunpack.c.h.b16 %v1690
    %v4081 = vunpack.c.l.b16 %v1691
    %v4082 = vunpack.c.h.b16 %v1691
    %v4083 = vunpack.c.l.b16 %v1692
    %v4084 = vunpack.c.h.b16 %v1692
    %v4085 = vunpack.c.l.b16 %v1693
    %v4086 = vunpack.c.h.b16 %v1693
    %v4087 = vunpack.c.l.b16 %v1694
    %v4088 = vunpack.c.h.b16 %v1694
    %v4089 = vunpack.c.l.b16 %v1695
    %v4090 = vunpack.c.h.b16 %v1695
    %v4091 = vunpack.c.l.b16 %v1696
    %v4092 = vunpack.c.h.b16 %v1696
    %v4093 = vunpack.c.l.b16 %v1697
    %v4094 = vunpack.c.h.b16 %v1697
    %v4095 = vunpack.c.l.b16 %v1698
    %v4096 = vunpack.c.h.b16 %v1698
    %v4097 = vunpack.c.l.b16 %v1699
    %v4098 = vunpack.c.h.b16 %v1699
    %v4099 = vunpack.c.l.b16 %v1700
    %v4100 = vunpack.c.h.b16 %v1700
    %v4101 = vunpack.c.l.b16 %v1701
    %v4102 = vunpack.c.h.b16 %v1701
    %v4103 = vunpack.c.l.b16 %v1702
    %v4104 = vunpack.c.h.b16 %v1702
    %v4105 = vunpack.c.l.b16 %v1703
    %v4106 = vunpack.c.h.b16 %v1703
    %v4107 = vunpack.c.l.b16 %v1704
    %v4108 = vunpack.c.h.b16 %v1704
    %v4109 = vunpack.c.l.b16 %v1705
    %v4110 = vunpack.c.h.b16 %v1705
    %v4111 = vunpack.c.l.b16 %v1706
    %v4112 = vunpack.c.h.b16 %v1706
    %v4113 = vunpack.c.l.b16 %v1707
    %v4114 = vunpack.c.h.b16 %v1707
    %v4115 = vunpack.c.l.b16 %v1708
    %v4116 = vunpack.c.h.b16 %v1708
    %v4117 = vunpack.c.l.b16 %v1709
    %v4118 = vunpack.c.h.b16 %v1709
    %v4119 = vunpack.c.l.b16 %v1710
    %v4120 = vunpack.c.h.b16 %v1710
    %v4121 = vunpack.c.l.b16 %v1711
    %v4122 = vunpack.c.h.b16 %v1711
    %v4123 = vunpack.c.l.b16 %v1712
    %v4124 = vunpack.c.h.b16 %v1712
    %v4125 = vunpack.c.l.b16 %v1713
    %v4126 = vunpack.c.h.b16 %v1713
    %v4127 = vunpack.c.l.b16 %v1714
    %v4128 = vunpack.c.h.b16 %v1714
    %v4129 = vunpack.c.l.b16 %v1715
    %v4130 = vunpack.c.h.b16 %v1715
    %v4131 = vunpack.c.l.b16 %v1716
    %v4132 = vunpack.c.h.b16 %v1716
    %v4133 = vunpack.c.l.b16 %v1717
    %v4134 = vunpack.c.h.b16 %v1717
    %v4135 = vunpack.c.l.b16 %v1718
    %v4136 = vunpack.c.h.b16 %v1718
    %v4137 = vunpack.c.l.b16 %v1719
    %v4138 = vunpack.c.h.b16 %v1719
    %v4139 = vunpack.c.l.b16 %v1720
    %v4140 = vunpack.c.h.b16 %v1720
    %v4141 = vunpack.c.l.b16 %v1721
    %v4142 = vunpack.c.h.b16 %v1721
    %v4143 = vunpack.c.l.b16 %v1722
    %v4144 = vunpack.c.h.b16 %v1722
    %v4145 = vunpack.c.l.b16 %v1723
    %v4146 = vunpack.c.h.b16 %v1723
    %v4147 = vunpack.c.l.b16 %v1724
    %v4148 = vunpack.c.h.b16 %v1724
    %v4149 = vunpack.c.l.b16 %v1725
    %v4150 = vunpack.c.h.b16 %v1725
    %v4151 = vunpack.c.l.b16 %v1726
    %v4152 = vunpack.c.h.b16 %v1726
    %v4153 = vunpack.c.l.b16 %v1727
    %v4154 = vunpack.c.h.b16 %v1727
    %v4155 = vunpack.c.l.b16 %v1728
    %v4156 = vunpack.c.h.b16 %v1728
    %v4157 = vunpack.c.l.b16 %v1729
    %v4158 = vunpack.c.h.b16 %v1729
    %v4159 = vunpack.c.l.b16 %v1730
    %v4160 = vunpack.c.h.b16 %v1730
    %v4161 = vunpack.c.l.b16 %v1731
    %v4162 = vunpack.c.h.b16 %v1731
    %v4163 = vunpack.c.l.b16 %v1732
    %v4164 = vunpack.c.h.b16 %v1732
    %v4165 = vunpack.c.l.b16 %v1733
    %v4166 = vunpack.c.h.b16 %v1733
    %v4167 = vunpack.c.l.b16 %v1734
    %v4168 = vunpack.c.h.b16 %v1734
    %v4169 = vunpack.c.l.b16 %v1735
    %v4170 = vunpack.c.h.b16 %v1735
    %v4171 = vunpack.c.l.b16 %v1736
    %v4172 = vunpack.c.h.b16 %v1736
    %v4173 = vunpack.c.l.b16 %v1737
    %v4174 = vunpack.c.h.b16 %v1737
    %v4175 = vunpack.c.l.b16 %v1738
    %v4176 = vunpack.c.h.b16 %v1738
    %v4177 = vunpack.c.l.b16 %v1739
    %v4178 = vunpack.c.h.b16 %v1739
    %v4179 = vunpack.c.l.b16 %v1740
    %v4180 = vunpack.c.h.b16 %v1740
    %v4181 = vunpack.c.l.b16 %v1741
    %v4182 = vunpack.c.h.b16 %v1741
    %v4183 = vunpack.c.l.b16 %v1742
    %v4184 = vunpack.c.h.b16 %v1742
    %v4185 = vunpack.c.l.b16 %v1743
    %v4186 = vunpack.c.h.b16 %v1743
    %v4187 = vunpack.c.l.b16 %v1744
    %v4188 = vunpack.c.h.b16 %v1744
    %v4189 = vunpack.c.l.b16 %v1745
    %v4190 = vunpack.c.h.b16 %v1745
    %v4191 = vunpack.c.l.b16 %v1746
    %v4192 = vunpack.c.h.b16 %v1746
    %v4193 = vunpack.c.l.b16 %v1747
    %v4194 = vunpack.c.h.b16 %v1747
    %v4195 = vunpack.c.l.b16 %v1748
    %v4196 = vunpack.c.h.b16 %v1748
    %v4197 = vunpack.c.l.b16 %v1749
    %v4198 = vunpack.c.h.b16 %v1749
    %v4199 = vunpack.c.l.b16 %v1750
    %v4200 = vunpack.c.h.b16 %v1750
    %v4201 = vunpack.c.l.b16 %v1751
    %v4202 = vunpack.c.h.b16 %v1751
    %v4203 = vunpack.c.l.b16 %v1752
    %v4204 = vunpack.c.h.b16 %v1752
    %v4205 = vunpack.c.l.b16 %v1753
    %v4206 = vunpack.c.h.b16 %v1753
    %v4207 = vunpack.c.l.b16 %v1754
    %v4208 = vunpack.c.h.b16 %v1754
    %v4209 = vunpack.c.l.b16 %v1755
    %v4210 = vunpack.c.h.b16 %v1755
    %v4211 = vunpack.c.l.b16 %v1756
    %v4212 = vunpack.c.h.b16 %v1756
    %v4213 = vunpack.c.l.b16 %v1757
    %v4214 = vunpack.c.h.b16 %v1757
    %v4215 = vunpack.c.l.b16 %v1758
    %v4216 = vunpack.c.h.b16 %v1758
    %v4217 = vunpack.c.l.b16 %v1759
    %v4218 = vunpack.c.h.b16 %v1759
    %v4219 = vunpack.c.l.b16 %v1760
    %v4220 = vunpack.c.h.b16 %v1760
    %v4221 = vunpack.c.l.b16 %v1761
    %v4222 = vunpack.c.h.b16 %v1761
    %v4223 = vunpack.c.l.b16 %v1762
    %v4224 = vunpack.c.h.b16 %v1762
    %v4225 = vunpack.c.l.b16 %v1763
    %v4226 = vunpack.c.h.b16 %v1763
    %v4227 = vunpack.c.l.b16 %v1764
    %v4228 = vunpack.c.h.b16 %v1764
    %v4229 = vunpack.c.l.b16 %v1765
    %v4230 = vunpack.c.h.b16 %v1765
    %v4231 = vunpack.c.l.b16 %v1766
    %v4232 = vunpack.c.h.b16 %v1766
    %v4233 = vunpack.c.l.b16 %v1767
    %v4234 = vunpack.c.h.b16 %v1767
    %v4235 = vunpack.c.l.b16 %v1768
    %v4236 = vunpack.c.h.b16 %v1768
    %v4237 = vunpack.c.l.b16 %v1769
    %v4238 = vunpack.c.h.b16 %v1769
    %v4239 = vunpack.c.l.b16 %v1770
    %v4240 = vunpack.c.h.b16 %v1770
    %v4241 = vunpack.c.l.b16 %v1771
    %v4242 = vunpack.c.h.b16 %v1771
    %v4243 = vunpack.c.l.b16 %v1772
    %v4244 = vunpack.c.h.b16 %v1772
    %v4245 = vunpack.c.l.b16 %v1773
    %v4246 = vunpack.c.h.b16 %v1773
    %v4247 = vunpack.c.l.b16 %v1774
    %v4248 = vunpack.c.h.b16 %v1774
    %v4249 = vunpack.c.l.b16 %v1775
    %v4250 = vunpack.c.h.b16 %v1775
    %v4251 = vunpack.c.l.b16 %v1776
    %v4252 = vunpack.c.h.b16 %v1776
    %v4253 = vunpack.c.l.b16 %v1777
    %v4254 = vunpack.c.h.b16 %v1777
    %v4255 = vunpack.c.l.b16 %v1778
    %v4256 = vunpack.c.h.b16 %v1778
    %v4257 = vunpack.c.l.b16 %v1779
    %v4258 = vunpack.c.h.b16 %v1779
    %v4259 = vunpack.c.l.b16 %v1780
    %v4260 = vunpack.c.h.b16 %v1780
    %v4261 = vunpack.c.l.b16 %v1781
    %v4262 = vunpack.c.h.b16 %v1781
    %v4263 = vunpack.c.l.b16 %v1782
    %v4264 = vunpack.c.h.b16 %v1782
    %v4265 = vunpack.c.l.b16 %v1783
    %v4266 = vunpack.c.h.b16 %v1783
    %v4267 = vunpack.c.l.b16 %v1784
    %v4268 = vunpack.c.h.b16 %v1784
    %v4269 = vunpack.c.l.b16 %v1785
    %v4270 = vunpack.c.h.b16 %v1785
    %v4271 = vunpack.c.l.b16 %v1786
    %v4272 = vunpack.c.h.b16 %v1786
    %v4273 = vunpack.c.l.b16 %v1787
    %v4274 = vunpack.c.h.b16 %v1787
    %v4275 = vunpack.c.l.b16 %v1788
    %v4276 = vunpack.c.h.b16 %v1788
    %v4277 = vunpack.c.l.b16 %v1789
    %v4278 = vunpack.c.h.b16 %v1789
    %v4279 = vunpack.c.l.b16 %v1790
    %v4280 = vunpack.c.h.b16 %v1790
    %v4281 = vunpack.c.l.b16 %v1791
    %v4282 = vunpack.c.h.b16 %v1791
    %v4283 = vunpack.c.l.b16 %v1792
    %v4284 = vunpack.c.h.b16 %v1792
    %v4285 = vunpack.c.l.b16 %v1793
    %v4286 = vunpack.c.h.b16 %v1793
    %v4287 = vunpack.c.l.b16 %v1794
    %v4288 = vunpack.c.h.b16 %v1794
    %v4289 = vunpack.c.l.b16 %v1795
    %v4290 = vunpack.c.h.b16 %v1795
    %v4291 = vunpack.c.l.b16 %v1796
    %v4292 = vunpack.c.h.b16 %v1796
    %v4293 = vunpack.c.l.b16 %v1797
    %v4294 = vunpack.c.h.b16 %v1797
    %v4295 = vunpack.c.l.b16 %v1798
    %v4296 = vunpack.c.h.b16 %v1798
    %v4297 = vunpack.c.l.b16 %v1799
    %v4298 = vunpack.c.h.b16 %v1799
    %v4299 = vunpack.c.l.b16 %v1800
    %v4300 = vunpack.c.h.b16 %v1800
    %v4301 = vunpack.c.l.b16 %v1801
    %v4302 = vunpack.c.h.b16 %v1801
    %v4303 = vunpack.c.l.b16 %v1802
    %v4304 = vunpack.c.h.b16 %v1802
    %v4305 = vunpack.c.l.b16 %v1803
    %v4306 = vunpack.c.h.b16 %v1803
    %v4307 = vunpack.c.l.b16 %v1804
    %v4308 = vunpack.c.h.b16 %v1804
    %v4309 = vunpack.c.l.b16 %v1805
    %v4310 = vunpack.c.h.b16 %v1805
    %v4311 = vunpack.c.l.b16 %v1806
    %v4312 = vunpack.c.h.b16 %v1806
    %v4313 = vunpack.c.l.b16 %v1807
    %v4314 = vunpack.c.h.b16 %v1807
    %v4315 = vunpack.c.l.b16 %v1808
    %v4316 = vunpack.c.h.b16 %v1808
    %v4317 = vunpack.c.l.b16 %v1809
    %v4318 = vunpack.c.h.b16 %v1809
    %v4319 = vunpack.c.l.b16 %v1810
    %v4320 = vunpack.c.h.b16 %v1810
    %v4321 = vunpack.c.l.b16 %v1811
    %v4322 = vunpack.c.h.b16 %v1811
    %v4323 = vunpack.c.l.b16 %v1812
    %v4324 = vunpack.c.h.b16 %v1812
    %v4325 = vunpack.c.l.b16 %v1813
    %v4326 = vunpack.c.h.b16 %v1813
    %v4327 = vunpack.c.l.b16 %v1814
    %v4328 = vunpack.c.h.b16 %v1814
    %v4329 = vunpack.c.l.b16 %v1815
    %v4330 = vunpack.c.h.b16 %v1815
    %v4331 = vunpack.c.l.b16 %v1816
    %v4332 = vunpack.c.h.b16 %v1816
    %v4333 = vunpack.c.l.b16 %v1817
    %v4334 = vunpack.c.h.b16 %v1817
    %v4335 = vunpack.c.l.b16 %v1818
    %v4336 = vunpack.c.h.b16 %v1818
    %v4337 = vunpack.c.l.b16 %v1819
    %v4338 = vunpack.c.h.b16 %v1819
    %v4339 = vunpack.c.l.b16 %v1820
    %v4340 = vunpack.c.h.b16 %v1820
    %v4341 = vunpack.c.l.b16 %v1821
    %v4342 = vunpack.c.h.b16 %v1821
    %v4343 = vunpack.c.l.b16 %v1822
    %v4344 = vunpack.c.h.b16 %v1822
    %v4345 = vunpack.c.l.b16 %v1823
    %v4346 = vunpack.c.h.b16 %v1823
    %v4347 = vunpack.c.l.b16 %v1824
    %v4348 = vunpack.c.h.b16 %v1824
    %v4349 = vunpack.c.l.b16 %v1825
    %v4350 = vunpack.c.h.b16 %v1825
    %v4351 = vunpack.c.l.b16 %v1826
    %v4352 = vunpack.c.h.b16 %v1826
    %v4353 = vunpack.c.l.b16 %v1827
    %v4354 = vunpack.c.h.b16 %v1827
    %v4355 = vunpack.c.l.b16 %v1828
    %v4356 = vunpack.c.h.b16 %v1828
    %v4357 = vunpack.c.l.b16 %v1829
    %v4358 = vunpack.c.h.b16 %v1829
    %v4359 = vunpack.c.l.b16 %v1830
    %v4360 = vunpack.c.h.b16 %v1830
    %v4361 = vunpack.c.l.b16 %v1831
    %v4362 = vunpack.c.h.b16 %v1831
    %v4363 = vunpack.c.l.b16 %v1832
    %v4364 = vunpack.c.h.b16 %v1832
    %v4365 = vunpack.c.l.b16 %v1833
    %v4366 = vunpack.c.h.b16 %v1833
    %v4367 = vunpack.c.l.b16 %v1834
    %v4368 = vunpack.c.h.b16 %v1834
    %v4369 = vunpack.c.l.b16 %v1835
    %v4370 = vunpack.c.h.b16 %v1835
    %v4371 = vunpack.c.l.b16 %v1836
    %v4372 = vunpack.c.h.b16 %v1836
    %v4373 = vunpack.c.l.b16 %v1837
    %v4374 = vunpack.c.h.b16 %v1837
    %v4375 = vunpack.c.l.b16 %v1838
    %v4376 = vunpack.c.h.b16 %v1838
    %v4377 = vunpack.c.l.b16 %v1839
    %v4378 = vunpack.c.h.b16 %v1839
    %v4379 = vunpack.c.l.b16 %v1840
    %v4380 = vunpack.c.h.b16 %v1840
    %v4381 = vunpack.c.l.b16 %v1841
    %v4382 = vunpack.c.h.b16 %v1841
    %v4383 = vunpack.c.l.b16 %v1842
    %v4384 = vunpack.c.h.b16 %v1842
    %v4385 = vunpack.c.l.b16 %v1843
    %v4386 = vunpack.c.h.b16 %v1843
    %v4387 = vunpack.c.l.b16 %v1844
    %v4388 = vunpack.c.h.b16 %v1844
    %v4389 = vunpack.c.l.b16 %v1845
    %v4390 = vunpack.c.h.b16 %v1845
    %v4391 = vunpack.c.l.b16 %v1846
    %v4392 = vunpack.c.h.b16 %v1846
    %v4393 = vunpack.c.l.b16 %v1847
    %v4394 = vunpack.c.h.b16 %v1847
    %v4395 = vunpack.c.l.b16 %v1848
    %v4396 = vunpack.c.h.b16 %v1848
    %v4397 = vunpack.c.l.b16 %v1849
    %v4398 = vunpack.c.h.b16 %v1849
    %v4399 = vunpack.c.l.b16 %v1850
    %v4400 = vunpack.c.h.b16 %v1850
    %v4401 = vunpack.c.l.b16 %v1851
    %v4402 = vunpack.c.h.b16 %v1851
    %v4403 = vunpack.c.l.b16 %v1852
    %v4404 = vunpack.c.h.b16 %v1852
    %v4405 = vunpack.c.l.b16 %v1853
    %v4406 = vunpack.c.h.b16 %v1853
    %v4407 = vunpack.c.l.b16 %v1854
    %v4408 = vunpack.c.h.b16 %v1854
    %v4409 = vunpack.c.l.b16 %v1855
    %v4410 = vunpack.c.h.b16 %v1855
    %v4411 = vunpack.c.l.b16 %v1856
    %v4412 = vunpack.c.h.b16 %v1856
    %v4413 = vunpack.c.l.b16 %v1857
    %v4414 = vunpack.c.h.b16 %v1857
    %v4415 = vunpack.c.l.b16 %v1858
    %v4416 = vunpack.c.h.b16 %v1858
    %v4417 = vunpack.c.l.b16 %v1859
    %v4418 = vunpack.c.h.b16 %v1859
    %v4419 = vunpack.c.l.b16 %v1860
    %v4420 = vunpack.c.h.b16 %v1860
    %v4421 = vunpack.c.l.b16 %v1861
    %v4422 = vunpack.c.h.b16 %v1861
    %v4423 = vunpack.c.l.b16 %v1862
    %v4424 = vunpack.c.h.b16 %v1862
    %v4425 = vunpack.c.l.b16 %v1863
    %v4426 = vunpack.c.h.b16 %v1863
    %v4427 = vunpack.c.l.b16 %v1864
    %v4428 = vunpack.c.h.b16 %v1864
    %v4429 = vunpack.c.l.b16 %v1865
    %v4430 = vunpack.c.h.b16 %v1865
    %v4431 = vunpack.c.l.b16 %v1866
    %v4432 = vunpack.c.h.b16 %v1866
    %v4433 = vunpack.c.l.b16 %v1867
    %v4434 = vunpack.c.h.b16 %v1867
    %v4435 = vunpack.c.l.b16 %v1868
    %v4436 = vunpack.c.h.b16 %v1868
    %v4437 = vunpack.c.l.b16 %v1869
    %v4438 = vunpack.c.h.b16 %v1869
    %v4439 = vunpack.c.l.b16 %v1870
    %v4440 = vunpack.c.h.b16 %v1870
    %v4441 = vunpack.c.l.b16 %v1871
    %v4442 = vunpack.c.h.b16 %v1871
    %v4443 = vunpack.c.l.b16 %v1872
    %v4444 = vunpack.c.h.b16 %v1872
    %v4445 = vunpack.c.l.b16 %v1873
    %v4446 = vunpack.c.h.b16 %v1873
    %v4447 = vunpack.c.l.b16 %v1874
    %v4448 = vunpack.c.h.b16 %v1874
    %v4449 = vunpack.c.l.b16 %v1875
    %v4450 = vunpack.c.h.b16 %v1875
    %v4451 = vunpack.c.l.b16 %v1876
    %v4452 = vunpack.c.h.b16 %v1876
    %v4453 = vunpack.c.l.b16 %v1877
    %v4454 = vunpack.c.h.b16 %v1877
    %v4455 = vunpack.c.l.b16 %v1878
    %v4456 = vunpack.c.h.b16 %v1878
    %v4457 = vunpack.c.l.b16 %v1879
    %v4458 = vunpack.c.h.b16 %v1879
    %v4459 = vunpack.c.l.b16 %v1880
    %v4460 = vunpack.c.h.b16 %v1880
    %v4461 = vunpack.c.l.b16 %v1881
    %v4462 = vunpack.c.h.b16 %v1881
    %v4463 = vunpack.c.l.b16 %v1882
    %v4464 = vunpack.c.h.b16 %v1882
    %v4465 = vunpack.c.l.b16 %v1883
    %v4466 = vunpack.c.h.b16 %v1883
    %v4467 = vunpack.c.l.b16 %v1884
    %v4468 = vunpack.c.h.b16 %v1884
    %v4469 = vunpack.c.l.b16 %v1885
    %v4470 = vunpack.c.h.b16 %v1885
    %v4471 = vunpack.c.l.b16 %v1886
    %v4472 = vunpack.c.h.b16 %v1886
    %v4473 = vunpack.c.l.b16 %v1887
    %v4474 = vunpack.c.h.b16 %v1887
    %v4475 = vunpack.c.l.b16 %v1888
    %v4476 = vunpack.c.h.b16 %v1888
    %v4477 = vunpack.c.l.b16 %v1889
    %v4478 = vunpack.c.h.b16 %v1889
    %v4479 = vunpack.c.l.b16 %v1890
    %v4480 = vunpack.c.h.b16 %v1890
    %v4481 = vunpack.c.l.b16 %v1891
    %v4482 = vunpack.c.h.b16 %v1891
    %v4483 = vunpack.c.l.b16 %v1892
    %v4484 = vunpack.c.h.b16 %v1892
    %v4485 = vunpack.c.l.b16 %v1893
    %v4486 = vunpack.c.h.b16 %v1893
    %v4487 = vunpack.c.l.b16 %v1894
    %v4488 = vunpack.c.h.b16 %v1894
    %v4489 = vunpack.c.l.b16 %v1895
    %v4490 = vunpack.c.h.b16 %v1895
    %v4491 = vunpack.c.l.b16 %v1896
    %v4492 = vunpack.c.h.b16 %v1896
    %v4493 = vunpack.c.l.b16 %v1897
    %v4494 = vunpack.c.h.b16 %v1897
    %v4495 = vunpack.c.l.b16 %v1898
    %v4496 = vunpack.c.h.b16 %v1898
    %v4497 = vunpack.c.l.b16 %v1899
    %v4498 = vunpack.c.h.b16 %v1899
    %v4499 = vunpack.c.l.b16 %v1900
    %v4500 = vunpack.c.h.b16 %v1900
    %v4501 = vunpack.c.l.b16 %v1901
    %v4502 = vunpack.c.h.b16 %v1901
    %v4503 = vunpack.c.l.b16 %v1902
    %v4504 = vunpack.c.h.b16 %v1902
    %v4505 = vunpack.c.l.b16 %v1903
    %v4506 = vunpack.c.h.b16 %v1903
    %v4507 = vunpack.c.l.b16 %v1904
    %v4508 = vunpack.c.h.b16 %v1904
    %v4509 = vunpack.c.l.b16 %v1905
    %v4510 = vunpack.c.h.b16 %v1905
    %v4511 = vunpack.c.l.b16 %v1906
    %v4512 = vunpack.c.h.b16 %v1906
    %v4513 = vunpack.c.l.b16 %v1907
    %v4514 = vunpack.c.h.b16 %v1907
    %v4515 = vunpack.c.l.b16 %v1908
    %v4516 = vunpack.c.h.b16 %v1908
    %v4517 = vunpack.c.l.b16 %v1909
    %v4518 = vunpack.c.h.b16 %v1909
    %v4519 = vunpack.c.l.b16 %v1910
    %v4520 = vunpack.c.h.b16 %v1910
    %v4521 = vunpack.c.l.b16 %v1911
    %v4522 = vunpack.c.h.b16 %v1911
    %v4523 = vunpack.c.l.b16 %v1912
    %v4524 = vunpack.c.h.b16 %v1912
    %v4525 = vunpack.c.l.b16 %v1913
    %v4526 = vunpack.c.h.b16 %v1913
    %v4527 = vunpack.c.l.b16 %v1914
    %v4528 = vunpack.c.h.b16 %v1914
    %v4529 = vunpack.c.l.b16 %v1915
    %v4530 = vunpack.c.h.b16 %v1915
    %v4531 = vunpack.c.l.b16 %v1916
    %v4532 = vunpack.c.h.b16 %v1916
    %v4533 = vunpack.c.l.b16 %v1917
    %v4534 = vunpack.c.h.b16 %v1917
    %v4535 = vunpack.c.l.b16 %v1918
    %v4536 = vunpack.c.h.b16 %v1918
    %v4537 = vunpack.c.l.b16 %v1919
    %v4538 = vunpack.c.h.b16 %v1919
    %v4539 = vunpack.c.l.b16 %v1920
    %v4540 = vunpack.c.h.b16 %v1920
    %v4541 = vunpack.c.l.b16 %v1921
    %v4542 = vunpack.c.h.b16 %v1921
    %v4543 = vunpack.c.l.b16 %v1922
    %v4544 = vunpack.c.h.b16 %v1922
    %v4545 = vunpack.c.l.b16 %v1923
    %v4546 = vunpack.c.h.b16 %v1923
    %v4547 = vunpack.c.l.b16 %v1924
    %v4548 = vunpack.c.h.b16 %v1924
    %v4549 = vunpack.c.l.b16 %v1925
    %v4550 = vunpack.c.h.b16 %v1925
    %v4551 = vunpack.c.l.b16 %v1926
    %v4552 = vunpack.c.h.b16 %v1926
    %v4553 = vunpack.c.l.b16 %v1927
    %v4554 = vunpack.c.h.b16 %v1927
    %v4555 = vunpack.c.l.b16 %v1928
    %v4556 = vunpack.c.h.b16 %v1928
    %v4557 = vunpack.c.l.b16 %v1929
    %v4558 = vunpack.c.h.b16 %v1929
    %v4559 = vunpack.c.l.b16 %v1930
    %v4560 = vunpack.c.h.b16 %v1930
    %v4561 = vunpack.c.l.b16 %v1931
    %v4562 = vunpack.c.h.b16 %v1931
    %v4563 = vunpack.c.l.b16 %v1932
    %v4564 = vunpack.c.h.b16 %v1932
    %v4565 = vunpack.c.l.b16 %v1933
    %v4566 = vunpack.c.h.b16 %v1933
    %v4567 = vunpack.c.l.b16 %v1934
    %v4568 = vunpack.c.h.b16 %v1934
    %v4569 = vunpack.c.l.b16 %v1935
    %v4570 = vunpack.c.h.b16 %v1935
    %v4571 = vunpack.c.l.b16 %v1936
    %v4572 = vunpack.c.h.b16 %v1936
    %v4573 = vunpack.c.l.b16 %v1937
    %v4574 = vunpack.c.h.b16 %v1937
    %v4575 = vunpack.c.l.b16 %v1938
    %v4576 = vunpack.c.h.b16 %v1938
    %v4577 = vunpack.c.l.b16 %v1939
    %v4578 = vunpack.c.h.b16 %v1939
    %v4579 = vunpack.c.l.b16 %v1940
    %v4580 = vunpack.c.h.b16 %v1940
    %v4581 = vunpack.c.l.b16 %v1941
    %v4582 = vunpack.c.h.b16 %v1941
    %v4583 = vunpack.c.l.b16 %v1942
    %v4584 = vunpack.c.h.b16 %v1942
    %v4585 = vunpack.c.l.b16 %v1943
    %v4586 = vunpack.c.h.b16 %v1943
    %v4587 = vunpack.c.l.b16 %v1944
    %v4588 = vunpack.c.h.b16 %v1944
    %v4589 = vunpack.c.l.b16 %v1945
    %v4590 = vunpack.c.h.b16 %v1945
    %v4591 = vunpack.c.l.b16 %v1946
    %v4592 = vunpack.c.h.b16 %v1946
    %v4593 = vunpack.c.l.b16 %v1947
    %v4594 = vunpack.c.h.b16 %v1947
    %v4595 = vunpack.c.l.b16 %v1948
    %v4596 = vunpack.c.h.b16 %v1948
    %v4597 = vunpack.c.l.b16 %v1949
    %v4598 = vunpack.c.h.b16 %v1949
    %v4599 = vunpack.c.l.b16 %v1950
    %v4600 = vunpack.c.h.b16 %v1950
    %v4601 = vunpack.c.l.b16 %v1951
    %v4602 = vunpack.c.h.b16 %v1951
    %v4603 = vunpack.c.l.b16 %v1952
    %v4604 = vunpack.c.h.b16 %v1952
    %v4605 = vunpack.c.l.b16 %v1953
    %v4606 = vunpack.c.h.b16 %v1953
    %v4607 = vunpack.c.l.b16 %v1954
    %v4608 = vunpack.c.h.b16 %v1954
    %v4609 = vunpack.c.l.b16 %v1955
    %v4610 = vunpack.c.h.b16 %v1955
    %v4611 = vunpack.c.l.b16 %v1956
    %v4612 = vunpack.c.h.b16 %v1956
    %v4613 = vunpack.c.l.b16 %v1957
    %v4614 = vunpack.c.h.b16 %v1957
    %v4615 = vunpack.c.l.b16 %v1958
    %v4616 = vunpack.c.h.b16 %v1958
    %v4617 = vunpack.c.l.b16 %v1959
    %v4618 = vunpack.c.h.b16 %v1959
    %v4619 = vunpack.c.l.b16 %v1960
    %v4620 = vunpack.c.h.b16 %v1960
    %v4621 = vunpack.c.l.b16 %v1961
    %v4622 = vunpack.c.h.b16 %v1961
    %v4623 = vunpack.c.l.b16 %v1962
    %v4624 = vunpack.c.h.b16 %v1962
    %v4625 = vunpack.c.l.b16 %v1963
    %v4626 = vunpack.c.h.b16 %v1963
    %v4627 = vunpack.c.l.b16 %v1964
    %v4628 = vunpack.c.h.b16 %v1964
    %v4629 = vunpack.c.l.b16 %v1965
    %v4630 = vunpack.c.h.b16 %v1965
    %v4631 = vunpack.c.l.b16 %v1966
    %v4632 = vunpack.c.h.b16 %v1966
    %v4633 = vunpack.c.l.b16 %v1967
    %v4634 = vunpack.c.h.b16 %v1967
    %v4635 = vunpack.c.l.b16 %v1968
    %v4636 = vunpack.c.h.b16 %v1968
    %v4637 = vunpack.c.l.b16 %v1969
    %v4638 = vunpack.c.h.b16 %v1969
    %v4639 = vunpack.c.l.b16 %v1970
    %v4640 = vunpack.c.h.b16 %v1970
    %v4641 = vunpack.c.l.b16 %v1971
    %v4642 = vunpack.c.h.b16 %v1971
    %v4643 = vunpack.c.l.b16 %v1972
    %v4644 = vunpack.c.h.b16 %v1972
    %v4645 = vunpack.c.l.b16 %v1973
    %v4646 = vunpack.c.h.b16 %v1973
    %v4647 = vunpack.c.l.b16 %v1974
    %v4648 = vunpack.c.h.b16 %v1974
    %v4649 = vunpack.c.l.b16 %v1975
    %v4650 = vunpack.c.h.b16 %v1975
    %v4651 = vunpack.c.l.b16 %v1976
    %v4652 = vunpack.c.h.b16 %v1976
    %v4653 = vunpack.c.l.b16 %v1977
    %v4654 = vunpack.c.h.b16 %v1977
    %v4655 = vunpack.c.l.b16 %v1978
    %v4656 = vunpack.c.h.b16 %v1978
    %v4657 = vunpack.c.l.b16 %v1979
    %v4658 = vunpack.c.h.b16 %v1979
    %v4659 = vunpack.c.l.b16 %v1980
    %v4660 = vunpack.c.h.b16 %v1980
    %v4661 = vunpack.c.l.b16 %v1981
    %v4662 = vunpack.c.h.b16 %v1981
    %v4663 = vunpack.c.l.b16 %v1982
    %v4664 = vunpack.c.h.b16 %v1982
    %v4665 = vunpack.c.l.b16 %v1983
    %v4666 = vunpack.c.h.b16 %v1983
    %v4667 = vunpack.c.l.b16 %v1984
    %v4668 = vunpack.c.h.b16 %v1984
    %v4669 = vunpack.c.l.b16 %v1985
    %v4670 = vunpack.c.h.b16 %v1985
    %v4671 = vunpack.c.l.b16 %v1986
    %v4672 = vunpack.c.h.b16 %v1986
    %v4673 = vunpack.c.l.b16 %v1987
    %v4674 = vunpack.c.h.b16 %v1987
    %v4675 = vunpack.c.l.b16 %v1988
    %v4676 = vunpack.c.h.b16 %v1988
    %v4677 = vunpack.c.l.b16 %v1989
    %v4678 = vunpack.c.h.b16 %v1989
    %v4679 = vunpack.c.l.b16 %v1990
    %v4680 = vunpack.c.h.b16 %v1990
    %v4681 = vunpack.c.l.b16 %v1991
    %v4682 = vunpack.c.h.b16 %v1991
    %v4683 = vunpack.c.l.b16 %v1992
    %v4684 = vunpack.c.h.b16 %v1992
    %v4685 = vunpack.c.l.b16 %v1993
    %v4686 = vunpack.c.h.b16 %v1993
    %v4687 = vunpack.c.l.b16 %v1994
    %v4688 = vunpack.c.h.b16 %v1994
    %v4689 = vunpack.c.l.b16 %v1995
    %v4690 = vunpack.c.h.b16 %v1995
    %v4691 = vunpack.c.l.b16 %v1996
    %v4692 = vunpack.c.h.b16 %v1996
    %v4693 = vunpack.c.l.b16 %v1997
    %v4694 = vunpack.c.h.b16 %v1997
    %v4695 = vunpack.c.l.b16 %v1998
    %v4696 = vunpack.c.h.b16 %v1998
    %v4697 = vunpack.c.l.b16 %v1999
    %v4698 = vunpack.c.h.b16 %v1999
    %v4699 = vunpack.c.l.b16 %v2000
    %v4700 = vunpack.c.h.b16 %v2000
    %v4701 = vunpack.c.l.b16 %v2001
    %v4702 = vunpack.c.h.b16 %v2001
    %v4703 = vunpack.c.l.b16 %v2002
    %v4704 = vunpack.c.h.b16 %v2002
    %v4705 = vunpack.c.l.b16 %v2003
    %v4706 = vunpack.c.h.b16 %v2003
    %v4707 = vunpack.c.l.b16 %v2004
    %v4708 = vunpack.c.h.b16 %v2004
    %v4709 = vunpack.c.l.b16 %v2005
    %v4710 = vunpack.c.h.b16 %v2005
    %v4711 = vunpack.c.l.b16 %v2006
    %v4712 = vunpack.c.h.b16 %v2006
    %v4713 = vunpack.c.l.b16 %v2007
    %v4714 = vunpack.c.h.b16 %v2007
    %v4715 = vunpack.c.l.b16 %v2008
    %v4716 = vunpack.c.h.b16 %v2008
    %v4717 = vunpack.c.l.b16 %v2009
    %v4718 = vunpack.c.h.b16 %v2009
    %v4719 = vunpack.c.l.b16 %v2010
    %v4720 = vunpack.c.h.b16 %v2010
    %v4721 = vunpack.c.l.b16 %v2011
    %v4722 = vunpack.c.h.b16 %v2011
    %v4723 = vunpack.c.l.b16 %v2012
    %v4724 = vunpack.c.h.b16 %v2012
    %v4725 = vunpack.c.l.b16 %v2013
    %v4726 = vunpack.c.h.b16 %v2013
    %v4727 = vunpack.c.l.b16 %v2014
    %v4728 = vunpack.c.h.b16 %v2014
    %v4729 = vunpack.c.l.b16 %v2015
    %v4730 = vunpack.c.h.b16 %v2015
    %v4731 = vunpack.c.l.b16 %v2016
    %v4732 = vunpack.c.h.b16 %v2016
    %v4733 = vunpack.c.l.b16 %v2017
    %v4734 = vunpack.c.h.b16 %v2017
    %v4735 = vunpack.c.l.b16 %v2018
    %v4736 = vunpack.c.h.b16 %v2018
    %v4737 = vunpack.c.l.b16 %v2019
    %v4738 = vunpack.c.h.b16 %v2019
    %v4739 = vunpack.c.l.b16 %v2020
    %v4740 = vunpack.c.h.b16 %v2020
    %v4741 = vunpack.c.l.b16 %v2021
    %v4742 = vunpack.c.h.b16 %v2021
    %v4743 = vunpack.c.l.b16 %v2022
    %v4744 = vunpack.c.h.b16 %v2022
    %v4745 = vunpack.c.l.b16 %v2023
    %v4746 = vunpack.c.h.b16 %v2023
    %v4747 = vunpack.c.l.b16 %v2024
    %v4748 = vunpack.c.h.b16 %v2024
    %v4749 = vunpack.c.l.b16 %v2025
    %v4750 = vunpack.c.h.b16 %v2025
    %v4751 = vunpack.c.l.b16 %v2026
    %v4752 = vunpack.c.h.b16 %v2026
    %v4753 = vunpack.c.l.b16 %v2027
    %v4754 = vunpack.c.h.b16 %v2027
    %v4755 = vunpack.c.l.b16 %v2028
    %v4756 = vunpack.c.h.b16 %v2028
    %v4757 = vunpack.c.l.b16 %v2029
    %v4758 = vunpack.c.h.b16 %v2029
    %v4759 = vunpack.c.l.b16 %v2030
    %v4760 = vunpack.c.h.b16 %v2030
    %v4761 = vunpack.c.l.b16 %v2031
    %v4762 = vunpack.c.h.b16 %v2031
    %v4763 = vunpack.c.l.b16 %v2032
    %v4764 = vunpack.c.h.b16 %v2032
    %v4765 = vunpack.c.l.b16 %v2033
    %v4766 = vunpack.c.h.b16 %v2033
    %v4767 = vunpack.c.l.b16 %v2034
    %v4768 = vunpack.c.h.b16 %v2034
    %v4769 = vunpack.c.l.b16 %v2035
    %v4770 = vunpack.c.h.b16 %v2035
    %v4771 = vunpack.c.l.b16 %v2036
    %v4772 = vunpack.c.h.b16 %v2036
    %v4773 = vunpack.c.l.b16 %v2037
    %v4774 = vunpack.c.h.b16 %v2037
    %v4775 = vunpack.c.l.b16 %v2038
    %v4776 = vunpack.c.h.b16 %v2038
    %v4777 = vunpack.c.l.b16 %v2039
    %v4778 = vunpack.c.h.b16 %v2039
    %v4779 = vunpack.c.l.b16 %v2040
    %v4780 = vunpack.c.h.b16 %v2040
    %v4781 = vunpack.c.l.b16 %v2041
    %v4782 = vunpack.c.h.b16 %v2041
    %v4783 = vunpack.c.l.b16 %v2042
    %v4784 = vunpack.c.h.b16 %v2042
    %v4785 = vunpack.c.l.b16 %v2043
    %v4786 = vunpack.c.h.b16 %v2043
    %v4787 = vunpack.c.l.b16 %v2044
    %v4788 = vunpack.c.h.b16 %v2044
    %v4789 = vunpack.c.l.b16 %v2045
    %v4790 = vunpack.c.h.b16 %v2045
    %v4791 = vunpack.c.l.b16 %v2046
    %v4792 = vunpack.c.h.b16 %v2046
    %v4793 = vunpack.c.l.b16 %v2047
    %v4794 = vunpack.c.h.b16 %v2047
    %v4795 = vunpack.c.l.b16 %v2048
    %v4796 = vunpack.c.h.b16 %v2048
    %v4797 = vunpack.c.l.b16 %v2049
    %v4798 = vunpack.c.h.b16 %v2049
    %v4799 = vunpack.c.l.b16 %v2050
    %v4800 = vunpack.c.h.b16 %v2050
    %v4801 = vunpack.c.l.b16 %v2051
    %v4802 = vunpack.c.h.b16 %v2051
    %v4803 = vunpack.c.l.b16 %v2052
    %v4804 = vunpack.c.h.b16 %v2052
    %v4805 = vunpack.c.l.b16 %v2053
    %v4806 = vunpack.c.h.b16 %v2053
    %v4807 = vunpack.c.l.b16 %v2054
    %v4808 = vunpack.c.h.b16 %v2054
    %v4809 = vunpack.c.l.b16 %v2055
    %v4810 = vunpack.c.h.b16 %v2055
    %v4811 = vunpack.c.l.b16 %v2056
    %v4812 = vunpack.c.h.b16 %v2056
    %v4813 = vunpack.c.l.b16 %v2057
    %v4814 = vunpack.c.h.b16 %v2057
    %v4815 = vunpack.c.l.b16 %v2058
    %v4816 = vunpack.c.h.b16 %v2058
    %v4817 = vunpack.c.l.b16 %v2059
    %v4818 = vunpack.c.h.b16 %v2059
    %v4819 = vunpack.c.l.b16 %v2060
    %v4820 = vunpack.c.h.b16 %v2060
    %v4821 = vunpack.c.l.b16 %v2061
    %v4822 = vunpack.c.h.b16 %v2061
    %v4823 = vunpack.c.l.b16 %v2062
    %v4824 = vunpack.c.h.b16 %v2062
    %v4825 = vunpack.c.l.b16 %v2063
    %v4826 = vunpack.c.h.b16 %v2063
    %v4827 = vunpack.c.l.b16 %v2064
    %v4828 = vunpack.c.h.b16 %v2064
    %v4829 = vunpack.c.l.b16 %v2065
    %v4830 = vunpack.c.h.b16 %v2065
    %v4831 = vunpack.c.l.b16 %v2066
    %v4832 = vunpack.c.h.b16 %v2066
    %v4833 = vunpack.c.l.b16 %v2067
    %v4834 = vunpack.c.h.b16 %v2067
    %v4835 = vunpack.c.l.b16 %v2068
    %v4836 = vunpack.c.h.b16 %v2068
    %v4837 = vunpack.c.l.b16 %v2069
    %v4838 = vunpack.c.h.b16 %v2069
    %v4839 = vunpack.c.l.b16 %v2070
    %v4840 = vunpack.c.h.b16 %v2070
    %v4841 = vunpack.c.l.b16 %v2071
    %v4842 = vunpack.c.h.b16 %v2071
    %v4843 = vunpack.c.l.b16 %v2072
    %v4844 = vunpack.c.h.b16 %v2072
    %v4845 = vunpack.c.l.b16 %v2073
    %v4846 = vunpack.c.h.b16 %v2073
    %v4847 = vunpack.c.l.b16 %v2074
    %v4848 = vunpack.c.h.b16 %v2074
    %v4849 = vunpack.c.l.b16 %v2075
    %v4850 = vunpack.c.h.b16 %v2075
    %v4851 = vunpack.c.l.b16 %v2076
    %v4852 = vunpack.c.h.b16 %v2076
    %v4853 = vunpack.c.l.b16 %v2077
    %v4854 = vunpack.c.h.b16 %v2077
    %v4855 = vunpack.c.l.b16 %v2078
    %v4856 = vunpack.c.h.b16 %v2078
    %v4857 = vunpack.c.l.b16 %v2079
    %v4858 = vunpack.c.h.b16 %v2079
    %v4859 = vunpack.c.l.b16 %v2080
    %v4860 = vunpack.c.h.b16 %v2080
    %v4861 = vunpack.c.l.b16 %v2081
    %v4862 = vunpack.c.h.b16 %v2081
    %v4863 = vunpack.c.l.b16 %v2082
    %v4864 = vunpack.c.h.b16 %v2082
    %v4865 = vunpack.c.l.b16 %v2083
    %v4866 = vunpack.c.h.b16 %v2083
    %v4867 = vunpack.c.l.b16 %v2084
    %v4868 = vunpack.c.h.b16 %v2084
    %v4869 = vunpack.c.l.b16 %v2085
    %v4870 = vunpack.c.h.b16 %v2085
    %v4871 = vunpack.c.l.b16 %v2086
    %v4872 = vunpack.c.h.b16 %v2086
    %v4873 = vunpack.c.l.b16 %v2087
    %v4874 = vunpack.c.h.b16 %v2087
    %v4875 = vunpack.c.l.b16 %v2088
    %v4876 = vunpack.c.h.b16 %v2088
    %v4877 = vunpack.c.l.b16 %v2089
    %v4878 = vunpack.c.h.b16 %v2089
    %v4879 = vunpack.c.l.b16 %v2090
    %v4880 = vunpack.c.h.b16 %v2090
    %v4881 = vunpack.c.l.b16 %v2091
    %v4882 = vunpack.c.h.b16 %v2091
    %v4883 = vunpack.c.l.b16 %v2092
    %v4884 = vunpack.c.h.b16 %v2092
    %v4885 = vunpack.c.l.b16 %v2093
    %v4886 = vunpack.c.h.b16 %v2093
    %v4887 = vunpack.c.l.b16 %v2094
    %v4888 = vunpack.c.h.b16 %v2094
    %v4889 = vunpack.c.l.b16 %v2095
    %v4890 = vunpack.c.h.b16 %v2095
    %v4891 = vunpack.c.l.b16 %v2096
    %v4892 = vunpack.c.h.b16 %v2096
    %v4893 = vunpack.c.l.b16 %v2097
    %v4894 = vunpack.c.h.b16 %v2097
    %v4895 = vunpack.c.l.b16 %v2098
    %v4896 = vunpack.c.h.b16 %v2098
    %v4897 = vunpack.c.l.b16 %v2099
    %v4898 = vunpack.c.h.b16 %v2099
    %v4899 = vunpack.c.l.b16 %v2100
    %v4900 = vunpack.c.h.b16 %v2100
    %v4901 = vunpack.c.l.b16 %v2101
    %v4902 = vunpack.c.h.b16 %v2101
    %v4903 = vunpack.c.l.b16 %v2102
    %v4904 = vunpack.c.h.b16 %v2102
    %v4905 = vunpack.c.l.b16 %v2103
    %v4906 = vunpack.c.h.b16 %v2103
    %v4907 = vunpack.c.l.b16 %v2104
    %v4908 = vunpack.c.h.b16 %v2104
    %v4909 = vunpack.c.l.b16 %v2105
    %v4910 = vunpack.c.h.b16 %v2105
    %v4911 = vunpack.c.l.b16 %v2106
    %v4912 = vunpack.c.h.b16 %v2106
    %v4913 = vunpack.c.l.b16 %v2107
    %v4914 = vunpack.c.h.b16 %v2107
    %v4915 = vunpack.c.l.b16 %v2108
    %v4916 = vunpack.c.h.b16 %v2108
    %v4917 = vunpack.c.l.b16 %v2109
    %v4918 = vunpack.c.h.b16 %v2109
    %v4919 = vunpack.c.l.b16 %v2110
    %v4920 = vunpack.c.h.b16 %v2110
    %v4921 = vunpack.c.l.b16 %v2111
    %v4922 = vunpack.c.h.b16 %v2111
    %v4923 = vunpack.c.l.b16 %v2112
    %v4924 = vunpack.c.h.b16 %v2112
    %v4925 = vunpack.c.l.b16 %v2113
    %v4926 = vunpack.c.h.b16 %v2113
    %v4927 = vunpack.c.l.b16 %v2114
    %v4928 = vunpack.c.h.b16 %v2114
    %v4929 = vunpack.c.l.b16 %v2115
    %v4930 = vunpack.c.h.b16 %v2115
    %v4931 = vunpack.c.l.b16 %v2116
    %v4932 = vunpack.c.h.b16 %v2116
    %v4933 = vunpack.c.l.b16 %v2117
    %v4934 = vunpack.c.h.b16 %v2117
    %v4935 = vunpack.c.l.b16 %v2118
    %v4936 = vunpack.c.h.b16 %v2118
    %v4937 = vunpack.c.l.b16 %v2119
    %v4938 = vunpack.c.h.b16 %v2119
    %v4939 = vunpack.c.l.b16 %v2120
    %v4940 = vunpack.c.h.b16 %v2120
    %v4941 = vunpack.c.l.b16 %v2121
    %v4942 = vunpack.c.h.b16 %v2121
    %v4943 = vunpack.c.l.b16 %v2122
    %v4944 = vunpack.c.h.b16 %v2122
    %v4945 = vunpack.c.l.b16 %v2123
    %v4946 = vunpack.c.h.b16 %v2123
    %v4947 = vunpack.c.l.b16 %v2124
    %v4948 = vunpack.c.h.b16 %v2124
    %v4949 = vunpack.c.l.b16 %v2125
    %v4950 = vunpack.c.h.b16 %v2125
    %v4951 = vunpack.c.l.b16 %v2126
    %v4952 = vunpack.c.h.b16 %v2126
    %v4953 = vunpack.c.l.b16 %v2127
    %v4954 = vunpack.c.h.b16 %v2127
    %v4955 = vunpack.c.l.b16 %v2128
    %v4956 = vunpack.c.h.b16 %v2128
    %v4957 = vunpack.c.l.b16 %v2129
    %v4958 = vunpack.c.h.b16 %v2129
    %v4959 = vunpack.c.l.b16 %v2130
    %v4960 = vunpack.c.h.b16 %v2130
    %v4961 = vunpack.c.l.b16 %v2131
    %v4962 = vunpack.c.h.b16 %v2131
    %v4963 = vunpack.c.l.b16 %v2132
    %v4964 = vunpack.c.h.b16 %v2132
    %v4965 = vunpack.c.l.b16 %v2133
    %v4966 = vunpack.c.h.b16 %v2133
    %v4967 = vunpack.c.l.b16 %v2134
    %v4968 = vunpack.c.h.b16 %v2134
    %v4969 = vunpack.c.l.b16 %v2135
    %v4970 = vunpack.c.h.b16 %v2135
    %v4971 = vunpack.c.l.b16 %v2136
    %v4972 = vunpack.c.h.b16 %v2136
    %v4973 = vunpack.c.l.b16 %v2137
    %v4974 = vunpack.c.h.b16 %v2137
    %v4975 = vunpack.c.l.b16 %v2138
    %v4976 = vunpack.c.h.b16 %v2138
    %v4977 = vunpack.c.l.b16 %v2139
    %v4978 = vunpack.c.h.b16 %v2139
    %v4979 = vunpack.c.l.b16 %v2140
    %v4980 = vunpack.c.h.b16 %v2140
    %v4981 = vunpack.c.l.b16 %v2141
    %v4982 = vunpack.c.h.b16 %v2141
    %v4983 = vunpack.c.l.b16 %v2142
    %v4984 = vunpack.c.h.b16 %v2142
    %v4985 = vunpack.c.l.b16 %v2143
    %v4986 = vunpack.c.h.b16 %v2143
    %v4987 = vunpack.c.l.b16 %v2144
    %v4988 = vunpack.c.h.b16 %v2144
    %v4989 = vunpack.c.l.b16 %v2145
    %v4990 = vunpack.c.h.b16 %v2145
    %v4991 = vunpack.c.l.b16 %v2146
    %v4992 = vunpack.c.h.b16 %v2146
    %v4993 = vunpack.c.l.b16 %v2147
    %v4994 = vunpack.c.h.b16 %v2147
    %v4995 = vunpack.c.l.b16 %v2148
    %v4996 = vunpack.c.h.b16 %v2148
    %v4997 = vunpack.c.l.b16 %v2149
    %v4998 = vunpack.c.h.b16 %v2149
    %v4999 = vunpack.c.l.b16 %v2150
    %v5000 = vunpack.c.h.b16 %v2150
    %v5001 = vunpack.c.l.b16 %v2151
    %v5002 = vunpack.c.h.b16 %v2151
    %v5003 = vunpack.c.l.b16 %v2152
    %v5004 = vunpack.c.h.b16 %v2152
    %v5005 = vunpack.c.l.b16 %v2153
    %v5006 = vunpack.c.h.b16 %v2153
    %v5007 = vunpack.c.l.b16 %v2154
    %v5008 = vunpack.c.h.b16 %v2154
    %v5009 = vunpack.c.l.b16 %v2155
    %v5010 = vunpack.c.h.b16 %v2155
    %v5011 = vunpack.c.l.b16 %v2156
    %v5012 = vunpack.c.h.b16 %v2156
    %v5013 = vunpack.c.l.b16 %v2157
    %v5014 = vunpack.c.h.b16 %v2157
    %v5015 = vunpack.c.l.b16 %v2158
    %v5016 = vunpack.c.h.b16 %v2158
    %v5017 = vunpack.c.l.b16 %v2159
    %v5018 = vunpack.c.h.b16 %v2159
    %v5019 = vunpack.c.l.b16 %v2160
    %v5020 = vunpack.c.h.b16 %v2160
    %v5021 = vunpack.c.l.b16 %v2161
    %v5022 = vunpack.c.h.b16 %v2161
    %v5023 = vunpack.c.l.b16 %v2162
    %v5024 = vunpack.c.h.b16 %v2162
    %v5025 = vunpack.c.l.b16 %v2163
    %v5026 = vunpack.c.h.b16 %v2163
    %v5027 = vunpack.c.l.b16 %v2164
    %v5028 = vunpack.c.h.b16 %v2164
    %v5029 = vunpack.c.l.b16 %v2165
    %v5030 = vunpack.c.h.b16 %v2165
    %v5031 = vunpack.c.l.b16 %v2166
    %v5032 = vunpack.c.h.b16 %v2166
    %v5033 = vunpack.c.l.b16 %v2167
    %v5034 = vunpack.c.h.b16 %v2167
    %v5035 = vunpack.c.l.b16 %v2168
    %v5036 = vunpack.c.h.b16 %v2168
    %v5037 = vunpack.c.l.b16 %v2169
    %v5038 = vunpack.c.h.b16 %v2169
    %v5039 = vunpack.c.l.b16 %v2170
    %v5040 = vunpack.c.h.b16 %v2170
    %v5041 = vunpack.c.l.b16 %v2171
    %v5042 = vunpack.c.h.b16 %v2171
    %v5043 = vunpack.c.l.b16 %v2172
    %v5044 = vunpack.c.h.b16 %v2172
    %v5045 = vunpack.c.l.b16 %v2173
    %v5046 = vunpack.c.h.b16 %v2173
    %v5047 = vunpack.c.l.b16 %v2174
    %v5048 = vunpack.c.h.b16 %v2174
    %v5049 = vunpack.c.l.b16 %v2175
    %v5050 = vunpack.c.h.b16 %v2175
    %v5051 = vunpack.c.l.b16 %v2176
    %v5052 = vunpack.c.h.b16 %v2176
    %v5053 = vunpack.c.l.b16 %v2177
    %v5054 = vunpack.c.h.b16 %v2177
    %v5055 = vunpack.c.l.b16 %v2178
    %v5056 = vunpack.c.h.b16 %v2178
    %v5057 = vunpack.c.l.b16 %v2179
    %v5058 = vunpack.c.h.b16 %v2179
    %v5059 = vunpack.c.l.b16 %v2180
    %v5060 = vunpack.c.h.b16 %v2180
    %v5061 = vunpack.c.l.b16 %v2181
    %v5062 = vunpack.c.h.b16 %v2181
    %v5063 = vunpack.c.l.b16 %v2182
    %v5064 = vunpack.c.h.b16 %v2182
    %v5065 = vunpack.c.l.b16 %v2183
    %v5066 = vunpack.c.h.b16 %v2183
    %v5067 = vunpack.c.l.b16 %v2184
    %v5068 = vunpack.c.h.b16 %v2184
    %v5069 = vunpack.c.l.b16 %v2185
    %v5070 = vunpack.c.h.b16 %v2185
    %v5071 = vunpack.c.l.b16 %v2186
    %v5072 = vunpack.c.h.b16 %v2186
    %v5073 = vunpack.c.l.b16 %v2187
    %v5074 = vunpack.c.h.b16 %v2187
    %v5075 = vunpack.c.l.b16 %v2188
    %v5076 = vunpack.c.h.b16 %v2188
    %v5077 = vunpack.c.l.b16 %v2189
    %v5078 = vunpack.c.h.b16 %v2189
    %v5079 = vunpack.c.l.b16 %v2190
    %v5080 = vunpack.c.h.b16 %v2190
    %v5081 = vunpack.c.l.b16 %v2191
    %v5082 = vunpack.c.h.b16 %v2191
    %v5083 = vunpack.c.l.b16 %v2192
    %v5084 = vunpack.c.h.b16 %v2192
    %v5085 = vunpack.c.l.b16 %v2193
    %v5086 = vunpack.c.h.b16 %v2193
    %v5087 = vunpack.c.l.b16 %v2194
    %v5088 = vunpack.c.h.b16 %v2194
    %v5089 = vunpack.c.l.b16 %v2195
    %v5090 = vunpack.c.h.b16 %v2195
    %v5091 = vunpack.c.l.b16 %v2196
    %v5092 = vunpack.c.h.b16 %v2196
    %v5093 = vunpack.c.l.b16 %v2197
    %v5094 = vunpack.c.h.b16 %v2197
    %v5095 = vunpack.c.l.b16 %v2198
    %v5096 = vunpack.c.h.b16 %v2198
    %v5097 = vunpack.c.l.b16 %v2199
    %v5098 = vunpack.c.h.b16 %v2199
    %v5099 = vunpack.c.l.b16 %v2200
    %v5100 = vunpack.c.h.b16 %v2200
    %v5101 = vunpack.c.l.b16 %v2201
    %v5102 = vunpack.c.h.b16 %v2201
    %v5103 = vunpack.c.l.b16 %v2202
    %v5104 = vunpack.c.h.b16 %v2202
    %v5105 = vunpack.c.l.b16 %v2203
    %v5106 = vunpack.c.h.b16 %v2203
    %v5107 = vunpack.c.l.b16 %v2204
    %v5108 = vunpack.c.h.b16 %v2204
    %v5109 = vunpack.c.l.b16 %v2205
    %v5110 = vunpack.c.h.b16 %v2205
    %v5111 = vunpack.c.l.b16 %v2206
    %v5112 = vunpack.c.h.b16 %v2206
    %v5113 = vunpack.c.l.b16 %v2207
    %v5114 = vunpack.c.h.b16 %v2207
    %v5115 = vunpack.c.l.b16 %v2208
    %v5116 = vunpack.c.h.b16 %v2208
    %v5117 = vunpack.c.l.b16 %v2209
    %v5118 = vunpack.c.h.b16 %v2209
    %v5119 = vunpack.c.l.b16 %v2210
    %v5120 = vunpack.c.h.b16 %v2210
    %v5121 = vunpack.c.l.b16 %v2211
    %v5122 = vunpack.c.h.b16 %v2211
    %v5123 = vunpack.c.l.b16 %v2212
    %v5124 = vunpack.c.h.b16 %v2212
    %v5125 = vunpack.c.l.b16 %v2213
    %v5126 = vunpack.c.h.b16 %v2213
    %v5127 = vunpack.c.l.b16 %v2214
    %v5128 = vunpack.c.h.b16 %v2214
    %v5129 = vunpack.c.l.b16 %v2215
    %v5130 = vunpack.c.h.b16 %v2215
    %v5131 = vunpack.c.l.b16 %v2216
    %v5132 = vunpack.c.h.b16 %v2216
    %v5133 = vunpack.c.l.b16 %v2217
    %v5134 = vunpack.c.h.b16 %v2217
    %v5135 = vunpack.c.l.b16 %v2218
    %v5136 = vunpack.c.h.b16 %v2218
    %v5137 = vunpack.c.l.b16 %v2219
    %v5138 = vunpack.c.h.b16 %v2219
    %v5139 = vunpack.c.l.b16 %v2220
    %v5140 = vunpack.c.h.b16 %v2220
    %v5141 = vunpack.c.l.b16 %v2221
    %v5142 = vunpack.c.h.b16 %v2221
    %v5143 = vunpack.c.l.b16 %v2222
    %v5144 = vunpack.c.h.b16 %v2222
    %v5145 = vunpack.c.l.b16 %v2223
    %v5146 = vunpack.c.h.b16 %v2223
    %v5147 = vunpack.c.l.b16 %v2224
    %v5148 = vunpack.c.h.b16 %v2224
    %v5149 = vunpack.c.l.b16 %v2225
    %v5150 = vunpack.c.h.b16 %v2225
    %v5151 = vunpack.c.l.b16 %v2226
    %v5152 = vunpack.c.h.b16 %v2226
    %v5153 = vunpack.c.l.b16 %v2227
    %v5154 = vunpack.c.h.b16 %v2227
    %v5155 = vunpack.c.l.b16 %v2228
    %v5156 = vunpack.c.h.b16 %v2228
    %v5157 = vunpack.c.l.b16 %v2229
    %v5158 = vunpack.c.h.b16 %v2229
    %v5159 = vunpack.c.l.b16 %v2230
    %v5160 = vunpack.c.h.b16 %v2230
    %v5161 = vunpack.c.l.b16 %v2231
    %v5162 = vunpack.c.h.b16 %v2231
    %v5163 = vunpack.c.l.b16 %v2232
    %v5164 = vunpack.c.h.b16 %v2232
    %v5165 = vunpack.c.l.b16 %v2233
    %v5166 = vunpack.c.h.b16 %v2233
    %v5167 = vunpack.c.l.b16 %v2234
    %v5168 = vunpack.c.h.b16 %v2234
    %v5169 = vunpack.c.l.b16 %v2235
    %v5170 = vunpack.c.h.b16 %v2235
    %v5171 = vunpack.c.l.b16 %v2236
    %v5172 = vunpack.c.h.b16 %v2236
    %v5173 = vunpack.c.l.b16 %v2237
    %v5174 = vunpack.c.h.b16 %v2237
    %v5175 = vunpack.c.l.b16 %v2238
    %v5176 = vunpack.c.h.b16 %v2238
    %v5177 = vunpack.c.l.b16 %v2239
    %v5178 = vunpack.c.h.b16 %v2239
    %v5179 = vunpack.c.l.b16 %v2240
    %v5180 = vunpack.c.h.b16 %v2240
    %v5181 = vunpack.c.l.b16 %v2241
    %v5182 = vunpack.c.h.b16 %v2241
    %v5183 = vunpack.c.l.b16 %v2242
    %v5184 = vunpack.c.h.b16 %v2242
    %v5185 = vunpack.c.l.b16 %v2243
    %v5186 = vunpack.c.h.b16 %v2243
    %v5187 = vunpack.c.l.b16 %v2244
    %v5188 = vunpack.c.h.b16 %v2244
    %v5189 = vunpack.c.l.b16 %v2245
    %v5190 = vunpack.c.h.b16 %v2245
    %v5191 = vunpack.c.l.b16 %v2246
    %v5192 = vunpack.c.h.b16 %v2246
    %v5193 = vunpack.c.l.b16 %v2247
    %v5194 = vunpack.c.h.b16 %v2247
    %v5195 = vunpack.c.l.b16 %v2248
    %v5196 = vunpack.c.h.b16 %v2248
    %v5197 = vunpack.c.l.b16 %v2249
    %v5198 = vunpack.c.h.b16 %v2249
    %v5199 = vunpack.c.l.b16 %v2250
    %v5200 = vunpack.c.h.b16 %v2250
    %v5201 = vunpack.c.l.b16 %v2251
    %v5202 = vunpack.c.h.b16 %v2251
    %v5203 = vunpack.c.l.b16 %v2252
    %v5204 = vunpack.c.h.b16 %v2252
    %v5205 = vunpack.c.l.b16 %v2253
    %v5206 = vunpack.c.h.b16 %v2253
    %v5207 = vunpack.c.l.b16 %v2254
    %v5208 = vunpack.c.h.b16 %v2254
    %v5209 = vunpack.c.l.b16 %v2255
    %v5210 = vunpack.c.h.b16 %v2255
    %v5211 = vunpack.c.l.b16 %v2256
    %v5212 = vunpack.c.h.b16 %v2256
    %v5213 = vunpack.c.l.b16 %v2257
    %v5214 = vunpack.c.h.b16 %v2257
    %v5215 = vunpack.c.l.b16 %v2258
    %v5216 = vunpack.c.h.b16 %v2258
    %v5217 = vunpack.c.l.b16 %v2259
    %v5218 = vunpack.c.h.b16 %v2259
    %v5219 = vunpack.c.l.b16 %v2260
    %v5220 = vunpack.c.h.b16 %v2260
    %v5221 = vunpack.c.l.b16 %v2261
    %v5222 = vunpack.c.h.b16 %v2261
    %v5223 = vunpack.c.l.b16 %v2262
    %v5224 = vunpack.c.h.b16 %v2262
    %v5225 = vunpack.c.l.b16 %v2263
    %v5226 = vunpack.c.h.b16 %v2263
    %v5227 = vunpack.c.l.b16 %v2264
    %v5228 = vunpack.c.h.b16 %v2264
    %v5229 = vunpack.c.l.b16 %v2265
    %v5230 = vunpack.c.h.b16 %v2265
    %v5231 = vunpack.c.l.b16 %v2266
    %v5232 = vunpack.c.h.b16 %v2266
    %v5233 = vunpack.c.l.b16 %v2267
    %v5234 = vunpack.c.h.b16 %v2267
    %v5235 = vunpack.c.l.b16 %v2268
    %v5236 = vunpack.c.h.b16 %v2268
    %v5237 = vunpack.c.l.b16 %v2269
    %v5238 = vunpack.c.h.b16 %v2269
    %v5239 = vunpack.c.l.b16 %v2270
    %v5240 = vunpack.c.h.b16 %v2270
    %v5241 = vunpack.c.l.b16 %v2271
    %v5242 = vunpack.c.h.b16 %v2271
    %v5243 = vunpack.c.l.b16 %v2272
    %v5244 = vunpack.c.h.b16 %v2272
    %v5245 = vunpack.c.l.b16 %v2273
    %v5246 = vunpack.c.h.b16 %v2273
    %v5247 = vunpack.c.l.b16 %v2274
    %v5248 = vunpack.c.h.b16 %v2274
    %v5249 = vunpack.c.l.b16 %v2275
    %v5250 = vunpack.c.h.b16 %v2275
    %v5251 = vunpack.c.l.b16 %v2276
    %v5252 = vunpack.c.h.b16 %v2276
    %v5253 = vunpack.c.l.b16 %v2277
    %v5254 = vunpack.c.h.b16 %v2277
    %v5255 = vunpack.c.l.b16 %v2278
    %v5256 = vunpack.c.h.b16 %v2278
    %v5257 = vunpack.c.l.b16 %v2279
    %v5258 = vunpack.c.h.b16 %v2279
    %v5259 = vunpack.c.l.b16 %v2280
    %v5260 = vunpack.c.h.b16 %v2280
    %v5261 = vunpack.c.l.b16 %v2281
    %v5262 = vunpack.c.h.b16 %v2281
    %v5263 = vunpack.c.l.b16 %v2282
    %v5264 = vunpack.c.h.b16 %v2282
    %v5265 = vunpack.c.l.b16 %v2283
    %v5266 = vunpack.c.h.b16 %v2283
    %v5267 = vunpack.c.l.b16 %v2284
    %v5268 = vunpack.c.h.b16 %v2284
    %v5269 = vunpack.c.l.b16 %v2285
    %v5270 = vunpack.c.h.b16 %v2285
    %v5271 = vunpack.c.l.b16 %v2286
    %v5272 = vunpack.c.h.b16 %v2286
    %v5273 = vunpack.c.l.b16 %v2287
    %v5274 = vunpack.c.h.b16 %v2287
    %v5275 = vunpack.c.l.b16 %v2288
    %v5276 = vunpack.c.h.b16 %v2288
    %v5277 = vunpack.c.l.b16 %v2289
    %v5278 = vunpack.c.h.b16 %v2289
    %v5279 = vunpack.c.l.b16 %v2290
    %v5280 = vunpack.c.h.b16 %v2290
    %v5281 = vunpack.c.l.b16 %v2291
    %v5282 = vunpack.c.h.b16 %v2291
    %v5283 = vunpack.c.l.b16 %v2292
    %v5284 = vunpack.c.h.b16 %v2292
    %v5285 = vunpack.c.l.b16 %v2293
    %v5286 = vunpack.c.h.b16 %v2293
    %v5287 = vunpack.c.l.b16 %v2294
    %v5288 = vunpack.c.h.b16 %v2294
    %v5289 = vunpack.c.l.b16 %v2295
    %v5290 = vunpack.c.h.b16 %v2295
    %v5291 = vunpack.c.l.b16 %v2296
    %v5292 = vunpack.c.h.b16 %v2296
    %v5293 = vunpack.c.l.b16 %v2297
    %v5294 = vunpack.c.h.b16 %v2297
    %v5295 = vunpack.c.l.b16 %v2298
    %v5296 = vunpack.c.h.b16 %v2298
    %v5297 = vunpack.c.l.b16 %v2299
    %v5298 = vunpack.c.h.b16 %v2299
    %v5299 = vunpack.c.l.b16 %v2300
    %v5300 = vunpack.c.h.b16 %v2300
    %v5301 = vunpack.c.l.b16 %v2301
    %v5302 = vunpack.c.h.b16 %v2301
    %v5303 = vunpack.c.l.b16 %v2302
    %v5304 = vunpack.c.h.b16 %v2302
    %v5305 = vunpack.c.l.b16 %v2303
    %v5306 = vunpack.c.h.b16 %v2303
    %v5307 = vunpack.c.l.b16 %v2304
    %v5308 = vunpack.c.h.b16 %v2304
    %v5309 = vunpack.c.l.b16 %v2305
    %v5310 = vunpack.c.h.b16 %v2305
    %v5311 = vunpack.c.l.b16 %v2306
    %v5312 = vunpack.c.h.b16 %v2306
    %v5313 = vunpack.c.l.b16 %v2307
    %v5314 = vunpack.c.h.b16 %v2307
    %v5315 = vunpack.c.l.b16 %v2308
    %v5316 = vunpack.c.h.b16 %v2308
    %v5317 = vunpack.c.l.b16 %v2309
    %v5318 = vunpack.c.h.b16 %v2309
    %v5319 = vunpack.c.l.b16 %v2310
    %v5320 = vunpack.c.h.b16 %v2310
    %v5321 = vunpack.c.l.b16 %v2311
    %v5322 = vunpack.c.h.b16 %v2311
    %v5323 = vunpack.c.l.b16 %v2312
    %v5324 = vunpack.c.h.b16 %v2312
    %v5325 = vunpack.c.l.b16 %v2313
    %v5326 = vunpack.c.h.b16 %v2313
    %v5327 = vunpack.c.l.b16 %v2314
    %v5328 = vunpack.c.h.b16 %v2314
    %v5329 = vunpack.c.l.b16 %v2315
    %v5330 = vunpack.c.h.b16 %v2315
    %v5331 = vunpack.c.l.b16 %v2316
    %v5332 = vunpack.c.h.b16 %v2316
    %v5333 = vunpack.c.l.b16 %v2317
    %v5334 = vunpack.c.h.b16 %v2317
    %v5335 = vunpack.c.l.b16 %v2318
    %v5336 = vunpack.c.h.b16 %v2318
    %v5337 = vunpack.c.l.b16 %v2319
    %v5338 = vunpack.c.h.b16 %v2319
    %v5339 = vunpack.c.l.b16 %v2320
    %v5340 = vunpack.c.h.b16 %v2320
    %v5341 = vunpack.c.l.b16 %v2321
    %v5342 = vunpack.c.h.b16 %v2321
    %v5343 = vunpack.c.l.b16 %v2322
    %v5344 = vunpack.c.h.b16 %v2322
    %v5345 = vunpack.c.l.b16 %v2323
    %v5346 = vunpack.c.h.b16 %v2323
    %v5347 = vunpack.c.l.b16 %v2324
    %v5348 = vunpack.c.h.b16 %v2324
    %v5349 = vunpack.c.l.b16 %v2325
    %v5350 = vunpack.c.h.b16 %v2325
    %v5351 = vunpack.c.l.b16 %v2326
    %v5352 = vunpack.c.h.b16 %v2326
    %v5353 = vunpack.c.l.b16 %v2327
    %v5354 = vunpack.c.h.b16 %v2327
    %v5355 = vunpack.c.l.b16 %v2328
    %v5356 = vunpack.c.h.b16 %v2328
    %v5357 = vunpack.c.l.b16 %v2329
    %v5358 = vunpack.c.h.b16 %v2329
    %v5359 = vunpack.c.l.b16 %v2330
    %v5360 = vunpack.c.h.b16 %v2330
    %v5361 = vunpack.c.l.b16 %v2331
    %v5362 = vunpack.c.h.b16 %v2331
    %v5363 = vunpack.c.l.b16 %v2332
    %v5364 = vunpack.c.h.b16 %v2332
    %v5365 = vunpack.c.l.b16 %v2333
    %v5366 = vunpack.c.h.b16 %v2333
    %v5367 = vunpack.c.l.b16 %v2334
    %v5368 = vunpack.c.h.b16 %v2334
    %v5369 = vunpack.c.l.b16 %v2335
    %v5370 = vunpack.c.h.b16 %v2335
    %v5371 = vunpack.c.l.b16 %v2336
    %v5372 = vunpack.c.h.b16 %v2336
    %v5373 = vunpack.c.l.b16 %v2337
    %v5374 = vunpack.c.h.b16 %v2337
    %v5375 = vunpack.c.l.b16 %v2338
    %v5376 = vunpack.c.h.b16 %v2338
    %v5377 = vunpack.c.l.b16 %v2339
    %v5378 = vunpack.c.h.b16 %v2339
    %v5379 = vunpack.c.l.b16 %v2340
    %v5380 = vunpack.c.h.b16 %v2340
    %v5381 = vunpack.c.l.b16 %v2341
    %v5382 = vunpack.c.h.b16 %v2341
    %v5383 = vunpack.c.l.b16 %v2342
    %v5384 = vunpack.c.h.b16 %v2342
    %v5385 = vunpack.c.l.b16 %v2343
    %v5386 = vunpack.c.h.b16 %v2343
    %v5387 = vunpack.c.l.b16 %v2344
    %v5388 = vunpack.c.h.b16 %v2344
    %v5389 = vunpack.c.l.b16 %v2345
    %v5390 = vunpack.c.h.b16 %v2345
    %v5391 = vunpack.c.l.b16 %v2346
    %v5392 = vunpack.c.h.b16 %v2346
    %v5393 = vunpack.c.l.b16 %v2347
    %v5394 = vunpack.c.h.b16 %v2347
    %v5395 = vunpack.c.l.b16 %v2348
    %v5396 = vunpack.c.h.b16 %v2348
    %v5397 = vunpack.c.l.b16 %v2349
    %v5398 = vunpack.c.h.b16 %v2349
    %v5399 = vunpack.c.l.b16 %v2350
    %v5400 = vunpack.c.h.b16 %v2350
    %v5401 = vunpack.c.l.b16 %v2351
    %v5402 = vunpack.c.h.b16 %v2351
    %v5403 = vunpack.c.l.b16 %v2352
    %v5404 = vunpack.c.h.b16 %v2352
    %v5405 = vunpack.c.l.b16 %v2353
    %v5406 = vunpack.c.h.b16 %v2353
    %v5407 = vunpack.c.l.b16 %v2354
    %v5408 = vunpack.c.h.b16 %v2354
    %v5409 = vunpack.c.l.b16 %v2355
    %v5410 = vunpack.c.h.b16 %v2355
    %v5411 = vunpack.c.l.b16 %v2356
    %v5412 = vunpack.c.h.b16 %v2356
    %v5413 = vunpack.c.l.b16 %v2357
    %v5414 = vunpack.c.h.b16 %v2357
    %v5415 = vunpack.c.l.b16 %v2358
    %v5416 = vunpack.c.h.b16 %v2358
    %v5417 = vunpack.c.l.b16 %v2359
    %v5418 = vunpack.c.h.b16 %v2359
    %v5419 = vunpack.c.l.b16 %v2360
    %v5420 = vunpack.c.h.b16 %v2360
    %v5421 = vunpack.c.l.b16 %v2361
    %v5422 = vunpack.c.h.b16 %v2361
    %v5423 = vunpack.c.l.b16 %v2362
    %v5424 = vunpack.c.h.b16 %v2362
    %v5425 = vunpack.c.l.b16 %v2363
    %v5426 = vunpack.c.h.b16 %v2363
    %v5427 = vunpack.c.l.b16 %v2364
    %v5428 = vunpack.c.h.b16 %v2364
    %v5429 = vunpack.c.l.b16 %v2365
    %v5430 = vunpack.c.h.b16 %v2365
    %v5431 = vunpack.c.l.b16 %v2366
    %v5432 = vunpack.c.h.b16 %v2366
    %v5433 = vunpack.c.l.b16 %v2367
    %v5434 = vunpack.c.h.b16 %v2367
    %v5435 = vunpack.c.l.b16 %v2368
    %v5436 = vunpack.c.h.b16 %v2368
    %v5437 = vunpack.c.l.b16 %v2369
    %v5438 = vunpack.c.h.b16 %v2369
    %v5439 = vunpack.c.l.b16 %v2370
    %v5440 = vunpack.c.h.b16 %v2370
    %v5441 = vunpack.c.l.b16 %v2371
    %v5442 = vunpack.c.h.b16 %v2371
    %v5443 = vunpack.c.l.b16 %v2372
    %v5444 = vunpack.c.h.b16 %v2372
    %v5445 = vunpack.c.l.b16 %v2373
    %v5446 = vunpack.c.h.b16 %v2373
    %v5447 = vunpack.c.l.b16 %v2374
    %v5448 = vunpack.c.h.b16 %v2374
    %v5449 = vunpack.c.l.b16 %v2375
    %v5450 = vunpack.c.h.b16 %v2375
    %v5451 = vunpack.c.l.b16 %v2376
    %v5452 = vunpack.c.h.b16 %v2376
    %v5453 = vunpack.c.l.b16 %v2377
    %v5454 = vunpack.c.h.b16 %v2377
    %v5455 = vunpack.c.l.b16 %v2378
    %v5456 = vunpack.c.h.b16 %v2378
    %v5457 = vunpack.c.l.b16 %v2379
    %v5458 = vunpack.c.h.b16 %v2379
    %v5459 = vunpack.c.l.b16 %v2380
    %v5460 = vunpack.c.h.b16 %v2380
    %v5461 = vunpack.c.l.b16 %v2381
    %v5462 = vunpack.c.h.b16 %v2381
    %v5463 = vunpack.c.l.b16 %v2382
    %v5464 = vunpack.c.h.b16 %v2382
    %v5465 = vunpack.c.l.b16 %v2383
    %v5466 = vunpack.c.h.b16 %v2383
    %v5467 = vunpack.c.l.b16 %v2384
    %v5468 = vunpack.c.h.b16 %v2384
    %v5469 = vunpack.c.l.b16 %v2385
    %v5470 = vunpack.c.h.b16 %v2385
    %v5471 = vunpack.c.l.b16 %v2386
    %v5472 = vunpack.c.h.b16 %v2386
    %v5473 = vunpack.c.l.b16 %v2387
    %v5474 = vunpack.c.h.b16 %v2387
    %v5475 = vunpack.c.l.b16 %v2388
    %v5476 = vunpack.c.h.b16 %v2388
    %v5477 = vunpack.c.l.b16 %v2389
    %v5478 = vunpack.c.h.b16 %v2389
    %v5479 = vunpack.c.l.b16 %v2390
    %v5480 = vunpack.c.h.b16 %v2390
    %v5481 = vunpack.c.l.b16 %v2391
    %v5482 = vunpack.c.h.b16 %v2391
    %v5483 = vunpack.c.l.b16 %v2392
    %v5484 = vunpack.c.h.b16 %v2392
    %v5485 = vunpack.c.l.b16 %v2393
    %v5486 = vunpack.c.h.b16 %v2393
    %v5487 = vunpack.c.l.b16 %v2394
    %v5488 = vunpack.c.h.b16 %v2394
    %v5489 = vunpack.c.l.b16 %v2395
    %v5490 = vunpack.c.h.b16 %v2395
    %v5491 = vunpack.c.l.b16 %v2396
    %v5492 = vunpack.c.h.b16 %v2396
    %v5493 = vunpack.c.l.b16 %v2397
    %v5494 = vunpack.c.h.b16 %v2397
    %v5495 = vunpack.c.l.b16 %v2398
    %v5496 = vunpack.c.h.b16 %v2398
    %v5497 = vunpack.c.l.b16 %v2399
    %v5498 = vunpack.c.h.b16 %v2399
    %v5499 = vunpack.c.l.b16 %v2400
    %v5500 = vunpack.c.h.b16 %v2400
    %v5501 = vunpack.c.l.b16 %v2401
    %v5502 = vunpack.c.h.b16 %v2401
    %v5503 = vunpack.c.l.b16 %v2402
    %v5504 = vunpack.c.h.b16 %v2402
    %v5505 = vunpack.c.l.b16 %v2403
    %v5506 = vunpack.c.h.b16 %v2403
    %v5507 = vunpack.c.l.b16 %v2404
    %v5508 = vunpack.c.h.b16 %v2404
    %v5509 = vunpack.c.l.b16 %v2405
    %v5510 = vunpack.c.h.b16 %v2405
    %v5511 = vunpack.c.l.b16 %v2406
    %v5512 = vunpack.c.h.b16 %v2406
    %v5513 = vunpack.c.l.b16 %v2407
    %v5514 = vunpack.c.h.b16 %v2407
    %v5515 = vunpack.c.l.b16 %v2408
    %v5516 = vunpack.c.h.b16 %v2408
    %v5517 = vunpack.c.l.b16 %v2409
    %v5518 = vunpack.c.h.b16 %v2409
    %v5519 = vunpack.c.l.b16 %v2410
    %v5520 = vunpack.c.h.b16 %v2410
    %v5521 = vunpack.c.l.b16 %v2411
    %v5522 = vunpack.c.h.b16 %v2411
    %v5523 = vunpack.c.l.b16 %v2412
    %v5524 = vunpack.c.h.b16 %v2412
    %v5525 = vunpack.c.l.b16 %v2413
    %v5526 = vunpack.c.h.b16 %v2413
    %v5527 = vunpack.c.l.b16 %v2414
    %v5528 = vunpack.c.h.b16 %v2414
    %v5529 = vpack.c.b16 %v3489, %v3481
    %v5530 = vpack.c.b16 %v3490, %v3482
    %v5531 = vpack.c.b16 %v3491, %v3483
    %v5532 = vpack.c.b16 %v3492, %v3484
    %v5533 = vpack.c.b16 %v3493, %v3485
    %v5534 = vpack.c.b16 %v3494, %v3486
    %v5535 = vpack.c.b16 %v3495, %v3487
    %v5536 = vpack.c.b16 %v3496, %v3488
    %v5537 = vpack.c.b16 %v3505, %v3497
    %v5538 = vpack.c.b16 %v3506, %v3498
    %v5539 = vpack.c.b16 %v3507, %v3499
    %v5540 = vpack.c.b16 %v3508, %v3500
    %v5541 = vpack.c.b16 %v3509, %v3501
    %v5542 = vpack.c.b16 %v3510, %v3502
    %v5543 = vpack.c.b16 %v3511, %v3503
    %v5544 = vpack.c.b16 %v3512, %v3504
    %v5545 = vpack.c.b16 %v3521, %v3513
    %v5546 = vpack.c.b16 %v3522, %v3514
    %v5547 = vpack.c.b16 %v3523, %v3515
    %v5548 = vpack.c.b16 %v3524, %v3516
    %v5549 = vpack.c.b16 %v3525, %v3517
    %v5550 = vpack.c.b16 %v3526, %v3518
    %v5551 = vpack.c.b16 %v3527, %v3519
    %v5552 = vpack.c.b16 %v3528, %v3520
    %v5553 = vpack.c.b16 %v3537, %v3529
    %v5554 = vpack.c.b16 %v3538, %v3530
    %v5555 = vpack.c.b16 %v3539, %v3531
    %v5556 = vpack.c.b16 %v3540, %v3532
    %v5557 = vpack.c.b16 %v3541, %v3533
    %v5558 = vpack.c.b16 %v3542, %v3534
    %v5559 = vpack.c.b16 %v3543, %v3535
    %v5560 = vpack.c.b16 %v3544, %v3536
    %v5561 = vpack.c.b16 %v3553, %v3545
    %v5562 = vpack.c.b16 %v3554, %v3546
    %v5563 = vpack.c.b16 %v3555, %v3547
    %v5564 = vpack.c.b16 %v3556, %v3548
    %v5565 = vpack.c.b16 %v3557, %v3549
    %v5566 = vpack.c.b16 %v3558, %v3550
    %v5567 = vpack.c.b16 %v3559, %v3551
    %v5568 = vpack.c.b16 %v3560, %v3552
    %v5569 = vpack.c.b16 %v3569, %v3561
    %v5570 = vpack.c.b16 %v3570, %v3562
    %v5571 = vpack.c.b16 %v3571, %v3563
    %v5572 = vpack.c.b16 %v3572, %v3564
    %v5573 = vpack.c.b16 %v3573, %v3565
    %v5574 = vpack.c.b16 %v3574, %v3566
    %v5575 = vpack.c.b16 %v3575, %v3567
    %v5576 = vpack.c.b16 %v3576, %v3568
    %v5577 = vpack.c.b16 %v3585, %v3577
    %v5578 = vpack.c.b16 %v3586, %v3578
    %v5579 = vpack.c.b16 %v3587, %v3579
    %v5580 = vpack.c.b16 %v3588, %v3580
    %v5581 = vpack.c.b16 %v3589, %v3581
    %v5582 = vpack.c.b16 %v3590, %v3582
    %v5583 = vpack.c.b16 %v3591, %v3583
    %v5584 = vpack.c.b16 %v3592, %v3584
    %v5585 = vpack.c.b16 %v3601, %v3593
    %v5586 = vpack.c.b16 %v3602, %v3594
    %v5587 = vpack.c.b16 %v3603, %v3595
    %v5588 = vpack.c.b16 %v3604, %v3596
    %v5589 = vpack.c.b16 %v3605, %v3597
    %v5590 = vpack.c.b16 %v3606, %v3598
    %v5591 = vpack.c.b16 %v3607, %v3599
    %v5592 = vpack.c.b16 %v3608, %v3600
    %v5593 = vpack.c.b16 %v3617, %v3609
    %v5594 = vpack.c.b16 %v3618, %v3610
    %v5595 = vpack.c.b16 %v3619, %v3611
    %v5596 = vpack.c.b16 %v3620, %v3612
    %v5597 = vpack.c.b16 %v3621, %v3613
    %v5598 = vpack.c.b16 %v3622, %v3614
    %v5599 = vpack.c.b16 %v3623, %v3615
    %v5600 = vpack.c.b16 %v3624, %v3616
    %v5601 = vpack.c.b16 %v3633, %v3625
    %v5602 = vpack.c.b16 %v3634, %v3626
    %v5603 = vpack.c.b16 %v3635, %v3627
    %v5604 = vpack.c.b16 %v3636, %v3628
    %v5605 = vpack.c.b16 %v3637, %v3629
    %v5606 = vpack.c.b16 %v3638, %v3630
    %v5607 = vpack.c.b16 %v3639, %v3631
    %v5608 = vpack.c.b16 %v3640, %v3632
    %v5609 = vpack.c.b16 %v3649, %v3641
    %v5610 = vpack.c.b16 %v3650, %v3642
    %v5611 = vpack.c.b16 %v3651, %v3643
    %v5612 = vpack.c.b16 %v3652, %v3644
    %v5613 = vpack.c.b16 %v3653, %v3645
    %v5614 = vpack.c.b16 %v3654, %v3646
    %v5615 = vpack.c.b16 %v3655, %v3647
    %v5616 = vpack.c.b16 %v3656, %v3648
    %v5617 = vpack.c.b16 %v3665, %v3657
    %v5618 = vpack.c.b16 %v3666, %v3658
    %v5619 = vpack.c.b16 %v3667, %v3659
    %v5620 = vpack.c.b16 %v3668, %v3660
    %v5621 = vpack.c.b16 %v3669, %v3661
    %v5622 = vpack.c.b16 %v3670, %v3662
    %v5623 = vpack.c.b16 %v3671, %v3663
    %v5624 = vpack.c.b16 %v3672, %v3664
    %v5625 = vpack.c.b16 %v3681, %v3673
    %v5626 = vpack.c.b16 %v3682, %v3674
    %v5627 = vpack.c.b16 %v3683, %v3675
    %v5628 = vpack.c.b16 %v3684, %v3676
    %v5629 = vpack.c.b16 %v3685, %v3677
    %v5630 = vpack.c.b16 %v3686, %v3678
    %v5631 = vpack.c.b16 %v3687, %v3679
    %v5632 = vpack.c.b16 %v3688, %v3680
    %v5633 = vpack.c.b16 %v3697, %v3689
    %v5634 = vpack.c.b16 %v3698, %v3690
    %v5635 = vpack.c.b16 %v3699, %v3691
    %v5636 = vpack.c.b16 %v3700, %v3692
    %v5637 = vpack.c.b16 %v3701, %v3693
    %v5638 = vpack.c.b16 %v3702, %v3694
    %v5639 = vpack.c.b16 %v3703, %v3695
    %v5640 = vpack.c.b16 %v3704, %v3696
    %v5641 = vpack.c.b16 %v3713, %v3705
    %v5642 = vpack.c.b16 %v3714, %v3706
    %v5643 = vpack.c.b16 %v3715, %v3707
    %v5644 = vpack.c.b16 %v3716, %v3708
    %v5645 = vpack.c.b16 %v3717, %v3709
    %v5646 = vpack.c.b16 %v3718, %v3710
    %v5647 = vpack.c.b16 %v3719, %v3711
    %v5648 = vpack.c.b16 %v3720, %v3712
    %v5649 = vpack.c.b16 %v3729, %v3721
    %v5650 = vpack.c.b16 %v3730, %v3722
    %v5651 = vpack.c.b16 %v3731, %v3723
    %v5652 = vpack.c.b16 %v3732, %v3724
    %v5653 = vpack.c.b16 %v3733, %v3725
    %v5654 = vpack.c.b16 %v3734, %v3726
    %v5655 = vpack.c.b16 %v3735, %v3727
    %v5656 = vpack.c.b16 %v3736, %v3728
    %v5657 = vpack.c.b16 %v3745, %v3737
    %v5658 = vpack.c.b16 %v3746, %v3738
    %v5659 = vpack.c.b16 %v3747, %v3739
    %v5660 = vpack.c.b16 %v3748, %v3740
    %v5661 = vpack.c.b16 %v3749, %v3741
    %v5662 = vpack.c.b16 %v3750, %v3742
    %v5663 = vpack.c.b16 %v3751, %v3743
    %v5664 = vpack.c.b16 %v3752, %v3744
    %v5665 = vpack.c.b16 %v3761, %v3753
    %v5666 = vpack.c.b16 %v3762, %v3754
    %v5667 = vpack.c.b16 %v3763, %v3755
    %v5668 = vpack.c.b16 %v3764, %v3756
    %v5669 = vpack.c.b16 %v3765, %v3757
    %v5670 = vpack.c.b16 %v3766, %v3758
    %v5671 = vpack.c.b16 %v3767, %v3759
    %v5672 = vpack.c.b16 %v3768, %v3760
    %v5673 = vpack.c.b16 %v3777, %v3769
    %v5674 = vpack.c.b16 %v3778, %v3770
    %v5675 = vpack.c.b16 %v3779, %v3771
    %v5676 = vpack.c.b16 %v3780, %v3772
    %v5677 = vpack.c.b16 %v3781, %v3773
    %v5678 = vpack.c.b16 %v3782, %v3774
    %v5679 = vpack.c.b16 %v3783, %v3775
    %v5680 = vpack.c.b16 %v3784, %v3776
    %v5681 = vpack.c.b16 %v3793, %v3785
    %v5682 = vpack.c.b16 %v3794, %v3786
    %v5683 = vpack.c.b16 %v3795, %v3787
    %v5684 = vpack.c.b16 %v3796, %v3788
    %v5685 = vpack.c.b16 %v3797, %v3789
    %v5686 = vpack.c.b16 %v3798, %v3790
    %v5687 = vpack.c.b16 %v3799, %v3791
    %v5688 = vpack.c.b16 %v3800, %v3792
    %v5689 = vpack.c.b16 %v3809, %v3801
    %v5690 = vpack.c.b16 %v3810, %v3802
    %v5691 = vpack.c.b16 %v3811, %v3803
    %v5692 = vpack.c.b16 %v3812, %v3804
    %v5693 = vpack.c.b16 %v3813, %v3805
    %v5694 = vpack.c.b16 %v3814, %v3806
    %v5695 = vpack.c.b16 %v3815, %v3807
    %v5696 = vpack.c.b16 %v3816, %v3808
    %v5697 = vpack.c.b16 %v3825, %v3817
    %v5698 = vpack.c.b16 %v3826, %v3818
    %v5699 = vpack.c.b16 %v3827, %v3819
    %v5700 = vpack.c.b16 %v3828, %v3820
    %v5701 = vpack.c.b16 %v3829, %v3821
    %v5702 = vpack.c.b16 %v3830, %v3822
    %v5703 = vpack.c.b16 %v3831, %v3823
    %v5704 = vpack.c.b16 %v3832, %v3824
    %v5705 = vpack.c.b16 %v3841, %v3833
    %v5706 = vpack.c.b16 %v3842, %v3834
    %v5707 = vpack.c.b16 %v3843, %v3835
    %v5708 = vpack.c.b16 %v3844, %v3836
    %v5709 = vpack.c.b16 %v3845, %v3837
    %v5710 = vpack.c.b16 %v3846, %v3838
    %v5711 = vpack.c.b16 %v3847, %v3839
    %v5712 = vpack.c.b16 %v3848, %v3840
    %v5713 = vpack.c.b16 %v3857, %v3849
    %v5714 = vpack.c.b16 %v3858, %v3850
    %v5715 = vpack.c.b16 %v3859, %v3851
    %v5716 = vpack.c.b16 %v3860, %v3852
    %v5717 = vpack.c.b16 %v3861, %v3853
    %v5718 = vpack.c.b16 %v3862, %v3854
    %v5719 = vpack.c.b16 %v3863, %v3855
    %v5720 = vpack.c.b16 %v3864, %v3856
    %v5721 = vpack.c.b16 %v3873, %v3865
    %v5722 = vpack.c.b16 %v3874, %v3866
    %v5723 = vpack.c.b16 %v3875, %v3867
    %v5724 = vpack.c.b16 %v3876, %v3868
    %v5725 = vpack.c.b16 %v3877, %v3869
    %v5726 = vpack.c.b16 %v3878, %v3870
    %v5727 = vpack.c.b16 %v3879, %v3871
    %v5728 = vpack.c.b16 %v3880, %v3872
    %v5729 = vpack.c.b16 %v3889, %v3881
    %v5730 = vpack.c.b16 %v3890, %v3882
    %v5731 = vpack.c.b16 %v3891, %v3883
    %v5732 = vpack.c.b16 %v3892, %v3884
    %v5733 = vpack.c.b16 %v3893, %v3885
    %v5734 = vpack.c.b16 %v3894, %v3886
    %v5735 = vpack.c.b16 %v3895, %v3887
    %v5736 = vpack.c.b16 %v3896, %v3888
    %v5737 = vpack.c.b16 %v3905, %v3897
    %v5738 = vpack.c.b16 %v3906, %v3898
    %v5739 = vpack.c.b16 %v3907, %v3899
    %v5740 = vpack.c.b16 %v3908, %v3900
    %v5741 = vpack.c.b16 %v3909, %v3901
    %v5742 = vpack.c.b16 %v3910, %v3902
    %v5743 = vpack.c.b16 %v3911, %v3903
    %v5744 = vpack.c.b16 %v3912, %v3904
    %v5745 = vpack.c.b16 %v3921, %v3913
    %v5746 = vpack.c.b16 %v3922, %v3914
    %v5747 = vpack.c.b16 %v3923, %v3915
    %v5748 = vpack.c.b16 %v3924, %v3916
    %v5749 = vpack.c.b16 %v3925, %v3917
    %v5750 = vpack.c.b16 %v3926, %v3918
    %v5751 = vpack.c.b16 %v3927, %v3919
    %v5752 = vpack.c.b16 %v3928, %v3920
    %v5753 = vpack.c.b16 %v3937, %v3929
    %v5754 = vpack.c.b16 %v3938, %v3930
    %v5755 = vpack.c.b16 %v3939, %v3931
    %v5756 = vpack.c.b16 %v3940, %v3932
    %v5757 = vpack.c.b16 %v3941, %v3933
    %v5758 = vpack.c.b16 %v3942, %v3934
    %v5759 = vpack.c.b16 %v3943, %v3935
    %v5760 = vpack.c.b16 %v3944, %v3936
    %v5761 = vpack.c.b16 %v3953, %v3945
    %v5762 = vpack.c.b16 %v3954, %v3946
    %v5763 = vpack.c.b16 %v3955, %v3947
    %v5764 = vpack.c.b16 %v3956, %v3948
    %v5765 = vpack.c.b16 %v3957, %v3949
    %v5766 = vpack.c.b16 %v3958, %v3950
    %v5767 = vpack.c.b16 %v3959, %v3951
    %v5768 = vpack.c.b16 %v3960, %v3952
    %v5769 = vpack.c.b16 %v3969, %v3961
    %v5770 = vpack.c.b16 %v3970, %v3962
    %v5771 = vpack.c.b16 %v3971, %v3963
    %v5772 = vpack.c.b16 %v3972, %v3964
    %v5773 = vpack.c.b16 %v3973, %v3965
    %v5774 = vpack.c.b16 %v3974, %v3966
    %v5775 = vpack.c.b16 %v3975, %v3967
    %v5776 = vpack.c.b16 %v3976, %v3968
    %v5777 = vpack.c.b16 %v3985, %v3977
    %v5778 = vpack.c.b16 %v3986, %v3978
    %v5779 = vpack.c.b16 %v3987, %v3979
    %v5780 = vpack.c.b16 %v3988, %v3980
    %v5781 = vpack.c.b16 %v3989, %v3981
    %v5782 = vpack.c.b16 %v3990, %v3982
    %v5783 = vpack.c.b16 %v3991, %v3983
    %v5784 = vpack.c.b16 %v3992, %v3984
    %v5785 = vpack.c.b16 %v4001, %v3993
    %v5786 = vpack.c.b16 %v4002, %v3994
    %v5787 = vpack.c.b16 %v4003, %v3995
    %v5788 = vpack.c.b16 %v4004, %v3996
    %v5789 = vpack.c.b16 %v4005, %v3997
    %v5790 = vpack.c.b16 %v4006, %v3998
    %v5791 = vpack.c.b16 %v4007, %v3999
    %v5792 = vpack.c.b16 %v4008, %v4000
    %v5793 = vpack.c.b16 %v4017, %v4009
    %v5794 = vpack.c.b16 %v4018, %v4010
    %v5795 = vpack.c.b16 %v4019, %v4011
    %v5796 = vpack.c.b16 %v4020, %v4012
    %v5797 = vpack.c.b16 %v4021, %v4013
    %v5798 = vpack.c.b16 %v4022, %v4014
    %v5799 = vpack.c.b16 %v4023, %v4015
    %v5800 = vpack.c.b16 %v4024, %v4016
    %v5801 = vpack.c.b16 %v4033, %v4025
    %v5802 = vpack.c.b16 %v4034, %v4026
    %v5803 = vpack.c.b16 %v4035, %v4027
    %v5804 = vpack.c.b16 %v4036, %v4028
    %v5805 = vpack.c.b16 %v4037, %v4029
    %v5806 = vpack.c.b16 %v4038, %v4030
    %v5807 = vpack.c.b16 %v4039, %v4031
    %v5808 = vpack.c.b16 %v4040, %v4032
    %v5809 = vpack.c.b16 %v4049, %v4041
    %v5810 = vpack.c.b16 %v4050, %v4042
    %v5811 = vpack.c.b16 %v4051, %v4043
    %v5812 = vpack.c.b16 %v4052, %v4044
    %v5813 = vpack.c.b16 %v4053, %v4045
    %v5814 = vpack.c.b16 %v4054, %v4046
    %v5815 = vpack.c.b16 %v4055, %v4047
    %v5816 = vpack.c.b16 %v4056, %v4048
    %v5817 = vpack.c.b16 %v4065, %v4057
    %v5818 = vpack.c.b16 %v4066, %v4058
    %v5819 = vpack.c.b16 %v4067, %v4059
    %v5820 = vpack.c.b16 %v4068, %v4060
    %v5821 = vpack.c.b16 %v4069, %v4061
    %v5822 = vpack.c.b16 %v4070, %v4062
    %v5823 = vpack.c.b16 %v4071, %v4063
    %v5824 = vpack.c.b16 %v4072, %v4064
    %v5825 = vpack.c.b16 %v4081, %v4073
    %v5826 = vpack.c.b16 %v4082, %v4074
    %v5827 = vpack.c.b16 %v4083, %v4075
    %v5828 = vpack.c.b16 %v4084, %v4076
    %v5829 = vpack.c.b16 %v4085, %v4077
    %v5830 = vpack.c.b16 %v4086, %v4078
    %v5831 = vpack.c.b16 %v4087, %v4079
    %v5832 = vpack.c.b16 %v4088, %v4080
    %v5833 = vpack.c.b16 %v4097, %v4089
    %v5834 = vpack.c.b16 %v4098, %v4090
    %v5835 = vpack.c.b16 %v4099, %v4091
    %v5836 = vpack.c.b16 %v4100, %v4092
    %v5837 = vpack.c.b16 %v4101, %v4093
    %v5838 = vpack.c.b16 %v4102, %v4094
    %v5839 = vpack.c.b16 %v4103, %v4095
    %v5840 = vpack.c.b16 %v4104, %v4096
    %v5841 = vpack.c.b16 %v4113, %v4105
    %v5842 = vpack.c.b16 %v4114, %v4106
    %v5843 = vpack.c.b16 %v4115, %v4107
    %v5844 = vpack.c.b16 %v4116, %v4108
    %v5845 = vpack.c.b16 %v4117, %v4109
    %v5846 = vpack.c.b16 %v4118, %v4110
    %v5847 = vpack.c.b16 %v4119, %v4111
    %v5848 = vpack.c.b16 %v4120, %v4112
    %v5849 = vpack.c.b16 %v4129, %v4121
    %v5850 = vpack.c.b16 %v4130, %v4122
    %v5851 = vpack.c.b16 %v4131, %v4123
    %v5852 = vpack.c.b16 %v4132, %v4124
    %v5853 = vpack.c.b16 %v4133, %v4125
    %v5854 = vpack.c.b16 %v4134, %v4126
    %v5855 = vpack.c.b16 %v4135, %v4127
    %v5856 = vpack.c.b16 %v4136, %v4128
    %v5857 = vpack.c.b16 %v4145, %v4137
    %v5858 = vpack.c.b16 %v4146, %v4138
    %v5859 = vpack.c.b16 %v4147, %v4139
    %v5860 = vpack.c.b16 %v4148, %v4140
    %v5861 = vpack.c.b16 %v4149, %v4141
    %v5862 = vpack.c.b16 %v4150, %v4142
    %v5863 = vpack.c.b16 %v4151, %v4143
    %v5864 = vpack.c.b16 %v4152, %v4144
    %v5865 = vpack.c.b16 %v4161, %v4153
    %v5866 = vpack.c.b16 %v4162, %v4154
    %v5867 = vpack.c.b16 %v4163, %v4155
    %v5868 = vpack.c.b16 %v4164, %v4156
    %v5869 = vpack.c.b16 %v4165, %v4157
    %v5870 = vpack.c.b16 %v4166, %v4158
    %v5871 = vpack.c.b16 %v4167, %v4159
    %v5872 = vpack.c.b16 %v4168, %v4160
    %v5873 = vpack.c.b16 %v4177, %v4169
    %v5874 = vpack.c.b16 %v4178, %v4170
    %v5875 = vpack.c.b16 %v4179, %v4171
    %v5876 = vpack.c.b16 %v4180, %v4172
    %v5877 = vpack.c.b16 %v4181, %v4173
    %v5878 = vpack.c.b16 %v4182, %v4174
    %v5879 = vpack.c.b16 %v4183, %v4175
    %v5880 = vpack.c.b16 %v4184, %v4176
    %v5881 = vpack.c.b16 %v4193, %v4185
    %v5882 = vpack.c.b16 %v4194, %v4186
    %v5883 = vpack.c.b16 %v4195, %v4187
    %v5884 = vpack.c.b16 %v4196, %v4188
    %v5885 = vpack.c.b16 %v4197, %v4189
    %v5886 = vpack.c.b16 %v4198, %v4190
    %v5887 = vpack.c.b16 %v4199, %v4191
    %v5888 = vpack.c.b16 %v4200, %v4192
    %v5889 = vpack.c.b16 %v4209, %v4201
    %v5890 = vpack.c.b16 %v4210, %v4202
    %v5891 = vpack.c.b16 %v4211, %v4203
    %v5892 = vpack.c.b16 %v4212, %v4204
    %v5893 = vpack.c.b16 %v4213, %v4205
    %v5894 = vpack.c.b16 %v4214, %v4206
    %v5895 = vpack.c.b16 %v4215, %v4207
    %v5896 = vpack.c.b16 %v4216, %v4208
    %v5897 = vpack.c.b16 %v4225, %v4217
    %v5898 = vpack.c.b16 %v4226, %v4218
    %v5899 = vpack.c.b16 %v4227, %v4219
    %v5900 = vpack.c.b16 %v4228, %v4220
    %v5901 = vpack.c.b16 %v4229, %v4221
    %v5902 = vpack.c.b16 %v4230, %v4222
    %v5903 = vpack.c.b16 %v4231, %v4223
    %v5904 = vpack.c.b16 %v4232, %v4224
    %v5905 = vpack.c.b16 %v4241, %v4233
    %v5906 = vpack.c.b16 %v4242, %v4234
    %v5907 = vpack.c.b16 %v4243, %v4235
    %v5908 = vpack.c.b16 %v4244, %v4236
    %v5909 = vpack.c.b16 %v4245, %v4237
    %v5910 = vpack.c.b16 %v4246, %v4238
    %v5911 = vpack.c.b16 %v4247, %v4239
    %v5912 = vpack.c.b16 %v4248, %v4240
    %v5913 = vpack.c.b16 %v4257, %v4249
    %v5914 = vpack.c.b16 %v4258, %v4250
    %v5915 = vpack.c.b16 %v4259, %v4251
    %v5916 = vpack.c.b16 %v4260, %v4252
    %v5917 = vpack.c.b16 %v4261, %v4253
    %v5918 = vpack.c.b16 %v4262, %v4254
    %v5919 = vpack.c.b16 %v4263, %v4255
    %v5920 = vpack.c.b16 %v4264, %v4256
    %v5921 = vpack.c.b16 %v4273, %v4265
    %v5922 = vpack.c.b16 %v4274, %v4266
    %v5923 = vpack.c.b16 %v4275, %v4267
    %v5924 = vpack.c.b16 %v4276, %v4268
    %v5925 = vpack.c.b16 %v4277, %v4269
    %v5926 = vpack.c.b16 %v4278, %v4270
    %v5927 = vpack.c.b16 %v4279, %v4271
    %v5928 = vpack.c.b16 %v4280, %v4272
    %v5929 = vpack.c.b16 %v4289, %v4281
    %v5930 = vpack.c.b16 %v4290, %v4282
    %v5931 = vpack.c.b16 %v4291, %v4283
    %v5932 = vpack.c.b16 %v4292, %v4284
    %v5933 = vpack.c.b16 %v4293, %v4285
    %v5934 = vpack.c.b16 %v4294, %v4286
    %v5935 = vpack.c.b16 %v4295, %v4287
    %v5936 = vpack.c.b16 %v4296, %v4288
    %v5937 = vpack.c.b16 %v4305, %v4297
    %v5938 = vpack.c.b16 %v4306, %v4298
    %v5939 = vpack.c.b16 %v4307, %v4299
    %v5940 = vpack.c.b16 %v4308, %v4300
    %v5941 = vpack.c.b16 %v4309, %v4301
    %v5942 = vpack.c.b16 %v4310, %v4302
    %v5943 = vpack.c.b16 %v4311, %v4303
    %v5944 = vpack.c.b16 %v4312, %v4304
    %v5945 = vpack.c.b16 %v4321, %v4313
    %v5946 = vpack.c.b16 %v4322, %v4314
    %v5947 = vpack.c.b16 %v4323, %v4315
    %v5948 = vpack.c.b16 %v4324, %v4316
    %v5949 = vpack.c.b16 %v4325, %v4317
    %v5950 = vpack.c.b16 %v4326, %v4318
    %v5951 = vpack.c.b16 %v4327, %v4319
    %v5952 = vpack.c.b16 %v4328, %v4320
    %v5953 = vpack.c.b16 %v4337, %v4329
    %v5954 = vpack.c.b16 %v4338, %v4330
    %v5955 = vpack.c.b16 %v4339, %v4331
    %v5956 = vpack.c.b16 %v4340, %v4332
    %v5957 = vpack.c.b16 %v4341, %v4333
    %v5958 = vpack.c.b16 %v4342, %v4334
    %v5959 = vpack.c.b16 %v4343, %v4335
    %v5960 = vpack.c.b16 %v4344, %v4336
    %v5961 = vpack.c.b16 %v4353, %v4345
    %v5962 = vpack.c.b16 %v4354, %v4346
    %v5963 = vpack.c.b16 %v4355, %v4347
    %v5964 = vpack.c.b16 %v4356, %v4348
    %v5965 = vpack.c.b16 %v4357, %v4349
    %v5966 = vpack.c.b16 %v4358, %v4350
    %v5967 = vpack.c.b16 %v4359, %v4351
    %v5968 = vpack.c.b16 %v4360, %v4352
    %v5969 = vpack.c.b16 %v4369, %v4361
    %v5970 = vpack.c.b16 %v4370, %v4362
    %v5971 = vpack.c.b16 %v4371, %v4363
    %v5972 = vpack.c.b16 %v4372, %v4364
    %v5973 = vpack.c.b16 %v4373, %v4365
    %v5974 = vpack.c.b16 %v4374, %v4366
    %v5975 = vpack.c.b16 %v4375, %v4367
    %v5976 = vpack.c.b16 %v4376, %v4368
    %v5977 = vpack.c.b16 %v4385, %v4377
    %v5978 = vpack.c.b16 %v4386, %v4378
    %v5979 = vpack.c.b16 %v4387, %v4379
    %v5980 = vpack.c.b16 %v4388, %v4380
    %v5981 = vpack.c.b16 %v4389, %v4381
    %v5982 = vpack.c.b16 %v4390, %v4382
    %v5983 = vpack.c.b16 %v4391, %v4383
    %v5984 = vpack.c.b16 %v4392, %v4384
    %v5985 = vpack.c.b16 %v4401, %v4393
    %v5986 = vpack.c.b16 %v4402, %v4394
    %v5987 = vpack.c.b16 %v4403, %v4395
    %v5988 = vpack.c.b16 %v4404, %v4396
    %v5989 = vpack.c.b16 %v4405, %v4397
    %v5990 = vpack.c.b16 %v4406, %v4398
    %v5991 = vpack.c.b16 %v4407, %v4399
    %v5992 = vpack.c.b16 %v4408, %v4400
    %v5993 = vpack.c.b16 %v4417, %v4409
    %v5994 = vpack.c.b16 %v4418, %v4410
    %v5995 = vpack.c.b16 %v4419, %v4411
    %v5996 = vpack.c.b16 %v4420, %v4412
    %v5997 = vpack.c.b16 %v4421, %v4413
    %v5998 = vpack.c.b16 %v4422, %v4414
    %v5999 = vpack.c.b16 %v4423, %v4415
    %v6000 = vpack.c.b16 %v4424, %v4416
    %v6001 = vpack.c.b16 %v4433, %v4425
    %v6002 = vpack.c.b16 %v4434, %v4426
    %v6003 = vpack.c.b16 %v4435, %v4427
    %v6004 = vpack.c.b16 %v4436, %v4428
    %v6005 = vpack.c.b16 %v4437, %v4429
    %v6006 = vpack.c.b16 %v4438, %v4430
    %v6007 = vpack.c.b16 %v4439, %v4431
    %v6008 = vpack.c.b16 %v4440, %v4432
    %v6009 = vpack.c.b16 %v4449, %v4441
    %v6010 = vpack.c.b16 %v4450, %v4442
    %v6011 = vpack.c.b16 %v4451, %v4443
    %v6012 = vpack.c.b16 %v4452, %v4444
    %v6013 = vpack.c.b16 %v4453, %v4445
    %v6014 = vpack.c.b16 %v4454, %v4446
    %v6015 = vpack.c.b16 %v4455, %v4447
    %v6016 = vpack.c.b16 %v4456, %v4448
    %v6017 = vpack.c.b16 %v4465, %v4457
    %v6018 = vpack.c.b16 %v4466, %v4458
    %v6019 = vpack.c.b16 %v4467, %v4459
    %v6020 = vpack.c.b16 %v4468, %v4460
    %v6021 = vpack.c.b16 %v4469, %v4461
    %v6022 = vpack.c.b16 %v4470, %v4462
    %v6023 = vpack.c.b16 %v4471, %v4463
    %v6024 = vpack.c.b16 %v4472, %v4464
    %v6025 = vpack.c.b16 %v4481, %v4473
    %v6026 = vpack.c.b16 %v4482, %v4474
    %v6027 = vpack.c.b16 %v4483, %v4475
    %v6028 = vpack.c.b16 %v4484, %v4476
    %v6029 = vpack.c.b16 %v4485, %v4477
    %v6030 = vpack.c.b16 %v4486, %v4478
    %v6031 = vpack.c.b16 %v4487, %v4479
    %v6032 = vpack.c.b16 %v4488, %v4480
    %v6033 = vpack.c.b16 %v4497, %v4489
    %v6034 = vpack.c.b16 %v4498, %v4490
    %v6035 = vpack.c.b16 %v4499, %v4491
    %v6036 = vpack.c.b16 %v4500, %v4492
    %v6037 = vpack.c.b16 %v4501, %v4493
    %v6038 = vpack.c.b16 %v4502, %v4494
    %v6039 = vpack.c.b16 %v4503, %v4495
    %v6040 = vpack.c.b16 %v4504, %v4496
    %v6041 = vpack.c.b16 %v4513, %v4505
    %v6042 = vpack.c.b16 %v4514, %v4506
    %v6043 = vpack.c.b16 %v4515, %v4507
    %v6044 = vpack.c.b16 %v4516, %v4508
    %v6045 = vpack.c.b16 %v4517, %v4509
    %v6046 = vpack.c.b16 %v4518, %v4510
    %v6047 = vpack.c.b16 %v4519, %v4511
    %v6048 = vpack.c.b16 %v4520, %v4512
    %v6049 = vpack.c.b16 %v4529, %v4521
    %v6050 = vpack.c.b16 %v4530, %v4522
    %v6051 = vpack.c.b16 %v4531, %v4523
    %v6052 = vpack.c.b16 %v4532, %v4524
    %v6053 = vpack.c.b16 %v4533, %v4525
    %v6054 = vpack.c.b16 %v4534, %v4526
    %v6055 = vpack.c.b16 %v4535, %v4527
    %v6056 = vpack.c.b16 %v4536, %v4528
    %v6057 = vpack.c.b16 %v4545, %v4537
    %v6058 = vpack.c.b16 %v4546, %v4538
    %v6059 = vpack.c.b16 %v4547, %v4539
    %v6060 = vpack.c.b16 %v4548, %v4540
    %v6061 = vpack.c.b16 %v4549, %v4541
    %v6062 = vpack.c.b16 %v4550, %v4542
    %v6063 = vpack.c.b16 %v4551, %v4543
    %v6064 = vpack.c.b16 %v4552, %v4544
    %v6065 = vpack.c.b16 %v4561, %v4553
    %v6066 = vpack.c.b16 %v4562, %v4554
    %v6067 = vpack.c.b16 %v4563, %v4555
    %v6068 = vpack.c.b16 %v4564, %v4556
    %v6069 = vpack.c.b16 %v4565, %v4557
    %v6070 = vpack.c.b16 %v4566, %v4558
    %v6071 = vpack.c.b16 %v4567, %v4559
    %v6072 = vpack.c.b16 %v4568, %v4560
    %v6073 = vpack.c.b16 %v4577, %v4569
    %v6074 = vpack.c.b16 %v4578, %v4570
    %v6075 = vpack.c.b16 %v4579, %v4571
    %v6076 = vpack.c.b16 %v4580, %v4572
    %v6077 = vpack.c.b16 %v4581, %v4573
    %v6078 = vpack.c.b16 %v4582, %v4574
    %v6079 = vpack.c.b16 %v4583, %v4575
    %v6080 = vpack.c.b16 %v4584, %v4576
    %v6081 = vpack.c.b16 %v4593, %v4585
    %v6082 = vpack.c.b16 %v4594, %v4586
    %v6083 = vpack.c.b16 %v4595, %v4587
    %v6084 = vpack.c.b16 %v4596, %v4588
    %v6085 = vpack.c.b16 %v4597, %v4589
    %v6086 = vpack.c.b16 %v4598, %v4590
    %v6087 = vpack.c.b16 %v4599, %v4591
    %v6088 = vpack.c.b16 %v4600, %v4592
    %v6089 = vpack.c.b16 %v4609, %v4601
    %v6090 = vpack.c.b16 %v4610, %v4602
    %v6091 = vpack.c.b16 %v4611, %v4603
    %v6092 = vpack.c.b16 %v4612, %v4604
    %v6093 = vpack.c.b16 %v4613, %v4605
    %v6094 = vpack.c.b16 %v4614, %v4606
    %v6095 = vpack.c.b16 %v4615, %v4607
    %v6096 = vpack.c.b16 %v4616, %v4608
    %v6097 = vpack.c.b16 %v4625, %v4617
    %v6098 = vpack.c.b16 %v4626, %v4618
    %v6099 = vpack.c.b16 %v4627, %v4619
    %v6100 = vpack.c.b16 %v4628, %v4620
    %v6101 = vpack.c.b16 %v4629, %v4621
    %v6102 = vpack.c.b16 %v4630, %v4622
    %v6103 = vpack.c.b16 %v4631, %v4623
    %v6104 = vpack.c.b16 %v4632, %v4624
    %v6105 = vpack.c.b16 %v4641, %v4633
    %v6106 = vpack.c.b16 %v4642, %v4634
    %v6107 = vpack.c.b16 %v4643, %v4635
    %v6108 = vpack.c.b16 %v4644, %v4636
    %v6109 = vpack.c.b16 %v4645, %v4637
    %v6110 = vpack.c.b16 %v4646, %v4638
    %v6111 = vpack.c.b16 %v4647, %v4639
    %v6112 = vpack.c.b16 %v4648, %v4640
    %v6113 = vpack.c.b16 %v4657, %v4649
    %v6114 = vpack.c.b16 %v4658, %v4650
    %v6115 = vpack.c.b16 %v4659, %v4651
    %v6116 = vpack.c.b16 %v4660, %v4652
    %v6117 = vpack.c.b16 %v4661, %v4653
    %v6118 = vpack.c.b16 %v4662, %v4654
    %v6119 = vpack.c.b16 %v4663, %v4655
    %v6120 = vpack.c.b16 %v4664, %v4656
    %v6121 = vpack.c.b16 %v4673, %v4665
    %v6122 = vpack.c.b16 %v4674, %v4666
    %v6123 = vpack.c.b16 %v4675, %v4667
    %v6124 = vpack.c.b16 %v4676, %v4668
    %v6125 = vpack.c.b16 %v4677, %v4669
    %v6126 = vpack.c.b16 %v4678, %v4670
    %v6127 = vpack.c.b16 %v4679, %v4671
    %v6128 = vpack.c.b16 %v4680, %v4672
    %v6129 = vpack.c.b16 %v4689, %v4681
    %v6130 = vpack.c.b16 %v4690, %v4682
    %v6131 = vpack.c.b16 %v4691, %v4683
    %v6132 = vpack.c.b16 %v4692, %v4684
    %v6133 = vpack.c.b16 %v4693, %v4685
    %v6134 = vpack.c.b16 %v4694, %v4686
    %v6135 = vpack.c.b16 %v4695, %v4687
    %v6136 = vpack.c.b16 %v4696, %v4688
    %v6137 = vpack.c.b16 %v4705, %v4697
    %v6138 = vpack.c.b16 %v4706, %v4698
    %v6139 = vpack.c.b16 %v4707, %v4699
    %v6140 = vpack.c.b16 %v4708, %v4700
    %v6141 = vpack.c.b16 %v4709, %v4701
    %v6142 = vpack.c.b16 %v4710, %v4702
    %v6143 = vpack.c.b16 %v4711, %v4703
    %v6144 = vpack.c.b16 %v4712, %v4704
    %v6145 = vpack.c.b16 %v4721, %v4713
    %v6146 = vpack.c.b16 %v4722, %v4714
    %v6147 = vpack.c.b16 %v4723, %v4715
    %v6148 = vpack.c.b16 %v4724, %v4716
    %v6149 = vpack.c.b16 %v4725, %v4717
    %v6150 = vpack.c.b16 %v4726, %v4718
    %v6151 = vpack.c.b16 %v4727, %v4719
    %v6152 = vpack.c.b16 %v4728, %v4720
    %v6153 = vpack.c.b16 %v4737, %v4729
    %v6154 = vpack.c.b16 %v4738, %v4730
    %v6155 = vpack.c.b16 %v4739, %v4731
    %v6156 = vpack.c.b16 %v4740, %v4732
    %v6157 = vpack.c.b16 %v4741, %v4733
    %v6158 = vpack.c.b16 %v4742, %v4734
    %v6159 = vpack.c.b16 %v4743, %v4735
    %v6160 = vpack.c.b16 %v4744, %v4736
    %v6161 = vpack.c.b16 %v4753, %v4745
    %v6162 = vpack.c.b16 %v4754, %v4746
    %v6163 = vpack.c.b16 %v4755, %v4747
    %v6164 = vpack.c.b16 %v4756, %v4748
    %v6165 = vpack.c.b16 %v4757, %v4749
    %v6166 = vpack.c.b16 %v4758, %v4750
    %v6167 = vpack.c.b16 %v4759, %v4751
    %v6168 = vpack.c.b16 %v4760, %v4752
    %v6169 = vpack.c.b16 %v4769, %v4761
    %v6170 = vpack.c.b16 %v4770, %v4762
    %v6171 = vpack.c.b16 %v4771, %v4763
    %v6172 = vpack.c.b16 %v4772, %v4764
    %v6173 = vpack.c.b16 %v4773, %v4765
    %v6174 = vpack.c.b16 %v4774, %v4766
    %v6175 = vpack.c.b16 %v4775, %v4767
    %v6176 = vpack.c.b16 %v4776, %v4768
    %v6177 = vpack.c.b16 %v4785, %v4777
    %v6178 = vpack.c.b16 %v4786, %v4778
    %v6179 = vpack.c.b16 %v4787, %v4779
    %v6180 = vpack.c.b16 %v4788, %v4780
    %v6181 = vpack.c.b16 %v4789, %v4781
    %v6182 = vpack.c.b16 %v4790, %v4782
    %v6183 = vpack.c.b16 %v4791, %v4783
    %v6184 = vpack.c.b16 %v4792, %v4784
    %v6185 = vpack.c.b16 %v4801, %v4793
    %v6186 = vpack.c.b16 %v4802, %v4794
    %v6187 = vpack.c.b16 %v4803, %v4795
    %v6188 = vpack.c.b16 %v4804, %v4796
    %v6189 = vpack.c.b16 %v4805, %v4797
    %v6190 = vpack.c.b16 %v4806, %v4798
    %v6191 = vpack.c.b16 %v4807, %v4799
    %v6192 = vpack.c.b16 %v4808, %v4800
    %v6193 = vpack.c.b16 %v4817, %v4809
    %v6194 = vpack.c.b16 %v4818, %v4810
    %v6195 = vpack.c.b16 %v4819, %v4811
    %v6196 = vpack.c.b16 %v4820, %v4812
    %v6197 = vpack.c.b16 %v4821, %v4813
    %v6198 = vpack.c.b16 %v4822, %v4814
    %v6199 = vpack.c.b16 %v4823, %v4815
    %v6200 = vpack.c.b16 %v4824, %v4816
    %v6201 = vpack.c.b16 %v4833, %v4825
    %v6202 = vpack.c.b16 %v4834, %v4826
    %v6203 = vpack.c.b16 %v4835, %v4827
    %v6204 = vpack.c.b16 %v4836, %v4828
    %v6205 = vpack.c.b16 %v4837, %v4829
    %v6206 = vpack.c.b16 %v4838, %v4830
    %v6207 = vpack.c.b16 %v4839, %v4831
    %v6208 = vpack.c.b16 %v4840, %v4832
    %v6209 = vpack.c.b16 %v4849, %v4841
    %v6210 = vpack.c.b16 %v4850, %v4842
    %v6211 = vpack.c.b16 %v4851, %v4843
    %v6212 = vpack.c.b16 %v4852, %v4844
    %v6213 = vpack.c.b16 %v4853, %v4845
    %v6214 = vpack.c.b16 %v4854, %v4846
    %v6215 = vpack.c.b16 %v4855, %v4847
    %v6216 = vpack.c.b16 %v4856, %v4848
    %v6217 = vpack.c.b16 %v4865, %v4857
    %v6218 = vpack.c.b16 %v4866, %v4858
    %v6219 = vpack.c.b16 %v4867, %v4859
    %v6220 = vpack.c.b16 %v4868, %v4860
    %v6221 = vpack.c.b16 %v4869, %v4861
    %v6222 = vpack.c.b16 %v4870, %v4862
    %v6223 = vpack.c.b16 %v4871, %v4863
    %v6224 = vpack.c.b16 %v4872, %v4864
    %v6225 = vpack.c.b16 %v4881, %v4873
    %v6226 = vpack.c.b16 %v4882, %v4874
    %v6227 = vpack.c.b16 %v4883, %v4875
    %v6228 = vpack.c.b16 %v4884, %v4876
    %v6229 = vpack.c.b16 %v4885, %v4877
    %v6230 = vpack.c.b16 %v4886, %v4878
    %v6231 = vpack.c.b16 %v4887, %v4879
    %v6232 = vpack.c.b16 %v4888, %v4880
    %v6233 = vpack.c.b16 %v4897, %v4889
    %v6234 = vpack.c.b16 %v4898, %v4890
    %v6235 = vpack.c.b16 %v4899, %v4891
    %v6236 = vpack.c.b16 %v4900, %v4892
    %v6237 = vpack.c.b16 %v4901, %v4893
    %v6238 = vpack.c.b16 %v4902, %v4894
    %v6239 = vpack.c.b16 %v4903, %v4895
    %v6240 = vpack.c.b16 %v4904, %v4896
    %v6241 = vpack.c.b16 %v4913, %v4905
    %v6242 = vpack.c.b16 %v4914, %v4906
    %v6243 = vpack.c.b16 %v4915, %v4907
    %v6244 = vpack.c.b16 %v4916, %v4908
    %v6245 = vpack.c.b16 %v4917, %v4909
    %v6246 = vpack.c.b16 %v4918, %v4910
    %v6247 = vpack.c.b16 %v4919, %v4911
    %v6248 = vpack.c.b16 %v4920, %v4912
    %v6249 = vpack.c.b16 %v4929, %v4921
    %v6250 = vpack.c.b16 %v4930, %v4922
    %v6251 = vpack.c.b16 %v4931, %v4923
    %v6252 = vpack.c.b16 %v4932, %v4924
    %v6253 = vpack.c.b16 %v4933, %v4925
    %v6254 = vpack.c.b16 %v4934, %v4926
    %v6255 = vpack.c.b16 %v4935, %v4927
    %v6256 = vpack.c.b16 %v4936, %v4928
    %v6257 = vpack.c.b16 %v4945, %v4937
    %v6258 = vpack.c.b16 %v4946, %v4938
    %v6259 = vpack.c.b16 %v4947, %v4939
    %v6260 = vpack.c.b16 %v4948, %v4940
    %v6261 = vpack.c.b16 %v4949, %v4941
    %v6262 = vpack.c.b16 %v4950, %v4942
    %v6263 = vpack.c.b16 %v4951, %v4943
    %v6264 = vpack.c.b16 %v4952, %v4944
    %v6265 = vpack.c.b16 %v4961, %v4953
    %v6266 = vpack.c.b16 %v4962, %v4954
    %v6267 = vpack.c.b16 %v4963, %v4955
    %v6268 = vpack.c.b16 %v4964, %v4956
    %v6269 = vpack.c.b16 %v4965, %v4957
    %v6270 = vpack.c.b16 %v4966, %v4958
    %v6271 = vpack.c.b16 %v4967, %v4959
    %v6272 = vpack.c.b16 %v4968, %v4960
    %v6273 = vpack.c.b16 %v4977, %v4969
    %v6274 = vpack.c.b16 %v4978, %v4970
    %v6275 = vpack.c.b16 %v4979, %v4971
    %v6276 = vpack.c.b16 %v4980, %v4972
    %v6277 = vpack.c.b16 %v4981, %v4973
    %v6278 = vpack.c.b16 %v4982, %v4974
    %v6279 = vpack.c.b16 %v4983, %v4975
    %v6280 = vpack.c.b16 %v4984, %v4976
    %v6281 = vpack.c.b16 %v4993, %v4985
    %v6282 = vpack.c.b16 %v4994, %v4986
    %v6283 = vpack.c.b16 %v4995, %v4987
    %v6284 = vpack.c.b16 %v4996, %v4988
    %v6285 = vpack.c.b16 %v4997, %v4989
    %v6286 = vpack.c.b16 %v4998, %v4990
    %v6287 = vpack.c.b16 %v4999, %v4991
    %v6288 = vpack.c.b16 %v5000, %v4992
    %v6289 = vpack.c.b16 %v5009, %v5001
    %v6290 = vpack.c.b16 %v5010, %v5002
    %v6291 = vpack.c.b16 %v5011, %v5003
    %v6292 = vpack.c.b16 %v5012, %v5004
    %v6293 = vpack.c.b16 %v5013, %v5005
    %v6294 = vpack.c.b16 %v5014, %v5006
    %v6295 = vpack.c.b16 %v5015, %v5007
    %v6296 = vpack.c.b16 %v5016, %v5008
    %v6297 = vpack.c.b16 %v5025, %v5017
    %v6298 = vpack.c.b16 %v5026, %v5018
    %v6299 = vpack.c.b16 %v5027, %v5019
    %v6300 = vpack.c.b16 %v5028, %v5020
    %v6301 = vpack.c.b16 %v5029, %v5021
    %v6302 = vpack.c.b16 %v5030, %v5022
    %v6303 = vpack.c.b16 %v5031, %v5023
    %v6304 = vpack.c.b16 %v5032, %v5024
    %v6305 = vpack.c.b16 %v5041, %v5033
    %v6306 = vpack.c.b16 %v5042, %v5034
    %v6307 = vpack.c.b16 %v5043, %v5035
    %v6308 = vpack.c.b16 %v5044, %v5036
    %v6309 = vpack.c.b16 %v5045, %v5037
    %v6310 = vpack.c.b16 %v5046, %v5038
    %v6311 = vpack.c.b16 %v5047, %v5039
    %v6312 = vpack.c.b16 %v5048, %v5040
    %v6313 = vpack.c.b16 %v5057, %v5049
    %v6314 = vpack.c.b16 %v5058, %v5050
    %v6315 = vpack.c.b16 %v5059, %v5051
    %v6316 = vpack.c.b16 %v5060, %v5052
    %v6317 = vpack.c.b16 %v5061, %v5053
    %v6318 = vpack.c.b16 %v5062, %v5054
    %v6319 = vpack.c.b16 %v5063, %v5055
    %v6320 = vpack.c.b16 %v5064, %v5056
    %v6321 = vpack.c.b16 %v5073, %v5065
    %v6322 = vpack.c.b16 %v5074, %v5066
    %v6323 = vpack.c.b16 %v5075, %v5067
    %v6324 = vpack.c.b16 %v5076, %v5068
    %v6325 = vpack.c.b16 %v5077, %v5069
    %v6326 = vpack.c.b16 %v5078, %v5070
    %v6327 = vpack.c.b16 %v5079, %v5071
    %v6328 = vpack.c.b16 %v5080, %v5072
    %v6329 = vpack.c.b16 %v5089, %v5081
    %v6330 = vpack.c.b16 %v5090, %v5082
    %v6331 = vpack.c.b16 %v5091, %v5083
    %v6332 = vpack.c.b16 %v5092, %v5084
    %v6333 = vpack.c.b16 %v5093, %v5085
    %v6334 = vpack.c.b16 %v5094, %v5086
    %v6335 = vpack.c.b16 %v5095, %v5087
    %v6336 = vpack.c.b16 %v5096, %v5088
    %v6337 = vpack.c.b16 %v5105, %v5097
    %v6338 = vpack.c.b16 %v5106, %v5098
    %v6339 = vpack.c.b16 %v5107, %v5099
    %v6340 = vpack.c.b16 %v5108, %v5100
    %v6341 = vpack.c.b16 %v5109, %v5101
    %v6342 = vpack.c.b16 %v5110, %v5102
    %v6343 = vpack.c.b16 %v5111, %v5103
    %v6344 = vpack.c.b16 %v5112, %v5104
    %v6345 = vpack.c.b16 %v5121, %v5113
    %v6346 = vpack.c.b16 %v5122, %v5114
    %v6347 = vpack.c.b16 %v5123, %v5115
    %v6348 = vpack.c.b16 %v5124, %v5116
    %v6349 = vpack.c.b16 %v5125, %v5117
    %v6350 = vpack.c.b16 %v5126, %v5118
    %v6351 = vpack.c.b16 %v5127, %v5119
    %v6352 = vpack.c.b16 %v5128, %v5120
    %v6353 = vpack.c.b16 %v5137, %v5129
    %v6354 = vpack.c.b16 %v5138, %v5130
    %v6355 = vpack.c.b16 %v5139, %v5131
    %v6356 = vpack.c.b16 %v5140, %v5132
    %v6357 = vpack.c.b16 %v5141, %v5133
    %v6358 = vpack.c.b16 %v5142, %v5134
    %v6359 = vpack.c.b16 %v5143, %v5135
    %v6360 = vpack.c.b16 %v5144, %v5136
    %v6361 = vpack.c.b16 %v5153, %v5145
    %v6362 = vpack.c.b16 %v5154, %v5146
    %v6363 = vpack.c.b16 %v5155, %v5147
    %v6364 = vpack.c.b16 %v5156, %v5148
    %v6365 = vpack.c.b16 %v5157, %v5149
    %v6366 = vpack.c.b16 %v5158, %v5150
    %v6367 = vpack.c.b16 %v5159, %v5151
    %v6368 = vpack.c.b16 %v5160, %v5152
    %v6369 = vpack.c.b16 %v5169, %v5161
    %v6370 = vpack.c.b16 %v5170, %v5162
    %v6371 = vpack.c.b16 %v5171, %v5163
    %v6372 = vpack.c.b16 %v5172, %v5164
    %v6373 = vpack.c.b16 %v5173, %v5165
    %v6374 = vpack.c.b16 %v5174, %v5166
    %v6375 = vpack.c.b16 %v5175, %v5167
    %v6376 = vpack.c.b16 %v5176, %v5168
    %v6377 = vpack.c.b16 %v5185, %v5177
    %v6378 = vpack.c.b16 %v5186, %v5178
    %v6379 = vpack.c.b16 %v5187, %v5179
    %v6380 = vpack.c.b16 %v5188, %v5180
    %v6381 = vpack.c.b16 %v5189, %v5181
    %v6382 = vpack.c.b16 %v5190, %v5182
    %v6383 = vpack.c.b16 %v5191, %v5183
    %v6384 = vpack.c.b16 %v5192, %v5184
    %v6385 = vpack.c.b16 %v5201, %v5193
    %v6386 = vpack.c.b16 %v5202, %v5194
    %v6387 = vpack.c.b16 %v5203, %v5195
    %v6388 = vpack.c.b16 %v5204, %v5196
    %v6389 = vpack.c.b16 %v5205, %v5197
    %v6390 = vpack.c.b16 %v5206, %v5198
    %v6391 = vpack.c.b16 %v5207, %v5199
    %v6392 = vpack.c.b16 %v5208, %v5200
    %v6393 = vpack.c.b16 %v5217, %v5209
    %v6394 = vpack.c.b16 %v5218, %v5210
    %v6395 = vpack.c.b16 %v5219, %v5211
    %v6396 = vpack.c.b16 %v5220, %v5212
    %v6397 = vpack.c.b16 %v5221, %v5213
    %v6398 = vpack.c.b16 %v5222, %v5214
    %v6399 = vpack.c.b16 %v5223, %v5215
    %v6400 = vpack.c.b16 %v5224, %v5216
    %v6401 = vpack.c.b16 %v5233, %v5225
    %v6402 = vpack.c.b16 %v5234, %v5226
    %v6403 = vpack.c.b16 %v5235, %v5227
    %v6404 = vpack.c.b16 %v5236, %v5228
    %v6405 = vpack.c.b16 %v5237, %v5229
    %v6406 = vpack.c.b16 %v5238, %v5230
    %v6407 = vpack.c.b16 %v5239, %v5231
    %v6408 = vpack.c.b16 %v5240, %v5232
    %v6409 = vpack.c.b16 %v5249, %v5241
    %v6410 = vpack.c.b16 %v5250, %v5242
    %v6411 = vpack.c.b16 %v5251, %v5243
    %v6412 = vpack.c.b16 %v5252, %v5244
    %v6413 = vpack.c.b16 %v5253, %v5245
    %v6414 = vpack.c.b16 %v5254, %v5246
    %v6415 = vpack.c.b16 %v5255, %v5247
    %v6416 = vpack.c.b16 %v5256, %v5248
    %v6417 = vpack.c.b16 %v5265, %v5257
    %v6418 = vpack.c.b16 %v5266, %v5258
    %v6419 = vpack.c.b16 %v5267, %v5259
    %v6420 = vpack.c.b16 %v5268, %v5260
    %v6421 = vpack.c.b16 %v5269, %v5261
    %v6422 = vpack.c.b16 %v5270, %v5262
    %v6423 = vpack.c.b16 %v5271, %v5263
    %v6424 = vpack.c.b16 %v5272, %v5264
    %v6425 = vpack.c.b16 %v5281, %v5273
    %v6426 = vpack.c.b16 %v5282, %v5274
    %v6427 = vpack.c.b16 %v5283, %v5275
    %v6428 = vpack.c.b16 %v5284, %v5276
    %v6429 = vpack.c.b16 %v5285, %v5277
    %v6430 = vpack.c.b16 %v5286, %v5278
    %v6431 = vpack.c.b16 %v5287, %v5279
    %v6432 = vpack.c.b16 %v5288, %v5280
    %v6433 = vpack.c.b16 %v5297, %v5289
    %v6434 = vpack.c.b16 %v5298, %v5290
    %v6435 = vpack.c.b16 %v5299, %v5291
    %v6436 = vpack.c.b16 %v5300, %v5292
    %v6437 = vpack.c.b16 %v5301, %v5293
    %v6438 = vpack.c.b16 %v5302, %v5294
    %v6439 = vpack.c.b16 %v5303, %v5295
    %v6440 = vpack.c.b16 %v5304, %v5296
    %v6441 = vpack.c.b16 %v5313, %v5305
    %v6442 = vpack.c.b16 %v5314, %v5306
    %v6443 = vpack.c.b16 %v5315, %v5307
    %v6444 = vpack.c.b16 %v5316, %v5308
    %v6445 = vpack.c.b16 %v5317, %v5309
    %v6446 = vpack.c.b16 %v5318, %v5310
    %v6447 = vpack.c.b16 %v5319, %v5311
    %v6448 = vpack.c.b16 %v5320, %v5312
    %v6449 = vpack.c.b16 %v5329, %v5321
    %v6450 = vpack.c.b16 %v5330, %v5322
    %v6451 = vpack.c.b16 %v5331, %v5323
    %v6452 = vpack.c.b16 %v5332, %v5324
    %v6453 = vpack.c.b16 %v5333, %v5325
    %v6454 = vpack.c.b16 %v5334, %v5326
    %v6455 = vpack.c.b16 %v5335, %v5327
    %v6456 = vpack.c.b16 %v5336, %v5328
    %v6457 = vpack.c.b16 %v5345, %v5337
    %v6458 = vpack.c.b16 %v5346, %v5338
    %v6459 = vpack.c.b16 %v5347, %v5339
    %v6460 = vpack.c.b16 %v5348, %v5340
    %v6461 = vpack.c.b16 %v5349, %v5341
    %v6462 = vpack.c.b16 %v5350, %v5342
    %v6463 = vpack.c.b16 %v5351, %v5343
    %v6464 = vpack.c.b16 %v5352, %v5344
    %v6465 = vpack.c.b16 %v5361, %v5353
    %v6466 = vpack.c.b16 %v5362, %v5354
    %v6467 = vpack.c.b16 %v5363, %v5355
    %v6468 = vpack.c.b16 %v5364, %v5356
    %v6469 = vpack.c.b16 %v5365, %v5357
    %v6470 = vpack.c.b16 %v5366, %v5358
    %v6471 = vpack.c.b16 %v5367, %v5359
    %v6472 = vpack.c.b16 %v5368, %v5360
    %v6473 = vpack.c.b16 %v5377, %v5369
    %v6474 = vpack.c.b16 %v5378, %v5370
    %v6475 = vpack.c.b16 %v5379, %v5371
    %v6476 = vpack.c.b16 %v5380, %v5372
    %v6477 = vpack.c.b16 %v5381, %v5373
    %v6478 = vpack.c.b16 %v5382, %v5374
    %v6479 = vpack.c.b16 %v5383, %v5375
    %v6480 = vpack.c.b16 %v5384, %v5376
    %v6481 = vpack.c.b16 %v5393, %v5385
    %v6482 = vpack.c.b16 %v5394, %v5386
    %v6483 = vpack.c.b16 %v5395, %v5387
    %v6484 = vpack.c.b16 %v5396, %v5388
    %v6485 = vpack.c.b16 %v5397, %v5389
    %v6486 = vpack.c.b16 %v5398, %v5390
    %v6487 = vpack.c.b16 %v5399, %v5391
    %v6488 = vpack.c.b16 %v5400, %v5392
    %v6489 = vpack.c.b16 %v5409, %v5401
    %v6490 = vpack.c.b16 %v5410, %v5402
    %v6491 = vpack.c.b16 %v5411, %v5403
    %v6492 = vpack.c.b16 %v5412, %v5404
    %v6493 = vpack.c.b16 %v5413, %v5405
    %v6494 = vpack.c.b16 %v5414, %v5406
    %v6495 = vpack.c.b16 %v5415, %v5407
    %v6496 = vpack.c.b16 %v5416, %v5408
    %v6497 = vpack.c.b16 %v5425, %v5417
    %v6498 = vpack.c.b16 %v5426, %v5418
    %v6499 = vpack.c.b16 %v5427, %v5419
    %v6500 = vpack.c.b16 %v5428, %v5420
    %v6501 = vpack.c.b16 %v5429, %v5421
    %v6502 = vpack.c.b16 %v5430, %v5422
    %v6503 = vpack.c.b16 %v5431, %v5423
    %v6504 = vpack.c.b16 %v5432, %v5424
    %v6505 = vpack.c.b16 %v5441, %v5433
    %v6506 = vpack.c.b16 %v5442, %v5434
    %v6507 = vpack.c.b16 %v5443, %v5435
    %v6508 = vpack.c.b16 %v5444, %v5436
    %v6509 = vpack.c.b16 %v5445, %v5437
    %v6510 = vpack.c.b16 %v5446, %v5438
    %v6511 = vpack.c.b16 %v5447, %v5439
    %v6512 = vpack.c.b16 %v5448, %v5440
    %v6513 = vpack.c.b16 %v5457, %v5449
    %v6514 = vpack.c.b16 %v5458, %v5450
    %v6515 = vpack.c.b16 %v5459, %v5451
    %v6516 = vpack.c.b16 %v5460, %v5452
    %v6517 = vpack.c.b16 %v5461, %v5453
    %v6518 = vpack.c.b16 %v5462, %v5454
    %v6519 = vpack.c.b16 %v5463, %v5455
    %v6520 = vpack.c.b16 %v5464, %v5456
    %v6521 = vpack.c.b16 %v5473, %v5465
    %v6522 = vpack.c.b16 %v5474, %v5466
    %v6523 = vpack.c.b16 %v5475, %v5467
    %v6524 = vpack.c.b16 %v5476, %v5468
    %v6525 = vpack.c.b16 %v5477, %v5469
    %v6526 = vpack.c.b16 %v5478, %v5470
    %v6527 = vpack.c.b16 %v5479, %v5471
    %v6528 = vpack.c.b16 %v5480, %v5472
    %v6529 = vpack.c.b16 %v5489, %v5481
    %v6530 = vpack.c.b16 %v5490, %v5482
    %v6531 = vpack.c.b16 %v5491, %v5483
    %v6532 = vpack.c.b16 %v5492, %v5484
    %v6533 = vpack.c.b16 %v5493, %v5485
    %v6534 = vpack.c.b16 %v5494, %v5486
    %v6535 = vpack.c.b16 %v5495, %v5487
    %v6536 = vpack.c.b16 %v5496, %v5488
    %v6537 = vpack.c.b16 %v5505, %v5497
    %v6538 = vpack.c.b16 %v5506, %v5498
    %v6539 = vpack.c.b16 %v5507, %v5499
    %v6540 = vpack.c.b16 %v5508, %v5500
    %v6541 = vpack.c.b16 %v5509, %v5501
    %v6542 = vpack.c.b16 %v5510, %v5502
    %v6543 = vpack.c.b16 %v5511, %v5503
    %v6544 = vpack.c.b16 %v5512, %v5504
    %v6545 = vpack.c.b16 %v5521, %v5513
    %v6546 = vpack.c.b16 %v5522, %v5514
    %v6547 = vpack.c.b16 %v5523, %v5515
    %v6548 = vpack.c.b16 %v5524, %v5516
    %v6549 = vpack.c.b16 %v5525, %v5517
    %v6550 = vpack.c.b16 %v5526, %v5518
    %v6551 = vpack.c.b16 %v5527, %v5519
    %v6552 = vpack.c.b16 %v5528, %v5520
    %7577 = vmatprep.subr.bf16.mxu0 %v5530
    %7578 = vmatpush1.bf16.msra.mxu0 %v5529
    %7579 = vmatprep.subr.bf16.mxu0 %v5538
    %7580 = vmatpush1.bf16.msra.mxu0 %v5537
    %7581 = vmatprep.subr.bf16.mxu0 %v5546
    %7582 = vmatpush1.bf16.msra.mxu0 %v5545
    %7583 = vmatprep.subr.bf16.mxu0 %v5554
    %7584 = vmatpush1.bf16.msra.mxu0 %v5553
    %7585 = vmatprep.subr.bf16.mxu0 %v5562
    %7586 = vmatpush1.bf16.msra.mxu0 %v5561
    %7587 = vmatprep.subr.bf16.mxu0 %v5570
    %7588 = vmatpush1.bf16.msra.mxu0 %v5569
    %7589 = vmatprep.subr.bf16.mxu0 %v5578
    %7590 = vmatpush1.bf16.msra.mxu0 %v5577
    %7591 = vmatprep.subr.bf16.mxu0 %v5586
    %7592 = vmatpush1.bf16.msra.mxu0 %v5585
    %7593 = vmatprep.subr.bf16.mxu0 %v5594
    %7594 = vmatpush1.bf16.msra.mxu0 %v5593
    %7595 = vmatprep.subr.bf16.mxu0 %v5602
    %7596 = vmatpush1.bf16.msra.mxu0 %v5601
    %7597 = vmatprep.subr.bf16.mxu0 %v5610
    %7598 = vmatpush1.bf16.msra.mxu0 %v5609
    %7599 = vmatprep.subr.bf16.mxu0 %v5618
    %7600 = vmatpush1.bf16.msra.mxu0 %v5617
    %7601 = vmatprep.subr.bf16.mxu0 %v5626
    %7602 = vmatpush1.bf16.msra.mxu0 %v5625
    %7603 = vmatprep.subr.bf16.mxu0 %v5634
    %7604 = vmatpush1.bf16.msra.mxu0 %v5633
    %7605 = vmatprep.subr.bf16.mxu0 %v5642
    %7606 = vmatpush1.bf16.msra.mxu0 %v5641
    %7607 = vmatprep.subr.bf16.mxu0 %v5650
    %7608 = vmatpush1.bf16.msra.mxu0 %v5649
    %7609 = vmatprep.mubr.bf16.mxu0 %v1376
    %7610 = vmatmul.mubr.bf16.gmra.mrb[0].mxu0 %v1375
    %v7611 = vpop.f32.mrb[0].mxu0
    %v7612 = vadd.f32 %v2420, %v7611
    %v7613 = vpop.f32.mrb[0].mxu0
    %v7614 = vadd.f32 %v2424, %v7613
    %v7615 = vpop.f32.mrb[0].mxu0
    %v7616 = vpop.f32.mrb[0].mxu0
    %7617 = vdwg.mxu0
    %7618 = vmatprep.subr.bf16.mxu0 %v5658
    %7619 = vmatpush1.bf16.msra.mxu0 %v5657
    %7620 = vmatprep.subr.bf16.mxu0 %v5666
    %7621 = vmatpush1.bf16.msra.mxu0 %v5665
    %7622 = vmatprep.subr.bf16.mxu0 %v5674
    %7623 = vmatpush1.bf16.msra.mxu0 %v5673
    %7624 = vmatprep.subr.bf16.mxu0 %v5682
    %7625 = vmatpush1.bf16.msra.mxu0 %v5681
    %7626 = vmatprep.subr.bf16.mxu0 %v5690
    %7627 = vmatpush1.bf16.msra.mxu0 %v5689
    %7628 = vmatprep.subr.bf16.mxu0 %v5698
    %7629 = vmatpush1.bf16.msra.mxu0 %v5697
    %7630 = vmatprep.subr.bf16.mxu0 %v5706
    %7631 = vmatpush1.bf16.msra.mxu0 %v5705
    %7632 = vmatprep.subr.bf16.mxu0 %v5714
    %7633 = vmatpush1.bf16.msra.mxu0 %v5713
    %7634 = vmatprep.subr.bf16.mxu0 %v5722
    %7635 = vmatpush1.bf16.msra.mxu0 %v5721
    %7636 = vmatprep.subr.bf16.mxu0 %v5730
    %7637 = vmatpush1.bf16.msra.mxu0 %v5729
    %7638 = vmatprep.subr.bf16.mxu0 %v5738
    %7639 = vmatpush1.bf16.msra.mxu0 %v5737
    %7640 = vmatprep.subr.bf16.mxu0 %v5746
    %7641 = vmatpush1.bf16.msra.mxu0 %v5745
    %7642 = vmatprep.subr.bf16.mxu0 %v5754
    %7643 = vmatpush1.bf16.msra.mxu0 %v5753
    %7644 = vmatprep.subr.bf16.mxu0 %v5762
    %7645 = vmatpush1.bf16.msra.mxu0 %v5761
    %7646 = vmatprep.subr.bf16.mxu0 %v5770
    %7647 = vmatpush1.bf16.msra.mxu0 %v5769
    %7648 = vmatprep.subr.bf16.mxu0 %v5778
    %7649 = vmatpush1.bf16.msra.mxu0 %v5777
    %7650 = vmatprep.mubr.bf16.mxu0 %v1378
    %7651 = vmatmul.mubr.bf16.gmra.mrb[0].mxu0 %v1377
    %v7652 = vpop.f32.mrb[0].mxu0
    %v7653 = vadd.f32 %v7612, %v7652
    %v7654 = vpop.f32.mrb[0].mxu0
    %v7655 = vadd.f32 %v7614, %v7654
    %v7656 = vpop.f32.mrb[0].mxu0
    %v7657 = vpop.f32.mrb[0].mxu0
    %7658 = vdwg.mxu0
    %7659 = vmatprep.subr.bf16.mxu0 %v5786
    %7660 = vmatpush1.bf16.msra.mxu0 %v5785
    %7661 = vmatprep.subr.bf16.mxu0 %v5794
    %7662 = vmatpush1.bf16.msra.mxu0 %v5793
    %7663 = vmatprep.subr.bf16.mxu0 %v5802
    %7664 = vmatpush1.bf16.msra.mxu0 %v5801
    %7665 = vmatprep.subr.bf16.mxu0 %v5810
    %7666 = vmatpush1.bf16.msra.mxu0 %v5809
    %7667 = vmatprep.subr.bf16.mxu0 %v5818
    %7668 = vmatpush1.bf16.msra.mxu0 %v5817
    %7669 = vmatprep.subr.bf16.mxu0 %v5826
    %7670 = vmatpush1.bf16.msra.mxu0 %v5825
    %7671 = vmatprep.subr.bf16.mxu0 %v5834
    %7672 = vmatpush1.bf16.msra.mxu0 %v5833
    %7673 = vmatprep.subr.bf16.mxu0 %v5842
    %7674 = vmatpush1.bf16.msra.mxu0 %v5841
    %7675 = vmatprep.subr.bf16.mxu0 %v5850
    %7676 = vmatpush1.bf16.msra.mxu0 %v5849
    %7677 = vmatprep.subr.bf16.mxu0 %v5858
    %7678 = vmatpush1.bf16.msra.mxu0 %v5857
    %7679 = vmatprep.subr.bf16.mxu0 %v5866
    %7680 = vmatpush1.bf16.msra.mxu0 %v5865
    %7681 = vmatprep.subr.bf16.mxu0 %v5874
    %7682 = vmatpush1.bf16.msra.mxu0 %v5873
    %7683 = vmatprep.subr.bf16.mxu0 %v5882
    %7684 = vmatpush1.bf16.msra.mxu0 %v5881
    %7685 = vmatprep.subr.bf16.mxu0 %v5890
    %7686 = vmatpush1.bf16.msra.mxu0 %v5889
    %7687 = vmatprep.subr.bf16.mxu0 %v5898
    %7688 = vmatpush1.bf16.msra.mxu0 %v5897
    %7689 = vmatprep.subr.bf16.mxu0 %v5906
    %7690 = vmatpush1.bf16.msra.mxu0 %v5905
    %7691 = vmatprep.mubr.bf16.mxu0 %v1380
    %7692 = vmatmul.mubr.bf16.gmra.mrb[0].mxu0 %v1379
    %v7693 = vpop.f32.mrb[0].mxu0
    %v7694 = vadd.f32 %v7653, %v7693
    %v7695 = vpop.f32.mrb[0].mxu0
    %v7696 = vadd.f32 %v7655, %v7695
    %v7697 = vpop.f32.mrb[0].mxu0
    %v7698 = vpop.f32.mrb[0].mxu0
    %7699 = vdwg.mxu0
    %7700 = vmatprep.subr.bf16.mxu0 %v5914
    %7701 = vmatpush1.bf16.msra.mxu0 %v5913
    %7702 = vmatprep.subr.bf16.mxu0 %v5922
    %7703 = vmatpush1.bf16.msra.mxu0 %v5921
    %7704 = vmatprep.subr.bf16.mxu0 %v5930
    %7705 = vmatpush1.bf16.msra.mxu0 %v5929
    %7706 = vmatprep.subr.bf16.mxu0 %v5938
    %7707 = vmatpush1.bf16.msra.mxu0 %v5937
    %7708 = vmatprep.subr.bf16.mxu0 %v5946
    %7709 = vmatpush1.bf16.msra.mxu0 %v5945
    %7710 = vmatprep.subr.bf16.mxu0 %v5954
    %7711 = vmatpush1.bf16.msra.mxu0 %v5953
    %7712 = vmatprep.subr.bf16.mxu0 %v5962
    %7713 = vmatpush1.bf16.msra.mxu0 %v5961
    %7714 = vmatprep.subr.bf16.mxu0 %v5970
    %7715 = vmatpush1.bf16.msra.mxu0 %v5969
    %7716 = vmatprep.subr.bf16.mxu0 %v5978
    %7717 = vmatpush1.bf16.msra.mxu0 %v5977
    %7718 = vmatprep.subr.bf16.mxu0 %v5986
    %7719 = vmatpush1.bf16.msra.mxu0 %v5985
    %7720 = vmatprep.subr.bf16.mxu0 %v5994
    %7721 = vmatpush1.bf16.msra.mxu0 %v5993
    %7722 = vmatprep.subr.bf16.mxu0 %v6002
    %7723 = vmatpush1.bf16.msra.mxu0 %v6001
    %7724 = vmatprep.subr.bf16.mxu0 %v6010
    %7725 = vmatpush1.bf16.msra.mxu0 %v6009
    %7726 = vmatprep.subr.bf16.mxu0 %v6018
    %7727 = vmatpush1.bf16.msra.mxu0 %v6017
    %7728 = vmatprep.subr.bf16.mxu0 %v6026
    %7729 = vmatpush1.bf16.msra.mxu0 %v6025
    %7730 = vmatprep.subr.bf16.mxu0 %v6034
    %7731 = vmatpush1.bf16.msra.mxu0 %v6033
    %7732 = vmatprep.mubr.bf16.mxu0 %v1382
    %7733 = vmatmul.mubr.bf16.gmra.mrb[0].mxu0 %v1381
    %v7734 = vpop.f32.mrb[0].mxu0
    %v7735 = vadd.f32 %v7694, %v7734
    %v7736 = vpop.f32.mrb[0].mxu0
    %v7737 = vadd.f32 %v7696, %v7736
    %v7738 = vpop.f32.mrb[0].mxu0
    %v7739 = vpop.f32.mrb[0].mxu0
    %7740 = vdwg.mxu0
    %7741 = vmatprep.subr.bf16.mxu0 %v6042
    %7742 = vmatpush1.bf16.msra.mxu0 %v6041
    %7743 = vmatprep.subr.bf16.mxu0 %v6050
    %7744 = vmatpush1.bf16.msra.mxu0 %v6049
    %7745 = vmatprep.subr.bf16.mxu0 %v6058
    %7746 = vmatpush1.bf16.msra.mxu0 %v6057
    %7747 = vmatprep.subr.bf16.mxu0 %v6066
    %7748 = vmatpush1.bf16.msra.mxu0 %v6065
    %7749 = vmatprep.subr.bf16.mxu0 %v6074
    %7750 = vmatpush1.bf16.msra.mxu0 %v6073
    %7751 = vmatprep.subr.bf16.mxu0 %v6082
    %7752 = vmatpush1.bf16.msra.mxu0 %v6081
    %7753 = vmatprep.subr.bf16.mxu0 %v6090
    %7754 = vmatpush1.bf16.msra.mxu0 %v6089
    %7755 = vmatprep.subr.bf16.mxu0 %v6098
    %7756 = vmatpush1.bf16.msra.mxu0 %v6097
    %7757 = vmatprep.subr.bf16.mxu0 %v6106
    %7758 = vmatpush1.bf16.msra.mxu0 %v6105
    %7759 = vmatprep.subr.bf16.mxu0 %v6114
    %7760 = vmatpush1.bf16.msra.mxu0 %v6113
    %7761 = vmatprep.subr.bf16.mxu0 %v6122
    %7762 = vmatpush1.bf16.msra.mxu0 %v6121
    %7763 = vmatprep.subr.bf16.mxu0 %v6130
    %7764 = vmatpush1.bf16.msra.mxu0 %v6129
    %7765 = vmatprep.subr.bf16.mxu0 %v6138
    %7766 = vmatpush1.bf16.msra.mxu0 %v6137
    %7767 = vmatprep.subr.bf16.mxu0 %v6146
    %7768 = vmatpush1.bf16.msra.mxu0 %v6145
    %7769 = vmatprep.subr.bf16.mxu0 %v6154
    %7770 = vmatpush1.bf16.msra.mxu0 %v6153
    %7771 = vmatprep.subr.bf16.mxu0 %v6162
    %7772 = vmatpush1.bf16.msra.mxu0 %v6161
    %7773 = vmatprep.mubr.bf16.mxu0 %v1384
    %7774 = vmatmul.mubr.bf16.gmra.mrb[0].mxu0 %v1383
    %v7775 = vpop.f32.mrb[0].mxu0
    %v7776 = vadd.f32 %v7735, %v7775
    %v7777 = vpop.f32.mrb[0].mxu0
    %v7778 = vadd.f32 %v7737, %v7777
    %v7779 = vpop.f32.mrb[0].mxu0
    %v7780 = vpop.f32.mrb[0].mxu0
    %7781 = vdwg.mxu0
    %7782 = vmatprep.subr.bf16.mxu0 %v6170
    %7783 = vmatpush1.bf16.msra.mxu0 %v6169
    %7784 = vmatprep.subr.bf16.mxu0 %v6178
    %7785 = vmatpush1.bf16.msra.mxu0 %v6177
    %7786 = vmatprep.subr.bf16.mxu0 %v6186
    %7787 = vmatpush1.bf16.msra.mxu0 %v6185
    %7788 = vmatprep.subr.bf16.mxu0 %v6194
    %7789 = vmatpush1.bf16.msra.mxu0 %v6193
    %7790 = vmatprep.subr.bf16.mxu0 %v6202
    %7791 = vmatpush1.bf16.msra.mxu0 %v6201
    %7792 = vmatprep.subr.bf16.mxu0 %v6210
    %7793 = vmatpush1.bf16.msra.mxu0 %v6209
    %7794 = vmatprep.subr.bf16.mxu0 %v6218
    %7795 = vmatpush1.bf16.msra.mxu0 %v6217
    %7796 = vmatprep.subr.bf16.mxu0 %v6226
    %7797 = vmatpush1.bf16.msra.mxu0 %v6225
    %7798 = vmatprep.subr.bf16.mxu0 %v6234
    %7799 = vmatpush1.bf16.msra.mxu0 %v6233
    %7800 = vmatprep.subr.bf16.mxu0 %v6242
    %7801 = vmatpush1.bf16.msra.mxu0 %v6241
    %7802 = vmatprep.subr.bf16.mxu0 %v6250
    %7803 = vmatpush1.bf16.msra.mxu0 %v6249
    %7804 = vmatprep.subr.bf16.mxu0 %v6258
    %7805 = vmatpush1.bf16.msra.mxu0 %v6257
    %7806 = vmatprep.subr.bf16.mxu0 %v6266
    %7807 = vmatpush1.bf16.msra.mxu0 %v6265
    %7808 = vmatprep.subr.bf16.mxu0 %v6274
    %7809 = vmatpush1.bf16.msra.mxu0 %v6273
    %7810 = vmatprep.subr.bf16.mxu0 %v6282
    %7811 = vmatpush1.bf16.msra.mxu0 %v6281
    %7812 = vmatprep.subr.bf16.mxu0 %v6290
    %7813 = vmatpush1.bf16.msra.mxu0 %v6289
    %7814 = vmatprep.mubr.bf16.mxu0 %v1386
    %7815 = vmatmul.mubr.bf16.gmra.mrb[0].mxu0 %v1385
    %v7816 = vpop.f32.mrb[0].mxu0
    %v7817 = vadd.f32 %v7776, %v7816
    %v7818 = vpop.f32.mrb[0].mxu0
    %v7819 = vadd.f32 %v7778, %v7818
    %v7820 = vpop.f32.mrb[0].mxu0
    %v7821 = vpop.f32.mrb[0].mxu0
    %7822 = vdwg.mxu0
    %7823 = vmatprep.subr.bf16.mxu0 %v6298
    %7824 = vmatpush1.bf16.msra.mxu0 %v6297
    %7825 = vmatprep.subr.bf16.mxu0 %v6306
    %7826 = vmatpush1.bf16.msra.mxu0 %v6305
    %7827 = vmatprep.subr.bf16.mxu0 %v6314
    %7828 = vmatpush1.bf16.msra.mxu0 %v6313
    %7829 = vmatprep.subr.bf16.mxu0 %v6322
    %7830 = vmatpush1.bf16.msra.mxu0 %v6321
    %7831 = vmatprep.subr.bf16.mxu0 %v6330
    %7832 = vmatpush1.bf16.msra.mxu0 %v6329
    %7833 = vmatprep.subr.bf16.mxu0 %v6338
    %7834 = vmatpush1.bf16.msra.mxu0 %v6337
    %7835 = vmatprep.subr.bf16.mxu0 %v6346
    %7836 = vmatpush1.bf16.msra.mxu0 %v6345
    %7837 = vmatprep.subr.bf16.mxu0 %v6354
    %7838 = vmatpush1.bf16.msra.mxu0 %v6353
    %7839 = vmatprep.subr.bf16.mxu0 %v6362
    %7840 = vmatpush1.bf16.msra.mxu0 %v6361
    %7841 = vmatprep.subr.bf16.mxu0 %v6370
    %7842 = vmatpush1.bf16.msra.mxu0 %v6369
    %7843 = vmatprep.subr.bf16.mxu0 %v6378
    %7844 = vmatpush1.bf16.msra.mxu0 %v6377
    %7845 = vmatprep.subr.bf16.mxu0 %v6386
    %7846 = vmatpush1.bf16.msra.mxu0 %v6385
    %7847 = vmatprep.subr.bf16.mxu0 %v6394
    %7848 = vmatpush1.bf16.msra.mxu0 %v6393
    %7849 = vmatprep.subr.bf16.mxu0 %v6402
    %7850 = vmatpush1.bf16.msra.mxu0 %v6401
    %7851 = vmatprep.subr.bf16.mxu0 %v6410
    %7852 = vmatpush1.bf16.msra.mxu0 %v6409
    %7853 = vmatprep.subr.bf16.mxu0 %v6418
    %7854 = vmatpush1.bf16.msra.mxu0 %v6417
    %7855 = vmatprep.mubr.bf16.mxu0 %v1388
    %7856 = vmatmul.mubr.bf16.gmra.mrb[0].mxu0 %v1387
    %v7857 = vpop.f32.mrb[0].mxu0
    %v7858 = vadd.f32 %v7817, %v7857
    %v7859 = vpop.f32.mrb[0].mxu0
    %v7860 = vadd.f32 %v7819, %v7859
    %v7861 = vpop.f32.mrb[0].mxu0
    %v7862 = vpop.f32.mrb[0].mxu0
    %7863 = vdwg.mxu0
    %7864 = vmatprep.subr.bf16.mxu0 %v6426
    %7865 = vmatpush1.bf16.msra.mxu0 %v6425
    %7866 = vmatprep.subr.bf16.mxu0 %v6434
    %7867 = vmatpush1.bf16.msra.mxu0 %v6433
    %7868 = vmatprep.subr.bf16.mxu0 %v6442
    %7869 = vmatpush1.bf16.msra.mxu0 %v6441
    %7870 = vmatprep.subr.bf16.mxu0 %v6450
    %7871 = vmatpush1.bf16.msra.mxu0 %v6449
    %7872 = vmatprep.subr.bf16.mxu0 %v6458
    %7873 = vmatpush1.bf16.msra.mxu0 %v6457
    %7874 = vmatprep.subr.bf16.mxu0 %v6466
    %7875 = vmatpush1.bf16.msra.mxu0 %v6465
    %7876 = vmatprep.subr.bf16.mxu0 %v6474
    %7877 = vmatpush1.bf16.msra.mxu0 %v6473
    %7878 = vmatprep.subr.bf16.mxu0 %v6482
    %7879 = vmatpush1.bf16.msra.mxu0 %v6481
    %7880 = vmatprep.subr.bf16.mxu0 %v6490
    %7881 = vmatpush1.bf16.msra.mxu0 %v6489
    %7882 = vmatprep.subr.bf16.mxu0 %v6498
    %7883 = vmatpush1.bf16.msra.mxu0 %v6497
    %7884 = vmatprep.subr.bf16.mxu0 %v6506
    %7885 = vmatpush1.bf16.msra.mxu0 %v6505
    %7886 = vmatprep.subr.bf16.mxu0 %v6514
    %7887 = vmatpush1.bf16.msra.mxu0 %v6513
    %7888 = vmatprep.subr.bf16.mxu0 %v6522
    %7889 = vmatpush1.bf16.msra.mxu0 %v6521
    %7890 = vmatprep.subr.bf16.mxu0 %v6530
    %7891 = vmatpush1.bf16.msra.mxu0 %v6529
    %7892 = vmatprep.subr.bf16.mxu0 %v6538
    %7893 = vmatpush1.bf16.msra.mxu0 %v6537
    %7894 = vmatprep.subr.bf16.mxu0 %v6546
    %7895 = vmatpush1.bf16.msra.mxu0 %v6545
    %7896 = vmatprep.mubr.bf16.mxu0 %v1390
    %7897 = vmatmul.mubr.bf16.gmra.mrb[0].mxu0 %v1389
    %v7898 = vpop.f32.mrb[0].mxu0
    %v7899 = vadd.f32 %v7858, %v7898
    %v7900 = vpop.f32.mrb[0].mxu0
    %v7901 = vadd.f32 %v7860, %v7900
    %v7902 = vpop.f32.mrb[0].mxu0
    %v7903 = vpop.f32.mrb[0].mxu0
    %7904 = vdwg.mxu0
    %7905 = vmatprep.subr.bf16.mxu0 %v5532
    %7906 = vmatpush1.bf16.msra.mxu0 %v5531
    %7907 = vmatprep.subr.bf16.mxu0 %v5540
    %7908 = vmatpush1.bf16.msra.mxu0 %v5539
    %7909 = vmatprep.subr.bf16.mxu0 %v5548
    %7910 = vmatpush1.bf16.msra.mxu0 %v5547
    %7911 = vmatprep.subr.bf16.mxu0 %v5556
    %7912 = vmatpush1.bf16.msra.mxu0 %v5555
    %7913 = vmatprep.subr.bf16.mxu0 %v5564
    %7914 = vmatpush1.bf16.msra.mxu0 %v5563
    %7915 = vmatprep.subr.bf16.mxu0 %v5572
    %7916 = vmatpush1.bf16.msra.mxu0 %v5571
    %7917 = vmatprep.subr.bf16.mxu0 %v5580
    %7918 = vmatpush1.bf16.msra.mxu0 %v5579
    %7919 = vmatprep.subr.bf16.mxu0 %v5588
    %7920 = vmatpush1.bf16.msra.mxu0 %v5587
    %7921 = vmatprep.subr.bf16.mxu0 %v5596
    %7922 = vmatpush1.bf16.msra.mxu0 %v5595
    %7923 = vmatprep.subr.bf16.mxu0 %v5604
    %7924 = vmatpush1.bf16.msra.mxu0 %v5603
    %7925 = vmatprep.subr.bf16.mxu0 %v5612
    %7926 = vmatpush1.bf16.msra.mxu0 %v5611
    %7927 = vmatprep.subr.bf16.mxu0 %v5620
    %7928 = vmatpush1.bf16.msra.mxu0 %v5619
    %7929 = vmatprep.subr.bf16.mxu0 %v5628
    %7930 = vmatpush1.bf16.msra.mxu0 %v5627
    %7931 = vmatprep.subr.bf16.mxu0 %v5636
    %7932 = vmatpush1.bf16.msra.mxu0 %v5635
    %7933 = vmatprep.subr.bf16.mxu0 %v5644
    %7934 = vmatpush1.bf16.msra.mxu0 %v5643
    %7935 = vmatprep.subr.bf16.mxu0 %v5652
    %7936 = vmatpush1.bf16.msra.mxu0 %v5651
    %7937 = vmatprep.mubr.bf16.mxu0 %v1376
    %7938 = vmatmul.mubr.bf16.gmra.mrb[0].mxu0 %v1375
    %v7939 = vpop.f32.mrb[0].mxu0
    %v7940 = vadd.f32 %v2428, %v7939
    %v7941 = vpop.f32.mrb[0].mxu0
    %v7942 = vadd.f32 %v2432, %v7941
    %v7943 = vpop.f32.mrb[0].mxu0
    %v7944 = vpop.f32.mrb[0].mxu0
    %7945 = vdwg.mxu0
    %7946 = vmatprep.subr.bf16.mxu0 %v5660
    %7947 = vmatpush1.bf16.msra.mxu0 %v5659
    %7948 = vmatprep.subr.bf16.mxu0 %v5668
    %7949 = vmatpush1.bf16.msra.mxu0 %v5667
    %7950 = vmatprep.subr.bf16.mxu0 %v5676
    %7951 = vmatpush1.bf16.msra.mxu0 %v5675
    %7952 = vmatprep.subr.bf16.mxu0 %v5684
    %7953 = vmatpush1.bf16.msra.mxu0 %v5683
    %7954 = vmatprep.subr.bf16.mxu0 %v5692
    %7955 = vmatpush1.bf16.msra.mxu0 %v5691
    %7956 = vmatprep.subr.bf16.mxu0 %v5700
    %7957 = vmatpush1.bf16.msra.mxu0 %v5699
    %7958 = vmatprep.subr.bf16.mxu0 %v5708
    %7959 = vmatpush1.bf16.msra.mxu0 %v5707
    %7960 = vmatprep.subr.bf16.mxu0 %v5716
    %7961 = vmatpush1.bf16.msra.mxu0 %v5715
    %7962 = vmatprep.subr.bf16.mxu0 %v5724
    %7963 = vmatpush1.bf16.msra.mxu0 %v5723
    %7964 = vmatprep.subr.bf16.mxu0 %v5732
    %7965 = vmatpush1.bf16.msra.mxu0 %v5731
    %7966 = vmatprep.subr.bf16.mxu0 %v5740
    %7967 = vmatpush1.bf16.msra.mxu0 %v5739
    %7968 = vmatprep.subr.bf16.mxu0 %v5748
    %7969 = vmatpush1.bf16.msra.mxu0 %v5747
    %7970 = vmatprep.subr.bf16.mxu0 %v5756
    %7971 = vmatpush1.bf16.msra.mxu0 %v5755
    %7972 = vmatprep.subr.bf16.mxu0 %v5764
    %7973 = vmatpush1.bf16.msra.mxu0 %v5763
    %7974 = vmatprep.subr.bf16.mxu0 %v5772
    %7975 = vmatpush1.bf16.msra.mxu0 %v5771
    %7976 = vmatprep.subr.bf16.mxu0 %v5780
    %7977 = vmatpush1.bf16.msra.mxu0 %v5779
    %7978 = vmatprep.mubr.bf16.mxu0 %v1378
    %7979 = vmatmul.mubr.bf16.gmra.mrb[0].mxu0 %v1377
    %v7980 = vpop.f32.mrb[0].mxu0
    %v7981 = vadd.f32 %v7940, %v7980
    %v7982 = vpop.f32.mrb[0].mxu0
    %v7983 = vadd.f32 %v7942, %v7982
    %v7984 = vpop.f32.mrb[0].mxu0
    %v7985 = vpop.f32.mrb[0].mxu0
    %7986 = vdwg.mxu0
    %7987 = vmatprep.subr.bf16.mxu0 %v5788
    %7988 = vmatpush1.bf16.msra.mxu0 %v5787
    %7989 = vmatprep.subr.bf16.mxu0 %v5796
    %7990 = vmatpush1.bf16.msra.mxu0 %v5795
    %7991 = vmatprep.subr.bf16.mxu0 %v5804
    %7992 = vmatpush1.bf16.msra.mxu0 %v5803
    %7993 = vmatprep.subr.bf16.mxu0 %v5812
    %7994 = vmatpush1.bf16.msra.mxu0 %v5811
    %7995 = vmatprep.subr.bf16.mxu0 %v5820
    %7996 = vmatpush1.bf16.msra.mxu0 %v5819
    %7997 = vmatprep.subr.bf16.mxu0 %v5828
    %7998 = vmatpush1.bf16.msra.mxu0 %v5827
    %7999 = vmatprep.subr.bf16.mxu0 %v5836
    %8000 = vmatpush1.bf16.msra.mxu0 %v5835
    %8001 = vmatprep.subr.bf16.mxu0 %v5844
    %8002 = vmatpush1.bf16.msra.mxu0 %v5843
    %8003 = vmatprep.subr.bf16.mxu0 %v5852
    %8004 = vmatpush1.bf16.msra.mxu0 %v5851
    %8005 = vmatprep.subr.bf16.mxu0 %v5860
    %8006 = vmatpush1.bf16.msra.mxu0 %v5859
    %8007 = vmatprep.subr.bf16.mxu0 %v5868
    %8008 = vmatpush1.bf16.msra.mxu0 %v5867
    %8009 = vmatprep.subr.bf16.mxu0 %v5876
    %8010 = vmatpush1.bf16.msra.mxu0 %v5875
    %8011 = vmatprep.subr.bf16.mxu0 %v5884
    %8012 = vmatpush1.bf16.msra.mxu0 %v5883
    %8013 = vmatprep.subr.bf16.mxu0 %v5892
    %8014 = vmatpush1.bf16.msra.mxu0 %v5891
    %8015 = vmatprep.subr.bf16.mxu0 %v5900
    %8016 = vmatpush1.bf16.msra.mxu0 %v5899
    %8017 = vmatprep.subr.bf16.mxu0 %v5908
    %8018 = vmatpush1.bf16.msra.mxu0 %v5907
    %8019 = vmatprep.mubr.bf16.mxu0 %v1380
    %8020 = vmatmul.mubr.bf16.gmra.mrb[0].mxu0 %v1379
    %v8021 = vpop.f32.mrb[0].mxu0
    %v8022 = vadd.f32 %v7981, %v8021
    %v8023 = vpop.f32.mrb[0].mxu0
    %v8024 = vadd.f32 %v7983, %v8023
    %v8025 = vpop.f32.mrb[0].mxu0
    %v8026 = vpop.f32.mrb[0].mxu0
    %8027 = vdwg.mxu0
    %8028 = vmatprep.subr.bf16.mxu0 %v5916
    %8029 = vmatpush1.bf16.msra.mxu0 %v5915
    %8030 = vmatprep.subr.bf16.mxu0 %v5924
    %8031 = vmatpush1.bf16.msra.mxu0 %v5923
    %8032 = vmatprep.subr.bf16.mxu0 %v5932
    %8033 = vmatpush1.bf16.msra.mxu0 %v5931
    %8034 = vmatprep.subr.bf16.mxu0 %v5940
    %8035 = vmatpush1.bf16.msra.mxu0 %v5939
    %8036 = vmatprep.subr.bf16.mxu0 %v5948
    %8037 = vmatpush1.bf16.msra.mxu0 %v5947
    %8038 = vmatprep.subr.bf16.mxu0 %v5956
    %8039 = vmatpush1.bf16.msra.mxu0 %v5955
    %8040 = vmatprep.subr.bf16.mxu0 %v5964
    %8041 = vmatpush1.bf16.msra.mxu0 %v5963
    %8042 = vmatprep.subr.bf16.mxu0 %v5972
    %8043 = vmatpush1.bf16.msra.mxu0 %v5971
    %8044 = vmatprep.subr.bf16.mxu0 %v5980
    %8045 = vmatpush1.bf16.msra.mxu0 %v5979
    %8046 = vmatprep.subr.bf16.mxu0 %v5988
    %8047 = vmatpush1.bf16.msra.mxu0 %v5987
    %8048 = vmatprep.subr.bf16.mxu0 %v5996
    %8049 = vmatpush1.bf16.msra.mxu0 %v5995
    %8050 = vmatprep.subr.bf16.mxu0 %v6004
    %8051 = vmatpush1.bf16.msra.mxu0 %v6003
    %8052 = vmatprep.subr.bf16.mxu0 %v6012
    %8053 = vmatpush1.bf16.msra.mxu0 %v6011
    %8054 = vmatprep.subr.bf16.mxu0 %v6020
    %8055 = vmatpush1.bf16.msra.mxu0 %v6019
    %8056 = vmatprep.subr.bf16.mxu0 %v6028
    %8057 = vmatpush1.bf16.msra.mxu0 %v6027
    %8058 = vmatprep.subr.bf16.mxu0 %v6036
    %8059 = vmatpush1.bf16.msra.mxu0 %v6035
    %8060 = vmatprep.mubr.bf16.mxu0 %v1382
    %8061 = vmatmul.mubr.bf16.gmra.mrb[0].mxu0 %v1381
    %v8062 = vpop.f32.mrb[0].mxu0
    %v8063 = vadd.f32 %v8022, %v8062
    %v8064 = vpop.f32.mrb[0].mxu0
    %v8065 = vadd.f32 %v8024, %v8064
    %v8066 = vpop.f32.mrb[0].mxu0
    %v8067 = vpop.f32.mrb[0].mxu0
    %8068 = vdwg.mxu0
    %8069 = vmatprep.subr.bf16.mxu0 %v6044
    %8070 = vmatpush1.bf16.msra.mxu0 %v6043
    %8071 = vmatprep.subr.bf16.mxu0 %v6052
    %8072 = vmatpush1.bf16.msra.mxu0 %v6051
    %8073 = vmatprep.subr.bf16.mxu0 %v6060
    %8074 = vmatpush1.bf16.msra.mxu0 %v6059
    %8075 = vmatprep.subr.bf16.mxu0 %v6068
    %8076 = vmatpush1.bf16.msra.mxu0 %v6067
    %8077 = vmatprep.subr.bf16.mxu0 %v6076
    %8078 = vmatpush1.bf16.msra.mxu0 %v6075
    %8079 = vmatprep.subr.bf16.mxu0 %v6084
    %8080 = vmatpush1.bf16.msra.mxu0 %v6083
    %8081 = vmatprep.subr.bf16.mxu0 %v6092
    %8082 = vmatpush1.bf16.msra.mxu0 %v6091
    %8083 = vmatprep.subr.bf16.mxu0 %v6100
    %8084 = vmatpush1.bf16.msra.mxu0 %v6099
    %8085 = vmatprep.subr.bf16.mxu0 %v6108
    %8086 = vmatpush1.bf16.msra.mxu0 %v6107
    %8087 = vmatprep.subr.bf16.mxu0 %v6116
    %8088 = vmatpush1.bf16.msra.mxu0 %v6115
    %8089 = vmatprep.subr.bf16.mxu0 %v6124
    %8090 = vmatpush1.bf16.msra.mxu0 %v6123
    %8091 = vmatprep.subr.bf16.mxu0 %v6132
    %8092 = vmatpush1.bf16.msra.mxu0 %v6131
    %8093 = vmatprep.subr.bf16.mxu0 %v6140
    %8094 = vmatpush1.bf16.msra.mxu0 %v6139
    %8095 = vmatprep.subr.bf16.mxu0 %v6148
    %8096 = vmatpush1.bf16.msra.mxu0 %v6147
    %8097 = vmatprep.subr.bf16.mxu0 %v6156
    %8098 = vmatpush1.bf16.msra.mxu0 %v6155
    %8099 = vmatprep.subr.bf16.mxu0 %v6164
    %8100 = vmatpush1.bf16.msra.mxu0 %v6163
    %8101 = vmatprep.mubr.bf16.mxu0 %v1384
    %8102 = vmatmul.mubr.bf16.gmra.mrb[0].mxu0 %v1383
    %v8103 = vpop.f32.mrb[0].mxu0
    %v8104 = vadd.f32 %v8063, %v8103
    %v8105 = vpop.f32.mrb[0].mxu0
    %v8106 = vadd.f32 %v8065, %v8105
    %v8107 = vpop.f32.mrb[0].mxu0
    %v8108 = vpop.f32.mrb[0].mxu0
    %8109 = vdwg.mxu0
    %8110 = vmatprep.subr.bf16.mxu0 %v6172
    %8111 = vmatpush1.bf16.msra.mxu0 %v6171
    %8112 = vmatprep.subr.bf16.mxu0 %v6180
    %8113 = vmatpush1.bf16.msra.mxu0 %v6179
    %8114 = vmatprep.subr.bf16.mxu0 %v6188
    %8115 = vmatpush1.bf16.msra.mxu0 %v6187
    %8116 = vmatprep.subr.bf16.mxu0 %v6196
    %8117 = vmatpush1.bf16.msra.mxu0 %v6195
    %8118 = vmatprep.subr.bf16.mxu0 %v6204
    %8119 = vmatpush1.bf16.msra.mxu0 %v6203
    %8120 = vmatprep.subr.bf16.mxu0 %v6212
    %8121 = vmatpush1.bf16.msra.mxu0 %v6211
    %8122 = vmatprep.subr.bf16.mxu0 %v6220
    %8123 = vmatpush1.bf16.msra.mxu0 %v6219
    %8124 = vmatprep.subr.bf16.mxu0 %v6228
    %8125 = vmatpush1.bf16.msra.mxu0 %v6227
    %8126 = vmatprep.subr.bf16.mxu0 %v6236
    %8127 = vmatpush1.bf16.msra.mxu0 %v6235
    %8128 = vmatprep.subr.bf16.mxu0 %v6244
    %8129 = vmatpush1.bf16.msra.mxu0 %v6243
    %8130 = vmatprep.subr.bf16.mxu0 %v6252
    %8131 = vmatpush1.bf16.msra.mxu0 %v6251
    %8132 = vmatprep.subr.bf16.mxu0 %v6260
    %8133 = vmatpush1.bf16.msra.mxu0 %v6259
    %8134 = vmatprep.subr.bf16.mxu0 %v6268
    %8135 = vmatpush1.bf16.msra.mxu0 %v6267
    %8136 = vmatprep.subr.bf16.mxu0 %v6276
    %8137 = vmatpush1.bf16.msra.mxu0 %v6275
    %8138 = vmatprep.subr.bf16.mxu0 %v6284
    %8139 = vmatpush1.bf16.msra.mxu0 %v6283
    %8140 = vmatprep.subr.bf16.mxu0 %v6292
    %8141 = vmatpush1.bf16.msra.mxu0 %v6291
    %8142 = vmatprep.mubr.bf16.mxu0 %v1386
    %8143 = vmatmul.mubr.bf16.gmra.mrb[0].mxu0 %v1385
    %v8144 = vpop.f32.mrb[0].mxu0
    %v8145 = vadd.f32 %v8104, %v8144
    %v8146 = vpop.f32.mrb[0].mxu0
    %v8147 = vadd.f32 %v8106, %v8146
    %v8148 = vpop.f32.mrb[0].mxu0
    %v8149 = vpop.f32.mrb[0].mxu0
    %8150 = vdwg.mxu0
    %8151 = vmatprep.subr.bf16.mxu0 %v6300
    %8152 = vmatpush1.bf16.msra.mxu0 %v6299
    %8153 = vmatprep.subr.bf16.mxu0 %v6308
    %8154 = vmatpush1.bf16.msra.mxu0 %v6307
    %8155 = vmatprep.subr.bf16.mxu0 %v6316
    %8156 = vmatpush1.bf16.msra.mxu0 %v6315
    %8157 = vmatprep.subr.bf16.mxu0 %v6324
    %8158 = vmatpush1.bf16.msra.mxu0 %v6323
    %8159 = vmatprep.subr.bf16.mxu0 %v6332
    %8160 = vmatpush1.bf16.msra.mxu0 %v6331
    %8161 = vmatprep.subr.bf16.mxu0 %v6340
    %8162 = vmatpush1.bf16.msra.mxu0 %v6339
    %8163 = vmatprep.subr.bf16.mxu0 %v6348
    %8164 = vmatpush1.bf16.msra.mxu0 %v6347
    %8165 = vmatprep.subr.bf16.mxu0 %v6356
    %8166 = vmatpush1.bf16.msra.mxu0 %v6355
    %8167 = vmatprep.subr.bf16.mxu0 %v6364
    %8168 = vmatpush1.bf16.msra.mxu0 %v6363
    %8169 = vmatprep.subr.bf16.mxu0 %v6372
    %8170 = vmatpush1.bf16.msra.mxu0 %v6371
    %8171 = vmatprep.subr.bf16.mxu0 %v6380
    %8172 = vmatpush1.bf16.msra.mxu0 %v6379
    %8173 = vmatprep.subr.bf16.mxu0 %v6388
    %8174 = vmatpush1.bf16.msra.mxu0 %v6387
    %8175 = vmatprep.subr.bf16.mxu0 %v6396
    %8176 = vmatpush1.bf16.msra.mxu0 %v6395
    %8177 = vmatprep.subr.bf16.mxu0 %v6404
    %8178 = vmatpush1.bf16.msra.mxu0 %v6403
    %8179 = vmatprep.subr.bf16.mxu0 %v6412
    %8180 = vmatpush1.bf16.msra.mxu0 %v6411
    %8181 = vmatprep.subr.bf16.mxu0 %v6420
    %8182 = vmatpush1.bf16.msra.mxu0 %v6419
    %8183 = vmatprep.mubr.bf16.mxu0 %v1388
    %8184 = vmatmul.mubr.bf16.gmra.mrb[0].mxu0 %v1387
    %v8185 = vpop.f32.mrb[0].mxu0
    %v8186 = vadd.f32 %v8145, %v8185
    %v8187 = vpop.f32.mrb[0].mxu0
    %v8188 = vadd.f32 %v8147, %v8187
    %v8189 = vpop.f32.mrb[0].mxu0
    %v8190 = vpop.f32.mrb[0].mxu0
    %8191 = vdwg.mxu0
    %8192 = vmatprep.subr.bf16.mxu0 %v6428
    %8193 = vmatpush1.bf16.msra.mxu0 %v6427
    %8194 = vmatprep.subr.bf16.mxu0 %v6436
    %8195 = vmatpush1.bf16.msra.mxu0 %v6435
    %8196 = vmatprep.subr.bf16.mxu0 %v6444
    %8197 = vmatpush1.bf16.msra.mxu0 %v6443
    %8198 = vmatprep.subr.bf16.mxu0 %v6452
    %8199 = vmatpush1.bf16.msra.mxu0 %v6451
    %8200 = vmatprep.subr.bf16.mxu0 %v6460
    %8201 = vmatpush1.bf16.msra.mxu0 %v6459
    %8202 = vmatprep.subr.bf16.mxu0 %v6468
    %8203 = vmatpush1.bf16.msra.mxu0 %v6467
    %8204 = vmatprep.subr.bf16.mxu0 %v6476
    %8205 = vmatpush1.bf16.msra.mxu0 %v6475
    %8206 = vmatprep.subr.bf16.mxu0 %v6484
    %8207 = vmatpush1.bf16.msra.mxu0 %v6483
    %8208 = vmatprep.subr.bf16.mxu0 %v6492
    %8209 = vmatpush1.bf16.msra.mxu0 %v6491
    %8210 = vmatprep.subr.bf16.mxu0 %v6500
    %8211 = vmatpush1.bf16.msra.mxu0 %v6499
    %8212 = vmatprep.subr.bf16.mxu0 %v6508
    %8213 = vmatpush1.bf16.msra.mxu0 %v6507
    %8214 = vmatprep.subr.bf16.mxu0 %v6516
    %8215 = vmatpush1.bf16.msra.mxu0 %v6515
    %8216 = vmatprep.subr.bf16.mxu0 %v6524
    %8217 = vmatpush1.bf16.msra.mxu0 %v6523
    %8218 = vmatprep.subr.bf16.mxu0 %v6532
    %8219 = vmatpush1.bf16.msra.mxu0 %v6531
    %8220 = vmatprep.subr.bf16.mxu0 %v6540
    %8221 = vmatpush1.bf16.msra.mxu0 %v6539
    %8222 = vmatprep.subr.bf16.mxu0 %v6548
    %8223 = vmatpush1.bf16.msra.mxu0 %v6547
    %8224 = vmatprep.mubr.bf16.mxu0 %v1390
    %8225 = vmatmul.mubr.bf16.gmra.mrb[0].mxu0 %v1389
    %v8226 = vpop.f32.mrb[0].mxu0
    %v8227 = vadd.f32 %v8186, %v8226
    %v8228 = vpop.f32.mrb[0].mxu0
    %v8229 = vadd.f32 %v8188, %v8228
    %v8230 = vpop.f32.mrb[0].mxu0
    %v8231 = vpop.f32.mrb[0].mxu0
    %8232 = vdwg.mxu0
    %8233 = vmatprep.subr.bf16.mxu0 %v5534
    %8234 = vmatpush1.bf16.msra.mxu0 %v5533
    %8235 = vmatprep.subr.bf16.mxu0 %v5542
    %8236 = vmatpush1.bf16.msra.mxu0 %v5541
    %8237 = vmatprep.subr.bf16.mxu0 %v5550
    %8238 = vmatpush1.bf16.msra.mxu0 %v5549
    %8239 = vmatprep.subr.bf16.mxu0 %v5558
    %8240 = vmatpush1.bf16.msra.mxu0 %v5557
    %8241 = vmatprep.subr.bf16.mxu0 %v5566
    %8242 = vmatpush1.bf16.msra.mxu0 %v5565
    %8243 = vmatprep.subr.bf16.mxu0 %v5574
    %8244 = vmatpush1.bf16.msra.mxu0 %v5573
    %8245 = vmatprep.subr.bf16.mxu0 %v5582
    %8246 = vmatpush1.bf16.msra.mxu0 %v5581
    %8247 = vmatprep.subr.bf16.mxu0 %v5590
    %8248 = vmatpush1.bf16.msra.mxu0 %v5589
    %8249 = vmatprep.subr.bf16.mxu0 %v5598
    %8250 = vmatpush1.bf16.msra.mxu0 %v5597
    %8251 = vmatprep.subr.bf16.mxu0 %v5606
    %8252 = vmatpush1.bf16.msra.mxu0 %v5605
    %8253 = vmatprep.subr.bf16.mxu0 %v5614
    %8254 = vmatpush1.bf16.msra.mxu0 %v5613
    %8255 = vmatprep.subr.bf16.mxu0 %v5622
    %8256 = vmatpush1.bf16.msra.mxu0 %v5621
    %8257 = vmatprep.subr.bf16.mxu0 %v5630
    %8258 = vmatpush1.bf16.msra.mxu0 %v5629
    %8259 = vmatprep.subr.bf16.mxu0 %v5638
    %8260 = vmatpush1.bf16.msra.mxu0 %v5637
    %8261 = vmatprep.subr.bf16.mxu0 %v5646
    %8262 = vmatpush1.bf16.msra.mxu0 %v5645
    %8263 = vmatprep.subr.bf16.mxu0 %v5654
    %8264 = vmatpush1.bf16.msra.mxu0 %v5653
    %8265 = vmatprep.mubr.bf16.mxu0 %v1376
    %8266 = vmatmul.mubr.bf16.gmra.mrb[0].mxu0 %v1375
    %v8267 = vpop.f32.mrb[0].mxu0
    %v8268 = vadd.f32 %v2436, %v8267
    %v8269 = vpop.f32.mrb[0].mxu0
    %v8270 = vadd.f32 %v2440, %v8269
    %v8271 = vpop.f32.mrb[0].mxu0
    %v8272 = vpop.f32.mrb[0].mxu0
    %8273 = vdwg.mxu0
    %8274 = vmatprep.subr.bf16.mxu0 %v5662
    %8275 = vmatpush1.bf16.msra.mxu0 %v5661
    %8276 = vmatprep.subr.bf16.mxu0 %v5670
    %8277 = vmatpush1.bf16.msra.mxu0 %v5669
    %8278 = vmatprep.subr.bf16.mxu0 %v5678
    %8279 = vmatpush1.bf16.msra.mxu0 %v5677
    %8280 = vmatprep.subr.bf16.mxu0 %v5686
    %8281 = vmatpush1.bf16.msra.mxu0 %v5685
    %8282 = vmatprep.subr.bf16.mxu0 %v5694
    %8283 = vmatpush1.bf16.msra.mxu0 %v5693
    %8284 = vmatprep.subr.bf16.mxu0 %v5702
    %8285 = vmatpush1.bf16.msra.mxu0 %v5701
    %8286 = vmatprep.subr.bf16.mxu0 %v5710
    %8287 = vmatpush1.bf16.msra.mxu0 %v5709
    %8288 = vmatprep.subr.bf16.mxu0 %v5718
    %8289 = vmatpush1.bf16.msra.mxu0 %v5717
    %8290 = vmatprep.subr.bf16.mxu0 %v5726
    %8291 = vmatpush1.bf16.msra.mxu0 %v5725
    %8292 = vmatprep.subr.bf16.mxu0 %v5734
    %8293 = vmatpush1.bf16.msra.mxu0 %v5733
    %8294 = vmatprep.subr.bf16.mxu0 %v5742
    %8295 = vmatpush1.bf16.msra.mxu0 %v5741
    %8296 = vmatprep.subr.bf16.mxu0 %v5750
    %8297 = vmatpush1.bf16.msra.mxu0 %v5749
    %8298 = vmatprep.subr.bf16.mxu0 %v5758
    %8299 = vmatpush1.bf16.msra.mxu0 %v5757
    %8300 = vmatprep.subr.bf16.mxu0 %v5766
    %8301 = vmatpush1.bf16.msra.mxu0 %v5765
    %8302 = vmatprep.subr.bf16.mxu0 %v5774
    %8303 = vmatpush1.bf16.msra.mxu0 %v5773
    %8304 = vmatprep.subr.bf16.mxu0 %v5782
    %8305 = vmatpush1.bf16.msra.mxu0 %v5781
    %8306 = vmatprep.mubr.bf16.mxu0 %v1378
    %8307 = vmatmul.mubr.bf16.gmra.mrb[0].mxu0 %v1377
    %v8308 = vpop.f32.mrb[0].mxu0
    %v8309 = vadd.f32 %v8268, %v8308
    %v8310 = vpop.f32.mrb[0].mxu0
    %v8311 = vadd.f32 %v8270, %v8310
    %v8312 = vpop.f32.mrb[0].mxu0
    %v8313 = vpop.f32.mrb[0].mxu0
    %8314 = vdwg.mxu0
    %8315 = vmatprep.subr.bf16.mxu0 %v5790
    %8316 = vmatpush1.bf16.msra.mxu0 %v5789
    %8317 = vmatprep.subr.bf16.mxu0 %v5798
    %8318 = vmatpush1.bf16.msra.mxu0 %v5797
    %8319 = vmatprep.subr.bf16.mxu0 %v5806
    %8320 = vmatpush1.bf16.msra.mxu0 %v5805
    %8321 = vmatprep.subr.bf16.mxu0 %v5814
    %8322 = vmatpush1.bf16.msra.mxu0 %v5813
    %8323 = vmatprep.subr.bf16.mxu0 %v5822
    %8324 = vmatpush1.bf16.msra.mxu0 %v5821
    %8325 = vmatprep.subr.bf16.mxu0 %v5830
    %8326 = vmatpush1.bf16.msra.mxu0 %v5829
    %8327 = vmatprep.subr.bf16.mxu0 %v5838
    %8328 = vmatpush1.bf16.msra.mxu0 %v5837
    %8329 = vmatprep.subr.bf16.mxu0 %v5846
    %8330 = vmatpush1.bf16.msra.mxu0 %v5845
    %8331 = vmatprep.subr.bf16.mxu0 %v5854
    %8332 = vmatpush1.bf16.msra.mxu0 %v5853
    %8333 = vmatprep.subr.bf16.mxu0 %v5862
    %8334 = vmatpush1.bf16.msra.mxu0 %v5861
    %8335 = vmatprep.subr.bf16.mxu0 %v5870
    %8336 = vmatpush1.bf16.msra.mxu0 %v5869
    %8337 = vmatprep.subr.bf16.mxu0 %v5878
    %8338 = vmatpush1.bf16.msra.mxu0 %v5877
    %8339 = vmatprep.subr.bf16.mxu0 %v5886
    %8340 = vmatpush1.bf16.msra.mxu0 %v5885
    %8341 = vmatprep.subr.bf16.mxu0 %v5894
    %8342 = vmatpush1.bf16.msra.mxu0 %v5893
    %8343 = vmatprep.subr.bf16.mxu0 %v5902
    %8344 = vmatpush1.bf16.msra.mxu0 %v5901
    %8345 = vmatprep.subr.bf16.mxu0 %v5910
    %8346 = vmatpush1.bf16.msra.mxu0 %v5909
    %8347 = vmatprep.mubr.bf16.mxu0 %v1380
    %8348 = vmatmul.mubr.bf16.gmra.mrb[0].mxu0 %v1379
    %v8349 = vpop.f32.mrb[0].mxu0
    %v8350 = vadd.f32 %v8309, %v8349
    %v8351 = vpop.f32.mrb[0].mxu0
    %v8352 = vadd.f32 %v8311, %v8351
    %v8353 = vpop.f32.mrb[0].mxu0
    %v8354 = vpop.f32.mrb[0].mxu0
    %8355 = vdwg.mxu0
    %8356 = vmatprep.subr.bf16.mxu0 %v5918
    %8357 = vmatpush1.bf16.msra.mxu0 %v5917
    %8358 = vmatprep.subr.bf16.mxu0 %v5926
    %8359 = vmatpush1.bf16.msra.mxu0 %v5925
    %8360 = vmatprep.subr.bf16.mxu0 %v5934
    %8361 = vmatpush1.bf16.msra.mxu0 %v5933
    %8362 = vmatprep.subr.bf16.mxu0 %v5942
    %8363 = vmatpush1.bf16.msra.mxu0 %v5941
    %8364 = vmatprep.subr.bf16.mxu0 %v5950
    %8365 = vmatpush1.bf16.msra.mxu0 %v5949
    %8366 = vmatprep.subr.bf16.mxu0 %v5958
    %8367 = vmatpush1.bf16.msra.mxu0 %v5957
    %8368 = vmatprep.subr.bf16.mxu0 %v5966
    %8369 = vmatpush1.bf16.msra.mxu0 %v5965
    %8370 = vmatprep.subr.bf16.mxu0 %v5974
    %8371 = vmatpush1.bf16.msra.mxu0 %v5973
    %8372 = vmatprep.subr.bf16.mxu0 %v5982
    %8373 = vmatpush1.bf16.msra.mxu0 %v5981
    %8374 = vmatprep.subr.bf16.mxu0 %v5990
    %8375 = vmatpush1.bf16.msra.mxu0 %v5989
    %8376 = vmatprep.subr.bf16.mxu0 %v5998
    %8377 = vmatpush1.bf16.msra.mxu0 %v5997
    %8378 = vmatprep.subr.bf16.mxu0 %v6006
    %8379 = vmatpush1.bf16.msra.mxu0 %v6005
    %8380 = vmatprep.subr.bf16.mxu0 %v6014
    %8381 = vmatpush1.bf16.msra.mxu0 %v6013
    %8382 = vmatprep.subr.bf16.mxu0 %v6022
    %8383 = vmatpush1.bf16.msra.mxu0 %v6021
    %8384 = vmatprep.subr.bf16.mxu0 %v6030
    %8385 = vmatpush1.bf16.msra.mxu0 %v6029
    %8386 = vmatprep.subr.bf16.mxu0 %v6038
    %8387 = vmatpush1.bf16.msra.mxu0 %v6037
    %8388 = vmatprep.mubr.bf16.mxu0 %v1382
    %8389 = vmatmul.mubr.bf16.gmra.mrb[0].mxu0 %v1381
    %v8390 = vpop.f32.mrb[0].mxu0
    %v8391 = vadd.f32 %v8350, %v8390
    %v8392 = vpop.f32.mrb[0].mxu0
    %v8393 = vadd.f32 %v8352, %v8392
    %v8394 = vpop.f32.mrb[0].mxu0
    %v8395 = vpop.f32.mrb[0].mxu0
    %8396 = vdwg.mxu0
    %8397 = vmatprep.subr.bf16.mxu0 %v6046
    %8398 = vmatpush1.bf16.msra.mxu0 %v6045
    %8399 = vmatprep.subr.bf16.mxu0 %v6054
    %8400 = vmatpush1.bf16.msra.mxu0 %v6053
    %8401 = vmatprep.subr.bf16.mxu0 %v6062
    %8402 = vmatpush1.bf16.msra.mxu0 %v6061
    %8403 = vmatprep.subr.bf16.mxu0 %v6070
    %8404 = vmatpush1.bf16.msra.mxu0 %v6069
    %8405 = vmatprep.subr.bf16.mxu0 %v6078
    %8406 = vmatpush1.bf16.msra.mxu0 %v6077
    %8407 = vmatprep.subr.bf16.mxu0 %v6086
    %8408 = vmatpush1.bf16.msra.mxu0 %v6085
    %8409 = vmatprep.subr.bf16.mxu0 %v6094
    %8410 = vmatpush1.bf16.msra.mxu0 %v6093
    %8411 = vmatprep.subr.bf16.mxu0 %v6102
    %8412 = vmatpush1.bf16.msra.mxu0 %v6101
    %8413 = vmatprep.subr.bf16.mxu0 %v6110
    %8414 = vmatpush1.bf16.msra.mxu0 %v6109
    %8415 = vmatprep.subr.bf16.mxu0 %v6118
    %8416 = vmatpush1.bf16.msra.mxu0 %v6117
    %8417 = vmatprep.subr.bf16.mxu0 %v6126
    %8418 = vmatpush1.bf16.msra.mxu0 %v6125
    %8419 = vmatprep.subr.bf16.mxu0 %v6134
    %8420 = vmatpush1.bf16.msra.mxu0 %v6133
    %8421 = vmatprep.subr.bf16.mxu0 %v6142
    %8422 = vmatpush1.bf16.msra.mxu0 %v6141
    %8423 = vmatprep.subr.bf16.mxu0 %v6150
    %8424 = vmatpush1.bf16.msra.mxu0 %v6149
    %8425 = vmatprep.subr.bf16.mxu0 %v6158
    %8426 = vmatpush1.bf16.msra.mxu0 %v6157
    %8427 = vmatprep.subr.bf16.mxu0 %v6166
    %8428 = vmatpush1.bf16.msra.mxu0 %v6165
    %8429 = vmatprep.mubr.bf16.mxu0 %v1384
    %8430 = vmatmul.mubr.bf16.gmra.mrb[0].mxu0 %v1383
    %v8431 = vpop.f32.mrb[0].mxu0
    %v8432 = vadd.f32 %v8391, %v8431
    %v8433 = vpop.f32.mrb[0].mxu0
    %v8434 = vadd.f32 %v8393, %v8433
    %v8435 = vpop.f32.mrb[0].mxu0
    %v8436 = vpop.f32.mrb[0].mxu0
    %8437 = vdwg.mxu0
    %8438 = vmatprep.subr.bf16.mxu0 %v6174
    %8439 = vmatpush1.bf16.msra.mxu0 %v6173
    %8440 = vmatprep.subr.bf16.mxu0 %v6182
    %8441 = vmatpush1.bf16.msra.mxu0 %v6181
    %8442 = vmatprep.subr.bf16.mxu0 %v6190
    %8443 = vmatpush1.bf16.msra.mxu0 %v6189
    %8444 = vmatprep.subr.bf16.mxu0 %v6198
    %8445 = vmatpush1.bf16.msra.mxu0 %v6197
    %8446 = vmatprep.subr.bf16.mxu0 %v6206
    %8447 = vmatpush1.bf16.msra.mxu0 %v6205
    %8448 = vmatprep.subr.bf16.mxu0 %v6214
    %8449 = vmatpush1.bf16.msra.mxu0 %v6213
    %8450 = vmatprep.subr.bf16.mxu0 %v6222
    %8451 = vmatpush1.bf16.msra.mxu0 %v6221
    %8452 = vmatprep.subr.bf16.mxu0 %v6230
    %8453 = vmatpush1.bf16.msra.mxu0 %v6229
    %8454 = vmatprep.subr.bf16.mxu0 %v6238
    %8455 = vmatpush1.bf16.msra.mxu0 %v6237
    %8456 = vmatprep.subr.bf16.mxu0 %v6246
    %8457 = vmatpush1.bf16.msra.mxu0 %v6245
    %8458 = vmatprep.subr.bf16.mxu0 %v6254
    %8459 = vmatpush1.bf16.msra.mxu0 %v6253
    %8460 = vmatprep.subr.bf16.mxu0 %v6262
    %8461 = vmatpush1.bf16.msra.mxu0 %v6261
    %8462 = vmatprep.subr.bf16.mxu0 %v6270
    %8463 = vmatpush1.bf16.msra.mxu0 %v6269
    %8464 = vmatprep.subr.bf16.mxu0 %v6278
    %8465 = vmatpush1.bf16.msra.mxu0 %v6277
    %8466 = vmatprep.subr.bf16.mxu0 %v6286
    %8467 = vmatpush1.bf16.msra.mxu0 %v6285
    %8468 = vmatprep.subr.bf16.mxu0 %v6294
    %8469 = vmatpush1.bf16.msra.mxu0 %v6293
    %8470 = vmatprep.mubr.bf16.mxu0 %v1386
    %8471 = vmatmul.mubr.bf16.gmra.mrb[0].mxu0 %v1385
    %v8472 = vpop.f32.mrb[0].mxu0
    %v8473 = vadd.f32 %v8432, %v8472
    %v8474 = vpop.f32.mrb[0].mxu0
    %v8475 = vadd.f32 %v8434, %v8474
    %v8476 = vpop.f32.mrb[0].mxu0
    %v8477 = vpop.f32.mrb[0].mxu0
    %8478 = vdwg.mxu0
    %8479 = vmatprep.subr.bf16.mxu0 %v6302
    %8480 = vmatpush1.bf16.msra.mxu0 %v6301
    %8481 = vmatprep.subr.bf16.mxu0 %v6310
    %8482 = vmatpush1.bf16.msra.mxu0 %v6309
    %8483 = vmatprep.subr.bf16.mxu0 %v6318
    %8484 = vmatpush1.bf16.msra.mxu0 %v6317
    %8485 = vmatprep.subr.bf16.mxu0 %v6326
    %8486 = vmatpush1.bf16.msra.mxu0 %v6325
    %8487 = vmatprep.subr.bf16.mxu0 %v6334
    %8488 = vmatpush1.bf16.msra.mxu0 %v6333
    %8489 = vmatprep.subr.bf16.mxu0 %v6342
    %8490 = vmatpush1.bf16.msra.mxu0 %v6341
    %8491 = vmatprep.subr.bf16.mxu0 %v6350
    %8492 = vmatpush1.bf16.msra.mxu0 %v6349
    %8493 = vmatprep.subr.bf16.mxu0 %v6358
    %8494 = vmatpush1.bf16.msra.mxu0 %v6357
    %8495 = vmatprep.subr.bf16.mxu0 %v6366
    %8496 = vmatpush1.bf16.msra.mxu0 %v6365
    %8497 = vmatprep.subr.bf16.mxu0 %v6374
    %8498 = vmatpush1.bf16.msra.mxu0 %v6373
    %8499 = vmatprep.subr.bf16.mxu0 %v6382
    %8500 = vmatpush1.bf16.msra.mxu0 %v6381
    %8501 = vmatprep.subr.bf16.mxu0 %v6390
    %8502 = vmatpush1.bf16.msra.mxu0 %v6389
    %8503 = vmatprep.subr.bf16.mxu0 %v6398
    %8504 = vmatpush1.bf16.msra.mxu0 %v6397
    %8505 = vmatprep.subr.bf16.mxu0 %v6406
    %8506 = vmatpush1.bf16.msra.mxu0 %v6405
    %8507 = vmatprep.subr.bf16.mxu0 %v6414
    %8508 = vmatpush1.bf16.msra.mxu0 %v6413
    %8509 = vmatprep.subr.bf16.mxu0 %v6422
    %8510 = vmatpush1.bf16.msra.mxu0 %v6421
    %8511 = vmatprep.mubr.bf16.mxu0 %v1388
    %8512 = vmatmul.mubr.bf16.gmra.mrb[0].mxu0 %v1387
    %v8513 = vpop.f32.mrb[0].mxu0
    %v8514 = vadd.f32 %v8473, %v8513
    %v8515 = vpop.f32.mrb[0].mxu0
    %v8516 = vadd.f32 %v8475, %v8515
    %v8517 = vpop.f32.mrb[0].mxu0
    %v8518 = vpop.f32.mrb[0].mxu0
    %8519 = vdwg.mxu0
    %8520 = vmatprep.subr.bf16.mxu0 %v6430
    %8521 = vmatpush1.bf16.msra.mxu0 %v6429
    %8522 = vmatprep.subr.bf16.mxu0 %v6438
    %8523 = vmatpush1.bf16.msra.mxu0 %v6437
    %8524 = vmatprep.subr.bf16.mxu0 %v6446
    %8525 = vmatpush1.bf16.msra.mxu0 %v6445
    %8526 = vmatprep.subr.bf16.mxu0 %v6454
    %8527 = vmatpush1.bf16.msra.mxu0 %v6453
    %8528 = vmatprep.subr.bf16.mxu0 %v6462
    %8529 = vmatpush1.bf16.msra.mxu0 %v6461
    %8530 = vmatprep.subr.bf16.mxu0 %v6470
    %8531 = vmatpush1.bf16.msra.mxu0 %v6469
    %8532 = vmatprep.subr.bf16.mxu0 %v6478
    %8533 = vmatpush1.bf16.msra.mxu0 %v6477
    %8534 = vmatprep.subr.bf16.mxu0 %v6486
    %8535 = vmatpush1.bf16.msra.mxu0 %v6485
    %8536 = vmatprep.subr.bf16.mxu0 %v6494
    %8537 = vmatpush1.bf16.msra.mxu0 %v6493
    %8538 = vmatprep.subr.bf16.mxu0 %v6502
    %8539 = vmatpush1.bf16.msra.mxu0 %v6501
    %8540 = vmatprep.subr.bf16.mxu0 %v6510
    %8541 = vmatpush1.bf16.msra.mxu0 %v6509
    %8542 = vmatprep.subr.bf16.mxu0 %v6518
    %8543 = vmatpush1.bf16.msra.mxu0 %v6517
    %8544 = vmatprep.subr.bf16.mxu0 %v6526
    %8545 = vmatpush1.bf16.msra.mxu0 %v6525
    %8546 = vmatprep.subr.bf16.mxu0 %v6534
    %8547 = vmatpush1.bf16.msra.mxu0 %v6533
    %8548 = vmatprep.subr.bf16.mxu0 %v6542
    %8549 = vmatpush1.bf16.msra.mxu0 %v6541
    %8550 = vmatprep.subr.bf16.mxu0 %v6550
    %8551 = vmatpush1.bf16.msra.mxu0 %v6549
    %8552 = vmatprep.mubr.bf16.mxu0 %v1390
    %8553 = vmatmul.mubr.bf16.gmra.mrb[0].mxu0 %v1389
    %v8554 = vpop.f32.mrb[0].mxu0
    %v8555 = vadd.f32 %v8514, %v8554
    %v8556 = vpop.f32.mrb[0].mxu0
    %v8557 = vadd.f32 %v8516, %v8556
    %v8558 = vpop.f32.mrb[0].mxu0
    %v8559 = vpop.f32.mrb[0].mxu0
    %8560 = vdwg.mxu0
    %8561 = vmatprep.subr.bf16.mxu0 %v5536
    %8562 = vmatpush1.bf16.msra.mxu0 %v5535
    %8563 = vmatprep.subr.bf16.mxu0 %v5544
    %8564 = vmatpush1.bf16.msra.mxu0 %v5543
    %8565 = vmatprep.subr.bf16.mxu0 %v5552
    %8566 = vmatpush1.bf16.msra.mxu0 %v5551
    %8567 = vmatprep.subr.bf16.mxu0 %v5560
    %8568 = vmatpush1.bf16.msra.mxu0 %v5559
    %8569 = vmatprep.subr.bf16.mxu0 %v5568
    %8570 = vmatpush1.bf16.msra.mxu0 %v5567
    %8571 = vmatprep.subr.bf16.mxu0 %v5576
    %8572 = vmatpush1.bf16.msra.mxu0 %v5575
    %8573 = vmatprep.subr.bf16.mxu0 %v5584
    %8574 = vmatpush1.bf16.msra.mxu0 %v5583
    %8575 = vmatprep.subr.bf16.mxu0 %v5592
    %8576 = vmatpush1.bf16.msra.mxu0 %v5591
    %8577 = vmatprep.subr.bf16.mxu0 %v5600
    %8578 = vmatpush1.bf16.msra.mxu0 %v5599
    %8579 = vmatprep.subr.bf16.mxu0 %v5608
    %8580 = vmatpush1.bf16.msra.mxu0 %v5607
    %8581 = vmatprep.subr.bf16.mxu0 %v5616
    %8582 = vmatpush1.bf16.msra.mxu0 %v5615
    %8583 = vmatprep.subr.bf16.mxu0 %v5624
    %8584 = vmatpush1.bf16.msra.mxu0 %v5623
    %8585 = vmatprep.subr.bf16.mxu0 %v5632
    %8586 = vmatpush1.bf16.msra.mxu0 %v5631
    %8587 = vmatprep.subr.bf16.mxu0 %v5640
    %8588 = vmatpush1.bf16.msra.mxu0 %v5639
    %8589 = vmatprep.subr.bf16.mxu0 %v5648
    %8590 = vmatpush1.bf16.msra.mxu0 %v5647
    %8591 = vmatprep.subr.bf16.mxu0 %v5656
    %8592 = vmatpush1.bf16.msra.mxu0 %v5655
    %8593 = vmatprep.mubr.bf16.mxu0 %v1376
    %8594 = vmatmul.mubr.bf16.gmra.mrb[0].mxu0 %v1375
    %v8595 = vpop.f32.mrb[0].mxu0
    %v8596 = vadd.f32 %v2444, %v8595
    %v8597 = vpop.f32.mrb[0].mxu0
    %v8598 = vadd.f32 %v2448, %v8597
    %v8599 = vpop.f32.mrb[0].mxu0
    %v8600 = vpop.f32.mrb[0].mxu0
    %8601 = vdwg.mxu0
    %8602 = vmatprep.subr.bf16.mxu0 %v5664
    %8603 = vmatpush1.bf16.msra.mxu0 %v5663
    %8604 = vmatprep.subr.bf16.mxu0 %v5672
    %8605 = vmatpush1.bf16.msra.mxu0 %v5671
    %8606 = vmatprep.subr.bf16.mxu0 %v5680
    %8607 = vmatpush1.bf16.msra.mxu0 %v5679
    %8608 = vmatprep.subr.bf16.mxu0 %v5688
    %8609 = vmatpush1.bf16.msra.mxu0 %v5687
    %8610 = vmatprep.subr.bf16.mxu0 %v5696
    %8611 = vmatpush1.bf16.msra.mxu0 %v5695
    %8612 = vmatprep.subr.bf16.mxu0 %v5704
    %8613 = vmatpush1.bf16.msra.mxu0 %v5703
    %8614 = vmatprep.subr.bf16.mxu0 %v5712
    %8615 = vmatpush1.bf16.msra.mxu0 %v5711
    %8616 = vmatprep.subr.bf16.mxu0 %v5720
    %8617 = vmatpush1.bf16.msra.mxu0 %v5719
    %8618 = vmatprep.subr.bf16.mxu0 %v5728
    %8619 = vmatpush1.bf16.msra.mxu0 %v5727
    %8620 = vmatprep.subr.bf16.mxu0 %v5736
    %8621 = vmatpush1.bf16.msra.mxu0 %v5735
    %8622 = vmatprep.subr.bf16.mxu0 %v5744
    %8623 = vmatpush1.bf16.msra.mxu0 %v5743
    %8624 = vmatprep.subr.bf16.mxu0 %v5752
    %8625 = vmatpush1.bf16.msra.mxu0 %v5751
    %8626 = vmatprep.subr.bf16.mxu0 %v5760
    %8627 = vmatpush1.bf16.msra.mxu0 %v5759
    %8628 = vmatprep.subr.bf16.mxu0 %v5768
    %8629 = vmatpush1.bf16.msra.mxu0 %v5767
    %8630 = vmatprep.subr.bf16.mxu0 %v5776
    %8631 = vmatpush1.bf16.msra.mxu0 %v5775
    %8632 = vmatprep.subr.bf16.mxu0 %v5784
    %8633 = vmatpush1.bf16.msra.mxu0 %v5783
    %8634 = vmatprep.mubr.bf16.mxu0 %v1378
    %8635 = vmatmul.mubr.bf16.gmra.mrb[0].mxu0 %v1377
    %v8636 = vpop.f32.mrb[0].mxu0
    %v8637 = vadd.f32 %v8596, %v8636
    %v8638 = vpop.f32.mrb[0].mxu0
    %v8639 = vadd.f32 %v8598, %v8638
    %v8640 = vpop.f32.mrb[0].mxu0
    %v8641 = vpop.f32.mrb[0].mxu0
    %8642 = vdwg.mxu0
    %8643 = vmatprep.subr.bf16.mxu0 %v5792
    %8644 = vmatpush1.bf16.msra.mxu0 %v5791
    %8645 = vmatprep.subr.bf16.mxu0 %v5800
    %8646 = vmatpush1.bf16.msra.mxu0 %v5799
    %8647 = vmatprep.subr.bf16.mxu0 %v5808
    %8648 = vmatpush1.bf16.msra.mxu0 %v5807
    %8649 = vmatprep.subr.bf16.mxu0 %v5816
    %8650 = vmatpush1.bf16.msra.mxu0 %v5815
    %8651 = vmatprep.subr.bf16.mxu0 %v5824
    %8652 = vmatpush1.bf16.msra.mxu0 %v5823
    %8653 = vmatprep.subr.bf16.mxu0 %v5832
    %8654 = vmatpush1.bf16.msra.mxu0 %v5831
    %8655 = vmatprep.subr.bf16.mxu0 %v5840
    %8656 = vmatpush1.bf16.msra.mxu0 %v5839
    %8657 = vmatprep.subr.bf16.mxu0 %v5848
    %8658 = vmatpush1.bf16.msra.mxu0 %v5847
    %8659 = vmatprep.subr.bf16.mxu0 %v5856
    %8660 = vmatpush1.bf16.msra.mxu0 %v5855
    %8661 = vmatprep.subr.bf16.mxu0 %v5864
    %8662 = vmatpush1.bf16.msra.mxu0 %v5863
    %8663 = vmatprep.subr.bf16.mxu0 %v5872
    %8664 = vmatpush1.bf16.msra.mxu0 %v5871
    %8665 = vmatprep.subr.bf16.mxu0 %v5880
    %8666 = vmatpush1.bf16.msra.mxu0 %v5879
    %8667 = vmatprep.subr.bf16.mxu0 %v5888
    %8668 = vmatpush1.bf16.msra.mxu0 %v5887
    %8669 = vmatprep.subr.bf16.mxu0 %v5896
    %8670 = vmatpush1.bf16.msra.mxu0 %v5895
    %8671 = vmatprep.subr.bf16.mxu0 %v5904
    %8672 = vmatpush1.bf16.msra.mxu0 %v5903
    %8673 = vmatprep.subr.bf16.mxu0 %v5912
    %8674 = vmatpush1.bf16.msra.mxu0 %v5911
    %8675 = vmatprep.mubr.bf16.mxu0 %v1380
    %8676 = vmatmul.mubr.bf16.gmra.mrb[0].mxu0 %v1379
    %v8677 = vpop.f32.mrb[0].mxu0
    %v8678 = vadd.f32 %v8637, %v8677
    %v8679 = vpop.f32.mrb[0].mxu0
    %v8680 = vadd.f32 %v8639, %v8679
    %v8681 = vpop.f32.mrb[0].mxu0
    %v8682 = vpop.f32.mrb[0].mxu0
    %8683 = vdwg.mxu0
    %8684 = vmatprep.subr.bf16.mxu0 %v5920
    %8685 = vmatpush1.bf16.msra.mxu0 %v5919
    %8686 = vmatprep.subr.bf16.mxu0 %v5928
    %8687 = vmatpush1.bf16.msra.mxu0 %v5927
    %8688 = vmatprep.subr.bf16.mxu0 %v5936
    %8689 = vmatpush1.bf16.msra.mxu0 %v5935
    %8690 = vmatprep.subr.bf16.mxu0 %v5944
    %8691 = vmatpush1.bf16.msra.mxu0 %v5943
    %8692 = vmatprep.subr.bf16.mxu0 %v5952
    %8693 = vmatpush1.bf16.msra.mxu0 %v5951
    %8694 = vmatprep.subr.bf16.mxu0 %v5960
    %8695 = vmatpush1.bf16.msra.mxu0 %v5959
    %8696 = vmatprep.subr.bf16.mxu0 %v5968
    %8697 = vmatpush1.bf16.msra.mxu0 %v5967
    %8698 = vmatprep.subr.bf16.mxu0 %v5976
    %8699 = vmatpush1.bf16.msra.mxu0 %v5975
    %8700 = vmatprep.subr.bf16.mxu0 %v5984
    %8701 = vmatpush1.bf16.msra.mxu0 %v5983
    %8702 = vmatprep.subr.bf16.mxu0 %v5992
    %8703 = vmatpush1.bf16.msra.mxu0 %v5991
    %8704 = vmatprep.subr.bf16.mxu0 %v6000
    %8705 = vmatpush1.bf16.msra.mxu0 %v5999
    %8706 = vmatprep.subr.bf16.mxu0 %v6008
    %8707 = vmatpush1.bf16.msra.mxu0 %v6007
    %8708 = vmatprep.subr.bf16.mxu0 %v6016
    %8709 = vmatpush1.bf16.msra.mxu0 %v6015
    %8710 = vmatprep.subr.bf16.mxu0 %v6024
    %8711 = vmatpush1.bf16.msra.mxu0 %v6023
    %8712 = vmatprep.subr.bf16.mxu0 %v6032
    %8713 = vmatpush1.bf16.msra.mxu0 %v6031
    %8714 = vmatprep.subr.bf16.mxu0 %v6040
    %8715 = vmatpush1.bf16.msra.mxu0 %v6039
    %8716 = vmatprep.mubr.bf16.mxu0 %v1382
    %8717 = vmatmul.mubr.bf16.gmra.mrb[0].mxu0 %v1381
    %v8718 = vpop.f32.mrb[0].mxu0
    %v8719 = vadd.f32 %v8678, %v8718
    %v8720 = vpop.f32.mrb[0].mxu0
    %v8721 = vadd.f32 %v8680, %v8720
    %v8722 = vpop.f32.mrb[0].mxu0
    %v8723 = vpop.f32.mrb[0].mxu0
    %8724 = vdwg.mxu0
    %8725 = vmatprep.subr.bf16.mxu0 %v6048
    %8726 = vmatpush1.bf16.msra.mxu0 %v6047
    %8727 = vmatprep.subr.bf16.mxu0 %v6056
    %8728 = vmatpush1.bf16.msra.mxu0 %v6055
    %8729 = vmatprep.subr.bf16.mxu0 %v6064
    %8730 = vmatpush1.bf16.msra.mxu0 %v6063
    %8731 = vmatprep.subr.bf16.mxu0 %v6072
    %8732 = vmatpush1.bf16.msra.mxu0 %v6071
    %8733 = vmatprep.subr.bf16.mxu0 %v6080
    %8734 = vmatpush1.bf16.msra.mxu0 %v6079
    %8735 = vmatprep.subr.bf16.mxu0 %v6088
    %8736 = vmatpush1.bf16.msra.mxu0 %v6087
    %8737 = vmatprep.subr.bf16.mxu0 %v6096
    %8738 = vmatpush1.bf16.msra.mxu0 %v6095
    %8739 = vmatprep.subr.bf16.mxu0 %v6104
    %8740 = vmatpush1.bf16.msra.mxu0 %v6103
    %8741 = vmatprep.subr.bf16.mxu0 %v6112
    %8742 = vmatpush1.bf16.msra.mxu0 %v6111
    %8743 = vmatprep.subr.bf16.mxu0 %v6120
    %8744 = vmatpush1.bf16.msra.mxu0 %v6119
    %8745 = vmatprep.subr.bf16.mxu0 %v6128
    %8746 = vmatpush1.bf16.msra.mxu0 %v6127
    %8747 = vmatprep.subr.bf16.mxu0 %v6136
    %8748 = vmatpush1.bf16.msra.mxu0 %v6135
    %8749 = vmatprep.subr.bf16.mxu0 %v6144
    %8750 = vmatpush1.bf16.msra.mxu0 %v6143
    %8751 = vmatprep.subr.bf16.mxu0 %v6152
    %8752 = vmatpush1.bf16.msra.mxu0 %v6151
    %8753 = vmatprep.subr.bf16.mxu0 %v6160
    %8754 = vmatpush1.bf16.msra.mxu0 %v6159
    %8755 = vmatprep.subr.bf16.mxu0 %v6168
    %8756 = vmatpush1.bf16.msra.mxu0 %v6167
    %8757 = vmatprep.mubr.bf16.mxu0 %v1384
    %8758 = vmatmul.mubr.bf16.gmra.mrb[0].mxu0 %v1383
    %v8759 = vpop.f32.mrb[0].mxu0
    %v8760 = vadd.f32 %v8719, %v8759
    %v8761 = vpop.f32.mrb[0].mxu0
    %v8762 = vadd.f32 %v8721, %v8761
    %v8763 = vpop.f32.mrb[0].mxu0
    %v8764 = vpop.f32.mrb[0].mxu0
    %8765 = vdwg.mxu0
    %8766 = vmatprep.subr.bf16.mxu0 %v6176
    %8767 = vmatpush1.bf16.msra.mxu0 %v6175
    %8768 = vmatprep.subr.bf16.mxu0 %v6184
    %8769 = vmatpush1.bf16.msra.mxu0 %v6183
    %8770 = vmatprep.subr.bf16.mxu0 %v6192
    %8771 = vmatpush1.bf16.msra.mxu0 %v6191
    %8772 = vmatprep.subr.bf16.mxu0 %v6200
    %8773 = vmatpush1.bf16.msra.mxu0 %v6199
    %8774 = vmatprep.subr.bf16.mxu0 %v6208
    %8775 = vmatpush1.bf16.msra.mxu0 %v6207
    %8776 = vmatprep.subr.bf16.mxu0 %v6216
    %8777 = vmatpush1.bf16.msra.mxu0 %v6215
    %8778 = vmatprep.subr.bf16.mxu0 %v6224
    %8779 = vmatpush1.bf16.msra.mxu0 %v6223
    %8780 = vmatprep.subr.bf16.mxu0 %v6232
    %8781 = vmatpush1.bf16.msra.mxu0 %v6231
    %8782 = vmatprep.subr.bf16.mxu0 %v6240
    %8783 = vmatpush1.bf16.msra.mxu0 %v6239
    %8784 = vmatprep.subr.bf16.mxu0 %v6248
    %8785 = vmatpush1.bf16.msra.mxu0 %v6247
    %8786 = vmatprep.subr.bf16.mxu0 %v6256
    %8787 = vmatpush1.bf16.msra.mxu0 %v6255
    %8788 = vmatprep.subr.bf16.mxu0 %v6264
    %8789 = vmatpush1.bf16.msra.mxu0 %v6263
    %8790 = vmatprep.subr.bf16.mxu0 %v6272
    %8791 = vmatpush1.bf16.msra.mxu0 %v6271
    %8792 = vmatprep.subr.bf16.mxu0 %v6280
    %8793 = vmatpush1.bf16.msra.mxu0 %v6279
    %8794 = vmatprep.subr.bf16.mxu0 %v6288
    %8795 = vmatpush1.bf16.msra.mxu0 %v6287
    %8796 = vmatprep.subr.bf16.mxu0 %v6296
    %8797 = vmatpush1.bf16.msra.mxu0 %v6295
    %8798 = vmatprep.mubr.bf16.mxu0 %v1386
    %8799 = vmatmul.mubr.bf16.gmra.mrb[0].mxu0 %v1385
    %v8800 = vpop.f32.mrb[0].mxu0
    %v8801 = vadd.f32 %v8760, %v8800
    %v8802 = vpop.f32.mrb[0].mxu0
    %v8803 = vadd.f32 %v8762, %v8802
    %v8804 = vpop.f32.mrb[0].mxu0
    %v8805 = vpop.f32.mrb[0].mxu0
    %8806 = vdwg.mxu0
    %8807 = vmatprep.subr.bf16.mxu0 %v6304
    %8808 = vmatpush1.bf16.msra.mxu0 %v6303
    %8809 = vmatprep.subr.bf16.mxu0 %v6312
    %8810 = vmatpush1.bf16.msra.mxu0 %v6311
    %8811 = vmatprep.subr.bf16.mxu0 %v6320
    %8812 = vmatpush1.bf16.msra.mxu0 %v6319
    %8813 = vmatprep.subr.bf16.mxu0 %v6328
    %8814 = vmatpush1.bf16.msra.mxu0 %v6327
    %8815 = vmatprep.subr.bf16.mxu0 %v6336
    %8816 = vmatpush1.bf16.msra.mxu0 %v6335
    %8817 = vmatprep.subr.bf16.mxu0 %v6344
    %8818 = vmatpush1.bf16.msra.mxu0 %v6343
    %8819 = vmatprep.subr.bf16.mxu0 %v6352
    %8820 = vmatpush1.bf16.msra.mxu0 %v6351
    %8821 = vmatprep.subr.bf16.mxu0 %v6360
    %8822 = vmatpush1.bf16.msra.mxu0 %v6359
    %8823 = vmatprep.subr.bf16.mxu0 %v6368
    %8824 = vmatpush1.bf16.msra.mxu0 %v6367
    %8825 = vmatprep.subr.bf16.mxu0 %v6376
    %8826 = vmatpush1.bf16.msra.mxu0 %v6375
    %8827 = vmatprep.subr.bf16.mxu0 %v6384
    %8828 = vmatpush1.bf16.msra.mxu0 %v6383
    %8829 = vmatprep.subr.bf16.mxu0 %v6392
    %8830 = vmatpush1.bf16.msra.mxu0 %v6391
    %8831 = vmatprep.subr.bf16.mxu0 %v6400
    %8832 = vmatpush1.bf16.msra.mxu0 %v6399
    %8833 = vmatprep.subr.bf16.mxu0 %v6408
    %8834 = vmatpush1.bf16.msra.mxu0 %v6407
    %8835 = vmatprep.subr.bf16.mxu0 %v6416
    %8836 = vmatpush1.bf16.msra.mxu0 %v6415
    %8837 = vmatprep.subr.bf16.mxu0 %v6424
    %8838 = vmatpush1.bf16.msra.mxu0 %v6423
    %8839 = vmatprep.mubr.bf16.mxu0 %v1388
    %8840 = vmatmul.mubr.bf16.gmra.mrb[0].mxu0 %v1387
    %v8841 = vpop.f32.mrb[0].mxu0
    %v8842 = vadd.f32 %v8801, %v8841
    %v8843 = vpop.f32.mrb[0].mxu0
    %v8844 = vadd.f32 %v8803, %v8843
    %v8845 = vpop.f32.mrb[0].mxu0
    %v8846 = vpop.f32.mrb[0].mxu0
    %8847 = vdwg.mxu0
    %8848 = vmatprep.subr.bf16.mxu0 %v6432
    %8849 = vmatpush1.bf16.msra.mxu0 %v6431
    %8850 = vmatprep.subr.bf16.mxu0 %v6440
    %8851 = vmatpush1.bf16.msra.mxu0 %v6439
    %8852 = vmatprep.subr.bf16.mxu0 %v6448
    %8853 = vmatpush1.bf16.msra.mxu0 %v6447
    %8854 = vmatprep.subr.bf16.mxu0 %v6456
    %8855 = vmatpush1.bf16.msra.mxu0 %v6455
    %8856 = vmatprep.subr.bf16.mxu0 %v6464
    %8857 = vmatpush1.bf16.msra.mxu0 %v6463
    %8858 = vmatprep.subr.bf16.mxu0 %v6472
    %8859 = vmatpush1.bf16.msra.mxu0 %v6471
    %8860 = vmatprep.subr.bf16.mxu0 %v6480
    %8861 = vmatpush1.bf16.msra.mxu0 %v6479
    %8862 = vmatprep.subr.bf16.mxu0 %v6488
    %8863 = vmatpush1.bf16.msra.mxu0 %v6487
    %8864 = vmatprep.subr.bf16.mxu0 %v6496
    %8865 = vmatpush1.bf16.msra.mxu0 %v6495
    %8866 = vmatprep.subr.bf16.mxu0 %v6504
    %8867 = vmatpush1.bf16.msra.mxu0 %v6503
    %8868 = vmatprep.subr.bf16.mxu0 %v6512
    %8869 = vmatpush1.bf16.msra.mxu0 %v6511
    %8870 = vmatprep.subr.bf16.mxu0 %v6520
    %8871 = vmatpush1.bf16.msra.mxu0 %v6519
    %8872 = vmatprep.subr.bf16.mxu0 %v6528
    %8873 = vmatpush1.bf16.msra.mxu0 %v6527
    %8874 = vmatprep.subr.bf16.mxu0 %v6536
    %8875 = vmatpush1.bf16.msra.mxu0 %v6535
    %8876 = vmatprep.subr.bf16.mxu0 %v6544
    %8877 = vmatpush1.bf16.msra.mxu0 %v6543
    %8878 = vmatprep.subr.bf16.mxu0 %v6552
    %8879 = vmatpush1.bf16.msra.mxu0 %v6551
    %8880 = vmatprep.mubr.bf16.mxu0 %v1390
    %8881 = vmatmul.mubr.bf16.gmra.mrb[0].mxu0 %v1389
    %v8882 = vpop.f32.mrb[0].mxu0
    %v8883 = vadd.f32 %v8842, %v8882
    %v8884 = vpop.f32.mrb[0].mxu0
    %v8885 = vadd.f32 %v8844, %v8884
    %v8886 = vpop.f32.mrb[0].mxu0
    %v8887 = vpop.f32.mrb[0].mxu0
    %8888 = vdwg.mxu0
    %v8889 = vmax.f32 %v7899, 0.0
    %v8890 = vmax.f32 %v7901, 0.0
    %v8891 = vmax.f32 %v8227, 0.0
    %v8892 = vmax.f32 %v8229, 0.0
    %v8893 = vmax.f32 %v8555, 0.0
    %v8894 = vmax.f32 %v8557, 0.0
    %v8895 = vmax.f32 %v8883, 0.0
    %v8896 = vmax.f32 %v8885, 0.0
    %v8897 = vpack.c.bf16 %v8889, %v8889
    %v8898 = vpack.c.bf16 %v8890, %v8890
    %v8899 = vpack.c.bf16 %v8891, %v8891
    %v8900 = vpack.c.bf16 %v8892, %v8892
    %v8901 = vpack.c.bf16 %v8893, %v8893
    %v8902 = vpack.c.bf16 %v8894, %v8894
    %v8903 = vpack.c.bf16 %v8895, %v8895
    %v8904 = vpack.c.bf16 %v8896, %v8896
    %v8905 = vld [vmem:[#allocation11] sm:$0xff]
    %v8906 = vld [vmem:[#allocation11 + $0x8] sm:$0xff]
    %v8907 = vld [vmem:[#allocation11 + $0x10] sm:$0xff]
    %v8908 = vld [vmem:[#allocation11 + $0x18] sm:$0xff]
    %v8909 = vld [vmem:[#allocation11 + $0x20] sm:$0xff]
    %v8910 = vld [vmem:[#allocation11 + $0x28] sm:$0xff]
    %v8911 = vld [vmem:[#allocation11 + $0x30] sm:$0xff]
    %v8912 = vld [vmem:[#allocation11 + $0x38] sm:$0xff]
    %v8913 = vld [vmem:[#allocation11 + $0x40] sm:$0xff]
    %v8914 = vld [vmem:[#allocation11 + $0x48] sm:$0xff]
    %v8915 = vld [vmem:[#allocation11 + $0x50] sm:$0xff]
    %v8916 = vld [vmem:[#allocation11 + $0x58] sm:$0xff]
    %v8917 = vld [vmem:[#allocation11 + $0x60] sm:$0xff]
    %v8918 = vld [vmem:[#allocation11 + $0x68] sm:$0xff]
    %v8919 = vld [vmem:[#allocation11 + $0x70] sm:$0xff]
    %v8920 = vld [vmem:[#allocation11 + $0x78] sm:$0xff]
    %v8921 = vld [vmem:[#allocation11 + $0x80] sm:$0xff]
    %v8922 = vld [vmem:[#allocation11 + $0x88] sm:$0xff]
    %v8923 = vld [vmem:[#allocation11 + $0x90] sm:$0xff]
    %v8924 = vld [vmem:[#allocation11 + $0x98] sm:$0xff]
    %v8925 = vld [vmem:[#allocation11 + $0xa0] sm:$0xff]
    %v8926 = vld [vmem:[#allocation11 + $0xa8] sm:$0xff]
    %v8927 = vld [vmem:[#allocation11 + $0xb0] sm:$0xff]
    %v8928 = vld [vmem:[#allocation11 + $0xb8] sm:$0xff]
    %v8929 = vld [vmem:[#allocation11 + $0xc0] sm:$0xff]
    %v8930 = vld [vmem:[#allocation11 + $0xc8] sm:$0xff]
    %v8931 = vld [vmem:[#allocation11 + $0xd0] sm:$0xff]
    %v8932 = vld [vmem:[#allocation11 + $0xd8] sm:$0xff]
    %v8933 = vld [vmem:[#allocation11 + $0xe0] sm:$0xff]
    %v8934 = vld [vmem:[#allocation11 + $0xe8] sm:$0xff]
    %v8935 = vld [vmem:[#allocation11 + $0xf0] sm:$0xff]
    %v8936 = vld [vmem:[#allocation11 + $0xf8] sm:$0xff]
    %v8937 = vld [vmem:[#allocation11 + $0x100] sm:$0xff]
    %v8938 = vld [vmem:[#allocation11 + $0x108] sm:$0xff]
    %v8939 = vld [vmem:[#allocation11 + $0x110] sm:$0xff]
    %v8940 = vld [vmem:[#allocation11 + $0x118] sm:$0xff]
    %v8941 = vld [vmem:[#allocation11 + $0x120] sm:$0xff]
    %v8942 = vld [vmem:[#allocation11 + $0x128] sm:$0xff]
    %v8943 = vld [vmem:[#allocation11 + $0x130] sm:$0xff]
    %v8944 = vld [vmem:[#allocation11 + $0x138] sm:$0xff]
    %v8945 = vld [vmem:[#allocation11 + $0x140] sm:$0xff]
    %v8946 = vld [vmem:[#allocation11 + $0x148] sm:$0xff]
    %v8947 = vld [vmem:[#allocation11 + $0x150] sm:$0xff]
    %v8948 = vld [vmem:[#allocation11 + $0x158] sm:$0xff]
    %v8949 = vld [vmem:[#allocation11 + $0x160] sm:$0xff]
    %v8950 = vld [vmem:[#allocation11 + $0x168] sm:$0xff]
    %v8951 = vld [vmem:[#allocation11 + $0x170] sm:$0xff]
    %v8952 = vld [vmem:[#allocation11 + $0x178] sm:$0xff]
    %v8953 = vld [vmem:[#allocation11 + $0x180] sm:$0xff]
    %v8954 = vld [vmem:[#allocation11 + $0x188] sm:$0xff]
    %v8955 = vld [vmem:[#allocation11 + $0x190] sm:$0xff]
    %v8956 = vld [vmem:[#allocation11 + $0x198] sm:$0xff]
    %v8957 = vld [vmem:[#allocation11 + $0x1a0] sm:$0xff]
    %v8958 = vld [vmem:[#allocation11 + $0x1a8] sm:$0xff]
    %v8959 = vld [vmem:[#allocation11 + $0x1b0] sm:$0xff]
    %v8960 = vld [vmem:[#allocation11 + $0x1b8] sm:$0xff]
    %v8961 = vld [vmem:[#allocation11 + $0x1c0] sm:$0xff]
    %v8962 = vld [vmem:[#allocation11 + $0x1c8] sm:$0xff]
    %v8963 = vld [vmem:[#allocation11 + $0x1d0] sm:$0xff]
    %v8964 = vld [vmem:[#allocation11 + $0x1d8] sm:$0xff]
    %v8965 = vld [vmem:[#allocation11 + $0x1e0] sm:$0xff]
    %v8966 = vld [vmem:[#allocation11 + $0x1e8] sm:$0xff]
    %v8967 = vld [vmem:[#allocation11 + $0x1f0] sm:$0xff]
    %v8968 = vld [vmem:[#allocation11 + $0x1f8] sm:$0xff]
    %v8969 = vld [vmem:[#allocation11 + $0x200] sm:$0xff]
    %v8970 = vld [vmem:[#allocation11 + $0x208] sm:$0xff]
    %v8971 = vld [vmem:[#allocation11 + $0x210] sm:$0xff]
    %v8972 = vld [vmem:[#allocation11 + $0x218] sm:$0xff]
    %v8973 = vld [vmem:[#allocation11 + $0x220] sm:$0xff]
    %v8974 = vld [vmem:[#allocation11 + $0x228] sm:$0xff]
    %v8975 = vld [vmem:[#allocation11 + $0x230] sm:$0xff]
    %v8976 = vld [vmem:[#allocation11 + $0x238] sm:$0xff]
    %v8977 = vld [vmem:[#allocation11 + $0x240] sm:$0xff]
    %v8978 = vld [vmem:[#allocation11 + $0x248] sm:$0xff]
    %v8979 = vld [vmem:[#allocation11 + $0x250] sm:$0xff]
    %v8980 = vld [vmem:[#allocation11 + $0x258] sm:$0xff]
    %v8981 = vld [vmem:[#allocation11 + $0x260] sm:$0xff]
    %v8982 = vld [vmem:[#allocation11 + $0x268] sm:$0xff]
    %v8983 = vld [vmem:[#allocation11 + $0x270] sm:$0xff]
    %v8984 = vld [vmem:[#allocation11 + $0x278] sm:$0xff]
    %v8985 = vld [vmem:[#allocation11 + $0x280] sm:$0xff]
    %v8986 = vld [vmem:[#allocation11 + $0x288] sm:$0xff]
    %v8987 = vld [vmem:[#allocation11 + $0x290] sm:$0xff]
    %v8988 = vld [vmem:[#allocation11 + $0x298] sm:$0xff]
    %v8989 = vld [vmem:[#allocation11 + $0x2a0] sm:$0xff]
    %v8990 = vld [vmem:[#allocation11 + $0x2a8] sm:$0xff]
    %v8991 = vld [vmem:[#allocation11 + $0x2b0] sm:$0xff]
    %v8992 = vld [vmem:[#allocation11 + $0x2b8] sm:$0xff]
    %v8993 = vld [vmem:[#allocation11 + $0x2c0] sm:$0xff]
    %v8994 = vld [vmem:[#allocation11 + $0x2c8] sm:$0xff]
    %v8995 = vld [vmem:[#allocation11 + $0x2d0] sm:$0xff]
    %v8996 = vld [vmem:[#allocation11 + $0x2d8] sm:$0xff]
    %v8997 = vld [vmem:[#allocation11 + $0x2e0] sm:$0xff]
    %v8998 = vld [vmem:[#allocation11 + $0x2e8] sm:$0xff]
    %v8999 = vld [vmem:[#allocation11 + $0x2f0] sm:$0xff]
    %v9000 = vld [vmem:[#allocation11 + $0x2f8] sm:$0xff]
    %v9001 = vld [vmem:[#allocation11 + $0x300] sm:$0xff]
    %v9002 = vld [vmem:[#allocation11 + $0x308] sm:$0xff]
    %v9003 = vld [vmem:[#allocation11 + $0x310] sm:$0xff]
    %v9004 = vld [vmem:[#allocation11 + $0x318] sm:$0xff]
    %v9005 = vld [vmem:[#allocation11 + $0x320] sm:$0xff]
    %v9006 = vld [vmem:[#allocation11 + $0x328] sm:$0xff]
    %v9007 = vld [vmem:[#allocation11 + $0x330] sm:$0xff]
    %v9008 = vld [vmem:[#allocation11 + $0x338] sm:$0xff]
    %v9009 = vld [vmem:[#allocation11 + $0x340] sm:$0xff]
    %v9010 = vld [vmem:[#allocation11 + $0x348] sm:$0xff]
    %v9011 = vld [vmem:[#allocation11 + $0x350] sm:$0xff]
    %v9012 = vld [vmem:[#allocation11 + $0x358] sm:$0xff]
    %v9013 = vld [vmem:[#allocation11 + $0x360] sm:$0xff]
    %v9014 = vld [vmem:[#allocation11 + $0x368] sm:$0xff]
    %v9015 = vld [vmem:[#allocation11 + $0x370] sm:$0xff]
    %v9016 = vld [vmem:[#allocation11 + $0x378] sm:$0xff]
    %v9017 = vld [vmem:[#allocation11 + $0x380] sm:$0xff]
    %v9018 = vld [vmem:[#allocation11 + $0x388] sm:$0xff]
    %v9019 = vld [vmem:[#allocation11 + $0x390] sm:$0xff]
    %v9020 = vld [vmem:[#allocation11 + $0x398] sm:$0xff]
    %v9021 = vld [vmem:[#allocation11 + $0x3a0] sm:$0xff]
    %v9022 = vld [vmem:[#allocation11 + $0x3a8] sm:$0xff]
    %v9023 = vld [vmem:[#allocation11 + $0x3b0] sm:$0xff]
    %v9024 = vld [vmem:[#allocation11 + $0x3b8] sm:$0xff]
    %v9025 = vld [vmem:[#allocation11 + $0x3c0] sm:$0xff]
    %v9026 = vld [vmem:[#allocation11 + $0x3c8] sm:$0xff]
    %v9027 = vld [vmem:[#allocation11 + $0x3d0] sm:$0xff]
    %v9028 = vld [vmem:[#allocation11 + $0x3d8] sm:$0xff]
    %v9029 = vld [vmem:[#allocation11 + $0x3e0] sm:$0xff]
    %v9030 = vld [vmem:[#allocation11 + $0x3e8] sm:$0xff]
    %v9031 = vld [vmem:[#allocation11 + $0x3f0] sm:$0xff]
    %v9032 = vld [vmem:[#allocation11 + $0x3f8] sm:$0xff]
    %v9033 = vld [vmem:[#allocation11 + $0x400] sm:$0xff]
    %v9034 = vld [vmem:[#allocation11 + $0x408] sm:$0xff]
    %v9035 = vld [vmem:[#allocation11 + $0x410] sm:$0xff]
    %v9036 = vld [vmem:[#allocation11 + $0x418] sm:$0xff]
    %v9037 = vld [vmem:[#allocation11 + $0x420] sm:$0xff]
    %v9038 = vld [vmem:[#allocation11 + $0x428] sm:$0xff]
    %v9039 = vld [vmem:[#allocation11 + $0x430] sm:$0xff]
    %v9040 = vld [vmem:[#allocation11 + $0x438] sm:$0xff]
    %v9041 = vld [vmem:[#allocation11 + $0x440] sm:$0xff]
    %v9042 = vld [vmem:[#allocation11 + $0x448] sm:$0xff]
    %v9043 = vld [vmem:[#allocation11 + $0x450] sm:$0xff]
    %v9044 = vld [vmem:[#allocation11 + $0x458] sm:$0xff]
    %v9045 = vld [vmem:[#allocation11 + $0x460] sm:$0xff]
    %v9046 = vld [vmem:[#allocation11 + $0x468] sm:$0xff]
    %v9047 = vld [vmem:[#allocation11 + $0x470] sm:$0xff]
    %v9048 = vld [vmem:[#allocation11 + $0x478] sm:$0xff]
    %v9049 = vld [vmem:[#allocation11 + $0x480] sm:$0xff]
    %v9050 = vld [vmem:[#allocation11 + $0x488] sm:$0xff]
    %v9051 = vld [vmem:[#allocation11 + $0x490] sm:$0xff]
    %v9052 = vld [vmem:[#allocation11 + $0x498] sm:$0xff]
    %v9053 = vld [vmem:[#allocation11 + $0x4a0] sm:$0xff]
    %v9054 = vld [vmem:[#allocation11 + $0x4a8] sm:$0xff]
    %v9055 = vld [vmem:[#allocation11 + $0x4b0] sm:$0xff]
    %v9056 = vld [vmem:[#allocation11 + $0x4b8] sm:$0xff]
    %v9057 = vld [vmem:[#allocation11 + $0x4c0] sm:$0xff]
    %v9058 = vld [vmem:[#allocation11 + $0x4c8] sm:$0xff]
    %v9059 = vld [vmem:[#allocation11 + $0x4d0] sm:$0xff]
    %v9060 = vld [vmem:[#allocation11 + $0x4d8] sm:$0xff]
    %v9061 = vld [vmem:[#allocation11 + $0x4e0] sm:$0xff]
    %v9062 = vld [vmem:[#allocation11 + $0x4e8] sm:$0xff]
    %v9063 = vld [vmem:[#allocation11 + $0x4f0] sm:$0xff]
    %v9064 = vld [vmem:[#allocation11 + $0x4f8] sm:$0xff]
    %v9065 = vld [vmem:[#allocation11 + $0x500] sm:$0xff]
    %v9066 = vld [vmem:[#allocation11 + $0x508] sm:$0xff]
    %v9067 = vld [vmem:[#allocation11 + $0x510] sm:$0xff]
    %v9068 = vld [vmem:[#allocation11 + $0x518] sm:$0xff]
    %v9069 = vld [vmem:[#allocation11 + $0x520] sm:$0xff]
    %v9070 = vld [vmem:[#allocation11 + $0x528] sm:$0xff]
    %v9071 = vld [vmem:[#allocation11 + $0x530] sm:$0xff]
    %v9072 = vld [vmem:[#allocation11 + $0x538] sm:$0xff]
    %v9073 = vld [vmem:[#allocation11 + $0x540] sm:$0xff]
    %v9074 = vld [vmem:[#allocation11 + $0x548] sm:$0xff]
    %v9075 = vld [vmem:[#allocation11 + $0x550] sm:$0xff]
    %v9076 = vld [vmem:[#allocation11 + $0x558] sm:$0xff]
    %v9077 = vld [vmem:[#allocation11 + $0x560] sm:$0xff]
    %v9078 = vld [vmem:[#allocation11 + $0x568] sm:$0xff]
    %v9079 = vld [vmem:[#allocation11 + $0x570] sm:$0xff]
    %v9080 = vld [vmem:[#allocation11 + $0x578] sm:$0xff]
    %v9081 = vld [vmem:[#allocation11 + $0x580] sm:$0xff]
    %v9082 = vld [vmem:[#allocation11 + $0x588] sm:$0xff]
    %v9083 = vld [vmem:[#allocation11 + $0x590] sm:$0xff]
    %v9084 = vld [vmem:[#allocation11 + $0x598] sm:$0xff]
    %v9085 = vld [vmem:[#allocation11 + $0x5a0] sm:$0xff]
    %v9086 = vld [vmem:[#allocation11 + $0x5a8] sm:$0xff]
    %v9087 = vld [vmem:[#allocation11 + $0x5b0] sm:$0xff]
    %v9088 = vld [vmem:[#allocation11 + $0x5b8] sm:$0xff]
    %v9089 = vld [vmem:[#allocation11 + $0x5c0] sm:$0xff]
    %v9090 = vld [vmem:[#allocation11 + $0x5c8] sm:$0xff]
    %v9091 = vld [vmem:[#allocation11 + $0x5d0] sm:$0xff]
    %v9092 = vld [vmem:[#allocation11 + $0x5d8] sm:$0xff]
    %v9093 = vld [vmem:[#allocation11 + $0x5e0] sm:$0xff]
    %v9094 = vld [vmem:[#allocation11 + $0x5e8] sm:$0xff]
    %v9095 = vld [vmem:[#allocation11 + $0x5f0] sm:$0xff]
    %v9096 = vld [vmem:[#allocation11 + $0x5f8] sm:$0xff]
    %v9097 = vld [vmem:[#allocation11 + $0x600] sm:$0xff]
    %v9098 = vld [vmem:[#allocation11 + $0x608] sm:$0xff]
    %v9099 = vld [vmem:[#allocation11 + $0x610] sm:$0xff]
    %v9100 = vld [vmem:[#allocation11 + $0x618] sm:$0xff]
    %v9101 = vld [vmem:[#allocation11 + $0x620] sm:$0xff]
    %v9102 = vld [vmem:[#allocation11 + $0x628] sm:$0xff]
    %v9103 = vld [vmem:[#allocation11 + $0x630] sm:$0xff]
    %v9104 = vld [vmem:[#allocation11 + $0x638] sm:$0xff]
    %v9105 = vld [vmem:[#allocation11 + $0x640] sm:$0xff]
    %v9106 = vld [vmem:[#allocation11 + $0x648] sm:$0xff]
    %v9107 = vld [vmem:[#allocation11 + $0x650] sm:$0xff]
    %v9108 = vld [vmem:[#allocation11 + $0x658] sm:$0xff]
    %v9109 = vld [vmem:[#allocation11 + $0x660] sm:$0xff]
    %v9110 = vld [vmem:[#allocation11 + $0x668] sm:$0xff]
    %v9111 = vld [vmem:[#allocation11 + $0x670] sm:$0xff]
    %v9112 = vld [vmem:[#allocation11 + $0x678] sm:$0xff]
    %v9113 = vld [vmem:[#allocation11 + $0x680] sm:$0xff]
    %v9114 = vld [vmem:[#allocation11 + $0x688] sm:$0xff]
    %v9115 = vld [vmem:[#allocation11 + $0x690] sm:$0xff]
    %v9116 = vld [vmem:[#allocation11 + $0x698] sm:$0xff]
    %v9117 = vld [vmem:[#allocation11 + $0x6a0] sm:$0xff]
    %v9118 = vld [vmem:[#allocation11 + $0x6a8] sm:$0xff]
    %v9119 = vld [vmem:[#allocation11 + $0x6b0] sm:$0xff]
    %v9120 = vld [vmem:[#allocation11 + $0x6b8] sm:$0xff]
    %v9121 = vld [vmem:[#allocation11 + $0x6c0] sm:$0xff]
    %v9122 = vld [vmem:[#allocation11 + $0x6c8] sm:$0xff]
    %v9123 = vld [vmem:[#allocation11 + $0x6d0] sm:$0xff]
    %v9124 = vld [vmem:[#allocation11 + $0x6d8] sm:$0xff]
    %v9125 = vld [vmem:[#allocation11 + $0x6e0] sm:$0xff]
    %v9126 = vld [vmem:[#allocation11 + $0x6e8] sm:$0xff]
    %v9127 = vld [vmem:[#allocation11 + $0x6f0] sm:$0xff]
    %v9128 = vld [vmem:[#allocation11 + $0x6f8] sm:$0xff]
    %v9129 = vld [vmem:[#allocation11 + $0x700] sm:$0xff]
    %v9130 = vld [vmem:[#allocation11 + $0x708] sm:$0xff]
    %v9131 = vld [vmem:[#allocation11 + $0x710] sm:$0xff]
    %v9132 = vld [vmem:[#allocation11 + $0x718] sm:$0xff]
    %v9133 = vld [vmem:[#allocation11 + $0x720] sm:$0xff]
    %v9134 = vld [vmem:[#allocation11 + $0x728] sm:$0xff]
    %v9135 = vld [vmem:[#allocation11 + $0x730] sm:$0xff]
    %v9136 = vld [vmem:[#allocation11 + $0x738] sm:$0xff]
    %v9137 = vld [vmem:[#allocation11 + $0x740] sm:$0xff]
    %v9138 = vld [vmem:[#allocation11 + $0x748] sm:$0xff]
    %v9139 = vld [vmem:[#allocation11 + $0x750] sm:$0xff]
    %v9140 = vld [vmem:[#allocation11 + $0x758] sm:$0xff]
    %v9141 = vld [vmem:[#allocation11 + $0x760] sm:$0xff]
    %v9142 = vld [vmem:[#allocation11 + $0x768] sm:$0xff]
    %v9143 = vld [vmem:[#allocation11 + $0x770] sm:$0xff]
    %v9144 = vld [vmem:[#allocation11 + $0x778] sm:$0xff]
    %v9145 = vld [vmem:[#allocation11 + $0x780] sm:$0xff]
    %v9146 = vld [vmem:[#allocation11 + $0x788] sm:$0xff]
    %v9147 = vld [vmem:[#allocation11 + $0x790] sm:$0xff]
    %v9148 = vld [vmem:[#allocation11 + $0x798] sm:$0xff]
    %v9149 = vld [vmem:[#allocation11 + $0x7a0] sm:$0xff]
    %v9150 = vld [vmem:[#allocation11 + $0x7a8] sm:$0xff]
    %v9151 = vld [vmem:[#allocation11 + $0x7b0] sm:$0xff]
    %v9152 = vld [vmem:[#allocation11 + $0x7b8] sm:$0xff]
    %v9153 = vld [vmem:[#allocation11 + $0x7c0] sm:$0xff]
    %v9154 = vld [vmem:[#allocation11 + $0x7c8] sm:$0xff]
    %v9155 = vld [vmem:[#allocation11 + $0x7d0] sm:$0xff]
    %v9156 = vld [vmem:[#allocation11 + $0x7d8] sm:$0xff]
    %v9157 = vld [vmem:[#allocation11 + $0x7e0] sm:$0xff]
    %v9158 = vld [vmem:[#allocation11 + $0x7e8] sm:$0xff]
    %v9159 = vld [vmem:[#allocation11 + $0x7f0] sm:$0xff]
    %v9160 = vld [vmem:[#allocation11 + $0x7f8] sm:$0xff]
    %v9161 = vld [vmem:[#allocation11 + $0x800] sm:$0xff]
    %v9162 = vld [vmem:[#allocation11 + $0x808] sm:$0xff]
    %v9163 = vld [vmem:[#allocation11 + $0x810] sm:$0xff]
    %v9164 = vld [vmem:[#allocation11 + $0x818] sm:$0xff]
    %v9165 = vld [vmem:[#allocation11 + $0x820] sm:$0xff]
    %v9166 = vld [vmem:[#allocation11 + $0x828] sm:$0xff]
    %v9167 = vld [vmem:[#allocation11 + $0x830] sm:$0xff]
    %v9168 = vld [vmem:[#allocation11 + $0x838] sm:$0xff]
    %v9169 = vld [vmem:[#allocation11 + $0x840] sm:$0xff]
    %v9170 = vld [vmem:[#allocation11 + $0x848] sm:$0xff]
    %v9171 = vld [vmem:[#allocation11 + $0x850] sm:$0xff]
    %v9172 = vld [vmem:[#allocation11 + $0x858] sm:$0xff]
    %v9173 = vld [vmem:[#allocation11 + $0x860] sm:$0xff]
    %v9174 = vld [vmem:[#allocation11 + $0x868] sm:$0xff]
    %v9175 = vld [vmem:[#allocation11 + $0x870] sm:$0xff]
    %v9176 = vld [vmem:[#allocation11 + $0x878] sm:$0xff]
    %v9177 = vld [vmem:[#allocation11 + $0x880] sm:$0xff]
    %v9178 = vld [vmem:[#allocation11 + $0x888] sm:$0xff]
    %v9179 = vld [vmem:[#allocation11 + $0x890] sm:$0xff]
    %v9180 = vld [vmem:[#allocation11 + $0x898] sm:$0xff]
    %v9181 = vld [vmem:[#allocation11 + $0x8a0] sm:$0xff]
    %v9182 = vld [vmem:[#allocation11 + $0x8a8] sm:$0xff]
    %v9183 = vld [vmem:[#allocation11 + $0x8b0] sm:$0xff]
    %v9184 = vld [vmem:[#allocation11 + $0x8b8] sm:$0xff]
    %v9185 = vld [vmem:[#allocation11 + $0x8c0] sm:$0xff]
    %v9186 = vld [vmem:[#allocation11 + $0x8c8] sm:$0xff]
    %v9187 = vld [vmem:[#allocation11 + $0x8d0] sm:$0xff]
    %v9188 = vld [vmem:[#allocation11 + $0x8d8] sm:$0xff]
    %v9189 = vld [vmem:[#allocation11 + $0x8e0] sm:$0xff]
    %v9190 = vld [vmem:[#allocation11 + $0x8e8] sm:$0xff]
    %v9191 = vld [vmem:[#allocation11 + $0x8f0] sm:$0xff]
    %v9192 = vld [vmem:[#allocation11 + $0x8f8] sm:$0xff]
    %v9193 = vld [vmem:[#allocation11 + $0x900] sm:$0xff]
    %v9194 = vld [vmem:[#allocation11 + $0x908] sm:$0xff]
    %v9195 = vld [vmem:[#allocation11 + $0x910] sm:$0xff]
    %v9196 = vld [vmem:[#allocation11 + $0x918] sm:$0xff]
    %v9197 = vld [vmem:[#allocation11 + $0x920] sm:$0xff]
    %v9198 = vld [vmem:[#allocation11 + $0x928] sm:$0xff]
    %v9199 = vld [vmem:[#allocation11 + $0x930] sm:$0xff]
    %v9200 = vld [vmem:[#allocation11 + $0x938] sm:$0xff]
    %v9201 = vld [vmem:[#allocation11 + $0x940] sm:$0xff]
    %v9202 = vld [vmem:[#allocation11 + $0x948] sm:$0xff]
    %v9203 = vld [vmem:[#allocation11 + $0x950] sm:$0xff]
    %v9204 = vld [vmem:[#allocation11 + $0x958] sm:$0xff]
    %v9205 = vld [vmem:[#allocation11 + $0x960] sm:$0xff]
    %v9206 = vld [vmem:[#allocation11 + $0x968] sm:$0xff]
    %v9207 = vld [vmem:[#allocation11 + $0x970] sm:$0xff]
    %v9208 = vld [vmem:[#allocation11 + $0x978] sm:$0xff]
    %v9209 = vld [vmem:[#allocation11 + $0x980] sm:$0xff]
    %v9210 = vld [vmem:[#allocation11 + $0x988] sm:$0xff]
    %v9211 = vld [vmem:[#allocation11 + $0x990] sm:$0xff]
    %v9212 = vld [vmem:[#allocation11 + $0x998] sm:$0xff]
    %v9213 = vld [vmem:[#allocation11 + $0x9a0] sm:$0xff]
    %v9214 = vld [vmem:[#allocation11 + $0x9a8] sm:$0xff]
    %v9215 = vld [vmem:[#allocation11 + $0x9b0] sm:$0xff]
    %v9216 = vld [vmem:[#allocation11 + $0x9b8] sm:$0xff]
    %v9217 = vld [vmem:[#allocation11 + $0x9c0] sm:$0xff]
    %v9218 = vld [vmem:[#allocation11 + $0x9c8] sm:$0xff]
    %v9219 = vld [vmem:[#allocation11 + $0x9d0] sm:$0xff]
    %v9220 = vld [vmem:[#allocation11 + $0x9d8] sm:$0xff]
    %v9221 = vld [vmem:[#allocation11 + $0x9e0] sm:$0xff]
    %v9222 = vld [vmem:[#allocation11 + $0x9e8] sm:$0xff]
    %v9223 = vld [vmem:[#allocation11 + $0x9f0] sm:$0xff]
    %v9224 = vld [vmem:[#allocation11 + $0x9f8] sm:$0xff]
    %v9225 = vld [vmem:[#allocation11 + $0xa00] sm:$0xff]
    %v9226 = vld [vmem:[#allocation11 + $0xa08] sm:$0xff]
    %v9227 = vld [vmem:[#allocation11 + $0xa10] sm:$0xff]
    %v9228 = vld [vmem:[#allocation11 + $0xa18] sm:$0xff]
    %v9229 = vld [vmem:[#allocation11 + $0xa20] sm:$0xff]
    %v9230 = vld [vmem:[#allocation11 + $0xa28] sm:$0xff]
    %v9231 = vld [vmem:[#allocation11 + $0xa30] sm:$0xff]
    %v9232 = vld [vmem:[#allocation11 + $0xa38] sm:$0xff]
    %v9233 = vld [vmem:[#allocation11 + $0xa40] sm:$0xff]
    %v9234 = vld [vmem:[#allocation11 + $0xa48] sm:$0xff]
    %v9235 = vld [vmem:[#allocation11 + $0xa50] sm:$0xff]
    %v9236 = vld [vmem:[#allocation11 + $0xa58] sm:$0xff]
    %v9237 = vld [vmem:[#allocation11 + $0xa60] sm:$0xff]
    %v9238 = vld [vmem:[#allocation11 + $0xa68] sm:$0xff]
    %v9239 = vld [vmem:[#allocation11 + $0xa70] sm:$0xff]
    %v9240 = vld [vmem:[#allocation11 + $0xa78] sm:$0xff]
    %v9241 = vld [vmem:[#allocation11 + $0xa80] sm:$0xff]
    %v9242 = vld [vmem:[#allocation11 + $0xa88] sm:$0xff]
    %v9243 = vld [vmem:[#allocation11 + $0xa90] sm:$0xff]
    %v9244 = vld [vmem:[#allocation11 + $0xa98] sm:$0xff]
    %v9245 = vld [vmem:[#allocation11 + $0xaa0] sm:$0xff]
    %v9246 = vld [vmem:[#allocation11 + $0xaa8] sm:$0xff]
    %v9247 = vld [vmem:[#allocation11 + $0xab0] sm:$0xff]
    %v9248 = vld [vmem:[#allocation11 + $0xab8] sm:$0xff]
    %v9249 = vld [vmem:[#allocation11 + $0xac0] sm:$0xff]
    %v9250 = vld [vmem:[#allocation11 + $0xac8] sm:$0xff]
    %v9251 = vld [vmem:[#allocation11 + $0xad0] sm:$0xff]
    %v9252 = vld [vmem:[#allocation11 + $0xad8] sm:$0xff]
    %v9253 = vld [vmem:[#allocation11 + $0xae0] sm:$0xff]
    %v9254 = vld [vmem:[#allocation11 + $0xae8] sm:$0xff]
    %v9255 = vld [vmem:[#allocation11 + $0xaf0] sm:$0xff]
    %v9256 = vld [vmem:[#allocation11 + $0xaf8] sm:$0xff]
    %v9257 = vld [vmem:[#allocation11 + $0xb00] sm:$0xff]
    %v9258 = vld [vmem:[#allocation11 + $0xb08] sm:$0xff]
    %v9259 = vld [vmem:[#allocation11 + $0xb10] sm:$0xff]
    %v9260 = vld [vmem:[#allocation11 + $0xb18] sm:$0xff]
    %v9261 = vld [vmem:[#allocation11 + $0xb20] sm:$0xff]
    %v9262 = vld [vmem:[#allocation11 + $0xb28] sm:$0xff]
    %v9263 = vld [vmem:[#allocation11 + $0xb30] sm:$0xff]
    %v9264 = vld [vmem:[#allocation11 + $0xb38] sm:$0xff]
    %v9265 = vld [vmem:[#allocation11 + $0xb40] sm:$0xff]
    %v9266 = vld [vmem:[#allocation11 + $0xb48] sm:$0xff]
    %v9267 = vld [vmem:[#allocation11 + $0xb50] sm:$0xff]
    %v9268 = vld [vmem:[#allocation11 + $0xb58] sm:$0xff]
    %v9269 = vld [vmem:[#allocation11 + $0xb60] sm:$0xff]
    %v9270 = vld [vmem:[#allocation11 + $0xb68] sm:$0xff]
    %v9271 = vld [vmem:[#allocation11 + $0xb70] sm:$0xff]
    %v9272 = vld [vmem:[#allocation11 + $0xb78] sm:$0xff]
    %v9273 = vld [vmem:[#allocation11 + $0xb80] sm:$0xff]
    %v9274 = vld [vmem:[#allocation11 + $0xb88] sm:$0xff]
    %v9275 = vld [vmem:[#allocation11 + $0xb90] sm:$0xff]
    %v9276 = vld [vmem:[#allocation11 + $0xb98] sm:$0xff]
    %v9277 = vld [vmem:[#allocation11 + $0xba0] sm:$0xff]
    %v9278 = vld [vmem:[#allocation11 + $0xba8] sm:$0xff]
    %v9279 = vld [vmem:[#allocation11 + $0xbb0] sm:$0xff]
    %v9280 = vld [vmem:[#allocation11 + $0xbb8] sm:$0xff]
    %v9281 = vld [vmem:[#allocation11 + $0xbc0] sm:$0xff]
    %v9282 = vld [vmem:[#allocation11 + $0xbc8] sm:$0xff]
    %v9283 = vld [vmem:[#allocation11 + $0xbd0] sm:$0xff]
    %v9284 = vld [vmem:[#allocation11 + $0xbd8] sm:$0xff]
    %v9285 = vld [vmem:[#allocation11 + $0xbe0] sm:$0xff]
    %v9286 = vld [vmem:[#allocation11 + $0xbe8] sm:$0xff]
    %v9287 = vld [vmem:[#allocation11 + $0xbf0] sm:$0xff]
    %v9288 = vld [vmem:[#allocation11 + $0xbf8] sm:$0xff]
    %v9289 = vld [vmem:[#allocation11 + $0xc00] sm:$0xff]
    %v9290 = vld [vmem:[#allocation11 + $0xc08] sm:$0xff]
    %v9291 = vld [vmem:[#allocation11 + $0xc10] sm:$0xff]
    %v9292 = vld [vmem:[#allocation11 + $0xc18] sm:$0xff]
    %v9293 = vld [vmem:[#allocation11 + $0xc20] sm:$0xff]
    %v9294 = vld [vmem:[#allocation11 + $0xc28] sm:$0xff]
    %v9295 = vld [vmem:[#allocation11 + $0xc30] sm:$0xff]
    %v9296 = vld [vmem:[#allocation11 + $0xc38] sm:$0xff]
    %v9297 = vld [vmem:[#allocation11 + $0xc40] sm:$0xff]
    %v9298 = vld [vmem:[#allocation11 + $0xc48] sm:$0xff]
    %v9299 = vld [vmem:[#allocation11 + $0xc50] sm:$0xff]
    %v9300 = vld [vmem:[#allocation11 + $0xc58] sm:$0xff]
    %v9301 = vld [vmem:[#allocation11 + $0xc60] sm:$0xff]
    %v9302 = vld [vmem:[#allocation11 + $0xc68] sm:$0xff]
    %v9303 = vld [vmem:[#allocation11 + $0xc70] sm:$0xff]
    %v9304 = vld [vmem:[#allocation11 + $0xc78] sm:$0xff]
    %v9305 = vld [vmem:[#allocation11 + $0xc80] sm:$0xff]
    %v9306 = vld [vmem:[#allocation11 + $0xc88] sm:$0xff]
    %v9307 = vld [vmem:[#allocation11 + $0xc90] sm:$0xff]
    %v9308 = vld [vmem:[#allocation11 + $0xc98] sm:$0xff]
    %v9309 = vld [vmem:[#allocation11 + $0xca0] sm:$0xff]
    %v9310 = vld [vmem:[#allocation11 + $0xca8] sm:$0xff]
    %v9311 = vld [vmem:[#allocation11 + $0xcb0] sm:$0xff]
    %v9312 = vld [vmem:[#allocation11 + $0xcb8] sm:$0xff]
    %v9313 = vld [vmem:[#allocation11 + $0xcc0] sm:$0xff]
    %v9314 = vld [vmem:[#allocation11 + $0xcc8] sm:$0xff]
    %v9315 = vld [vmem:[#allocation11 + $0xcd0] sm:$0xff]
    %v9316 = vld [vmem:[#allocation11 + $0xcd8] sm:$0xff]
    %v9317 = vld [vmem:[#allocation11 + $0xce0] sm:$0xff]
    %v9318 = vld [vmem:[#allocation11 + $0xce8] sm:$0xff]
    %v9319 = vld [vmem:[#allocation11 + $0xcf0] sm:$0xff]
    %v9320 = vld [vmem:[#allocation11 + $0xcf8] sm:$0xff]
    %v9321 = vld [vmem:[#allocation11 + $0xd00] sm:$0xff]
    %v9322 = vld [vmem:[#allocation11 + $0xd08] sm:$0xff]
    %v9323 = vld [vmem:[#allocation11 + $0xd10] sm:$0xff]
    %v9324 = vld [vmem:[#allocation11 + $0xd18] sm:$0xff]
    %v9325 = vld [vmem:[#allocation11 + $0xd20] sm:$0xff]
    %v9326 = vld [vmem:[#allocation11 + $0xd28] sm:$0xff]
    %v9327 = vld [vmem:[#allocation11 + $0xd30] sm:$0xff]
    %v9328 = vld [vmem:[#allocation11 + $0xd38] sm:$0xff]
    %v9329 = vld [vmem:[#allocation11 + $0xd40] sm:$0xff]
    %v9330 = vld [vmem:[#allocation11 + $0xd48] sm:$0xff]
    %v9331 = vld [vmem:[#allocation11 + $0xd50] sm:$0xff]
    %v9332 = vld [vmem:[#allocation11 + $0xd58] sm:$0xff]
    %v9333 = vld [vmem:[#allocation11 + $0xd60] sm:$0xff]
    %v9334 = vld [vmem:[#allocation11 + $0xd68] sm:$0xff]
    %v9335 = vld [vmem:[#allocation11 + $0xd70] sm:$0xff]
    %v9336 = vld [vmem:[#allocation11 + $0xd78] sm:$0xff]
    %v9337 = vld [vmem:[#allocation11 + $0xd80] sm:$0xff]
    %v9338 = vld [vmem:[#allocation11 + $0xd88] sm:$0xff]
    %v9339 = vld [vmem:[#allocation11 + $0xd90] sm:$0xff]
    %v9340 = vld [vmem:[#allocation11 + $0xd98] sm:$0xff]
    %v9341 = vld [vmem:[#allocation11 + $0xda0] sm:$0xff]
    %v9342 = vld [vmem:[#allocation11 + $0xda8] sm:$0xff]
    %v9343 = vld [vmem:[#allocation11 + $0xdb0] sm:$0xff]
    %v9344 = vld [vmem:[#allocation11 + $0xdb8] sm:$0xff]
    %v9345 = vld [vmem:[#allocation11 + $0xdc0] sm:$0xff]
    %v9346 = vld [vmem:[#allocation11 + $0xdc8] sm:$0xff]
    %v9347 = vld [vmem:[#allocation11 + $0xdd0] sm:$0xff]
    %v9348 = vld [vmem:[#allocation11 + $0xdd8] sm:$0xff]
    %v9349 = vld [vmem:[#allocation11 + $0xde0] sm:$0xff]
    %v9350 = vld [vmem:[#allocation11 + $0xde8] sm:$0xff]
    %v9351 = vld [vmem:[#allocation11 + $0xdf0] sm:$0xff]
    %v9352 = vld [vmem:[#allocation11 + $0xdf8] sm:$0xff]
    %v9353 = vld [vmem:[#allocation11 + $0xe00] sm:$0xff]
    %v9354 = vld [vmem:[#allocation11 + $0xe08] sm:$0xff]
    %v9355 = vld [vmem:[#allocation11 + $0xe10] sm:$0xff]
    %v9356 = vld [vmem:[#allocation11 + $0xe18] sm:$0xff]
    %v9357 = vld [vmem:[#allocation11 + $0xe20] sm:$0xff]
    %v9358 = vld [vmem:[#allocation11 + $0xe28] sm:$0xff]
    %v9359 = vld [vmem:[#allocation11 + $0xe30] sm:$0xff]
    %v9360 = vld [vmem:[#allocation11 + $0xe38] sm:$0xff]
    %v9361 = vld [vmem:[#allocation11 + $0xe40] sm:$0xff]
    %v9362 = vld [vmem:[#allocation11 + $0xe48] sm:$0xff]
    %v9363 = vld [vmem:[#allocation11 + $0xe50] sm:$0xff]
    %v9364 = vld [vmem:[#allocation11 + $0xe58] sm:$0xff]
    %v9365 = vld [vmem:[#allocation11 + $0xe60] sm:$0xff]
    %v9366 = vld [vmem:[#allocation11 + $0xe68] sm:$0xff]
    %v9367 = vld [vmem:[#allocation11 + $0xe70] sm:$0xff]
    %v9368 = vld [vmem:[#allocation11 + $0xe78] sm:$0xff]
    %v9369 = vld [vmem:[#allocation11 + $0xe80] sm:$0xff]
    %v9370 = vld [vmem:[#allocation11 + $0xe88] sm:$0xff]
    %v9371 = vld [vmem:[#allocation11 + $0xe90] sm:$0xff]
    %v9372 = vld [vmem:[#allocation11 + $0xe98] sm:$0xff]
    %v9373 = vld [vmem:[#allocation11 + $0xea0] sm:$0xff]
    %v9374 = vld [vmem:[#allocation11 + $0xea8] sm:$0xff]
    %v9375 = vld [vmem:[#allocation11 + $0xeb0] sm:$0xff]
    %v9376 = vld [vmem:[#allocation11 + $0xeb8] sm:$0xff]
    %v9377 = vld [vmem:[#allocation11 + $0xec0] sm:$0xff]
    %v9378 = vld [vmem:[#allocation11 + $0xec8] sm:$0xff]
    %v9379 = vld [vmem:[#allocation11 + $0xed0] sm:$0xff]
    %v9380 = vld [vmem:[#allocation11 + $0xed8] sm:$0xff]
    %v9381 = vld [vmem:[#allocation11 + $0xee0] sm:$0xff]
    %v9382 = vld [vmem:[#allocation11 + $0xee8] sm:$0xff]
    %v9383 = vld [vmem:[#allocation11 + $0xef0] sm:$0xff]
    %v9384 = vld [vmem:[#allocation11 + $0xef8] sm:$0xff]
    %v9385 = vld [vmem:[#allocation11 + $0xf00] sm:$0xff]
    %v9386 = vld [vmem:[#allocation11 + $0xf08] sm:$0xff]
    %v9387 = vld [vmem:[#allocation11 + $0xf10] sm:$0xff]
    %v9388 = vld [vmem:[#allocation11 + $0xf18] sm:$0xff]
    %v9389 = vld [vmem:[#allocation11 + $0xf20] sm:$0xff]
    %v9390 = vld [vmem:[#allocation11 + $0xf28] sm:$0xff]
    %v9391 = vld [vmem:[#allocation11 + $0xf30] sm:$0xff]
    %v9392 = vld [vmem:[#allocation11 + $0xf38] sm:$0xff]
    %v9393 = vld [vmem:[#allocation11 + $0xf40] sm:$0xff]
    %v9394 = vld [vmem:[#allocation11 + $0xf48] sm:$0xff]
    %v9395 = vld [vmem:[#allocation11 + $0xf50] sm:$0xff]
    %v9396 = vld [vmem:[#allocation11 + $0xf58] sm:$0xff]
    %v9397 = vld [vmem:[#allocation11 + $0xf60] sm:$0xff]
    %v9398 = vld [vmem:[#allocation11 + $0xf68] sm:$0xff]
    %v9399 = vld [vmem:[#allocation11 + $0xf70] sm:$0xff]
    %v9400 = vld [vmem:[#allocation11 + $0xf78] sm:$0xff]
    %v9401 = vld [vmem:[#allocation11 + $0xf80] sm:$0xff]
    %v9402 = vld [vmem:[#allocation11 + $0xf88] sm:$0xff]
    %v9403 = vld [vmem:[#allocation11 + $0xf90] sm:$0xff]
    %v9404 = vld [vmem:[#allocation11 + $0xf98] sm:$0xff]
    %v9405 = vld [vmem:[#allocation11 + $0xfa0] sm:$0xff]
    %v9406 = vld [vmem:[#allocation11 + $0xfa8] sm:$0xff]
    %v9407 = vld [vmem:[#allocation11 + $0xfb0] sm:$0xff]
    %v9408 = vld [vmem:[#allocation11 + $0xfb8] sm:$0xff]
    %v9409 = vld [vmem:[#allocation11 + $0xfc0] sm:$0xff]
    %v9410 = vld [vmem:[#allocation11 + $0xfc8] sm:$0xff]
    %v9411 = vld [vmem:[#allocation11 + $0xfd0] sm:$0xff]
    %v9412 = vld [vmem:[#allocation11 + $0xfd8] sm:$0xff]
    %v9413 = vld [vmem:[#allocation11 + $0xfe0] sm:$0xff]
    %v9414 = vld [vmem:[#allocation11 + $0xfe8] sm:$0xff]
    %v9415 = vld [vmem:[#allocation11 + $0xff0] sm:$0xff]
    %v9416 = vld [vmem:[#allocation11 + $0xff8] sm:$0xff]
    %v9417 = vld [vmem:[#allocation13] sm:$0xff]
    %v9419 = vlaneseq
    %v9420 = vshrl.u32 %v9419, 7
    %v9421 = vsub.s32 0, %v9420
    %v9422 = vrot.slane %v9417, %v9421
    %v9423 = vlaneseq
    %v9424 = vshrl.u32 %v9423, 7
    %v9425 = vsub.s32 1, %v9424
    %v9426 = vrot.slane %v9417, %v9425
    %v9427 = vlaneseq
    %v9428 = vshrl.u32 %v9427, 7
    %v9429 = vsub.s32 2, %v9428
    %v9430 = vrot.slane %v9417, %v9429
    %v9431 = vlaneseq
    %v9432 = vshrl.u32 %v9431, 7
    %v9433 = vsub.s32 3, %v9432
    %v9434 = vrot.slane %v9417, %v9433
    %v9435 = vlaneseq
    %v9436 = vshrl.u32 %v9435, 7
    %v9437 = vsub.s32 4, %v9436
    %v9438 = vrot.slane %v9417, %v9437
    %v9439 = vlaneseq
    %v9440 = vshrl.u32 %v9439, 7
    %v9441 = vsub.s32 5, %v9440
    %v9442 = vrot.slane %v9417, %v9441
    %v9443 = vlaneseq
    %v9444 = vshrl.u32 %v9443, 7
    %v9445 = vsub.s32 6, %v9444
    %v9446 = vrot.slane %v9417, %v9445
    %v9447 = vlaneseq
    %v9448 = vshrl.u32 %v9447, 7
    %v9449 = vsub.s32 7, %v9448
    %v9450 = vrot.slane %v9417, %v9449
    %v9971 = vunpack.c.l.b16 %v8905
    %v9972 = vunpack.c.h.b16 %v8905
    %v9973 = vunpack.c.l.b16 %v8906
    %v9974 = vunpack.c.h.b16 %v8906
    %v9975 = vunpack.c.l.b16 %v8907
    %v9976 = vunpack.c.h.b16 %v8907
    %v9977 = vunpack.c.l.b16 %v8908
    %v9978 = vunpack.c.h.b16 %v8908
    %v9979 = vunpack.c.l.b16 %v8909
    %v9980 = vunpack.c.h.b16 %v8909
    %v9981 = vunpack.c.l.b16 %v8910
    %v9982 = vunpack.c.h.b16 %v8910
    %v9983 = vunpack.c.l.b16 %v8911
    %v9984 = vunpack.c.h.b16 %v8911
    %v9985 = vunpack.c.l.b16 %v8912
    %v9986 = vunpack.c.h.b16 %v8912
    %v9987 = vunpack.c.l.b16 %v8913
    %v9988 = vunpack.c.h.b16 %v8913
    %v9989 = vunpack.c.l.b16 %v8914
    %v9990 = vunpack.c.h.b16 %v8914
    %v9991 = vunpack.c.l.b16 %v8915
    %v9992 = vunpack.c.h.b16 %v8915
    %v9993 = vunpack.c.l.b16 %v8916
    %v9994 = vunpack.c.h.b16 %v8916
    %v9995 = vunpack.c.l.b16 %v8917
    %v9996 = vunpack.c.h.b16 %v8917
    %v9997 = vunpack.c.l.b16 %v8918
    %v9998 = vunpack.c.h.b16 %v8918
    %v9999 = vunpack.c.l.b16 %v8919
    %v10000 = vunpack.c.h.b16 %v8919
    %v10001 = vunpack.c.l.b16 %v8920
    %v10002 = vunpack.c.h.b16 %v8920
    %v10003 = vunpack.c.l.b16 %v8921
    %v10004 = vunpack.c.h.b16 %v8921
    %v10005 = vunpack.c.l.b16 %v8922
    %v10006 = vunpack.c.h.b16 %v8922
    %v10007 = vunpack.c.l.b16 %v8923
    %v10008 = vunpack.c.h.b16 %v8923
    %v10009 = vunpack.c.l.b16 %v8924
    %v10010 = vunpack.c.h.b16 %v8924
    %v10011 = vunpack.c.l.b16 %v8925
    %v10012 = vunpack.c.h.b16 %v8925
    %v10013 = vunpack.c.l.b16 %v8926
    %v10014 = vunpack.c.h.b16 %v8926
    %v10015 = vunpack.c.l.b16 %v8927
    %v10016 = vunpack.c.h.b16 %v8927
    %v10017 = vunpack.c.l.b16 %v8928
    %v10018 = vunpack.c.h.b16 %v8928
    %v10019 = vunpack.c.l.b16 %v8929
    %v10020 = vunpack.c.h.b16 %v8929
    %v10021 = vunpack.c.l.b16 %v8930
    %v10022 = vunpack.c.h.b16 %v8930
    %v10023 = vunpack.c.l.b16 %v8931
    %v10024 = vunpack.c.h.b16 %v8931
    %v10025 = vunpack.c.l.b16 %v8932
    %v10026 = vunpack.c.h.b16 %v8932
    %v10027 = vunpack.c.l.b16 %v8933
    %v10028 = vunpack.c.h.b16 %v8933
    %v10029 = vunpack.c.l.b16 %v8934
    %v10030 = vunpack.c.h.b16 %v8934
    %v10031 = vunpack.c.l.b16 %v8935
    %v10032 = vunpack.c.h.b16 %v8935
    %v10033 = vunpack.c.l.b16 %v8936
    %v10034 = vunpack.c.h.b16 %v8936
    %v10035 = vunpack.c.l.b16 %v8937
    %v10036 = vunpack.c.h.b16 %v8937
    %v10037 = vunpack.c.l.b16 %v8938
    %v10038 = vunpack.c.h.b16 %v8938
    %v10039 = vunpack.c.l.b16 %v8939
    %v10040 = vunpack.c.h.b16 %v8939
    %v10041 = vunpack.c.l.b16 %v8940
    %v10042 = vunpack.c.h.b16 %v8940
    %v10043 = vunpack.c.l.b16 %v8941
    %v10044 = vunpack.c.h.b16 %v8941
    %v10045 = vunpack.c.l.b16 %v8942
    %v10046 = vunpack.c.h.b16 %v8942
    %v10047 = vunpack.c.l.b16 %v8943
    %v10048 = vunpack.c.h.b16 %v8943
    %v10049 = vunpack.c.l.b16 %v8944
    %v10050 = vunpack.c.h.b16 %v8944
    %v10051 = vunpack.c.l.b16 %v8945
    %v10052 = vunpack.c.h.b16 %v8945
    %v10053 = vunpack.c.l.b16 %v8946
    %v10054 = vunpack.c.h.b16 %v8946
    %v10055 = vunpack.c.l.b16 %v8947
    %v10056 = vunpack.c.h.b16 %v8947
    %v10057 = vunpack.c.l.b16 %v8948
    %v10058 = vunpack.c.h.b16 %v8948
    %v10059 = vunpack.c.l.b16 %v8949
    %v10060 = vunpack.c.h.b16 %v8949
    %v10061 = vunpack.c.l.b16 %v8950
    %v10062 = vunpack.c.h.b16 %v8950
    %v10063 = vunpack.c.l.b16 %v8951
    %v10064 = vunpack.c.h.b16 %v8951
    %v10065 = vunpack.c.l.b16 %v8952
    %v10066 = vunpack.c.h.b16 %v8952
    %v10067 = vunpack.c.l.b16 %v8953
    %v10068 = vunpack.c.h.b16 %v8953
    %v10069 = vunpack.c.l.b16 %v8954
    %v10070 = vunpack.c.h.b16 %v8954
    %v10071 = vunpack.c.l.b16 %v8955
    %v10072 = vunpack.c.h.b16 %v8955
    %v10073 = vunpack.c.l.b16 %v8956
    %v10074 = vunpack.c.h.b16 %v8956
    %v10075 = vunpack.c.l.b16 %v8957
    %v10076 = vunpack.c.h.b16 %v8957
    %v10077 = vunpack.c.l.b16 %v8958
    %v10078 = vunpack.c.h.b16 %v8958
    %v10079 = vunpack.c.l.b16 %v8959
    %v10080 = vunpack.c.h.b16 %v8959
    %v10081 = vunpack.c.l.b16 %v8960
    %v10082 = vunpack.c.h.b16 %v8960
    %v10083 = vunpack.c.l.b16 %v8961
    %v10084 = vunpack.c.h.b16 %v8961
    %v10085 = vunpack.c.l.b16 %v8962
    %v10086 = vunpack.c.h.b16 %v8962
    %v10087 = vunpack.c.l.b16 %v8963
    %v10088 = vunpack.c.h.b16 %v8963
    %v10089 = vunpack.c.l.b16 %v8964
    %v10090 = vunpack.c.h.b16 %v8964
    %v10091 = vunpack.c.l.b16 %v8965
    %v10092 = vunpack.c.h.b16 %v8965
    %v10093 = vunpack.c.l.b16 %v8966
    %v10094 = vunpack.c.h.b16 %v8966
    %v10095 = vunpack.c.l.b16 %v8967
    %v10096 = vunpack.c.h.b16 %v8967
    %v10097 = vunpack.c.l.b16 %v8968
    %v10098 = vunpack.c.h.b16 %v8968
    %v10099 = vunpack.c.l.b16 %v8969
    %v10100 = vunpack.c.h.b16 %v8969
    %v10101 = vunpack.c.l.b16 %v8970
    %v10102 = vunpack.c.h.b16 %v8970
    %v10103 = vunpack.c.l.b16 %v8971
    %v10104 = vunpack.c.h.b16 %v8971
    %v10105 = vunpack.c.l.b16 %v8972
    %v10106 = vunpack.c.h.b16 %v8972
    %v10107 = vunpack.c.l.b16 %v8973
    %v10108 = vunpack.c.h.b16 %v8973
    %v10109 = vunpack.c.l.b16 %v8974
    %v10110 = vunpack.c.h.b16 %v8974
    %v10111 = vunpack.c.l.b16 %v8975
    %v10112 = vunpack.c.h.b16 %v8975
    %v10113 = vunpack.c.l.b16 %v8976
    %v10114 = vunpack.c.h.b16 %v8976
    %v10115 = vunpack.c.l.b16 %v8977
    %v10116 = vunpack.c.h.b16 %v8977
    %v10117 = vunpack.c.l.b16 %v8978
    %v10118 = vunpack.c.h.b16 %v8978
    %v10119 = vunpack.c.l.b16 %v8979
    %v10120 = vunpack.c.h.b16 %v8979
    %v10121 = vunpack.c.l.b16 %v8980
    %v10122 = vunpack.c.h.b16 %v8980
    %v10123 = vunpack.c.l.b16 %v8981
    %v10124 = vunpack.c.h.b16 %v8981
    %v10125 = vunpack.c.l.b16 %v8982
    %v10126 = vunpack.c.h.b16 %v8982
    %v10127 = vunpack.c.l.b16 %v8983
    %v10128 = vunpack.c.h.b16 %v8983
    %v10129 = vunpack.c.l.b16 %v8984
    %v10130 = vunpack.c.h.b16 %v8984
    %v10131 = vunpack.c.l.b16 %v8985
    %v10132 = vunpack.c.h.b16 %v8985
    %v10133 = vunpack.c.l.b16 %v8986
    %v10134 = vunpack.c.h.b16 %v8986
    %v10135 = vunpack.c.l.b16 %v8987
    %v10136 = vunpack.c.h.b16 %v8987
    %v10137 = vunpack.c.l.b16 %v8988
    %v10138 = vunpack.c.h.b16 %v8988
    %v10139 = vunpack.c.l.b16 %v8989
    %v10140 = vunpack.c.h.b16 %v8989
    %v10141 = vunpack.c.l.b16 %v8990
    %v10142 = vunpack.c.h.b16 %v8990
    %v10143 = vunpack.c.l.b16 %v8991
    %v10144 = vunpack.c.h.b16 %v8991
    %v10145 = vunpack.c.l.b16 %v8992
    %v10146 = vunpack.c.h.b16 %v8992
    %v10147 = vunpack.c.l.b16 %v8993
    %v10148 = vunpack.c.h.b16 %v8993
    %v10149 = vunpack.c.l.b16 %v8994
    %v10150 = vunpack.c.h.b16 %v8994
    %v10151 = vunpack.c.l.b16 %v8995
    %v10152 = vunpack.c.h.b16 %v8995
    %v10153 = vunpack.c.l.b16 %v8996
    %v10154 = vunpack.c.h.b16 %v8996
    %v10155 = vunpack.c.l.b16 %v8997
    %v10156 = vunpack.c.h.b16 %v8997
    %v10157 = vunpack.c.l.b16 %v8998
    %v10158 = vunpack.c.h.b16 %v8998
    %v10159 = vunpack.c.l.b16 %v8999
    %v10160 = vunpack.c.h.b16 %v8999
    %v10161 = vunpack.c.l.b16 %v9000
    %v10162 = vunpack.c.h.b16 %v9000
    %v10163 = vunpack.c.l.b16 %v9001
    %v10164 = vunpack.c.h.b16 %v9001
    %v10165 = vunpack.c.l.b16 %v9002
    %v10166 = vunpack.c.h.b16 %v9002
    %v10167 = vunpack.c.l.b16 %v9003
    %v10168 = vunpack.c.h.b16 %v9003
    %v10169 = vunpack.c.l.b16 %v9004
    %v10170 = vunpack.c.h.b16 %v9004
    %v10171 = vunpack.c.l.b16 %v9005
    %v10172 = vunpack.c.h.b16 %v9005
    %v10173 = vunpack.c.l.b16 %v9006
    %v10174 = vunpack.c.h.b16 %v9006
    %v10175 = vunpack.c.l.b16 %v9007
    %v10176 = vunpack.c.h.b16 %v9007
    %v10177 = vunpack.c.l.b16 %v9008
    %v10178 = vunpack.c.h.b16 %v9008
    %v10179 = vunpack.c.l.b16 %v9009
    %v10180 = vunpack.c.h.b16 %v9009
    %v10181 = vunpack.c.l.b16 %v9010
    %v10182 = vunpack.c.h.b16 %v9010
    %v10183 = vunpack.c.l.b16 %v9011
    %v10184 = vunpack.c.h.b16 %v9011
    %v10185 = vunpack.c.l.b16 %v9012
    %v10186 = vunpack.c.h.b16 %v9012
    %v10187 = vunpack.c.l.b16 %v9013
    %v10188 = vunpack.c.h.b16 %v9013
    %v10189 = vunpack.c.l.b16 %v9014
    %v10190 = vunpack.c.h.b16 %v9014
    %v10191 = vunpack.c.l.b16 %v9015
    %v10192 = vunpack.c.h.b16 %v9015
    %v10193 = vunpack.c.l.b16 %v9016
    %v10194 = vunpack.c.h.b16 %v9016
    %v10195 = vunpack.c.l.b16 %v9017
    %v10196 = vunpack.c.h.b16 %v9017
    %v10197 = vunpack.c.l.b16 %v9018
    %v10198 = vunpack.c.h.b16 %v9018
    %v10199 = vunpack.c.l.b16 %v9019
    %v10200 = vunpack.c.h.b16 %v9019
    %v10201 = vunpack.c.l.b16 %v9020
    %v10202 = vunpack.c.h.b16 %v9020
    %v10203 = vunpack.c.l.b16 %v9021
    %v10204 = vunpack.c.h.b16 %v9021
    %v10205 = vunpack.c.l.b16 %v9022
    %v10206 = vunpack.c.h.b16 %v9022
    %v10207 = vunpack.c.l.b16 %v9023
    %v10208 = vunpack.c.h.b16 %v9023
    %v10209 = vunpack.c.l.b16 %v9024
    %v10210 = vunpack.c.h.b16 %v9024
    %v10211 = vunpack.c.l.b16 %v9025
    %v10212 = vunpack.c.h.b16 %v9025
    %v10213 = vunpack.c.l.b16 %v9026
    %v10214 = vunpack.c.h.b16 %v9026
    %v10215 = vunpack.c.l.b16 %v9027
    %v10216 = vunpack.c.h.b16 %v9027
    %v10217 = vunpack.c.l.b16 %v9028
    %v10218 = vunpack.c.h.b16 %v9028
    %v10219 = vunpack.c.l.b16 %v9029
    %v10220 = vunpack.c.h.b16 %v9029
    %v10221 = vunpack.c.l.b16 %v9030
    %v10222 = vunpack.c.h.b16 %v9030
    %v10223 = vunpack.c.l.b16 %v9031
    %v10224 = vunpack.c.h.b16 %v9031
    %v10225 = vunpack.c.l.b16 %v9032
    %v10226 = vunpack.c.h.b16 %v9032
    %v10227 = vunpack.c.l.b16 %v9033
    %v10228 = vunpack.c.h.b16 %v9033
    %v10229 = vunpack.c.l.b16 %v9034
    %v10230 = vunpack.c.h.b16 %v9034
    %v10231 = vunpack.c.l.b16 %v9035
    %v10232 = vunpack.c.h.b16 %v9035
    %v10233 = vunpack.c.l.b16 %v9036
    %v10234 = vunpack.c.h.b16 %v9036
    %v10235 = vunpack.c.l.b16 %v9037
    %v10236 = vunpack.c.h.b16 %v9037
    %v10237 = vunpack.c.l.b16 %v9038
    %v10238 = vunpack.c.h.b16 %v9038
    %v10239 = vunpack.c.l.b16 %v9039
    %v10240 = vunpack.c.h.b16 %v9039
    %v10241 = vunpack.c.l.b16 %v9040
    %v10242 = vunpack.c.h.b16 %v9040
    %v10243 = vunpack.c.l.b16 %v9041
    %v10244 = vunpack.c.h.b16 %v9041
    %v10245 = vunpack.c.l.b16 %v9042
    %v10246 = vunpack.c.h.b16 %v9042
    %v10247 = vunpack.c.l.b16 %v9043
    %v10248 = vunpack.c.h.b16 %v9043
    %v10249 = vunpack.c.l.b16 %v9044
    %v10250 = vunpack.c.h.b16 %v9044
    %v10251 = vunpack.c.l.b16 %v9045
    %v10252 = vunpack.c.h.b16 %v9045
    %v10253 = vunpack.c.l.b16 %v9046
    %v10254 = vunpack.c.h.b16 %v9046
    %v10255 = vunpack.c.l.b16 %v9047
    %v10256 = vunpack.c.h.b16 %v9047
    %v10257 = vunpack.c.l.b16 %v9048
    %v10258 = vunpack.c.h.b16 %v9048
    %v10259 = vunpack.c.l.b16 %v9049
    %v10260 = vunpack.c.h.b16 %v9049
    %v10261 = vunpack.c.l.b16 %v9050
    %v10262 = vunpack.c.h.b16 %v9050
    %v10263 = vunpack.c.l.b16 %v9051
    %v10264 = vunpack.c.h.b16 %v9051
    %v10265 = vunpack.c.l.b16 %v9052
    %v10266 = vunpack.c.h.b16 %v9052
    %v10267 = vunpack.c.l.b16 %v9053
    %v10268 = vunpack.c.h.b16 %v9053
    %v10269 = vunpack.c.l.b16 %v9054
    %v10270 = vunpack.c.h.b16 %v9054
    %v10271 = vunpack.c.l.b16 %v9055
    %v10272 = vunpack.c.h.b16 %v9055
    %v10273 = vunpack.c.l.b16 %v9056
    %v10274 = vunpack.c.h.b16 %v9056
    %v10275 = vunpack.c.l.b16 %v9057
    %v10276 = vunpack.c.h.b16 %v9057
    %v10277 = vunpack.c.l.b16 %v9058
    %v10278 = vunpack.c.h.b16 %v9058
    %v10279 = vunpack.c.l.b16 %v9059
    %v10280 = vunpack.c.h.b16 %v9059
    %v10281 = vunpack.c.l.b16 %v9060
    %v10282 = vunpack.c.h.b16 %v9060
    %v10283 = vunpack.c.l.b16 %v9061
    %v10284 = vunpack.c.h.b16 %v9061
    %v10285 = vunpack.c.l.b16 %v9062
    %v10286 = vunpack.c.h.b16 %v9062
    %v10287 = vunpack.c.l.b16 %v9063
    %v10288 = vunpack.c.h.b16 %v9063
    %v10289 = vunpack.c.l.b16 %v9064
    %v10290 = vunpack.c.h.b16 %v9064
    %v10291 = vunpack.c.l.b16 %v9065
    %v10292 = vunpack.c.h.b16 %v9065
    %v10293 = vunpack.c.l.b16 %v9066
    %v10294 = vunpack.c.h.b16 %v9066
    %v10295 = vunpack.c.l.b16 %v9067
    %v10296 = vunpack.c.h.b16 %v9067
    %v10297 = vunpack.c.l.b16 %v9068
    %v10298 = vunpack.c.h.b16 %v9068
    %v10299 = vunpack.c.l.b16 %v9069
    %v10300 = vunpack.c.h.b16 %v9069
    %v10301 = vunpack.c.l.b16 %v9070
    %v10302 = vunpack.c.h.b16 %v9070
    %v10303 = vunpack.c.l.b16 %v9071
    %v10304 = vunpack.c.h.b16 %v9071
    %v10305 = vunpack.c.l.b16 %v9072
    %v10306 = vunpack.c.h.b16 %v9072
    %v10307 = vunpack.c.l.b16 %v9073
    %v10308 = vunpack.c.h.b16 %v9073
    %v10309 = vunpack.c.l.b16 %v9074
    %v10310 = vunpack.c.h.b16 %v9074
    %v10311 = vunpack.c.l.b16 %v9075
    %v10312 = vunpack.c.h.b16 %v9075
    %v10313 = vunpack.c.l.b16 %v9076
    %v10314 = vunpack.c.h.b16 %v9076
    %v10315 = vunpack.c.l.b16 %v9077
    %v10316 = vunpack.c.h.b16 %v9077
    %v10317 = vunpack.c.l.b16 %v9078
    %v10318 = vunpack.c.h.b16 %v9078
    %v10319 = vunpack.c.l.b16 %v9079
    %v10320 = vunpack.c.h.b16 %v9079
    %v10321 = vunpack.c.l.b16 %v9080
    %v10322 = vunpack.c.h.b16 %v9080
    %v10323 = vunpack.c.l.b16 %v9081
    %v10324 = vunpack.c.h.b16 %v9081
    %v10325 = vunpack.c.l.b16 %v9082
    %v10326 = vunpack.c.h.b16 %v9082
    %v10327 = vunpack.c.l.b16 %v9083
    %v10328 = vunpack.c.h.b16 %v9083
    %v10329 = vunpack.c.l.b16 %v9084
    %v10330 = vunpack.c.h.b16 %v9084
    %v10331 = vunpack.c.l.b16 %v9085
    %v10332 = vunpack.c.h.b16 %v9085
    %v10333 = vunpack.c.l.b16 %v9086
    %v10334 = vunpack.c.h.b16 %v9086
    %v10335 = vunpack.c.l.b16 %v9087
    %v10336 = vunpack.c.h.b16 %v9087
    %v10337 = vunpack.c.l.b16 %v9088
    %v10338 = vunpack.c.h.b16 %v9088
    %v10339 = vunpack.c.l.b16 %v9089
    %v10340 = vunpack.c.h.b16 %v9089
    %v10341 = vunpack.c.l.b16 %v9090
    %v10342 = vunpack.c.h.b16 %v9090
    %v10343 = vunpack.c.l.b16 %v9091
    %v10344 = vunpack.c.h.b16 %v9091
    %v10345 = vunpack.c.l.b16 %v9092
    %v10346 = vunpack.c.h.b16 %v9092
    %v10347 = vunpack.c.l.b16 %v9093
    %v10348 = vunpack.c.h.b16 %v9093
    %v10349 = vunpack.c.l.b16 %v9094
    %v10350 = vunpack.c.h.b16 %v9094
    %v10351 = vunpack.c.l.b16 %v9095
    %v10352 = vunpack.c.h.b16 %v9095
    %v10353 = vunpack.c.l.b16 %v9096
    %v10354 = vunpack.c.h.b16 %v9096
    %v10355 = vunpack.c.l.b16 %v9097
    %v10356 = vunpack.c.h.b16 %v9097
    %v10357 = vunpack.c.l.b16 %v9098
    %v10358 = vunpack.c.h.b16 %v9098
    %v10359 = vunpack.c.l.b16 %v9099
    %v10360 = vunpack.c.h.b16 %v9099
    %v10361 = vunpack.c.l.b16 %v9100
    %v10362 = vunpack.c.h.b16 %v9100
    %v10363 = vunpack.c.l.b16 %v9101
    %v10364 = vunpack.c.h.b16 %v9101
    %v10365 = vunpack.c.l.b16 %v9102
    %v10366 = vunpack.c.h.b16 %v9102
    %v10367 = vunpack.c.l.b16 %v9103
    %v10368 = vunpack.c.h.b16 %v9103
    %v10369 = vunpack.c.l.b16 %v9104
    %v10370 = vunpack.c.h.b16 %v9104
    %v10371 = vunpack.c.l.b16 %v9105
    %v10372 = vunpack.c.h.b16 %v9105
    %v10373 = vunpack.c.l.b16 %v9106
    %v10374 = vunpack.c.h.b16 %v9106
    %v10375 = vunpack.c.l.b16 %v9107
    %v10376 = vunpack.c.h.b16 %v9107
    %v10377 = vunpack.c.l.b16 %v9108
    %v10378 = vunpack.c.h.b16 %v9108
    %v10379 = vunpack.c.l.b16 %v9109
    %v10380 = vunpack.c.h.b16 %v9109
    %v10381 = vunpack.c.l.b16 %v9110
    %v10382 = vunpack.c.h.b16 %v9110
    %v10383 = vunpack.c.l.b16 %v9111
    %v10384 = vunpack.c.h.b16 %v9111
    %v10385 = vunpack.c.l.b16 %v9112
    %v10386 = vunpack.c.h.b16 %v9112
    %v10387 = vunpack.c.l.b16 %v9113
    %v10388 = vunpack.c.h.b16 %v9113
    %v10389 = vunpack.c.l.b16 %v9114
    %v10390 = vunpack.c.h.b16 %v9114
    %v10391 = vunpack.c.l.b16 %v9115
    %v10392 = vunpack.c.h.b16 %v9115
    %v10393 = vunpack.c.l.b16 %v9116
    %v10394 = vunpack.c.h.b16 %v9116
    %v10395 = vunpack.c.l.b16 %v9117
    %v10396 = vunpack.c.h.b16 %v9117
    %v10397 = vunpack.c.l.b16 %v9118
    %v10398 = vunpack.c.h.b16 %v9118
    %v10399 = vunpack.c.l.b16 %v9119
    %v10400 = vunpack.c.h.b16 %v9119
    %v10401 = vunpack.c.l.b16 %v9120
    %v10402 = vunpack.c.h.b16 %v9120
    %v10403 = vunpack.c.l.b16 %v9121
    %v10404 = vunpack.c.h.b16 %v9121
    %v10405 = vunpack.c.l.b16 %v9122
    %v10406 = vunpack.c.h.b16 %v9122
    %v10407 = vunpack.c.l.b16 %v9123
    %v10408 = vunpack.c.h.b16 %v9123
    %v10409 = vunpack.c.l.b16 %v9124
    %v10410 = vunpack.c.h.b16 %v9124
    %v10411 = vunpack.c.l.b16 %v9125
    %v10412 = vunpack.c.h.b16 %v9125
    %v10413 = vunpack.c.l.b16 %v9126
    %v10414 = vunpack.c.h.b16 %v9126
    %v10415 = vunpack.c.l.b16 %v9127
    %v10416 = vunpack.c.h.b16 %v9127
    %v10417 = vunpack.c.l.b16 %v9128
    %v10418 = vunpack.c.h.b16 %v9128
    %v10419 = vunpack.c.l.b16 %v9129
    %v10420 = vunpack.c.h.b16 %v9129
    %v10421 = vunpack.c.l.b16 %v9130
    %v10422 = vunpack.c.h.b16 %v9130
    %v10423 = vunpack.c.l.b16 %v9131
    %v10424 = vunpack.c.h.b16 %v9131
    %v10425 = vunpack.c.l.b16 %v9132
    %v10426 = vunpack.c.h.b16 %v9132
    %v10427 = vunpack.c.l.b16 %v9133
    %v10428 = vunpack.c.h.b16 %v9133
    %v10429 = vunpack.c.l.b16 %v9134
    %v10430 = vunpack.c.h.b16 %v9134
    %v10431 = vunpack.c.l.b16 %v9135
    %v10432 = vunpack.c.h.b16 %v9135
    %v10433 = vunpack.c.l.b16 %v9136
    %v10434 = vunpack.c.h.b16 %v9136
    %v10435 = vunpack.c.l.b16 %v9137
    %v10436 = vunpack.c.h.b16 %v9137
    %v10437 = vunpack.c.l.b16 %v9138
    %v10438 = vunpack.c.h.b16 %v9138
    %v10439 = vunpack.c.l.b16 %v9139
    %v10440 = vunpack.c.h.b16 %v9139
    %v10441 = vunpack.c.l.b16 %v9140
    %v10442 = vunpack.c.h.b16 %v9140
    %v10443 = vunpack.c.l.b16 %v9141
    %v10444 = vunpack.c.h.b16 %v9141
    %v10445 = vunpack.c.l.b16 %v9142
    %v10446 = vunpack.c.h.b16 %v9142
    %v10447 = vunpack.c.l.b16 %v9143
    %v10448 = vunpack.c.h.b16 %v9143
    %v10449 = vunpack.c.l.b16 %v9144
    %v10450 = vunpack.c.h.b16 %v9144
    %v10451 = vunpack.c.l.b16 %v9145
    %v10452 = vunpack.c.h.b16 %v9145
    %v10453 = vunpack.c.l.b16 %v9146
    %v10454 = vunpack.c.h.b16 %v9146
    %v10455 = vunpack.c.l.b16 %v9147
    %v10456 = vunpack.c.h.b16 %v9147
    %v10457 = vunpack.c.l.b16 %v9148
    %v10458 = vunpack.c.h.b16 %v9148
    %v10459 = vunpack.c.l.b16 %v9149
    %v10460 = vunpack.c.h.b16 %v9149
    %v10461 = vunpack.c.l.b16 %v9150
    %v10462 = vunpack.c.h.b16 %v9150
    %v10463 = vunpack.c.l.b16 %v9151
    %v10464 = vunpack.c.h.b16 %v9151
    %v10465 = vunpack.c.l.b16 %v9152
    %v10466 = vunpack.c.h.b16 %v9152
    %v10467 = vunpack.c.l.b16 %v9153
    %v10468 = vunpack.c.h.b16 %v9153
    %v10469 = vunpack.c.l.b16 %v9154
    %v10470 = vunpack.c.h.b16 %v9154
    %v10471 = vunpack.c.l.b16 %v9155
    %v10472 = vunpack.c.h.b16 %v9155
    %v10473 = vunpack.c.l.b16 %v9156
    %v10474 = vunpack.c.h.b16 %v9156
    %v10475 = vunpack.c.l.b16 %v9157
    %v10476 = vunpack.c.h.b16 %v9157
    %v10477 = vunpack.c.l.b16 %v9158
    %v10478 = vunpack.c.h.b16 %v9158
    %v10479 = vunpack.c.l.b16 %v9159
    %v10480 = vunpack.c.h.b16 %v9159
    %v10481 = vunpack.c.l.b16 %v9160
    %v10482 = vunpack.c.h.b16 %v9160
    %v10483 = vunpack.c.l.b16 %v9161
    %v10484 = vunpack.c.h.b16 %v9161
    %v10485 = vunpack.c.l.b16 %v9162
    %v10486 = vunpack.c.h.b16 %v9162
    %v10487 = vunpack.c.l.b16 %v9163
    %v10488 = vunpack.c.h.b16 %v9163
    %v10489 = vunpack.c.l.b16 %v9164
    %v10490 = vunpack.c.h.b16 %v9164
    %v10491 = vunpack.c.l.b16 %v9165
    %v10492 = vunpack.c.h.b16 %v9165
    %v10493 = vunpack.c.l.b16 %v9166
    %v10494 = vunpack.c.h.b16 %v9166
    %v10495 = vunpack.c.l.b16 %v9167
    %v10496 = vunpack.c.h.b16 %v9167
    %v10497 = vunpack.c.l.b16 %v9168
    %v10498 = vunpack.c.h.b16 %v9168
    %v10499 = vunpack.c.l.b16 %v9169
    %v10500 = vunpack.c.h.b16 %v9169
    %v10501 = vunpack.c.l.b16 %v9170
    %v10502 = vunpack.c.h.b16 %v9170
    %v10503 = vunpack.c.l.b16 %v9171
    %v10504 = vunpack.c.h.b16 %v9171
    %v10505 = vunpack.c.l.b16 %v9172
    %v10506 = vunpack.c.h.b16 %v9172
    %v10507 = vunpack.c.l.b16 %v9173
    %v10508 = vunpack.c.h.b16 %v9173
    %v10509 = vunpack.c.l.b16 %v9174
    %v10510 = vunpack.c.h.b16 %v9174
    %v10511 = vunpack.c.l.b16 %v9175
    %v10512 = vunpack.c.h.b16 %v9175
    %v10513 = vunpack.c.l.b16 %v9176
    %v10514 = vunpack.c.h.b16 %v9176
    %v10515 = vunpack.c.l.b16 %v9177
    %v10516 = vunpack.c.h.b16 %v9177
    %v10517 = vunpack.c.l.b16 %v9178
    %v10518 = vunpack.c.h.b16 %v9178
    %v10519 = vunpack.c.l.b16 %v9179
    %v10520 = vunpack.c.h.b16 %v9179
    %v10521 = vunpack.c.l.b16 %v9180
    %v10522 = vunpack.c.h.b16 %v9180
    %v10523 = vunpack.c.l.b16 %v9181
    %v10524 = vunpack.c.h.b16 %v9181
    %v10525 = vunpack.c.l.b16 %v9182
    %v10526 = vunpack.c.h.b16 %v9182
    %v10527 = vunpack.c.l.b16 %v9183
    %v10528 = vunpack.c.h.b16 %v9183
    %v10529 = vunpack.c.l.b16 %v9184
    %v10530 = vunpack.c.h.b16 %v9184
    %v10531 = vunpack.c.l.b16 %v9185
    %v10532 = vunpack.c.h.b16 %v9185
    %v10533 = vunpack.c.l.b16 %v9186
    %v10534 = vunpack.c.h.b16 %v9186
    %v10535 = vunpack.c.l.b16 %v9187
    %v10536 = vunpack.c.h.b16 %v9187
    %v10537 = vunpack.c.l.b16 %v9188
    %v10538 = vunpack.c.h.b16 %v9188
    %v10539 = vunpack.c.l.b16 %v9189
    %v10540 = vunpack.c.h.b16 %v9189
    %v10541 = vunpack.c.l.b16 %v9190
    %v10542 = vunpack.c.h.b16 %v9190
    %v10543 = vunpack.c.l.b16 %v9191
    %v10544 = vunpack.c.h.b16 %v9191
    %v10545 = vunpack.c.l.b16 %v9192
    %v10546 = vunpack.c.h.b16 %v9192
    %v10547 = vunpack.c.l.b16 %v9193
    %v10548 = vunpack.c.h.b16 %v9193
    %v10549 = vunpack.c.l.b16 %v9194
    %v10550 = vunpack.c.h.b16 %v9194
    %v10551 = vunpack.c.l.b16 %v9195
    %v10552 = vunpack.c.h.b16 %v9195
    %v10553 = vunpack.c.l.b16 %v9196
    %v10554 = vunpack.c.h.b16 %v9196
    %v10555 = vunpack.c.l.b16 %v9197
    %v10556 = vunpack.c.h.b16 %v9197
    %v10557 = vunpack.c.l.b16 %v9198
    %v10558 = vunpack.c.h.b16 %v9198
    %v10559 = vunpack.c.l.b16 %v9199
    %v10560 = vunpack.c.h.b16 %v9199
    %v10561 = vunpack.c.l.b16 %v9200
    %v10562 = vunpack.c.h.b16 %v9200
    %v10563 = vunpack.c.l.b16 %v9201
    %v10564 = vunpack.c.h.b16 %v9201
    %v10565 = vunpack.c.l.b16 %v9202
    %v10566 = vunpack.c.h.b16 %v9202
    %v10567 = vunpack.c.l.b16 %v9203
    %v10568 = vunpack.c.h.b16 %v9203
    %v10569 = vunpack.c.l.b16 %v9204
    %v10570 = vunpack.c.h.b16 %v9204
    %v10571 = vunpack.c.l.b16 %v9205
    %v10572 = vunpack.c.h.b16 %v9205
    %v10573 = vunpack.c.l.b16 %v9206
    %v10574 = vunpack.c.h.b16 %v9206
    %v10575 = vunpack.c.l.b16 %v9207
    %v10576 = vunpack.c.h.b16 %v9207
    %v10577 = vunpack.c.l.b16 %v9208
    %v10578 = vunpack.c.h.b16 %v9208
    %v10579 = vunpack.c.l.b16 %v9209
    %v10580 = vunpack.c.h.b16 %v9209
    %v10581 = vunpack.c.l.b16 %v9210
    %v10582 = vunpack.c.h.b16 %v9210
    %v10583 = vunpack.c.l.b16 %v9211
    %v10584 = vunpack.c.h.b16 %v9211
    %v10585 = vunpack.c.l.b16 %v9212
    %v10586 = vunpack.c.h.b16 %v9212
    %v10587 = vunpack.c.l.b16 %v9213
    %v10588 = vunpack.c.h.b16 %v9213
    %v10589 = vunpack.c.l.b16 %v9214
    %v10590 = vunpack.c.h.b16 %v9214
    %v10591 = vunpack.c.l.b16 %v9215
    %v10592 = vunpack.c.h.b16 %v9215
    %v10593 = vunpack.c.l.b16 %v9216
    %v10594 = vunpack.c.h.b16 %v9216
    %v10595 = vunpack.c.l.b16 %v9217
    %v10596 = vunpack.c.h.b16 %v9217
    %v10597 = vunpack.c.l.b16 %v9218
    %v10598 = vunpack.c.h.b16 %v9218
    %v10599 = vunpack.c.l.b16 %v9219
    %v10600 = vunpack.c.h.b16 %v9219
    %v10601 = vunpack.c.l.b16 %v9220
    %v10602 = vunpack.c.h.b16 %v9220
    %v10603 = vunpack.c.l.b16 %v9221
    %v10604 = vunpack.c.h.b16 %v9221
    %v10605 = vunpack.c.l.b16 %v9222
    %v10606 = vunpack.c.h.b16 %v9222
    %v10607 = vunpack.c.l.b16 %v9223
    %v10608 = vunpack.c.h.b16 %v9223
    %v10609 = vunpack.c.l.b16 %v9224
    %v10610 = vunpack.c.h.b16 %v9224
    %v10611 = vunpack.c.l.b16 %v9225
    %v10612 = vunpack.c.h.b16 %v9225
    %v10613 = vunpack.c.l.b16 %v9226
    %v10614 = vunpack.c.h.b16 %v9226
    %v10615 = vunpack.c.l.b16 %v9227
    %v10616 = vunpack.c.h.b16 %v9227
    %v10617 = vunpack.c.l.b16 %v9228
    %v10618 = vunpack.c.h.b16 %v9228
    %v10619 = vunpack.c.l.b16 %v9229
    %v10620 = vunpack.c.h.b16 %v9229
    %v10621 = vunpack.c.l.b16 %v9230
    %v10622 = vunpack.c.h.b16 %v9230
    %v10623 = vunpack.c.l.b16 %v9231
    %v10624 = vunpack.c.h.b16 %v9231
    %v10625 = vunpack.c.l.b16 %v9232
    %v10626 = vunpack.c.h.b16 %v9232
    %v10627 = vunpack.c.l.b16 %v9233
    %v10628 = vunpack.c.h.b16 %v9233
    %v10629 = vunpack.c.l.b16 %v9234
    %v10630 = vunpack.c.h.b16 %v9234
    %v10631 = vunpack.c.l.b16 %v9235
    %v10632 = vunpack.c.h.b16 %v9235
    %v10633 = vunpack.c.l.b16 %v9236
    %v10634 = vunpack.c.h.b16 %v9236
    %v10635 = vunpack.c.l.b16 %v9237
    %v10636 = vunpack.c.h.b16 %v9237
    %v10637 = vunpack.c.l.b16 %v9238
    %v10638 = vunpack.c.h.b16 %v9238
    %v10639 = vunpack.c.l.b16 %v9239
    %v10640 = vunpack.c.h.b16 %v9239
    %v10641 = vunpack.c.l.b16 %v9240
    %v10642 = vunpack.c.h.b16 %v9240
    %v10643 = vunpack.c.l.b16 %v9241
    %v10644 = vunpack.c.h.b16 %v9241
    %v10645 = vunpack.c.l.b16 %v9242
    %v10646 = vunpack.c.h.b16 %v9242
    %v10647 = vunpack.c.l.b16 %v9243
    %v10648 = vunpack.c.h.b16 %v9243
    %v10649 = vunpack.c.l.b16 %v9244
    %v10650 = vunpack.c.h.b16 %v9244
    %v10651 = vunpack.c.l.b16 %v9245
    %v10652 = vunpack.c.h.b16 %v9245
    %v10653 = vunpack.c.l.b16 %v9246
    %v10654 = vunpack.c.h.b16 %v9246
    %v10655 = vunpack.c.l.b16 %v9247
    %v10656 = vunpack.c.h.b16 %v9247
    %v10657 = vunpack.c.l.b16 %v9248
    %v10658 = vunpack.c.h.b16 %v9248
    %v10659 = vunpack.c.l.b16 %v9249
    %v10660 = vunpack.c.h.b16 %v9249
    %v10661 = vunpack.c.l.b16 %v9250
    %v10662 = vunpack.c.h.b16 %v9250
    %v10663 = vunpack.c.l.b16 %v9251
    %v10664 = vunpack.c.h.b16 %v9251
    %v10665 = vunpack.c.l.b16 %v9252
    %v10666 = vunpack.c.h.b16 %v9252
    %v10667 = vunpack.c.l.b16 %v9253
    %v10668 = vunpack.c.h.b16 %v9253
    %v10669 = vunpack.c.l.b16 %v9254
    %v10670 = vunpack.c.h.b16 %v9254
    %v10671 = vunpack.c.l.b16 %v9255
    %v10672 = vunpack.c.h.b16 %v9255
    %v10673 = vunpack.c.l.b16 %v9256
    %v10674 = vunpack.c.h.b16 %v9256
    %v10675 = vunpack.c.l.b16 %v9257
    %v10676 = vunpack.c.h.b16 %v9257
    %v10677 = vunpack.c.l.b16 %v9258
    %v10678 = vunpack.c.h.b16 %v9258
    %v10679 = vunpack.c.l.b16 %v9259
    %v10680 = vunpack.c.h.b16 %v9259
    %v10681 = vunpack.c.l.b16 %v9260
    %v10682 = vunpack.c.h.b16 %v9260
    %v10683 = vunpack.c.l.b16 %v9261
    %v10684 = vunpack.c.h.b16 %v9261
    %v10685 = vunpack.c.l.b16 %v9262
    %v10686 = vunpack.c.h.b16 %v9262
    %v10687 = vunpack.c.l.b16 %v9263
    %v10688 = vunpack.c.h.b16 %v9263
    %v10689 = vunpack.c.l.b16 %v9264
    %v10690 = vunpack.c.h.b16 %v9264
    %v10691 = vunpack.c.l.b16 %v9265
    %v10692 = vunpack.c.h.b16 %v9265
    %v10693 = vunpack.c.l.b16 %v9266
    %v10694 = vunpack.c.h.b16 %v9266
    %v10695 = vunpack.c.l.b16 %v9267
    %v10696 = vunpack.c.h.b16 %v9267
    %v10697 = vunpack.c.l.b16 %v9268
    %v10698 = vunpack.c.h.b16 %v9268
    %v10699 = vunpack.c.l.b16 %v9269
    %v10700 = vunpack.c.h.b16 %v9269
    %v10701 = vunpack.c.l.b16 %v9270
    %v10702 = vunpack.c.h.b16 %v9270
    %v10703 = vunpack.c.l.b16 %v9271
    %v10704 = vunpack.c.h.b16 %v9271
    %v10705 = vunpack.c.l.b16 %v9272
    %v10706 = vunpack.c.h.b16 %v9272
    %v10707 = vunpack.c.l.b16 %v9273
    %v10708 = vunpack.c.h.b16 %v9273
    %v10709 = vunpack.c.l.b16 %v9274
    %v10710 = vunpack.c.h.b16 %v9274
    %v10711 = vunpack.c.l.b16 %v9275
    %v10712 = vunpack.c.h.b16 %v9275
    %v10713 = vunpack.c.l.b16 %v9276
    %v10714 = vunpack.c.h.b16 %v9276
    %v10715 = vunpack.c.l.b16 %v9277
    %v10716 = vunpack.c.h.b16 %v9277
    %v10717 = vunpack.c.l.b16 %v9278
    %v10718 = vunpack.c.h.b16 %v9278
    %v10719 = vunpack.c.l.b16 %v9279
    %v10720 = vunpack.c.h.b16 %v9279
    %v10721 = vunpack.c.l.b16 %v9280
    %v10722 = vunpack.c.h.b16 %v9280
    %v10723 = vunpack.c.l.b16 %v9281
    %v10724 = vunpack.c.h.b16 %v9281
    %v10725 = vunpack.c.l.b16 %v9282
    %v10726 = vunpack.c.h.b16 %v9282
    %v10727 = vunpack.c.l.b16 %v9283
    %v10728 = vunpack.c.h.b16 %v9283
    %v10729 = vunpack.c.l.b16 %v9284
    %v10730 = vunpack.c.h.b16 %v9284
    %v10731 = vunpack.c.l.b16 %v9285
    %v10732 = vunpack.c.h.b16 %v9285
    %v10733 = vunpack.c.l.b16 %v9286
    %v10734 = vunpack.c.h.b16 %v9286
    %v10735 = vunpack.c.l.b16 %v9287
    %v10736 = vunpack.c.h.b16 %v9287
    %v10737 = vunpack.c.l.b16 %v9288
    %v10738 = vunpack.c.h.b16 %v9288
    %v10739 = vunpack.c.l.b16 %v9289
    %v10740 = vunpack.c.h.b16 %v9289
    %v10741 = vunpack.c.l.b16 %v9290
    %v10742 = vunpack.c.h.b16 %v9290
    %v10743 = vunpack.c.l.b16 %v9291
    %v10744 = vunpack.c.h.b16 %v9291
    %v10745 = vunpack.c.l.b16 %v9292
    %v10746 = vunpack.c.h.b16 %v9292
    %v10747 = vunpack.c.l.b16 %v9293
    %v10748 = vunpack.c.h.b16 %v9293
    %v10749 = vunpack.c.l.b16 %v9294
    %v10750 = vunpack.c.h.b16 %v9294
    %v10751 = vunpack.c.l.b16 %v9295
    %v10752 = vunpack.c.h.b16 %v9295
    %v10753 = vunpack.c.l.b16 %v9296
    %v10754 = vunpack.c.h.b16 %v9296
    %v10755 = vunpack.c.l.b16 %v9297
    %v10756 = vunpack.c.h.b16 %v9297
    %v10757 = vunpack.c.l.b16 %v9298
    %v10758 = vunpack.c.h.b16 %v9298
    %v10759 = vunpack.c.l.b16 %v9299
    %v10760 = vunpack.c.h.b16 %v9299
    %v10761 = vunpack.c.l.b16 %v9300
    %v10762 = vunpack.c.h.b16 %v9300
    %v10763 = vunpack.c.l.b16 %v9301
    %v10764 = vunpack.c.h.b16 %v9301
    %v10765 = vunpack.c.l.b16 %v9302
    %v10766 = vunpack.c.h.b16 %v9302
    %v10767 = vunpack.c.l.b16 %v9303
    %v10768 = vunpack.c.h.b16 %v9303
    %v10769 = vunpack.c.l.b16 %v9304
    %v10770 = vunpack.c.h.b16 %v9304
    %v10771 = vunpack.c.l.b16 %v9305
    %v10772 = vunpack.c.h.b16 %v9305
    %v10773 = vunpack.c.l.b16 %v9306
    %v10774 = vunpack.c.h.b16 %v9306
    %v10775 = vunpack.c.l.b16 %v9307
    %v10776 = vunpack.c.h.b16 %v9307
    %v10777 = vunpack.c.l.b16 %v9308
    %v10778 = vunpack.c.h.b16 %v9308
    %v10779 = vunpack.c.l.b16 %v9309
    %v10780 = vunpack.c.h.b16 %v9309
    %v10781 = vunpack.c.l.b16 %v9310
    %v10782 = vunpack.c.h.b16 %v9310
    %v10783 = vunpack.c.l.b16 %v9311
    %v10784 = vunpack.c.h.b16 %v9311
    %v10785 = vunpack.c.l.b16 %v9312
    %v10786 = vunpack.c.h.b16 %v9312
    %v10787 = vunpack.c.l.b16 %v9313
    %v10788 = vunpack.c.h.b16 %v9313
    %v10789 = vunpack.c.l.b16 %v9314
    %v10790 = vunpack.c.h.b16 %v9314
    %v10791 = vunpack.c.l.b16 %v9315
    %v10792 = vunpack.c.h.b16 %v9315
    %v10793 = vunpack.c.l.b16 %v9316
    %v10794 = vunpack.c.h.b16 %v9316
    %v10795 = vunpack.c.l.b16 %v9317
    %v10796 = vunpack.c.h.b16 %v9317
    %v10797 = vunpack.c.l.b16 %v9318
    %v10798 = vunpack.c.h.b16 %v9318
    %v10799 = vunpack.c.l.b16 %v9319
    %v10800 = vunpack.c.h.b16 %v9319
    %v10801 = vunpack.c.l.b16 %v9320
    %v10802 = vunpack.c.h.b16 %v9320
    %v10803 = vunpack.c.l.b16 %v9321
    %v10804 = vunpack.c.h.b16 %v9321
    %v10805 = vunpack.c.l.b16 %v9322
    %v10806 = vunpack.c.h.b16 %v9322
    %v10807 = vunpack.c.l.b16 %v9323
    %v10808 = vunpack.c.h.b16 %v9323
    %v10809 = vunpack.c.l.b16 %v9324
    %v10810 = vunpack.c.h.b16 %v9324
    %v10811 = vunpack.c.l.b16 %v9325
    %v10812 = vunpack.c.h.b16 %v9325
    %v10813 = vunpack.c.l.b16 %v9326
    %v10814 = vunpack.c.h.b16 %v9326
    %v10815 = vunpack.c.l.b16 %v9327
    %v10816 = vunpack.c.h.b16 %v9327
    %v10817 = vunpack.c.l.b16 %v9328
    %v10818 = vunpack.c.h.b16 %v9328
    %v10819 = vunpack.c.l.b16 %v9329
    %v10820 = vunpack.c.h.b16 %v9329
    %v10821 = vunpack.c.l.b16 %v9330
    %v10822 = vunpack.c.h.b16 %v9330
    %v10823 = vunpack.c.l.b16 %v9331
    %v10824 = vunpack.c.h.b16 %v9331
    %v10825 = vunpack.c.l.b16 %v9332
    %v10826 = vunpack.c.h.b16 %v9332
    %v10827 = vunpack.c.l.b16 %v9333
    %v10828 = vunpack.c.h.b16 %v9333
    %v10829 = vunpack.c.l.b16 %v9334
    %v10830 = vunpack.c.h.b16 %v9334
    %v10831 = vunpack.c.l.b16 %v9335
    %v10832 = vunpack.c.h.b16 %v9335
    %v10833 = vunpack.c.l.b16 %v9336
    %v10834 = vunpack.c.h.b16 %v9336
    %v10835 = vunpack.c.l.b16 %v9337
    %v10836 = vunpack.c.h.b16 %v9337
    %v10837 = vunpack.c.l.b16 %v9338
    %v10838 = vunpack.c.h.b16 %v9338
    %v10839 = vunpack.c.l.b16 %v9339
    %v10840 = vunpack.c.h.b16 %v9339
    %v10841 = vunpack.c.l.b16 %v9340
    %v10842 = vunpack.c.h.b16 %v9340
    %v10843 = vunpack.c.l.b16 %v9341
    %v10844 = vunpack.c.h.b16 %v9341
    %v10845 = vunpack.c.l.b16 %v9342
    %v10846 = vunpack.c.h.b16 %v9342
    %v10847 = vunpack.c.l.b16 %v9343
    %v10848 = vunpack.c.h.b16 %v9343
    %v10849 = vunpack.c.l.b16 %v9344
    %v10850 = vunpack.c.h.b16 %v9344
    %v10851 = vunpack.c.l.b16 %v9345
    %v10852 = vunpack.c.h.b16 %v9345
    %v10853 = vunpack.c.l.b16 %v9346
    %v10854 = vunpack.c.h.b16 %v9346
    %v10855 = vunpack.c.l.b16 %v9347
    %v10856 = vunpack.c.h.b16 %v9347
    %v10857 = vunpack.c.l.b16 %v9348
    %v10858 = vunpack.c.h.b16 %v9348
    %v10859 = vunpack.c.l.b16 %v9349
    %v10860 = vunpack.c.h.b16 %v9349
    %v10861 = vunpack.c.l.b16 %v9350
    %v10862 = vunpack.c.h.b16 %v9350
    %v10863 = vunpack.c.l.b16 %v9351
    %v10864 = vunpack.c.h.b16 %v9351
    %v10865 = vunpack.c.l.b16 %v9352
    %v10866 = vunpack.c.h.b16 %v9352
    %v10867 = vunpack.c.l.b16 %v9353
    %v10868 = vunpack.c.h.b16 %v9353
    %v10869 = vunpack.c.l.b16 %v9354
    %v10870 = vunpack.c.h.b16 %v9354
    %v10871 = vunpack.c.l.b16 %v9355
    %v10872 = vunpack.c.h.b16 %v9355
    %v10873 = vunpack.c.l.b16 %v9356
    %v10874 = vunpack.c.h.b16 %v9356
    %v10875 = vunpack.c.l.b16 %v9357
    %v10876 = vunpack.c.h.b16 %v9357
    %v10877 = vunpack.c.l.b16 %v9358
    %v10878 = vunpack.c.h.b16 %v9358
    %v10879 = vunpack.c.l.b16 %v9359
    %v10880 = vunpack.c.h.b16 %v9359
    %v10881 = vunpack.c.l.b16 %v9360
    %v10882 = vunpack.c.h.b16 %v9360
    %v10883 = vunpack.c.l.b16 %v9361
    %v10884 = vunpack.c.h.b16 %v9361
    %v10885 = vunpack.c.l.b16 %v9362
    %v10886 = vunpack.c.h.b16 %v9362
    %v10887 = vunpack.c.l.b16 %v9363
    %v10888 = vunpack.c.h.b16 %v9363
    %v10889 = vunpack.c.l.b16 %v9364
    %v10890 = vunpack.c.h.b16 %v9364
    %v10891 = vunpack.c.l.b16 %v9365
    %v10892 = vunpack.c.h.b16 %v9365
    %v10893 = vunpack.c.l.b16 %v9366
    %v10894 = vunpack.c.h.b16 %v9366
    %v10895 = vunpack.c.l.b16 %v9367
    %v10896 = vunpack.c.h.b16 %v9367
    %v10897 = vunpack.c.l.b16 %v9368
    %v10898 = vunpack.c.h.b16 %v9368
    %v10899 = vunpack.c.l.b16 %v9369
    %v10900 = vunpack.c.h.b16 %v9369
    %v10901 = vunpack.c.l.b16 %v9370
    %v10902 = vunpack.c.h.b16 %v9370
    %v10903 = vunpack.c.l.b16 %v9371
    %v10904 = vunpack.c.h.b16 %v9371
    %v10905 = vunpack.c.l.b16 %v9372
    %v10906 = vunpack.c.h.b16 %v9372
    %v10907 = vunpack.c.l.b16 %v9373
    %v10908 = vunpack.c.h.b16 %v9373
    %v10909 = vunpack.c.l.b16 %v9374
    %v10910 = vunpack.c.h.b16 %v9374
    %v10911 = vunpack.c.l.b16 %v9375
    %v10912 = vunpack.c.h.b16 %v9375
    %v10913 = vunpack.c.l.b16 %v9376
    %v10914 = vunpack.c.h.b16 %v9376
    %v10915 = vunpack.c.l.b16 %v9377
    %v10916 = vunpack.c.h.b16 %v9377
    %v10917 = vunpack.c.l.b16 %v9378
    %v10918 = vunpack.c.h.b16 %v9378
    %v10919 = vunpack.c.l.b16 %v9379
    %v10920 = vunpack.c.h.b16 %v9379
    %v10921 = vunpack.c.l.b16 %v9380
    %v10922 = vunpack.c.h.b16 %v9380
    %v10923 = vunpack.c.l.b16 %v9381
    %v10924 = vunpack.c.h.b16 %v9381
    %v10925 = vunpack.c.l.b16 %v9382
    %v10926 = vunpack.c.h.b16 %v9382
    %v10927 = vunpack.c.l.b16 %v9383
    %v10928 = vunpack.c.h.b16 %v9383
    %v10929 = vunpack.c.l.b16 %v9384
    %v10930 = vunpack.c.h.b16 %v9384
    %v10931 = vunpack.c.l.b16 %v9385
    %v10932 = vunpack.c.h.b16 %v9385
    %v10933 = vunpack.c.l.b16 %v9386
    %v10934 = vunpack.c.h.b16 %v9386
    %v10935 = vunpack.c.l.b16 %v9387
    %v10936 = vunpack.c.h.b16 %v9387
    %v10937 = vunpack.c.l.b16 %v9388
    %v10938 = vunpack.c.h.b16 %v9388
    %v10939 = vunpack.c.l.b16 %v9389
    %v10940 = vunpack.c.h.b16 %v9389
    %v10941 = vunpack.c.l.b16 %v9390
    %v10942 = vunpack.c.h.b16 %v9390
    %v10943 = vunpack.c.l.b16 %v9391
    %v10944 = vunpack.c.h.b16 %v9391
    %v10945 = vunpack.c.l.b16 %v9392
    %v10946 = vunpack.c.h.b16 %v9392
    %v10947 = vunpack.c.l.b16 %v9393
    %v10948 = vunpack.c.h.b16 %v9393
    %v10949 = vunpack.c.l.b16 %v9394
    %v10950 = vunpack.c.h.b16 %v9394
    %v10951 = vunpack.c.l.b16 %v9395
    %v10952 = vunpack.c.h.b16 %v9395
    %v10953 = vunpack.c.l.b16 %v9396
    %v10954 = vunpack.c.h.b16 %v9396
    %v10955 = vunpack.c.l.b16 %v9397
    %v10956 = vunpack.c.h.b16 %v9397
    %v10957 = vunpack.c.l.b16 %v9398
    %v10958 = vunpack.c.h.b16 %v9398
    %v10959 = vunpack.c.l.b16 %v9399
    %v10960 = vunpack.c.h.b16 %v9399
    %v10961 = vunpack.c.l.b16 %v9400
    %v10962 = vunpack.c.h.b16 %v9400
    %v10963 = vunpack.c.l.b16 %v9401
    %v10964 = vunpack.c.h.b16 %v9401
    %v10965 = vunpack.c.l.b16 %v9402
    %v10966 = vunpack.c.h.b16 %v9402
    %v10967 = vunpack.c.l.b16 %v9403
    %v10968 = vunpack.c.h.b16 %v9403
    %v10969 = vunpack.c.l.b16 %v9404
    %v10970 = vunpack.c.h.b16 %v9404
    %v10971 = vunpack.c.l.b16 %v9405
    %v10972 = vunpack.c.h.b16 %v9405
    %v10973 = vunpack.c.l.b16 %v9406
    %v10974 = vunpack.c.h.b16 %v9406
    %v10975 = vunpack.c.l.b16 %v9407
    %v10976 = vunpack.c.h.b16 %v9407
    %v10977 = vunpack.c.l.b16 %v9408
    %v10978 = vunpack.c.h.b16 %v9408
    %v10979 = vunpack.c.l.b16 %v9409
    %v10980 = vunpack.c.h.b16 %v9409
    %v10981 = vunpack.c.l.b16 %v9410
    %v10982 = vunpack.c.h.b16 %v9410
    %v10983 = vunpack.c.l.b16 %v9411
    %v10984 = vunpack.c.h.b16 %v9411
    %v10985 = vunpack.c.l.b16 %v9412
    %v10986 = vunpack.c.h.b16 %v9412
    %v10987 = vunpack.c.l.b16 %v9413
    %v10988 = vunpack.c.h.b16 %v9413
    %v10989 = vunpack.c.l.b16 %v9414
    %v10990 = vunpack.c.h.b16 %v9414
    %v10991 = vunpack.c.l.b16 %v9415
    %v10992 = vunpack.c.h.b16 %v9415
    %v10993 = vunpack.c.l.b16 %v9416
    %v10994 = vunpack.c.h.b16 %v9416
    %v10995 = vpack.c.b16 %v9979, %v9971
    %v10996 = vpack.c.b16 %v9980, %v9972
    %v10997 = vpack.c.b16 %v9981, %v9973
    %v10998 = vpack.c.b16 %v9982, %v9974
    %v10999 = vpack.c.b16 %v9983, %v9975
    %v11000 = vpack.c.b16 %v9984, %v9976
    %v11001 = vpack.c.b16 %v9985, %v9977
    %v11002 = vpack.c.b16 %v9986, %v9978
    %v11003 = vpack.c.b16 %v9995, %v9987
    %v11004 = vpack.c.b16 %v9996, %v9988
    %v11005 = vpack.c.b16 %v9997, %v9989
    %v11006 = vpack.c.b16 %v9998, %v9990
    %v11007 = vpack.c.b16 %v9999, %v9991
    %v11008 = vpack.c.b16 %v10000, %v9992
    %v11009 = vpack.c.b16 %v10001, %v9993
    %v11010 = vpack.c.b16 %v10002, %v9994
    %v11011 = vpack.c.b16 %v10011, %v10003
    %v11012 = vpack.c.b16 %v10012, %v10004
    %v11013 = vpack.c.b16 %v10013, %v10005
    %v11014 = vpack.c.b16 %v10014, %v10006
    %v11015 = vpack.c.b16 %v10015, %v10007
    %v11016 = vpack.c.b16 %v10016, %v10008
    %v11017 = vpack.c.b16 %v10017, %v10009
    %v11018 = vpack.c.b16 %v10018, %v10010
    %v11019 = vpack.c.b16 %v10027, %v10019
    %v11020 = vpack.c.b16 %v10028, %v10020
    %v11021 = vpack.c.b16 %v10029, %v10021
    %v11022 = vpack.c.b16 %v10030, %v10022
    %v11023 = vpack.c.b16 %v10031, %v10023
    %v11024 = vpack.c.b16 %v10032, %v10024
    %v11025 = vpack.c.b16 %v10033, %v10025
    %v11026 = vpack.c.b16 %v10034, %v10026
    %v11027 = vpack.c.b16 %v10043, %v10035
    %v11028 = vpack.c.b16 %v10044, %v10036
    %v11029 = vpack.c.b16 %v10045, %v10037
    %v11030 = vpack.c.b16 %v10046, %v10038
    %v11031 = vpack.c.b16 %v10047, %v10039
    %v11032 = vpack.c.b16 %v10048, %v10040
    %v11033 = vpack.c.b16 %v10049, %v10041
    %v11034 = vpack.c.b16 %v10050, %v10042
    %v11035 = vpack.c.b16 %v10059, %v10051
    %v11036 = vpack.c.b16 %v10060, %v10052
    %v11037 = vpack.c.b16 %v10061, %v10053
    %v11038 = vpack.c.b16 %v10062, %v10054
    %v11039 = vpack.c.b16 %v10063, %v10055
    %v11040 = vpack.c.b16 %v10064, %v10056
    %v11041 = vpack.c.b16 %v10065, %v10057
    %v11042 = vpack.c.b16 %v10066, %v10058
    %v11043 = vpack.c.b16 %v10075, %v10067
    %v11044 = vpack.c.b16 %v10076, %v10068
    %v11045 = vpack.c.b16 %v10077, %v10069
    %v11046 = vpack.c.b16 %v10078, %v10070
    %v11047 = vpack.c.b16 %v10079, %v10071
    %v11048 = vpack.c.b16 %v10080, %v10072
    %v11049 = vpack.c.b16 %v10081, %v10073
    %v11050 = vpack.c.b16 %v10082, %v10074
    %v11051 = vpack.c.b16 %v10091, %v10083
    %v11052 = vpack.c.b16 %v10092, %v10084
    %v11053 = vpack.c.b16 %v10093, %v10085
    %v11054 = vpack.c.b16 %v10094, %v10086
    %v11055 = vpack.c.b16 %v10095, %v10087
    %v11056 = vpack.c.b16 %v10096, %v10088
    %v11057 = vpack.c.b16 %v10097, %v10089
    %v11058 = vpack.c.b16 %v10098, %v10090
    %v11059 = vpack.c.b16 %v10107, %v10099
    %v11060 = vpack.c.b16 %v10108, %v10100
    %v11061 = vpack.c.b16 %v10109, %v10101
    %v11062 = vpack.c.b16 %v10110, %v10102
    %v11063 = vpack.c.b16 %v10111, %v10103
    %v11064 = vpack.c.b16 %v10112, %v10104
    %v11065 = vpack.c.b16 %v10113, %v10105
    %v11066 = vpack.c.b16 %v10114, %v10106
    %v11067 = vpack.c.b16 %v10123, %v10115
    %v11068 = vpack.c.b16 %v10124, %v10116
    %v11069 = vpack.c.b16 %v10125, %v10117
    %v11070 = vpack.c.b16 %v10126, %v10118
    %v11071 = vpack.c.b16 %v10127, %v10119
    %v11072 = vpack.c.b16 %v10128, %v10120
    %v11073 = vpack.c.b16 %v10129, %v10121
    %v11074 = vpack.c.b16 %v10130, %v10122
    %v11075 = vpack.c.b16 %v10139, %v10131
    %v11076 = vpack.c.b16 %v10140, %v10132
    %v11077 = vpack.c.b16 %v10141, %v10133
    %v11078 = vpack.c.b16 %v10142, %v10134
    %v11079 = vpack.c.b16 %v10143, %v10135
    %v11080 = vpack.c.b16 %v10144, %v10136
    %v11081 = vpack.c.b16 %v10145, %v10137
    %v11082 = vpack.c.b16 %v10146, %v10138
    %v11083 = vpack.c.b16 %v10155, %v10147
    %v11084 = vpack.c.b16 %v10156, %v10148
    %v11085 = vpack.c.b16 %v10157, %v10149
    %v11086 = vpack.c.b16 %v10158, %v10150
    %v11087 = vpack.c.b16 %v10159, %v10151
    %v11088 = vpack.c.b16 %v10160, %v10152
    %v11089 = vpack.c.b16 %v10161, %v10153
    %v11090 = vpack.c.b16 %v10162, %v10154
    %v11091 = vpack.c.b16 %v10171, %v10163
    %v11092 = vpack.c.b16 %v10172, %v10164
    %v11093 = vpack.c.b16 %v10173, %v10165
    %v11094 = vpack.c.b16 %v10174, %v10166
    %v11095 = vpack.c.b16 %v10175, %v10167
    %v11096 = vpack.c.b16 %v10176, %v10168
    %v11097 = vpack.c.b16 %v10177, %v10169
    %v11098 = vpack.c.b16 %v10178, %v10170
    %v11099 = vpack.c.b16 %v10187, %v10179
    %v11100 = vpack.c.b16 %v10188, %v10180
    %v11101 = vpack.c.b16 %v10189, %v10181
    %v11102 = vpack.c.b16 %v10190, %v10182
    %v11103 = vpack.c.b16 %v10191, %v10183
    %v11104 = vpack.c.b16 %v10192, %v10184
    %v11105 = vpack.c.b16 %v10193, %v10185
    %v11106 = vpack.c.b16 %v10194, %v10186
    %v11107 = vpack.c.b16 %v10203, %v10195
    %v11108 = vpack.c.b16 %v10204, %v10196
    %v11109 = vpack.c.b16 %v10205, %v10197
    %v11110 = vpack.c.b16 %v10206, %v10198
    %v11111 = vpack.c.b16 %v10207, %v10199
    %v11112 = vpack.c.b16 %v10208, %v10200
    %v11113 = vpack.c.b16 %v10209, %v10201
    %v11114 = vpack.c.b16 %v10210, %v10202
    %v11115 = vpack.c.b16 %v10219, %v10211
    %v11116 = vpack.c.b16 %v10220, %v10212
    %v11117 = vpack.c.b16 %v10221, %v10213
    %v11118 = vpack.c.b16 %v10222, %v10214
    %v11119 = vpack.c.b16 %v10223, %v10215
    %v11120 = vpack.c.b16 %v10224, %v10216
    %v11121 = vpack.c.b16 %v10225, %v10217
    %v11122 = vpack.c.b16 %v10226, %v10218
    %v11123 = vpack.c.b16 %v10235, %v10227
    %v11124 = vpack.c.b16 %v10236, %v10228
    %v11125 = vpack.c.b16 %v10237, %v10229
    %v11126 = vpack.c.b16 %v10238, %v10230
    %v11127 = vpack.c.b16 %v10239, %v10231
    %v11128 = vpack.c.b16 %v10240, %v10232
    %v11129 = vpack.c.b16 %v10241, %v10233
    %v11130 = vpack.c.b16 %v10242, %v10234
    %v11131 = vpack.c.b16 %v10251, %v10243
    %v11132 = vpack.c.b16 %v10252, %v10244
    %v11133 = vpack.c.b16 %v10253, %v10245
    %v11134 = vpack.c.b16 %v10254, %v10246
    %v11135 = vpack.c.b16 %v10255, %v10247
    %v11136 = vpack.c.b16 %v10256, %v10248
    %v11137 = vpack.c.b16 %v10257, %v10249
    %v11138 = vpack.c.b16 %v10258, %v10250
    %v11139 = vpack.c.b16 %v10267, %v10259
    %v11140 = vpack.c.b16 %v10268, %v10260
    %v11141 = vpack.c.b16 %v10269, %v10261
    %v11142 = vpack.c.b16 %v10270, %v10262
    %v11143 = vpack.c.b16 %v10271, %v10263
    %v11144 = vpack.c.b16 %v10272, %v10264
    %v11145 = vpack.c.b16 %v10273, %v10265
    %v11146 = vpack.c.b16 %v10274, %v10266
    %v11147 = vpack.c.b16 %v10283, %v10275
    %v11148 = vpack.c.b16 %v10284, %v10276
    %v11149 = vpack.c.b16 %v10285, %v10277
    %v11150 = vpack.c.b16 %v10286, %v10278
    %v11151 = vpack.c.b16 %v10287, %v10279
    %v11152 = vpack.c.b16 %v10288, %v10280
    %v11153 = vpack.c.b16 %v10289, %v10281
    %v11154 = vpack.c.b16 %v10290, %v10282
    %v11155 = vpack.c.b16 %v10299, %v10291
    %v11156 = vpack.c.b16 %v10300, %v10292
    %v11157 = vpack.c.b16 %v10301, %v10293
    %v11158 = vpack.c.b16 %v10302, %v10294
    %v11159 = vpack.c.b16 %v10303, %v10295
    %v11160 = vpack.c.b16 %v10304, %v10296
    %v11161 = vpack.c.b16 %v10305, %v10297
    %v11162 = vpack.c.b16 %v10306, %v10298
    %v11163 = vpack.c.b16 %v10315, %v10307
    %v11164 = vpack.c.b16 %v10316, %v10308
    %v11165 = vpack.c.b16 %v10317, %v10309
    %v11166 = vpack.c.b16 %v10318, %v10310
    %v11167 = vpack.c.b16 %v10319, %v10311
    %v11168 = vpack.c.b16 %v10320, %v10312
    %v11169 = vpack.c.b16 %v10321, %v10313
    %v11170 = vpack.c.b16 %v10322, %v10314
    %v11171 = vpack.c.b16 %v10331, %v10323
    %v11172 = vpack.c.b16 %v10332, %v10324
    %v11173 = vpack.c.b16 %v10333, %v10325
    %v11174 = vpack.c.b16 %v10334, %v10326
    %v11175 = vpack.c.b16 %v10335, %v10327
    %v11176 = vpack.c.b16 %v10336, %v10328
    %v11177 = vpack.c.b16 %v10337, %v10329
    %v11178 = vpack.c.b16 %v10338, %v10330
    %v11179 = vpack.c.b16 %v10347, %v10339
    %v11180 = vpack.c.b16 %v10348, %v10340
    %v11181 = vpack.c.b16 %v10349, %v10341
    %v11182 = vpack.c.b16 %v10350, %v10342
    %v11183 = vpack.c.b16 %v10351, %v10343
    %v11184 = vpack.c.b16 %v10352, %v10344
    %v11185 = vpack.c.b16 %v10353, %v10345
    %v11186 = vpack.c.b16 %v10354, %v10346
    %v11187 = vpack.c.b16 %v10363, %v10355
    %v11188 = vpack.c.b16 %v10364, %v10356
    %v11189 = vpack.c.b16 %v10365, %v10357
    %v11190 = vpack.c.b16 %v10366, %v10358
    %v11191 = vpack.c.b16 %v10367, %v10359
    %v11192 = vpack.c.b16 %v10368, %v10360
    %v11193 = vpack.c.b16 %v10369, %v10361
    %v11194 = vpack.c.b16 %v10370, %v10362
    %v11195 = vpack.c.b16 %v10379, %v10371
    %v11196 = vpack.c.b16 %v10380, %v10372
    %v11197 = vpack.c.b16 %v10381, %v10373
    %v11198 = vpack.c.b16 %v10382, %v10374
    %v11199 = vpack.c.b16 %v10383, %v10375
    %v11200 = vpack.c.b16 %v10384, %v10376
    %v11201 = vpack.c.b16 %v10385, %v10377
    %v11202 = vpack.c.b16 %v10386, %v10378
    %v11203 = vpack.c.b16 %v10395, %v10387
    %v11204 = vpack.c.b16 %v10396, %v10388
    %v11205 = vpack.c.b16 %v10397, %v10389
    %v11206 = vpack.c.b16 %v10398, %v10390
    %v11207 = vpack.c.b16 %v10399, %v10391
    %v11208 = vpack.c.b16 %v10400, %v10392
    %v11209 = vpack.c.b16 %v10401, %v10393
    %v11210 = vpack.c.b16 %v10402, %v10394
    %v11211 = vpack.c.b16 %v10411, %v10403
    %v11212 = vpack.c.b16 %v10412, %v10404
    %v11213 = vpack.c.b16 %v10413, %v10405
    %v11214 = vpack.c.b16 %v10414, %v10406
    %v11215 = vpack.c.b16 %v10415, %v10407
    %v11216 = vpack.c.b16 %v10416, %v10408
    %v11217 = vpack.c.b16 %v10417, %v10409
    %v11218 = vpack.c.b16 %v10418, %v10410
    %v11219 = vpack.c.b16 %v10427, %v10419
    %v11220 = vpack.c.b16 %v10428, %v10420
    %v11221 = vpack.c.b16 %v10429, %v10421
    %v11222 = vpack.c.b16 %v10430, %v10422
    %v11223 = vpack.c.b16 %v10431, %v10423
    %v11224 = vpack.c.b16 %v10432, %v10424
    %v11225 = vpack.c.b16 %v10433, %v10425
    %v11226 = vpack.c.b16 %v10434, %v10426
    %v11227 = vpack.c.b16 %v10443, %v10435
    %v11228 = vpack.c.b16 %v10444, %v10436
    %v11229 = vpack.c.b16 %v10445, %v10437
    %v11230 = vpack.c.b16 %v10446, %v10438
    %v11231 = vpack.c.b16 %v10447, %v10439
    %v11232 = vpack.c.b16 %v10448, %v10440
    %v11233 = vpack.c.b16 %v10449, %v10441
    %v11234 = vpack.c.b16 %v10450, %v10442
    %v11235 = vpack.c.b16 %v10459, %v10451
    %v11236 = vpack.c.b16 %v10460, %v10452
    %v11237 = vpack.c.b16 %v10461, %v10453
    %v11238 = vpack.c.b16 %v10462, %v10454
    %v11239 = vpack.c.b16 %v10463, %v10455
    %v11240 = vpack.c.b16 %v10464, %v10456
    %v11241 = vpack.c.b16 %v10465, %v10457
    %v11242 = vpack.c.b16 %v10466, %v10458
    %v11243 = vpack.c.b16 %v10475, %v10467
    %v11244 = vpack.c.b16 %v10476, %v10468
    %v11245 = vpack.c.b16 %v10477, %v10469
    %v11246 = vpack.c.b16 %v10478, %v10470
    %v11247 = vpack.c.b16 %v10479, %v10471
    %v11248 = vpack.c.b16 %v10480, %v10472
    %v11249 = vpack.c.b16 %v10481, %v10473
    %v11250 = vpack.c.b16 %v10482, %v10474
    %v11251 = vpack.c.b16 %v10491, %v10483
    %v11252 = vpack.c.b16 %v10492, %v10484
    %v11253 = vpack.c.b16 %v10493, %v10485
    %v11254 = vpack.c.b16 %v10494, %v10486
    %v11255 = vpack.c.b16 %v10495, %v10487
    %v11256 = vpack.c.b16 %v10496, %v10488
    %v11257 = vpack.c.b16 %v10497, %v10489
    %v11258 = vpack.c.b16 %v10498, %v10490
    %v11259 = vpack.c.b16 %v10507, %v10499
    %v11260 = vpack.c.b16 %v10508, %v10500
    %v11261 = vpack.c.b16 %v10509, %v10501
    %v11262 = vpack.c.b16 %v10510, %v10502
    %v11263 = vpack.c.b16 %v10511, %v10503
    %v11264 = vpack.c.b16 %v10512, %v10504
    %v11265 = vpack.c.b16 %v10513, %v10505
    %v11266 = vpack.c.b16 %v10514, %v10506
    %v11267 = vpack.c.b16 %v10523, %v10515
    %v11268 = vpack.c.b16 %v10524, %v10516
    %v11269 = vpack.c.b16 %v10525, %v10517
    %v11270 = vpack.c.b16 %v10526, %v10518
    %v11271 = vpack.c.b16 %v10527, %v10519
    %v11272 = vpack.c.b16 %v10528, %v10520
    %v11273 = vpack.c.b16 %v10529, %v10521
    %v11274 = vpack.c.b16 %v10530, %v10522
    %v11275 = vpack.c.b16 %v10539, %v10531
    %v11276 = vpack.c.b16 %v10540, %v10532
    %v11277 = vpack.c.b16 %v10541, %v10533
    %v11278 = vpack.c.b16 %v10542, %v10534
    %v11279 = vpack.c.b16 %v10543, %v10535
    %v11280 = vpack.c.b16 %v10544, %v10536
    %v11281 = vpack.c.b16 %v10545, %v10537
    %v11282 = vpack.c.b16 %v10546, %v10538
    %v11283 = vpack.c.b16 %v10555, %v10547
    %v11284 = vpack.c.b16 %v10556, %v10548
    %v11285 = vpack.c.b16 %v10557, %v10549
    %v11286 = vpack.c.b16 %v10558, %v10550
    %v11287 = vpack.c.b16 %v10559, %v10551
    %v11288 = vpack.c.b16 %v10560, %v10552
    %v11289 = vpack.c.b16 %v10561, %v10553
    %v11290 = vpack.c.b16 %v10562, %v10554
    %v11291 = vpack.c.b16 %v10571, %v10563
    %v11292 = vpack.c.b16 %v10572, %v10564
    %v11293 = vpack.c.b16 %v10573, %v10565
    %v11294 = vpack.c.b16 %v10574, %v10566
    %v11295 = vpack.c.b16 %v10575, %v10567
    %v11296 = vpack.c.b16 %v10576, %v10568
    %v11297 = vpack.c.b16 %v10577, %v10569
    %v11298 = vpack.c.b16 %v10578, %v10570
    %v11299 = vpack.c.b16 %v10587, %v10579
    %v11300 = vpack.c.b16 %v10588, %v10580
    %v11301 = vpack.c.b16 %v10589, %v10581
    %v11302 = vpack.c.b16 %v10590, %v10582
    %v11303 = vpack.c.b16 %v10591, %v10583
    %v11304 = vpack.c.b16 %v10592, %v10584
    %v11305 = vpack.c.b16 %v10593, %v10585
    %v11306 = vpack.c.b16 %v10594, %v10586
    %v11307 = vpack.c.b16 %v10603, %v10595
    %v11308 = vpack.c.b16 %v10604, %v10596
    %v11309 = vpack.c.b16 %v10605, %v10597
    %v11310 = vpack.c.b16 %v10606, %v10598
    %v11311 = vpack.c.b16 %v10607, %v10599
    %v11312 = vpack.c.b16 %v10608, %v10600
    %v11313 = vpack.c.b16 %v10609, %v10601
    %v11314 = vpack.c.b16 %v10610, %v10602
    %v11315 = vpack.c.b16 %v10619, %v10611
    %v11316 = vpack.c.b16 %v10620, %v10612
    %v11317 = vpack.c.b16 %v10621, %v10613
    %v11318 = vpack.c.b16 %v10622, %v10614
    %v11319 = vpack.c.b16 %v10623, %v10615
    %v11320 = vpack.c.b16 %v10624, %v10616
    %v11321 = vpack.c.b16 %v10625, %v10617
    %v11322 = vpack.c.b16 %v10626, %v10618
    %v11323 = vpack.c.b16 %v10635, %v10627
    %v11324 = vpack.c.b16 %v10636, %v10628
    %v11325 = vpack.c.b16 %v10637, %v10629
    %v11326 = vpack.c.b16 %v10638, %v10630
    %v11327 = vpack.c.b16 %v10639, %v10631
    %v11328 = vpack.c.b16 %v10640, %v10632
    %v11329 = vpack.c.b16 %v10641, %v10633
    %v11330 = vpack.c.b16 %v10642, %v10634
    %v11331 = vpack.c.b16 %v10651, %v10643
    %v11332 = vpack.c.b16 %v10652, %v10644
    %v11333 = vpack.c.b16 %v10653, %v10645
    %v11334 = vpack.c.b16 %v10654, %v10646
    %v11335 = vpack.c.b16 %v10655, %v10647
    %v11336 = vpack.c.b16 %v10656, %v10648
    %v11337 = vpack.c.b16 %v10657, %v10649
    %v11338 = vpack.c.b16 %v10658, %v10650
    %v11339 = vpack.c.b16 %v10667, %v10659
    %v11340 = vpack.c.b16 %v10668, %v10660
    %v11341 = vpack.c.b16 %v10669, %v10661
    %v11342 = vpack.c.b16 %v10670, %v10662
    %v11343 = vpack.c.b16 %v10671, %v10663
    %v11344 = vpack.c.b16 %v10672, %v10664
    %v11345 = vpack.c.b16 %v10673, %v10665
    %v11346 = vpack.c.b16 %v10674, %v10666
    %v11347 = vpack.c.b16 %v10683, %v10675
    %v11348 = vpack.c.b16 %v10684, %v10676
    %v11349 = vpack.c.b16 %v10685, %v10677
    %v11350 = vpack.c.b16 %v10686, %v10678
    %v11351 = vpack.c.b16 %v10687, %v10679
    %v11352 = vpack.c.b16 %v10688, %v10680
    %v11353 = vpack.c.b16 %v10689, %v10681
    %v11354 = vpack.c.b16 %v10690, %v10682
    %v11355 = vpack.c.b16 %v10699, %v10691
    %v11356 = vpack.c.b16 %v10700, %v10692
    %v11357 = vpack.c.b16 %v10701, %v10693
    %v11358 = vpack.c.b16 %v10702, %v10694
    %v11359 = vpack.c.b16 %v10703, %v10695
    %v11360 = vpack.c.b16 %v10704, %v10696
    %v11361 = vpack.c.b16 %v10705, %v10697
    %v11362 = vpack.c.b16 %v10706, %v10698
    %v11363 = vpack.c.b16 %v10715, %v10707
    %v11364 = vpack.c.b16 %v10716, %v10708
    %v11365 = vpack.c.b16 %v10717, %v10709
    %v11366 = vpack.c.b16 %v10718, %v10710
    %v11367 = vpack.c.b16 %v10719, %v10711
    %v11368 = vpack.c.b16 %v10720, %v10712
    %v11369 = vpack.c.b16 %v10721, %v10713
    %v11370 = vpack.c.b16 %v10722, %v10714
    %v11371 = vpack.c.b16 %v10731, %v10723
    %v11372 = vpack.c.b16 %v10732, %v10724
    %v11373 = vpack.c.b16 %v10733, %v10725
    %v11374 = vpack.c.b16 %v10734, %v10726
    %v11375 = vpack.c.b16 %v10735, %v10727
    %v11376 = vpack.c.b16 %v10736, %v10728
    %v11377 = vpack.c.b16 %v10737, %v10729
    %v11378 = vpack.c.b16 %v10738, %v10730
    %v11379 = vpack.c.b16 %v10747, %v10739
    %v11380 = vpack.c.b16 %v10748, %v10740
    %v11381 = vpack.c.b16 %v10749, %v10741
    %v11382 = vpack.c.b16 %v10750, %v10742
    %v11383 = vpack.c.b16 %v10751, %v10743
    %v11384 = vpack.c.b16 %v10752, %v10744
    %v11385 = vpack.c.b16 %v10753, %v10745
    %v11386 = vpack.c.b16 %v10754, %v10746
    %v11387 = vpack.c.b16 %v10763, %v10755
    %v11388 = vpack.c.b16 %v10764, %v10756
    %v11389 = vpack.c.b16 %v10765, %v10757
    %v11390 = vpack.c.b16 %v10766, %v10758
    %v11391 = vpack.c.b16 %v10767, %v10759
    %v11392 = vpack.c.b16 %v10768, %v10760
    %v11393 = vpack.c.b16 %v10769, %v10761
    %v11394 = vpack.c.b16 %v10770, %v10762
    %v11395 = vpack.c.b16 %v10779, %v10771
    %v11396 = vpack.c.b16 %v10780, %v10772
    %v11397 = vpack.c.b16 %v10781, %v10773
    %v11398 = vpack.c.b16 %v10782, %v10774
    %v11399 = vpack.c.b16 %v10783, %v10775
    %v11400 = vpack.c.b16 %v10784, %v10776
    %v11401 = vpack.c.b16 %v10785, %v10777
    %v11402 = vpack.c.b16 %v10786, %v10778
    %v11403 = vpack.c.b16 %v10795, %v10787
    %v11404 = vpack.c.b16 %v10796, %v10788
    %v11405 = vpack.c.b16 %v10797, %v10789
    %v11406 = vpack.c.b16 %v10798, %v10790
    %v11407 = vpack.c.b16 %v10799, %v10791
    %v11408 = vpack.c.b16 %v10800, %v10792
    %v11409 = vpack.c.b16 %v10801, %v10793
    %v11410 = vpack.c.b16 %v10802, %v10794
    %v11411 = vpack.c.b16 %v10811, %v10803
    %v11412 = vpack.c.b16 %v10812, %v10804
    %v11413 = vpack.c.b16 %v10813, %v10805
    %v11414 = vpack.c.b16 %v10814, %v10806
    %v11415 = vpack.c.b16 %v10815, %v10807
    %v11416 = vpack.c.b16 %v10816, %v10808
    %v11417 = vpack.c.b16 %v10817, %v10809
    %v11418 = vpack.c.b16 %v10818, %v10810
    %v11419 = vpack.c.b16 %v10827, %v10819
    %v11420 = vpack.c.b16 %v10828, %v10820
    %v11421 = vpack.c.b16 %v10829, %v10821
    %v11422 = vpack.c.b16 %v10830, %v10822
    %v11423 = vpack.c.b16 %v10831, %v10823
    %v11424 = vpack.c.b16 %v10832, %v10824
    %v11425 = vpack.c.b16 %v10833, %v10825
    %v11426 = vpack.c.b16 %v10834, %v10826
    %v11427 = vpack.c.b16 %v10843, %v10835
    %v11428 = vpack.c.b16 %v10844, %v10836
    %v11429 = vpack.c.b16 %v10845, %v10837
    %v11430 = vpack.c.b16 %v10846, %v10838
    %v11431 = vpack.c.b16 %v10847, %v10839
    %v11432 = vpack.c.b16 %v10848, %v10840
    %v11433 = vpack.c.b16 %v10849, %v10841
    %v11434 = vpack.c.b16 %v10850, %v10842
    %v11435 = vpack.c.b16 %v10859, %v10851
    %v11436 = vpack.c.b16 %v10860, %v10852
    %v11437 = vpack.c.b16 %v10861, %v10853
    %v11438 = vpack.c.b16 %v10862, %v10854
    %v11439 = vpack.c.b16 %v10863, %v10855
    %v11440 = vpack.c.b16 %v10864, %v10856
    %v11441 = vpack.c.b16 %v10865, %v10857
    %v11442 = vpack.c.b16 %v10866, %v10858
    %v11443 = vpack.c.b16 %v10875, %v10867
    %v11444 = vpack.c.b16 %v10876, %v10868
    %v11445 = vpack.c.b16 %v10877, %v10869
    %v11446 = vpack.c.b16 %v10878, %v10870
    %v11447 = vpack.c.b16 %v10879, %v10871
    %v11448 = vpack.c.b16 %v10880, %v10872
    %v11449 = vpack.c.b16 %v10881, %v10873
    %v11450 = vpack.c.b16 %v10882, %v10874
    %v11451 = vpack.c.b16 %v10891, %v10883
    %v11452 = vpack.c.b16 %v10892, %v10884
    %v11453 = vpack.c.b16 %v10893, %v10885
    %v11454 = vpack.c.b16 %v10894, %v10886
    %v11455 = vpack.c.b16 %v10895, %v10887
    %v11456 = vpack.c.b16 %v10896, %v10888
    %v11457 = vpack.c.b16 %v10897, %v10889
    %v11458 = vpack.c.b16 %v10898, %v10890
    %v11459 = vpack.c.b16 %v10907, %v10899
    %v11460 = vpack.c.b16 %v10908, %v10900
    %v11461 = vpack.c.b16 %v10909, %v10901
    %v11462 = vpack.c.b16 %v10910, %v10902
    %v11463 = vpack.c.b16 %v10911, %v10903
    %v11464 = vpack.c.b16 %v10912, %v10904
    %v11465 = vpack.c.b16 %v10913, %v10905
    %v11466 = vpack.c.b16 %v10914, %v10906
    %v11467 = vpack.c.b16 %v10923, %v10915
    %v11468 = vpack.c.b16 %v10924, %v10916
    %v11469 = vpack.c.b16 %v10925, %v10917
    %v11470 = vpack.c.b16 %v10926, %v10918
    %v11471 = vpack.c.b16 %v10927, %v10919
    %v11472 = vpack.c.b16 %v10928, %v10920
    %v11473 = vpack.c.b16 %v10929, %v10921
    %v11474 = vpack.c.b16 %v10930, %v10922
    %v11475 = vpack.c.b16 %v10939, %v10931
    %v11476 = vpack.c.b16 %v10940, %v10932
    %v11477 = vpack.c.b16 %v10941, %v10933
    %v11478 = vpack.c.b16 %v10942, %v10934
    %v11479 = vpack.c.b16 %v10943, %v10935
    %v11480 = vpack.c.b16 %v10944, %v10936
    %v11481 = vpack.c.b16 %v10945, %v10937
    %v11482 = vpack.c.b16 %v10946, %v10938
    %v11483 = vpack.c.b16 %v10955, %v10947
    %v11484 = vpack.c.b16 %v10956, %v10948
    %v11485 = vpack.c.b16 %v10957, %v10949
    %v11486 = vpack.c.b16 %v10958, %v10950
    %v11487 = vpack.c.b16 %v10959, %v10951
    %v11488 = vpack.c.b16 %v10960, %v10952
    %v11489 = vpack.c.b16 %v10961, %v10953
    %v11490 = vpack.c.b16 %v10962, %v10954
    %v11491 = vpack.c.b16 %v10971, %v10963
    %v11492 = vpack.c.b16 %v10972, %v10964
    %v11493 = vpack.c.b16 %v10973, %v10965
    %v11494 = vpack.c.b16 %v10974, %v10966
    %v11495 = vpack.c.b16 %v10975, %v10967
    %v11496 = vpack.c.b16 %v10976, %v10968
    %v11497 = vpack.c.b16 %v10977, %v10969
    %v11498 = vpack.c.b16 %v10978, %v10970
    %v11499 = vpack.c.b16 %v10987, %v10979
    %v11500 = vpack.c.b16 %v10988, %v10980
    %v11501 = vpack.c.b16 %v10989, %v10981
    %v11502 = vpack.c.b16 %v10990, %v10982
    %v11503 = vpack.c.b16 %v10991, %v10983
    %v11504 = vpack.c.b16 %v10992, %v10984
    %v11505 = vpack.c.b16 %v10993, %v10985
    %v11506 = vpack.c.b16 %v10994, %v10986
    %12019 = vmatprep.subr.bf16.mxu0 %v10996
    %12020 = vmatpush1.bf16.msra.mxu0 %v10995
    %12021 = vmatprep.subr.bf16.mxu0 %v11004
    %12022 = vmatpush1.bf16.msra.mxu0 %v11003
    %12023 = vmatprep.subr.bf16.mxu0 %v11012
    %12024 = vmatpush1.bf16.msra.mxu0 %v11011
    %12025 = vmatprep.subr.bf16.mxu0 %v11020
    %12026 = vmatpush1.bf16.msra.mxu0 %v11019
    %12027 = vmatprep.subr.bf16.mxu0 %v11028
    %12028 = vmatpush1.bf16.msra.mxu0 %v11027
    %12029 = vmatprep.subr.bf16.mxu0 %v11036
    %12030 = vmatpush1.bf16.msra.mxu0 %v11035
    %12031 = vmatprep.subr.bf16.mxu0 %v11044
    %12032 = vmatpush1.bf16.msra.mxu0 %v11043
    %12033 = vmatprep.subr.bf16.mxu0 %v11052
    %12034 = vmatpush1.bf16.msra.mxu0 %v11051
    %12035 = vmatprep.subr.bf16.mxu0 %v11060
    %12036 = vmatpush1.bf16.msra.mxu0 %v11059
    %12037 = vmatprep.subr.bf16.mxu0 %v11068
    %12038 = vmatpush1.bf16.msra.mxu0 %v11067
    %12039 = vmatprep.subr.bf16.mxu0 %v11076
    %12040 = vmatpush1.bf16.msra.mxu0 %v11075
    %12041 = vmatprep.subr.bf16.mxu0 %v11084
    %12042 = vmatpush1.bf16.msra.mxu0 %v11083
    %12043 = vmatprep.subr.bf16.mxu0 %v11092
    %12044 = vmatpush1.bf16.msra.mxu0 %v11091
    %12045 = vmatprep.subr.bf16.mxu0 %v11100
    %12046 = vmatpush1.bf16.msra.mxu0 %v11099
    %12047 = vmatprep.subr.bf16.mxu0 %v11108
    %12048 = vmatpush1.bf16.msra.mxu0 %v11107
    %12049 = vmatprep.subr.bf16.mxu0 %v11116
    %12050 = vmatpush1.bf16.msra.mxu0 %v11115
    %12051 = vmatprep.mubr.bf16.mxu0 %v8898
    %12052 = vmatmul.mubr.bf16.gmra.mrb[0].mxu0 %v8897
    %v12053 = vpop.f32.mrb[0].mxu0
    %v12054 = vadd.f32 %v9422, %v12053
    %v12055 = vpop.f32.mrb[0].mxu0
    %v12056 = vadd.f32 %v9426, %v12055
    %v12057 = vpop.f32.mrb[0].mxu0
    %v12058 = vpop.f32.mrb[0].mxu0
    %12059 = vdwg.mxu0
    %12060 = vmatprep.subr.bf16.mxu0 %v11124
    %12061 = vmatpush1.bf16.msra.mxu0 %v11123
    %12062 = vmatprep.subr.bf16.mxu0 %v11132
    %12063 = vmatpush1.bf16.msra.mxu0 %v11131
    %12064 = vmatprep.subr.bf16.mxu0 %v11140
    %12065 = vmatpush1.bf16.msra.mxu0 %v11139
    %12066 = vmatprep.subr.bf16.mxu0 %v11148
    %12067 = vmatpush1.bf16.msra.mxu0 %v11147
    %12068 = vmatprep.subr.bf16.mxu0 %v11156
    %12069 = vmatpush1.bf16.msra.mxu0 %v11155
    %12070 = vmatprep.subr.bf16.mxu0 %v11164
    %12071 = vmatpush1.bf16.msra.mxu0 %v11163
    %12072 = vmatprep.subr.bf16.mxu0 %v11172
    %12073 = vmatpush1.bf16.msra.mxu0 %v11171
    %12074 = vmatprep.subr.bf16.mxu0 %v11180
    %12075 = vmatpush1.bf16.msra.mxu0 %v11179
    %12076 = vmatprep.subr.bf16.mxu0 %v11188
    %12077 = vmatpush1.bf16.msra.mxu0 %v11187
    %12078 = vmatprep.subr.bf16.mxu0 %v11196
    %12079 = vmatpush1.bf16.msra.mxu0 %v11195
    %12080 = vmatprep.subr.bf16.mxu0 %v11204
    %12081 = vmatpush1.bf16.msra.mxu0 %v11203
    %12082 = vmatprep.subr.bf16.mxu0 %v11212
    %12083 = vmatpush1.bf16.msra.mxu0 %v11211
    %12084 = vmatprep.subr.bf16.mxu0 %v11220
    %12085 = vmatpush1.bf16.msra.mxu0 %v11219
    %12086 = vmatprep.subr.bf16.mxu0 %v11228
    %12087 = vmatpush1.bf16.msra.mxu0 %v11227
    %12088 = vmatprep.subr.bf16.mxu0 %v11236
    %12089 = vmatpush1.bf16.msra.mxu0 %v11235
    %12090 = vmatprep.subr.bf16.mxu0 %v11244
    %12091 = vmatpush1.bf16.msra.mxu0 %v11243
    %12092 = vmatprep.mubr.bf16.mxu0 %v8900
    %12093 = vmatmul.mubr.bf16.gmra.mrb[0].mxu0 %v8899
    %v12094 = vpop.f32.mrb[0].mxu0
    %v12095 = vadd.f32 %v12054, %v12094
    %v12096 = vpop.f32.mrb[0].mxu0
    %v12097 = vadd.f32 %v12056, %v12096
    %v12098 = vpop.f32.mrb[0].mxu0
    %v12099 = vpop.f32.mrb[0].mxu0
    %12100 = vdwg.mxu0
    %12101 = vmatprep.subr.bf16.mxu0 %v11252
    %12102 = vmatpush1.bf16.msra.mxu0 %v11251
    %12103 = vmatprep.subr.bf16.mxu0 %v11260
    %12104 = vmatpush1.bf16.msra.mxu0 %v11259
    %12105 = vmatprep.subr.bf16.mxu0 %v11268
    %12106 = vmatpush1.bf16.msra.mxu0 %v11267
    %12107 = vmatprep.subr.bf16.mxu0 %v11276
    %12108 = vmatpush1.bf16.msra.mxu0 %v11275
    %12109 = vmatprep.subr.bf16.mxu0 %v11284
    %12110 = vmatpush1.bf16.msra.mxu0 %v11283
    %12111 = vmatprep.subr.bf16.mxu0 %v11292
    %12112 = vmatpush1.bf16.msra.mxu0 %v11291
    %12113 = vmatprep.subr.bf16.mxu0 %v11300
    %12114 = vmatpush1.bf16.msra.mxu0 %v11299
    %12115 = vmatprep.subr.bf16.mxu0 %v11308
    %12116 = vmatpush1.bf16.msra.mxu0 %v11307
    %12117 = vmatprep.subr.bf16.mxu0 %v11316
    %12118 = vmatpush1.bf16.msra.mxu0 %v11315
    %12119 = vmatprep.subr.bf16.mxu0 %v11324
    %12120 = vmatpush1.bf16.msra.mxu0 %v11323
    %12121 = vmatprep.subr.bf16.mxu0 %v11332
    %12122 = vmatpush1.bf16.msra.mxu0 %v11331
    %12123 = vmatprep.subr.bf16.mxu0 %v11340
    %12124 = vmatpush1.bf16.msra.mxu0 %v11339
    %12125 = vmatprep.subr.bf16.mxu0 %v11348
    %12126 = vmatpush1.bf16.msra.mxu0 %v11347
    %12127 = vmatprep.subr.bf16.mxu0 %v11356
    %12128 = vmatpush1.bf16.msra.mxu0 %v11355
    %12129 = vmatprep.subr.bf16.mxu0 %v11364
    %12130 = vmatpush1.bf16.msra.mxu0 %v11363
    %12131 = vmatprep.subr.bf16.mxu0 %v11372
    %12132 = vmatpush1.bf16.msra.mxu0 %v11371
    %12133 = vmatprep.mubr.bf16.mxu0 %v8902
    %12134 = vmatmul.mubr.bf16.gmra.mrb[0].mxu0 %v8901
    %v12135 = vpop.f32.mrb[0].mxu0
    %v12136 = vadd.f32 %v12095, %v12135
    %v12137 = vpop.f32.mrb[0].mxu0
    %v12138 = vadd.f32 %v12097, %v12137
    %v12139 = vpop.f32.mrb[0].mxu0
    %v12140 = vpop.f32.mrb[0].mxu0
    %12141 = vdwg.mxu0
    %12142 = vmatprep.subr.bf16.mxu0 %v11380
    %12143 = vmatpush1.bf16.msra.mxu0 %v11379
    %12144 = vmatprep.subr.bf16.mxu0 %v11388
    %12145 = vmatpush1.bf16.msra.mxu0 %v11387
    %12146 = vmatprep.subr.bf16.mxu0 %v11396
    %12147 = vmatpush1.bf16.msra.mxu0 %v11395
    %12148 = vmatprep.subr.bf16.mxu0 %v11404
    %12149 = vmatpush1.bf16.msra.mxu0 %v11403
    %12150 = vmatprep.subr.bf16.mxu0 %v11412
    %12151 = vmatpush1.bf16.msra.mxu0 %v11411
    %12152 = vmatprep.subr.bf16.mxu0 %v11420
    %12153 = vmatpush1.bf16.msra.mxu0 %v11419
    %12154 = vmatprep.subr.bf16.mxu0 %v11428
    %12155 = vmatpush1.bf16.msra.mxu0 %v11427
    %12156 = vmatprep.subr.bf16.mxu0 %v11436
    %12157 = vmatpush1.bf16.msra.mxu0 %v11435
    %12158 = vmatprep.subr.bf16.mxu0 %v11444
    %12159 = vmatpush1.bf16.msra.mxu0 %v11443
    %12160 = vmatprep.subr.bf16.mxu0 %v11452
    %12161 = vmatpush1.bf16.msra.mxu0 %v11451
    %12162 = vmatprep.subr.bf16.mxu0 %v11460
    %12163 = vmatpush1.bf16.msra.mxu0 %v11459
    %12164 = vmatprep.subr.bf16.mxu0 %v11468
    %12165 = vmatpush1.bf16.msra.mxu0 %v11467
    %12166 = vmatprep.subr.bf16.mxu0 %v11476
    %12167 = vmatpush1.bf16.msra.mxu0 %v11475
    %12168 = vmatprep.subr.bf16.mxu0 %v11484
    %12169 = vmatpush1.bf16.msra.mxu0 %v11483
    %12170 = vmatprep.subr.bf16.mxu0 %v11492
    %12171 = vmatpush1.bf16.msra.mxu0 %v11491
    %12172 = vmatprep.subr.bf16.mxu0 %v11500
    %12173 = vmatpush1.bf16.msra.mxu0 %v11499
    %12174 = vmatprep.mubr.bf16.mxu0 %v8904
    %12175 = vmatmul.mubr.bf16.gmra.mrb[0].mxu0 %v8903
    %v12176 = vpop.f32.mrb[0].mxu0
    %v12177 = vadd.f32 %v12136, %v12176
    %v12178 = vpop.f32.mrb[0].mxu0
    %v12179 = vadd.f32 %v12138, %v12178
    %v12180 = vpop.f32.mrb[0].mxu0
    %v12181 = vpop.f32.mrb[0].mxu0
    %12182 = vdwg.mxu0
    %12183 = vmatprep.subr.bf16.mxu0 %v10998
    %12184 = vmatpush1.bf16.msra.mxu0 %v10997
    %12185 = vmatprep.subr.bf16.mxu0 %v11006
    %12186 = vmatpush1.bf16.msra.mxu0 %v11005
    %12187 = vmatprep.subr.bf16.mxu0 %v11014
    %12188 = vmatpush1.bf16.msra.mxu0 %v11013
    %12189 = vmatprep.subr.bf16.mxu0 %v11022
    %12190 = vmatpush1.bf16.msra.mxu0 %v11021
    %12191 = vmatprep.subr.bf16.mxu0 %v11030
    %12192 = vmatpush1.bf16.msra.mxu0 %v11029
    %12193 = vmatprep.subr.bf16.mxu0 %v11038
    %12194 = vmatpush1.bf16.msra.mxu0 %v11037
    %12195 = vmatprep.subr.bf16.mxu0 %v11046
    %12196 = vmatpush1.bf16.msra.mxu0 %v11045
    %12197 = vmatprep.subr.bf16.mxu0 %v11054
    %12198 = vmatpush1.bf16.msra.mxu0 %v11053
    %12199 = vmatprep.subr.bf16.mxu0 %v11062
    %12200 = vmatpush1.bf16.msra.mxu0 %v11061
    %12201 = vmatprep.subr.bf16.mxu0 %v11070
    %12202 = vmatpush1.bf16.msra.mxu0 %v11069
    %12203 = vmatprep.subr.bf16.mxu0 %v11078
    %12204 = vmatpush1.bf16.msra.mxu0 %v11077
    %12205 = vmatprep.subr.bf16.mxu0 %v11086
    %12206 = vmatpush1.bf16.msra.mxu0 %v11085
    %12207 = vmatprep.subr.bf16.mxu0 %v11094
    %12208 = vmatpush1.bf16.msra.mxu0 %v11093
    %12209 = vmatprep.subr.bf16.mxu0 %v11102
    %12210 = vmatpush1.bf16.msra.mxu0 %v11101
    %12211 = vmatprep.subr.bf16.mxu0 %v11110
    %12212 = vmatpush1.bf16.msra.mxu0 %v11109
    %12213 = vmatprep.subr.bf16.mxu0 %v11118
    %12214 = vmatpush1.bf16.msra.mxu0 %v11117
    %12215 = vmatprep.mubr.bf16.mxu0 %v8898
    %12216 = vmatmul.mubr.bf16.gmra.mrb[0].mxu0 %v8897
    %v12217 = vpop.f32.mrb[0].mxu0
    %v12218 = vadd.f32 %v9430, %v12217
    %v12219 = vpop.f32.mrb[0].mxu0
    %v12220 = vadd.f32 %v9434, %v12219
    %v12221 = vpop.f32.mrb[0].mxu0
    %v12222 = vpop.f32.mrb[0].mxu0
    %12223 = vdwg.mxu0
    %12224 = vmatprep.subr.bf16.mxu0 %v11126
    %12225 = vmatpush1.bf16.msra.mxu0 %v11125
    %12226 = vmatprep.subr.bf16.mxu0 %v11134
    %12227 = vmatpush1.bf16.msra.mxu0 %v11133
    %12228 = vmatprep.subr.bf16.mxu0 %v11142
    %12229 = vmatpush1.bf16.msra.mxu0 %v11141
    %12230 = vmatprep.subr.bf16.mxu0 %v11150
    %12231 = vmatpush1.bf16.msra.mxu0 %v11149
    %12232 = vmatprep.subr.bf16.mxu0 %v11158
    %12233 = vmatpush1.bf16.msra.mxu0 %v11157
    %12234 = vmatprep.subr.bf16.mxu0 %v11166
    %12235 = vmatpush1.bf16.msra.mxu0 %v11165
    %12236 = vmatprep.subr.bf16.mxu0 %v11174
    %12237 = vmatpush1.bf16.msra.mxu0 %v11173
    %12238 = vmatprep.subr.bf16.mxu0 %v11182
    %12239 = vmatpush1.bf16.msra.mxu0 %v11181
    %12240 = vmatprep.subr.bf16.mxu0 %v11190
    %12241 = vmatpush1.bf16.msra.mxu0 %v11189
    %12242 = vmatprep.subr.bf16.mxu0 %v11198
    %12243 = vmatpush1.bf16.msra.mxu0 %v11197
    %12244 = vmatprep.subr.bf16.mxu0 %v11206
    %12245 = vmatpush1.bf16.msra.mxu0 %v11205
    %12246 = vmatprep.subr.bf16.mxu0 %v11214
    %12247 = vmatpush1.bf16.msra.mxu0 %v11213
    %12248 = vmatprep.subr.bf16.mxu0 %v11222
    %12249 = vmatpush1.bf16.msra.mxu0 %v11221
    %12250 = vmatprep.subr.bf16.mxu0 %v11230
    %12251 = vmatpush1.bf16.msra.mxu0 %v11229
    %12252 = vmatprep.subr.bf16.mxu0 %v11238
    %12253 = vmatpush1.bf16.msra.mxu0 %v11237
    %12254 = vmatprep.subr.bf16.mxu0 %v11246
    %12255 = vmatpush1.bf16.msra.mxu0 %v11245
    %12256 = vmatprep.mubr.bf16.mxu0 %v8900
    %12257 = vmatmul.mubr.bf16.gmra.mrb[0].mxu0 %v8899
    %v12258 = vpop.f32.mrb[0].mxu0
    %v12259 = vadd.f32 %v12218, %v12258
    %v12260 = vpop.f32.mrb[0].mxu0
    %v12261 = vadd.f32 %v12220, %v12260
    %v12262 = vpop.f32.mrb[0].mxu0
    %v12263 = vpop.f32.mrb[0].mxu0
    %12264 = vdwg.mxu0
    %12265 = vmatprep.subr.bf16.mxu0 %v11254
    %12266 = vmatpush1.bf16.msra.mxu0 %v11253
    %12267 = vmatprep.subr.bf16.mxu0 %v11262
    %12268 = vmatpush1.bf16.msra.mxu0 %v11261
    %12269 = vmatprep.subr.bf16.mxu0 %v11270
    %12270 = vmatpush1.bf16.msra.mxu0 %v11269
    %12271 = vmatprep.subr.bf16.mxu0 %v11278
    %12272 = vmatpush1.bf16.msra.mxu0 %v11277
    %12273 = vmatprep.subr.bf16.mxu0 %v11286
    %12274 = vmatpush1.bf16.msra.mxu0 %v11285
    %12275 = vmatprep.subr.bf16.mxu0 %v11294
    %12276 = vmatpush1.bf16.msra.mxu0 %v11293
    %12277 = vmatprep.subr.bf16.mxu0 %v11302
    %12278 = vmatpush1.bf16.msra.mxu0 %v11301
    %12279 = vmatprep.subr.bf16.mxu0 %v11310
    %12280 = vmatpush1.bf16.msra.mxu0 %v11309
    %12281 = vmatprep.subr.bf16.mxu0 %v11318
    %12282 = vmatpush1.bf16.msra.mxu0 %v11317
    %12283 = vmatprep.subr.bf16.mxu0 %v11326
    %12284 = vmatpush1.bf16.msra.mxu0 %v11325
    %12285 = vmatprep.subr.bf16.mxu0 %v11334
    %12286 = vmatpush1.bf16.msra.mxu0 %v11333
    %12287 = vmatprep.subr.bf16.mxu0 %v11342
    %12288 = vmatpush1.bf16.msra.mxu0 %v11341
    %12289 = vmatprep.subr.bf16.mxu0 %v11350
    %12290 = vmatpush1.bf16.msra.mxu0 %v11349
    %12291 = vmatprep.subr.bf16.mxu0 %v11358
    %12292 = vmatpush1.bf16.msra.mxu0 %v11357
    %12293 = vmatprep.subr.bf16.mxu0 %v11366
    %12294 = vmatpush1.bf16.msra.mxu0 %v11365
    %12295 = vmatprep.subr.bf16.mxu0 %v11374
    %12296 = vmatpush1.bf16.msra.mxu0 %v11373
    %12297 = vmatprep.mubr.bf16.mxu0 %v8902
    %12298 = vmatmul.mubr.bf16.gmra.mrb[0].mxu0 %v8901
    %v12299 = vpop.f32.mrb[0].mxu0
    %v12300 = vadd.f32 %v12259, %v12299
    %v12301 = vpop.f32.mrb[0].mxu0
    %v12302 = vadd.f32 %v12261, %v12301
    %v12303 = vpop.f32.mrb[0].mxu0
    %v12304 = vpop.f32.mrb[0].mxu0
    %12305 = vdwg.mxu0
    %12306 = vmatprep.subr.bf16.mxu0 %v11382
    %12307 = vmatpush1.bf16.msra.mxu0 %v11381
    %12308 = vmatprep.subr.bf16.mxu0 %v11390
    %12309 = vmatpush1.bf16.msra.mxu0 %v11389
    %12310 = vmatprep.subr.bf16.mxu0 %v11398
    %12311 = vmatpush1.bf16.msra.mxu0 %v11397
    %12312 = vmatprep.subr.bf16.mxu0 %v11406
    %12313 = vmatpush1.bf16.msra.mxu0 %v11405
    %12314 = vmatprep.subr.bf16.mxu0 %v11414
    %12315 = vmatpush1.bf16.msra.mxu0 %v11413
    %12316 = vmatprep.subr.bf16.mxu0 %v11422
    %12317 = vmatpush1.bf16.msra.mxu0 %v11421
    %12318 = vmatprep.subr.bf16.mxu0 %v11430
    %12319 = vmatpush1.bf16.msra.mxu0 %v11429
    %12320 = vmatprep.subr.bf16.mxu0 %v11438
    %12321 = vmatpush1.bf16.msra.mxu0 %v11437
    %12322 = vmatprep.subr.bf16.mxu0 %v11446
    %12323 = vmatpush1.bf16.msra.mxu0 %v11445
    %12324 = vmatprep.subr.bf16.mxu0 %v11454
    %12325 = vmatpush1.bf16.msra.mxu0 %v11453
    %12326 = vmatprep.subr.bf16.mxu0 %v11462
    %12327 = vmatpush1.bf16.msra.mxu0 %v11461
    %12328 = vmatprep.subr.bf16.mxu0 %v11470
    %12329 = vmatpush1.bf16.msra.mxu0 %v11469
    %12330 = vmatprep.subr.bf16.mxu0 %v11478
    %12331 = vmatpush1.bf16.msra.mxu0 %v11477
    %12332 = vmatprep.subr.bf16.mxu0 %v11486
    %12333 = vmatpush1.bf16.msra.mxu0 %v11485
    %12334 = vmatprep.subr.bf16.mxu0 %v11494
    %12335 = vmatpush1.bf16.msra.mxu0 %v11493
    %12336 = vmatprep.subr.bf16.mxu0 %v11502
    %12337 = vmatpush1.bf16.msra.mxu0 %v11501
    %12338 = vmatprep.mubr.bf16.mxu0 %v8904
    %12339 = vmatmul.mubr.bf16.gmra.mrb[0].mxu0 %v8903
    %v12340 = vpop.f32.mrb[0].mxu0
    %v12341 = vadd.f32 %v12300, %v12340
    %v12342 = vpop.f32.mrb[0].mxu0
    %v12343 = vadd.f32 %v12302, %v12342
    %v12344 = vpop.f32.mrb[0].mxu0
    %v12345 = vpop.f32.mrb[0].mxu0
    %12346 = vdwg.mxu0
    %12347 = vmatprep.subr.bf16.mxu0 %v11000
    %12348 = vmatpush1.bf16.msra.mxu0 %v10999
    %12349 = vmatprep.subr.bf16.mxu0 %v11008
    %12350 = vmatpush1.bf16.msra.mxu0 %v11007
    %12351 = vmatprep.subr.bf16.mxu0 %v11016
    %12352 = vmatpush1.bf16.msra.mxu0 %v11015
    %12353 = vmatprep.subr.bf16.mxu0 %v11024
    %12354 = vmatpush1.bf16.msra.mxu0 %v11023
    %12355 = vmatprep.subr.bf16.mxu0 %v11032
    %12356 = vmatpush1.bf16.msra.mxu0 %v11031
    %12357 = vmatprep.subr.bf16.mxu0 %v11040
    %12358 = vmatpush1.bf16.msra.mxu0 %v11039
    %12359 = vmatprep.subr.bf16.mxu0 %v11048
    %12360 = vmatpush1.bf16.msra.mxu0 %v11047
    %12361 = vmatprep.subr.bf16.mxu0 %v11056
    %12362 = vmatpush1.bf16.msra.mxu0 %v11055
    %12363 = vmatprep.subr.bf16.mxu0 %v11064
    %12364 = vmatpush1.bf16.msra.mxu0 %v11063
    %12365 = vmatprep.subr.bf16.mxu0 %v11072
    %12366 = vmatpush1.bf16.msra.mxu0 %v11071
    %12367 = vmatprep.subr.bf16.mxu0 %v11080
    %12368 = vmatpush1.bf16.msra.mxu0 %v11079
    %12369 = vmatprep.subr.bf16.mxu0 %v11088
    %12370 = vmatpush1.bf16.msra.mxu0 %v11087
    %12371 = vmatprep.subr.bf16.mxu0 %v11096
    %12372 = vmatpush1.bf16.msra.mxu0 %v11095
    %12373 = vmatprep.subr.bf16.mxu0 %v11104
    %12374 = vmatpush1.bf16.msra.mxu0 %v11103
    %12375 = vmatprep.subr.bf16.mxu0 %v11112
    %12376 = vmatpush1.bf16.msra.mxu0 %v11111
    %12377 = vmatprep.subr.bf16.mxu0 %v11120
    %12378 = vmatpush1.bf16.msra.mxu0 %v11119
    %12379 = vmatprep.mubr.bf16.mxu0 %v8898
    %12380 = vmatmul.mubr.bf16.gmra.mrb[0].mxu0 %v8897
    %v12381 = vpop.f32.mrb[0].mxu0
    %v12382 = vadd.f32 %v9438, %v12381
    %v12383 = vpop.f32.mrb[0].mxu0
    %v12384 = vadd.f32 %v9442, %v12383
    %v12385 = vpop.f32.mrb[0].mxu0
    %v12386 = vpop.f32.mrb[0].mxu0
    %12387 = vdwg.mxu0
    %12388 = vmatprep.subr.bf16.mxu0 %v11128
    %12389 = vmatpush1.bf16.msra.mxu0 %v11127
    %12390 = vmatprep.subr.bf16.mxu0 %v11136
    %12391 = vmatpush1.bf16.msra.mxu0 %v11135
    %12392 = vmatprep.subr.bf16.mxu0 %v11144
    %12393 = vmatpush1.bf16.msra.mxu0 %v11143
    %12394 = vmatprep.subr.bf16.mxu0 %v11152
    %12395 = vmatpush1.bf16.msra.mxu0 %v11151
    %12396 = vmatprep.subr.bf16.mxu0 %v11160
    %12397 = vmatpush1.bf16.msra.mxu0 %v11159
    %12398 = vmatprep.subr.bf16.mxu0 %v11168
    %12399 = vmatpush1.bf16.msra.mxu0 %v11167
    %12400 = vmatprep.subr.bf16.mxu0 %v11176
    %12401 = vmatpush1.bf16.msra.mxu0 %v11175
    %12402 = vmatprep.subr.bf16.mxu0 %v11184
    %12403 = vmatpush1.bf16.msra.mxu0 %v11183
    %12404 = vmatprep.subr.bf16.mxu0 %v11192
    %12405 = vmatpush1.bf16.msra.mxu0 %v11191
    %12406 = vmatprep.subr.bf16.mxu0 %v11200
    %12407 = vmatpush1.bf16.msra.mxu0 %v11199
    %12408 = vmatprep.subr.bf16.mxu0 %v11208
    %12409 = vmatpush1.bf16.msra.mxu0 %v11207
    %12410 = vmatprep.subr.bf16.mxu0 %v11216
    %12411 = vmatpush1.bf16.msra.mxu0 %v11215
    %12412 = vmatprep.subr.bf16.mxu0 %v11224
    %12413 = vmatpush1.bf16.msra.mxu0 %v11223
    %12414 = vmatprep.subr.bf16.mxu0 %v11232
    %12415 = vmatpush1.bf16.msra.mxu0 %v11231
    %12416 = vmatprep.subr.bf16.mxu0 %v11240
    %12417 = vmatpush1.bf16.msra.mxu0 %v11239
    %12418 = vmatprep.subr.bf16.mxu0 %v11248
    %12419 = vmatpush1.bf16.msra.mxu0 %v11247
    %12420 = vmatprep.mubr.bf16.mxu0 %v8900
    %12421 = vmatmul.mubr.bf16.gmra.mrb[0].mxu0 %v8899
    %v12422 = vpop.f32.mrb[0].mxu0
    %v12423 = vadd.f32 %v12382, %v12422
    %v12424 = vpop.f32.mrb[0].mxu0
    %v12425 = vadd.f32 %v12384, %v12424
    %v12426 = vpop.f32.mrb[0].mxu0
    %v12427 = vpop.f32.mrb[0].mxu0
    %12428 = vdwg.mxu0
    %12429 = vmatprep.subr.bf16.mxu0 %v11256
    %12430 = vmatpush1.bf16.msra.mxu0 %v11255
    %12431 = vmatprep.subr.bf16.mxu0 %v11264
    %12432 = vmatpush1.bf16.msra.mxu0 %v11263
    %12433 = vmatprep.subr.bf16.mxu0 %v11272
    %12434 = vmatpush1.bf16.msra.mxu0 %v11271
    %12435 = vmatprep.subr.bf16.mxu0 %v11280
    %12436 = vmatpush1.bf16.msra.mxu0 %v11279
    %12437 = vmatprep.subr.bf16.mxu0 %v11288
    %12438 = vmatpush1.bf16.msra.mxu0 %v11287
    %12439 = vmatprep.subr.bf16.mxu0 %v11296
    %12440 = vmatpush1.bf16.msra.mxu0 %v11295
    %12441 = vmatprep.subr.bf16.mxu0 %v11304
    %12442 = vmatpush1.bf16.msra.mxu0 %v11303
    %12443 = vmatprep.subr.bf16.mxu0 %v11312
    %12444 = vmatpush1.bf16.msra.mxu0 %v11311
    %12445 = vmatprep.subr.bf16.mxu0 %v11320
    %12446 = vmatpush1.bf16.msra.mxu0 %v11319
    %12447 = vmatprep.subr.bf16.mxu0 %v11328
    %12448 = vmatpush1.bf16.msra.mxu0 %v11327
    %12449 = vmatprep.subr.bf16.mxu0 %v11336
    %12450 = vmatpush1.bf16.msra.mxu0 %v11335
    %12451 = vmatprep.subr.bf16.mxu0 %v11344
    %12452 = vmatpush1.bf16.msra.mxu0 %v11343
    %12453 = vmatprep.subr.bf16.mxu0 %v11352
    %12454 = vmatpush1.bf16.msra.mxu0 %v11351
    %12455 = vmatprep.subr.bf16.mxu0 %v11360
    %12456 = vmatpush1.bf16.msra.mxu0 %v11359
    %12457 = vmatprep.subr.bf16.mxu0 %v11368
    %12458 = vmatpush1.bf16.msra.mxu0 %v11367
    %12459 = vmatprep.subr.bf16.mxu0 %v11376
    %12460 = vmatpush1.bf16.msra.mxu0 %v11375
    %12461 = vmatprep.mubr.bf16.mxu0 %v8902
    %12462 = vmatmul.mubr.bf16.gmra.mrb[0].mxu0 %v8901
    %v12463 = vpop.f32.mrb[0].mxu0
    %v12464 = vadd.f32 %v12423, %v12463
    %v12465 = vpop.f32.mrb[0].mxu0
    %v12466 = vadd.f32 %v12425, %v12465
    %v12467 = vpop.f32.mrb[0].mxu0
    %v12468 = vpop.f32.mrb[0].mxu0
    %12469 = vdwg.mxu0
    %12470 = vmatprep.subr.bf16.mxu0 %v11384
    %12471 = vmatpush1.bf16.msra.mxu0 %v11383
    %12472 = vmatprep.subr.bf16.mxu0 %v11392
    %12473 = vmatpush1.bf16.msra.mxu0 %v11391
    %12474 = vmatprep.subr.bf16.mxu0 %v11400
    %12475 = vmatpush1.bf16.msra.mxu0 %v11399
    %12476 = vmatprep.subr.bf16.mxu0 %v11408
    %12477 = vmatpush1.bf16.msra.mxu0 %v11407
    %12478 = vmatprep.subr.bf16.mxu0 %v11416
    %12479 = vmatpush1.bf16.msra.mxu0 %v11415
    %12480 = vmatprep.subr.bf16.mxu0 %v11424
    %12481 = vmatpush1.bf16.msra.mxu0 %v11423
    %12482 = vmatprep.subr.bf16.mxu0 %v11432
    %12483 = vmatpush1.bf16.msra.mxu0 %v11431
    %12484 = vmatprep.subr.bf16.mxu0 %v11440
    %12485 = vmatpush1.bf16.msra.mxu0 %v11439
    %12486 = vmatprep.subr.bf16.mxu0 %v11448
    %12487 = vmatpush1.bf16.msra.mxu0 %v11447
    %12488 = vmatprep.subr.bf16.mxu0 %v11456
    %12489 = vmatpush1.bf16.msra.mxu0 %v11455
    %12490 = vmatprep.subr.bf16.mxu0 %v11464
    %12491 = vmatpush1.bf16.msra.mxu0 %v11463
    %12492 = vmatprep.subr.bf16.mxu0 %v11472
    %12493 = vmatpush1.bf16.msra.mxu0 %v11471
    %12494 = vmatprep.subr.bf16.mxu0 %v11480
    %12495 = vmatpush1.bf16.msra.mxu0 %v11479
    %12496 = vmatprep.subr.bf16.mxu0 %v11488
    %12497 = vmatpush1.bf16.msra.mxu0 %v11487
    %12498 = vmatprep.subr.bf16.mxu0 %v11496
    %12499 = vmatpush1.bf16.msra.mxu0 %v11495
    %12500 = vmatprep.subr.bf16.mxu0 %v11504
    %12501 = vmatpush1.bf16.msra.mxu0 %v11503
    %12502 = vmatprep.mubr.bf16.mxu0 %v8904
    %12503 = vmatmul.mubr.bf16.gmra.mrb[0].mxu0 %v8903
    %v12504 = vpop.f32.mrb[0].mxu0
    %v12505 = vadd.f32 %v12464, %v12504
    %v12506 = vpop.f32.mrb[0].mxu0
    %v12507 = vadd.f32 %v12466, %v12506
    %v12508 = vpop.f32.mrb[0].mxu0
    %v12509 = vpop.f32.mrb[0].mxu0
    %12510 = vdwg.mxu0
    %12511 = vmatprep.subr.bf16.mxu0 %v11002
    %12512 = vmatpush1.bf16.msra.mxu0 %v11001
    %12513 = vmatprep.subr.bf16.mxu0 %v11010
    %12514 = vmatpush1.bf16.msra.mxu0 %v11009
    %12515 = vmatprep.subr.bf16.mxu0 %v11018
    %12516 = vmatpush1.bf16.msra.mxu0 %v11017
    %12517 = vmatprep.subr.bf16.mxu0 %v11026
    %12518 = vmatpush1.bf16.msra.mxu0 %v11025
    %12519 = vmatprep.subr.bf16.mxu0 %v11034
    %12520 = vmatpush1.bf16.msra.mxu0 %v11033
    %12521 = vmatprep.subr.bf16.mxu0 %v11042
    %12522 = vmatpush1.bf16.msra.mxu0 %v11041
    %12523 = vmatprep.subr.bf16.mxu0 %v11050
    %12524 = vmatpush1.bf16.msra.mxu0 %v11049
    %12525 = vmatprep.subr.bf16.mxu0 %v11058
    %12526 = vmatpush1.bf16.msra.mxu0 %v11057
    %12527 = vmatprep.subr.bf16.mxu0 %v11066
    %12528 = vmatpush1.bf16.msra.mxu0 %v11065
    %12529 = vmatprep.subr.bf16.mxu0 %v11074
    %12530 = vmatpush1.bf16.msra.mxu0 %v11073
    %12531 = vmatprep.subr.bf16.mxu0 %v11082
    %12532 = vmatpush1.bf16.msra.mxu0 %v11081
    %12533 = vmatprep.subr.bf16.mxu0 %v11090
    %12534 = vmatpush1.bf16.msra.mxu0 %v11089
    %12535 = vmatprep.subr.bf16.mxu0 %v11098
    %12536 = vmatpush1.bf16.msra.mxu0 %v11097
    %12537 = vmatprep.subr.bf16.mxu0 %v11106
    %12538 = vmatpush1.bf16.msra.mxu0 %v11105
    %12539 = vmatprep.subr.bf16.mxu0 %v11114
    %12540 = vmatpush1.bf16.msra.mxu0 %v11113
    %12541 = vmatprep.subr.bf16.mxu0 %v11122
    %12542 = vmatpush1.bf16.msra.mxu0 %v11121
    %12543 = vmatprep.mubr.bf16.mxu0 %v8898
    %12544 = vmatmul.mubr.bf16.gmra.mrb[0].mxu0 %v8897
    %v12545 = vpop.f32.mrb[0].mxu0
    %v12546 = vadd.f32 %v9446, %v12545
    %v12547 = vpop.f32.mrb[0].mxu0
    %v12548 = vadd.f32 %v9450, %v12547
    %v12549 = vpop.f32.mrb[0].mxu0
    %v12550 = vpop.f32.mrb[0].mxu0
    %12551 = vdwg.mxu0
    %12552 = vmatprep.subr.bf16.mxu0 %v11130
    %12553 = vmatpush1.bf16.msra.mxu0 %v11129
    %12554 = vmatprep.subr.bf16.mxu0 %v11138
    %12555 = vmatpush1.bf16.msra.mxu0 %v11137
    %12556 = vmatprep.subr.bf16.mxu0 %v11146
    %12557 = vmatpush1.bf16.msra.mxu0 %v11145
    %12558 = vmatprep.subr.bf16.mxu0 %v11154
    %12559 = vmatpush1.bf16.msra.mxu0 %v11153
    %12560 = vmatprep.subr.bf16.mxu0 %v11162
    %12561 = vmatpush1.bf16.msra.mxu0 %v11161
    %12562 = vmatprep.subr.bf16.mxu0 %v11170
    %12563 = vmatpush1.bf16.msra.mxu0 %v11169
    %12564 = vmatprep.subr.bf16.mxu0 %v11178
    %12565 = vmatpush1.bf16.msra.mxu0 %v11177
    %12566 = vmatprep.subr.bf16.mxu0 %v11186
    %12567 = vmatpush1.bf16.msra.mxu0 %v11185
    %12568 = vmatprep.subr.bf16.mxu0 %v11194
    %12569 = vmatpush1.bf16.msra.mxu0 %v11193
    %12570 = vmatprep.subr.bf16.mxu0 %v11202
    %12571 = vmatpush1.bf16.msra.mxu0 %v11201
    %12572 = vmatprep.subr.bf16.mxu0 %v11210
    %12573 = vmatpush1.bf16.msra.mxu0 %v11209
    %12574 = vmatprep.subr.bf16.mxu0 %v11218
    %12575 = vmatpush1.bf16.msra.mxu0 %v11217
    %12576 = vmatprep.subr.bf16.mxu0 %v11226
    %12577 = vmatpush1.bf16.msra.mxu0 %v11225
    %12578 = vmatprep.subr.bf16.mxu0 %v11234
    %12579 = vmatpush1.bf16.msra.mxu0 %v11233
    %12580 = vmatprep.subr.bf16.mxu0 %v11242
    %12581 = vmatpush1.bf16.msra.mxu0 %v11241
    %12582 = vmatprep.subr.bf16.mxu0 %v11250
    %12583 = vmatpush1.bf16.msra.mxu0 %v11249
    %12584 = vmatprep.mubr.bf16.mxu0 %v8900
    %12585 = vmatmul.mubr.bf16.gmra.mrb[0].mxu0 %v8899
    %v12586 = vpop.f32.mrb[0].mxu0
    %v12587 = vadd.f32 %v12546, %v12586
    %v12588 = vpop.f32.mrb[0].mxu0
    %v12589 = vadd.f32 %v12548, %v12588
    %v12590 = vpop.f32.mrb[0].mxu0
    %v12591 = vpop.f32.mrb[0].mxu0
    %12592 = vdwg.mxu0
    %12593 = vmatprep.subr.bf16.mxu0 %v11258
    %12594 = vmatpush1.bf16.msra.mxu0 %v11257
    %12595 = vmatprep.subr.bf16.mxu0 %v11266
    %12596 = vmatpush1.bf16.msra.mxu0 %v11265
    %12597 = vmatprep.subr.bf16.mxu0 %v11274
    %12598 = vmatpush1.bf16.msra.mxu0 %v11273
    %12599 = vmatprep.subr.bf16.mxu0 %v11282
    %12600 = vmatpush1.bf16.msra.mxu0 %v11281
    %12601 = vmatprep.subr.bf16.mxu0 %v11290
    %12602 = vmatpush1.bf16.msra.mxu0 %v11289
    %12603 = vmatprep.subr.bf16.mxu0 %v11298
    %12604 = vmatpush1.bf16.msra.mxu0 %v11297
    %12605 = vmatprep.subr.bf16.mxu0 %v11306
    %12606 = vmatpush1.bf16.msra.mxu0 %v11305
    %12607 = vmatprep.subr.bf16.mxu0 %v11314
    %12608 = vmatpush1.bf16.msra.mxu0 %v11313
    %12609 = vmatprep.subr.bf16.mxu0 %v11322
    %12610 = vmatpush1.bf16.msra.mxu0 %v11321
    %12611 = vmatprep.subr.bf16.mxu0 %v11330
    %12612 = vmatpush1.bf16.msra.mxu0 %v11329
    %12613 = vmatprep.subr.bf16.mxu0 %v11338
    %12614 = vmatpush1.bf16.msra.mxu0 %v11337
    %12615 = vmatprep.subr.bf16.mxu0 %v11346
    %12616 = vmatpush1.bf16.msra.mxu0 %v11345
    %12617 = vmatprep.subr.bf16.mxu0 %v11354
    %12618 = vmatpush1.bf16.msra.mxu0 %v11353
    %12619 = vmatprep.subr.bf16.mxu0 %v11362
    %12620 = vmatpush1.bf16.msra.mxu0 %v11361
    %12621 = vmatprep.subr.bf16.mxu0 %v11370
    %12622 = vmatpush1.bf16.msra.mxu0 %v11369
    %12623 = vmatprep.subr.bf16.mxu0 %v11378
    %12624 = vmatpush1.bf16.msra.mxu0 %v11377
    %12625 = vmatprep.mubr.bf16.mxu0 %v8902
    %12626 = vmatmul.mubr.bf16.gmra.mrb[0].mxu0 %v8901
    %v12627 = vpop.f32.mrb[0].mxu0
    %v12628 = vadd.f32 %v12587, %v12627
    %v12629 = vpop.f32.mrb[0].mxu0
    %v12630 = vadd.f32 %v12589, %v12629
    %v12631 = vpop.f32.mrb[0].mxu0
    %v12632 = vpop.f32.mrb[0].mxu0
    %12633 = vdwg.mxu0
    %12634 = vmatprep.subr.bf16.mxu0 %v11386
    %12635 = vmatpush1.bf16.msra.mxu0 %v11385
    %12636 = vmatprep.subr.bf16.mxu0 %v11394
    %12637 = vmatpush1.bf16.msra.mxu0 %v11393
    %12638 = vmatprep.subr.bf16.mxu0 %v11402
    %12639 = vmatpush1.bf16.msra.mxu0 %v11401
    %12640 = vmatprep.subr.bf16.mxu0 %v11410
    %12641 = vmatpush1.bf16.msra.mxu0 %v11409
    %12642 = vmatprep.subr.bf16.mxu0 %v11418
    %12643 = vmatpush1.bf16.msra.mxu0 %v11417
    %12644 = vmatprep.subr.bf16.mxu0 %v11426
    %12645 = vmatpush1.bf16.msra.mxu0 %v11425
    %12646 = vmatprep.subr.bf16.mxu0 %v11434
    %12647 = vmatpush1.bf16.msra.mxu0 %v11433
    %12648 = vmatprep.subr.bf16.mxu0 %v11442
    %12649 = vmatpush1.bf16.msra.mxu0 %v11441
    %12650 = vmatprep.subr.bf16.mxu0 %v11450
    %12651 = vmatpush1.bf16.msra.mxu0 %v11449
    %12652 = vmatprep.subr.bf16.mxu0 %v11458
    %12653 = vmatpush1.bf16.msra.mxu0 %v11457
    %12654 = vmatprep.subr.bf16.mxu0 %v11466
    %12655 = vmatpush1.bf16.msra.mxu0 %v11465
    %12656 = vmatprep.subr.bf16.mxu0 %v11474
    %12657 = vmatpush1.bf16.msra.mxu0 %v11473
    %12658 = vmatprep.subr.bf16.mxu0 %v11482
    %12659 = vmatpush1.bf16.msra.mxu0 %v11481
    %12660 = vmatprep.subr.bf16.mxu0 %v11490
    %12661 = vmatpush1.bf16.msra.mxu0 %v11489
    %12662 = vmatprep.subr.bf16.mxu0 %v11498
    %12663 = vmatpush1.bf16.msra.mxu0 %v11497
    %12664 = vmatprep.subr.bf16.mxu0 %v11506
    %12665 = vmatpush1.bf16.msra.mxu0 %v11505
    %12666 = vmatprep.mubr.bf16.mxu0 %v8904
    %12667 = vmatmul.mubr.bf16.gmra.mrb[0].mxu0 %v8903
    %v12668 = vpop.f32.mrb[0].mxu0
    %v12669 = vadd.f32 %v12628, %v12668
    %v12670 = vpop.f32.mrb[0].mxu0
    %v12671 = vadd.f32 %v12630, %v12670
    %v12672 = vpop.f32.mrb[0].mxu0
    %v12673 = vpop.f32.mrb[0].mxu0
    %12674 = vdwg.mxu0
    %12675 = vst [vmem:[#allocation14] sm:$0xff] %v12177
    %12676 = vst [vmem:[#allocation14 + $0x8] sm:$0xff] %v12179
    %12677 = vst [vmem:[#allocation14 + $0x10] sm:$0xff] %v12341
    %12678 = vst [vmem:[#allocation14 + $0x18] sm:$0xff] %v12343
    %12679 = vst [vmem:[#allocation14 + $0x20] sm:$0xff] %v12505
    %12680 = vst [vmem:[#allocation14 + $0x28] sm:$0xff] %v12507
    %12681 = vst [vmem:[#allocation14 + $0x30] sm:$0xff] %v12669
    %12682 = vst [vmem:[#allocation14 + $0x38] sm:$0xff] %v12671
    // Predicated region
    $region62: #{tpu_custom_call.1} parent=1 // pred_check
      _
    $region63: #{tpu_custom_call.1} parent=1 // pred_check_branch
      %12684 = sbr.rel (0) target = $region65
    $region64: #{tpu_custom_call.1} parent=1 // pred_region
      %s12686 = ssub.s32 1024, 1024
      %12687 = vsyncadd [#allocation4], %s12686
      %s12689 = sshll.u32 [#allocation14], 4
      %s12690 = int_to_ptr.vmem [resolvable:$true] %s12689
      %12692 = dma.vmem_to_hbm [thread:$0]  %s12690, 1024, %s8, [#allocation4]
    $region65: #{tpu_custom_call.1} parent=1 // pred_fallthru
      _
    // Predicated region
    $region66: #{tpu_custom_call.1} parent=1 // pred_check
      _
    $region67: #{tpu_custom_call.1} parent=1 // pred_check_branch
      %12694 = sbr.rel (0) target = $region69
    $region68: #{tpu_custom_call.1} parent=1 // pred_region
      %12695 = dma.done [#allocation4], 1024
    $region69: #{tpu_custom_call.1} parent=1 // pred_fallthru
      _
    %12696 = vsyncpa [#allocation3], 1
    %12697 = vsyncpa [#allocation6], 1
    %12698 = vsyncpa [#allocation9], 1
    %12699 = vsyncpa [#allocation12], 1
    %12700 = vsyncpa [#allocation4], 1

</llo_original>
